<compile_context>
chip_gen: v7x
topology: tpu7x:2x2x1
jax: 0.10.0
libtpu: 0.0.40
codegen_flags: <defaults>
</compile_context>

<pallas_src>
import math
from functools import partial

import jax
import jax.numpy as jnp
from jax.experimental import pallas as pl
from jax.experimental.pallas import tpu as pltpu


def _heads_per_block(bh, target=16):
    """Largest divisor of bh that is <= target, while keeping >= 2 grid steps when possible
    (so a 2-TensorCore chip gets work on both cores along the parallel grid axis)."""
    cap = min(target, max(1, bh // 2))
    best = 1
    for c in range(1, cap + 1):
        if bh % c == 0:
            best = c
    return best


def _attn_kernel(q_ref, k_ref, v_ref, bias_ref, o_ref, *, scale, block_heads):
    # q_ref/k_ref : (B, Dk, E), v_ref : (B, Dv, E), bias_ref : (E, E) f32, o_ref : (B, Dv, E)
    bias = bias_ref[...]                                     # additive mask bias, shared by all heads
    e = bias.shape[-1]
    ones_row = jnp.ones((1, e), jnp.bfloat16)                # hoisted out of the head loop

    for h in range(block_heads):                             # unrolled: `block_heads` heads per grid step
        # bf16 MXU operands, f32 everywhere else (softmax math stays f32 for v5e).
        q = (q_ref[h] * jnp.float32(scale)).astype(jnp.bfloat16)   # (Dk, E), scale applied to queries
        k = k_ref[h].astype(jnp.bfloat16)                          # (Dk, E)
        v = v_ref[h].astype(jnp.bfloat16)                          # (Dv, E)

        # logits[eq, ek] = sum_d q[d, eq] * k[d, ek]  -> (E, E), f32 accumulation on the MXU
        logits = jax.lax.dot_general(
            q, k, (((0,), (0,)), ((), ())), preferred_element_type=jnp.float32)

        # masked_fill(~attn_mask, -inf)  ==>  single vector add of a 0 / -1e30 bias
        logits = logits + bias

        # Unnormalized softmax numerator (normalization deferred past the PV matmul).
        m = jnp.max(logits, axis=-1, keepdims=True)          # (E, 1), XLU cross-lane reduce
        p = jnp.exp(logits - m).astype(jnp.bfloat16)         # (E, E), values in [0, 1]

        # out[dv, eq] = sum_ek v[dv, ek] * p[eq, ek]  -> (Dv, E); E stays on the lane axis.
        out = jax.lax.dot_general(
            v, p, (((1,), (1,)), ((), ())), preferred_element_type=jnp.float32)

        # Row sums as a lane-oriented (1, E) vector via a tiny ones-row matmul (MXU has slack),
        # so the normalization is a (Dv, E) * (1, E) multiply after the PV matmul.
        denom = jax.lax.dot_general(
            ones_row, p, (((1,), (1,)), ((), ())), preferred_element_type=jnp.float32)

        out = out * pl.reciprocal(denom, approx=True)        # EUP reciprocal, broadcast over Dv
        o_ref[h] = out.astype(o_ref.dtype)


def causal_attention(keys, queries, values, attn_mask, num_heads=8, heads_per_block=16):
    s, b, num_keys, *dims = keys.shape
    num_values = values.shape[2]
    nh = num_heads
    assert num_keys % nh == 0 and num_values % nh == 0
    E = math.prod(dims)
    Dk = num_keys // nh
    Dv = num_values // nh
    BH = s * b * nh
    scale = Dk ** (-0.5)
    assert attn_mask.shape == (E, E), attn_mask.shape

    blk = _heads_per_block(BH, heads_per_block)
    grid = (BH // blk,)

    flat_q = queries.reshape(BH, Dk, E)
    flat_k = keys.reshape(BH, Dk, E)
    flat_v = values.reshape(BH, Dv, E)
    # Additive f32 mask bias: 0 where attended, -1e30 where masked (finite -> no NaN risk
    # for fully-masked rows, and exp(-1e30 - m) underflows to exactly 0).
    bias = jnp.where(attn_mask, 0.0, -1e30).astype(jnp.float32)    # (E, E)

    out = pl.pallas_call(
        partial(_attn_kernel, scale=scale, block_heads=blk),
        out_shape=jax.ShapeDtypeStruct((BH, Dv, E), queries.dtype),
        grid_spec=pltpu.PrefetchScalarGridSpec(
            num_scalar_prefetch=0,
            grid=grid,
            in_specs=[
                pl.BlockSpec((blk, Dk, E), lambda i: (i, 0, 0)),
                pl.BlockSpec((blk, Dk, E), lambda i: (i, 0, 0)),
                pl.BlockSpec((blk, Dv, E), lambda i: (i, 0, 0)),
                pl.BlockSpec((E, E), lambda i: (0, 0)),   # constant block index -> fetched once
            ],
            out_specs=pl.BlockSpec((blk, Dv, E), lambda i: (i, 0, 0)),
        ),
        compiler_params=pltpu.CompilerParams(
            dimension_semantics=("parallel",)),
    )(flat_q, flat_k, flat_v, bias)

    # (BH, Dv, E) -> (s, b, nh*Dv, *dims) == (s, b, num_values, *dims)
    return out.reshape(s, b, num_values, *dims)


def causal_attention_reference(keys, queries, values, attn_mask, num_heads=8):
    # Pure-JAX f32 reference mirroring the PyTorch forward (eval mode).
    s, b, nk, *dims = keys.shape
    nv = values.shape[2]
    nh = num_heads
    E = math.prod(dims)
    Dk, Dv = nk // nh, nv // nh
    fq = queries.reshape(s, b, nh, Dk, E) * Dk ** (-0.5)
    fk = keys.reshape(s, b, nh, Dk, E)
    fv = values.reshape(s, b, nh, Dv, E)
    logits = jnp.einsum('sbhde,sbhdf->sbhef', fq, fk)
    logits = jnp.where(attn_mask, logits, -jnp.inf)
    w = jax.nn.softmax(logits, axis=-1)
    out = jnp.einsum('sbhef,sbhvf->sbhve', w, fv)
    return out.reshape(s, b, nv, *dims)


if __name__ == "__main__":
    # Small shapes consistent with the module:
    #   stack=2, batch=2, num_heads=8, num_keys=num_values=64, spatial dims=(16, 8) -> embed_dim=128
    stack_dim, batch, num_heads = 2, 2, 8
    num_keys, num_values = 64, 64
    dims = (16, 8)
    E = math.prod(dims)

    key = jax.random.PRNGKey(0)
    k1, k2, k3 = jax.random.split(key, 3)
    keys_in = jax.random.normal(k1, (stack_dim, batch, num_keys, *dims), jnp.float32)
    queries_in = jax.random.normal(k2, (stack_dim, batch, num_keys, *dims), jnp.float32)
    values_in = jax.random.normal(k3, (stack_dim, batch, num_values, *dims), jnp.float32)
    # Causal (lower-triangular) mask over the embed axis, broadcast over (stack, batch, head).
    attn_mask = jnp.tril(jnp.ones((E, E), dtype=jnp.bool_))

    out = causal_attention(keys_in, queries_in, values_in, attn_mask, num_heads=num_heads)
    out = jax.block_until_ready(out)

    ref = causal_attention_reference(keys_in, queries_in, values_in, attn_mask, num_heads=num_heads)
    assert out.shape == (stack_dim, batch, num_values, *dims), out.shape
    # Tolerances relaxed vs. a pure-f32 version because the MXU operands are bf16
    # (accumulation stays f32 via preferred_element_type); mean error stays ~1e-3.
    max_err = float(jnp.max(jnp.abs(out - ref)))
    mean_err = float(jnp.mean(jnp.abs(out - ref)))
    assert max_err < 1e-1 and mean_err < 2e-2, (max_err, mean_err)

    print("KERNEL_OK")
</pallas_src>

<mosaic_0001>
module attributes {stable_mosaic.version = 11 : i64} {
  func.func @_attn_kernel(%arg0: i32, %arg1: memref<16x8x128xf32, #tpu.memory_space<vmem>>, %arg2: memref<16x8x128xf32, #tpu.memory_space<vmem>>, %arg3: memref<16x8x128xf32, #tpu.memory_space<vmem>>, %arg4: memref<128x128xf32, #tpu.memory_space<vmem>>, %arg5: memref<16x8x128xf32, #tpu.memory_space<vmem>>) attributes {dimension_semantics = [#tpu.dimension_semantics<parallel>], iteration_bounds = array<i64: 2>, scalar_prefetch = 0 : i64, scratch_operands = 0 : i64, tpu.core_type = #tpu.core_type<tc>, window_params = [{transform_indices = @transform_0, window_bounds = array<i64: 16, 8, 128>}, {transform_indices = @transform_1, window_bounds = array<i64: 16, 8, 128>}, {transform_indices = @transform_2, window_bounds = array<i64: 16, 8, 128>}, {pipeline_mode = #tpu.pipeline_mode<synchronous>, transform_indices = @transform_3, window_bounds = array<i64: 128, 128>}, {transform_indices = @transform_4, window_bounds = array<i64: 16, 8, 128>}]} {
    %c0 = arith.constant 0 : index
    %c0_0 = arith.constant 0 : index
    %0 = vector.load %arg4[%c0, %c0_0] : memref<128x128xf32, #tpu.memory_space<vmem>>, vector<128x128xf32>
    %cst = arith.constant 1.000000e+00 : bf16
    %1 = vector.broadcast %cst : bf16 to vector<1x128xbf16>
    %c0_1 = arith.constant 0 : index
    %c0_2 = arith.constant 0 : index
    %c0_3 = arith.constant 0 : index
    %2 = vector.load %arg1[%c0_1, %c0_2, %c0_3] : memref<16x8x128xf32, #tpu.memory_space<vmem>>, vector<1x8x128xf32>
    %3 = vector.shape_cast %2 : vector<1x8x128xf32> to vector<8x128xf32>
    %cst_4 = arith.constant 0.353553385 : f32
    %4 = vector.broadcast %cst_4 : f32 to vector<8x128xf32>
    %5 = arith.mulf %3, %4 : vector<8x128xf32>
    %6 = arith.truncf %5 : vector<8x128xf32> to vector<8x128xbf16>
    %c0_5 = arith.constant 0 : index
    %c0_6 = arith.constant 0 : index
    %c0_7 = arith.constant 0 : index
    %7 = vector.load %arg2[%c0_5, %c0_6, %c0_7] : memref<16x8x128xf32, #tpu.memory_space<vmem>>, vector<1x8x128xf32>
    %8 = vector.shape_cast %7 : vector<1x8x128xf32> to vector<8x128xf32>
    %9 = arith.truncf %8 : vector<8x128xf32> to vector<8x128xbf16>
    %c0_8 = arith.constant 0 : index
    %c0_9 = arith.constant 0 : index
    %c0_10 = arith.constant 0 : index
    %10 = vector.load %arg3[%c0_8, %c0_9, %c0_10] : memref<16x8x128xf32, #tpu.memory_space<vmem>>, vector<1x8x128xf32>
    %11 = vector.shape_cast %10 : vector<1x8x128xf32> to vector<8x128xf32>
    %12 = arith.truncf %11 : vector<8x128xf32> to vector<8x128xbf16>
    %cst_11 = arith.constant dense<0.000000e+00> : vector<128x128xf32>
    %13 = tpu.matmul %6, %9, %cst_11 {dimension_numbers = #tpu.dot_dimension_numbers<[0], [0], [1], [1], [0, 1, 1, 1], [], []>} : vector<8x128xbf16>, vector<8x128xbf16>, vector<128x128xf32> -> vector<128x128xf32>
    %14 = arith.addf %13, %0 : vector<128x128xf32>
    %cst_12 = arith.constant dense<0xFF800000> : vector<128xf32>
    %15 = vector.multi_reduction <maximumf>, %14, %cst_12 [1] : vector<128x128xf32> to vector<128xf32>
    %16 = vector.shape_cast %15 : vector<128xf32> to vector<128x1xf32>
    %17 = vector.broadcast %16 : vector<128x1xf32> to vector<128x128xf32>
    %18 = arith.subf %14, %17 : vector<128x128xf32>
    %19 = math.exp %18 : vector<128x128xf32>
    %20 = arith.truncf %19 : vector<128x128xf32> to vector<128x128xbf16>
    %cst_13 = arith.constant dense<0.000000e+00> : vector<8x128xf32>
    %21 = tpu.matmul %12, %20, %cst_13 {dimension_numbers = #tpu.dot_dimension_numbers<[1], [1], [0], [0], [0, 0, 1, 0], [], []>} : vector<8x128xbf16>, vector<128x128xbf16>, vector<8x128xf32> -> vector<8x128xf32>
    %cst_14 = arith.constant dense<0.000000e+00> : vector<1x128xf32>
    %22 = tpu.matmul %1, %20, %cst_14 {dimension_numbers = #tpu.dot_dimension_numbers<[1], [1], [0], [0], [0, 0, 1, 0], [], []>} : vector<1x128xbf16>, vector<128x128xbf16>, vector<1x128xf32> -> vector<1x128xf32>
    %23 = tpu.reciprocal %22 {approx = true} : vector<1x128xf32> -> vector<1x128xf32>
    %24 = vector.broadcast %23 : vector<1x128xf32> to vector<8x128xf32>
    %25 = arith.mulf %21, %24 : vector<8x128xf32>
    %c0_15 = arith.constant 0 : index
    %c0_16 = arith.constant 0 : index
    %c0_17 = arith.constant 0 : index
    %26 = vector.load %arg5[%c0_15, %c0_16, %c0_17] : memref<16x8x128xf32, #tpu.memory_space<vmem>>, vector<1x8x128xf32>
    %27 = vector.shape_cast %26 : vector<1x8x128xf32> to vector<8x128xf32>
    %28 = vector.shape_cast %25 : vector<8x128xf32> to vector<1x8x128xf32>
    tpu.vector_store %arg5[%c0_15, %c0_16, %c0_17], %28 {strides = array<i32>} : memref<16x8x128xf32, #tpu.memory_space<vmem>>, vector<1x8x128xf32>,
    %c1 = arith.constant 1 : index
    %c0_18 = arith.constant 0 : index
    %c0_19 = arith.constant 0 : index
    %29 = vector.load %arg1[%c1, %c0_18, %c0_19] : memref<16x8x128xf32, #tpu.memory_space<vmem>>, vector<1x8x128xf32>
    %30 = vector.shape_cast %29 : vector<1x8x128xf32> to vector<8x128xf32>
    %cst_20 = arith.constant 0.353553385 : f32
    %31 = vector.broadcast %cst_20 : f32 to vector<8x128xf32>
    %32 = arith.mulf %30, %31 : vector<8x128xf32>
    %33 = arith.truncf %32 : vector<8x128xf32> to vector<8x128xbf16>
    %c1_21 = arith.constant 1 : index
    %c0_22 = arith.constant 0 : index
    %c0_23 = arith.constant 0 : index
    %34 = vector.load %arg2[%c1_21, %c0_22, %c0_23] : memref<16x8x128xf32, #tpu.memory_space<vmem>>, vector<1x8x128xf32>
    %35 = vector.shape_cast %34 : vector<1x8x128xf32> to vector<8x128xf32>
    %36 = arith.truncf %35 : vector<8x128xf32> to vector<8x128xbf16>
    %c1_24 = arith.constant 1 : index
    %c0_25 = arith.constant 0 : index
    %c0_26 = arith.constant 0 : index
    %37 = vector.load %arg3[%c1_24, %c0_25, %c0_26] : memref<16x8x128xf32, #tpu.memory_space<vmem>>, vector<1x8x128xf32>
    %38 = vector.shape_cast %37 : vector<1x8x128xf32> to vector<8x128xf32>
    %39 = arith.truncf %38 : vector<8x128xf32> to vector<8x128xbf16>
    %cst_27 = arith.constant dense<0.000000e+00> : vector<128x128xf32>
    %40 = tpu.matmul %33, %36, %cst_27 {dimension_numbers = #tpu.dot_dimension_numbers<[0], [0], [1], [1], [0, 1, 1, 1], [], []>} : vector<8x128xbf16>, vector<8x128xbf16>, vector<128x128xf32> -> vector<128x128xf32>
    %41 = arith.addf %40, %0 : vector<128x128xf32>
    %cst_28 = arith.constant dense<0xFF800000> : vector<128xf32>
    %42 = vector.multi_reduction <maximumf>, %41, %cst_28 [1] : vector<128x128xf32> to vector<128xf32>
    %43 = vector.shape_cast %42 : vector<128xf32> to vector<128x1xf32>
    %44 = vector.broadcast %43 : vector<128x1xf32> to vector<128x128xf32>
    %45 = arith.subf %41, %44 : vector<128x128xf32>
    %46 = math.exp %45 : vector<128x128xf32>
    %47 = arith.truncf %46 : vector<128x128xf32> to vector<128x128xbf16>
    %cst_29 = arith.constant dense<0.000000e+00> : vector<8x128xf32>
    %48 = tpu.matmul %39, %47, %cst_29 {dimension_numbers = #tpu.dot_dimension_numbers<[1], [1], [0], [0], [0, 0, 1, 0], [], []>} : vector<8x128xbf16>, vector<128x128xbf16>, vector<8x128xf32> -> vector<8x128xf32>
    %cst_30 = arith.constant dense<0.000000e+00> : vector<1x128xf32>
    %49 = tpu.matmul %1, %47, %cst_30 {dimension_numbers = #tpu.dot_dimension_numbers<[1], [1], [0], [0], [0, 0, 1, 0], [], []>} : vector<1x128xbf16>, vector<128x128xbf16>, vector<1x128xf32> -> vector<1x128xf32>
    %50 = tpu.reciprocal %49 {approx = true} : vector<1x128xf32> -> vector<1x128xf32>
    %51 = vector.broadcast %50 : vector<1x128xf32> to vector<8x128xf32>
    %52 = arith.mulf %48, %51 : vector<8x128xf32>
    %c1_31 = arith.constant 1 : index
    %c0_32 = arith.constant 0 : index
    %c0_33 = arith.constant 0 : index
    %53 = vector.load %arg5[%c1_31, %c0_32, %c0_33] : memref<16x8x128xf32, #tpu.memory_space<vmem>>, vector<1x8x128xf32>
    %54 = vector.shape_cast %53 : vector<1x8x128xf32> to vector<8x128xf32>
    %55 = vector.shape_cast %52 : vector<8x128xf32> to vector<1x8x128xf32>
    tpu.vector_store %arg5[%c1_31, %c0_32, %c0_33], %55 {strides = array<i32>} : memref<16x8x128xf32, #tpu.memory_space<vmem>>, vector<1x8x128xf32>,
    %c2 = arith.constant 2 : index
    %c0_34 = arith.constant 0 : index
    %c0_35 = arith.constant 0 : index
    %56 = vector.load %arg1[%c2, %c0_34, %c0_35] : memref<16x8x128xf32, #tpu.memory_space<vmem>>, vector<1x8x128xf32>
    %57 = vector.shape_cast %56 : vector<1x8x128xf32> to vector<8x128xf32>
    %cst_36 = arith.constant 0.353553385 : f32
    %58 = vector.broadcast %cst_36 : f32 to vector<8x128xf32>
    %59 = arith.mulf %57, %58 : vector<8x128xf32>
    %60 = arith.truncf %59 : vector<8x128xf32> to vector<8x128xbf16>
    %c2_37 = arith.constant 2 : index
    %c0_38 = arith.constant 0 : index
    %c0_39 = arith.constant 0 : index
    %61 = vector.load %arg2[%c2_37, %c0_38, %c0_39] : memref<16x8x128xf32, #tpu.memory_space<vmem>>, vector<1x8x128xf32>
    %62 = vector.shape_cast %61 : vector<1x8x128xf32> to vector<8x128xf32>
    %63 = arith.truncf %62 : vector<8x128xf32> to vector<8x128xbf16>
    %c2_40 = arith.constant 2 : index
    %c0_41 = arith.constant 0 : index
    %c0_42 = arith.constant 0 : index
    %64 = vector.load %arg3[%c2_40, %c0_41, %c0_42] : memref<16x8x128xf32, #tpu.memory_space<vmem>>, vector<1x8x128xf32>
    %65 = vector.shape_cast %64 : vector<1x8x128xf32> to vector<8x128xf32>
    %66 = arith.truncf %65 : vector<8x128xf32> to vector<8x128xbf16>
    %cst_43 = arith.constant dense<0.000000e+00> : vector<128x128xf32>
    %67 = tpu.matmul %60, %63, %cst_43 {dimension_numbers = #tpu.dot_dimension_numbers<[0], [0], [1], [1], [0, 1, 1, 1], [], []>} : vector<8x128xbf16>, vector<8x128xbf16>, vector<128x128xf32> -> vector<128x128xf32>
    %68 = arith.addf %67, %0 : vector<128x128xf32>
    %cst_44 = arith.constant dense<0xFF800000> : vector<128xf32>
    %69 = vector.multi_reduction <maximumf>, %68, %cst_44 [1] : vector<128x128xf32> to vector<128xf32>
    %70 = vector.shape_cast %69 : vector<128xf32> to vector<128x1xf32>
    %71 = vector.broadcast %70 : vector<128x1xf32> to vector<128x128xf32>
    %72 = arith.subf %68, %71 : vector<128x128xf32>
    %73 = math.exp %72 : vector<128x128xf32>
    %74 = arith.truncf %73 : vector<128x128xf32> to vector<128x128xbf16>
    %cst_45 = arith.constant dense<0.000000e+00> : vector<8x128xf32>
    %75 = tpu.matmul %66, %74, %cst_45 {dimension_numbers = #tpu.dot_dimension_numbers<[1], [1], [0], [0], [0, 0, 1, 0], [], []>} : vector<8x128xbf16>, vector<128x128xbf16>, vector<8x128xf32> -> vector<8x128xf32>
    %cst_46 = arith.constant dense<0.000000e+00> : vector<1x128xf32>
    %76 = tpu.matmul %1, %74, %cst_46 {dimension_numbers = #tpu.dot_dimension_numbers<[1], [1], [0], [0], [0, 0, 1, 0], [], []>} : vector<1x128xbf16>, vector<128x128xbf16>, vector<1x128xf32> -> vector<1x128xf32>
    %77 = tpu.reciprocal %76 {approx = true} : vector<1x128xf32> -> vector<1x128xf32>
    %78 = vector.broadcast %77 : vector<1x128xf32> to vector<8x128xf32>
    %79 = arith.mulf %75, %78 : vector<8x128xf32>
    %c2_47 = arith.constant 2 : index
    %c0_48 = arith.constant 0 : index
    %c0_49 = arith.constant 0 : index
    %80 = vector.load %arg5[%c2_47, %c0_48, %c0_49] : memref<16x8x128xf32, #tpu.memory_space<vmem>>, vector<1x8x128xf32>
    %81 = vector.shape_cast %80 : vector<1x8x128xf32> to vector<8x128xf32>
    %82 = vector.shape_cast %79 : vector<8x128xf32> to vector<1x8x128xf32>
    tpu.vector_store %arg5[%c2_47, %c0_48, %c0_49], %82 {strides = array<i32>} : memref<16x8x128xf32, #tpu.memory_space<vmem>>, vector<1x8x128xf32>,
    %c3 = arith.constant 3 : index
    %c0_50 = arith.constant 0 : index
    %c0_51 = arith.constant 0 : index
    %83 = vector.load %arg1[%c3, %c0_50, %c0_51] : memref<16x8x128xf32, #tpu.memory_space<vmem>>, vector<1x8x128xf32>
    %84 = vector.shape_cast %83 : vector<1x8x128xf32> to vector<8x128xf32>
    %cst_52 = arith.constant 0.353553385 : f32
    %85 = vector.broadcast %cst_52 : f32 to vector<8x128xf32>
    %86 = arith.mulf %84, %85 : vector<8x128xf32>
    %87 = arith.truncf %86 : vector<8x128xf32> to vector<8x128xbf16>
    %c3_53 = arith.constant 3 : index
    %c0_54 = arith.constant 0 : index
    %c0_55 = arith.constant 0 : index
    %88 = vector.load %arg2[%c3_53, %c0_54, %c0_55] : memref<16x8x128xf32, #tpu.memory_space<vmem>>, vector<1x8x128xf32>
    %89 = vector.shape_cast %88 : vector<1x8x128xf32> to vector<8x128xf32>
    %90 = arith.truncf %89 : vector<8x128xf32> to vector<8x128xbf16>
    %c3_56 = arith.constant 3 : index
    %c0_57 = arith.constant 0 : index
    %c0_58 = arith.constant 0 : index
    %91 = vector.load %arg3[%c3_56, %c0_57, %c0_58] : memref<16x8x128xf32, #tpu.memory_space<vmem>>, vector<1x8x128xf32>
    %92 = vector.shape_cast %91 : vector<1x8x128xf32> to vector<8x128xf32>
    %93 = arith.truncf %92 : vector<8x128xf32> to vector<8x128xbf16>
    %cst_59 = arith.constant dense<0.000000e+00> : vector<128x128xf32>
    %94 = tpu.matmul %87, %90, %cst_59 {dimension_numbers = #tpu.dot_dimension_numbers<[0], [0], [1], [1], [0, 1, 1, 1], [], []>} : vector<8x128xbf16>, vector<8x128xbf16>, vector<128x128xf32> -> vector<128x128xf32>
    %95 = arith.addf %94, %0 : vector<128x128xf32>
    %cst_60 = arith.constant dense<0xFF800000> : vector<128xf32>
    %96 = vector.multi_reduction <maximumf>, %95, %cst_60 [1] : vector<128x128xf32> to vector<128xf32>
    %97 = vector.shape_cast %96 : vector<128xf32> to vector<128x1xf32>
    %98 = vector.broadcast %97 : vector<128x1xf32> to vector<128x128xf32>
    %99 = arith.subf %95, %98 : vector<128x128xf32>
    %100 = math.exp %99 : vector<128x128xf32>
    %101 = arith.truncf %100 : vector<128x128xf32> to vector<128x128xbf16>
    %cst_61 = arith.constant dense<0.000000e+00> : vector<8x128xf32>
    %102 = tpu.matmul %93, %101, %cst_61 {dimension_numbers = #tpu.dot_dimension_numbers<[1], [1], [0], [0], [0, 0, 1, 0], [], []>} : vector<8x128xbf16>, vector<128x128xbf16>, vector<8x128xf32> -> vector<8x128xf32>
    %cst_62 = arith.constant dense<0.000000e+00> : vector<1x128xf32>
    %103 = tpu.matmul %1, %101, %cst_62 {dimension_numbers = #tpu.dot_dimension_numbers<[1], [1], [0], [0], [0, 0, 1, 0], [], []>} : vector<1x128xbf16>, vector<128x128xbf16>, vector<1x128xf32> -> vector<1x128xf32>
    %104 = tpu.reciprocal %103 {approx = true} : vector<1x128xf32> -> vector<1x128xf32>
    %105 = vector.broadcast %104 : vector<1x128xf32> to vector<8x128xf32>
    %106 = arith.mulf %102, %105 : vector<8x128xf32>
    %c3_63 = arith.constant 3 : index
    %c0_64 = arith.constant 0 : index
    %c0_65 = arith.constant 0 : index
    %107 = vector.load %arg5[%c3_63, %c0_64, %c0_65] : memref<16x8x128xf32, #tpu.memory_space<vmem>>, vector<1x8x128xf32>
    %108 = vector.shape_cast %107 : vector<1x8x128xf32> to vector<8x128xf32>
    %109 = vector.shape_cast %106 : vector<8x128xf32> to vector<1x8x128xf32>
    tpu.vector_store %arg5[%c3_63, %c0_64, %c0_65], %109 {strides = array<i32>} : memref<16x8x128xf32, #tpu.memory_space<vmem>>, vector<1x8x128xf32>,
    %c4 = arith.constant 4 : index
    %c0_66 = arith.constant 0 : index
    %c0_67 = arith.constant 0 : index
    %110 = vector.load %arg1[%c4, %c0_66, %c0_67] : memref<16x8x128xf32, #tpu.memory_space<vmem>>, vector<1x8x128xf32>
    %111 = vector.shape_cast %110 : vector<1x8x128xf32> to vector<8x128xf32>
    %cst_68 = arith.constant 0.353553385 : f32
    %112 = vector.broadcast %cst_68 : f32 to vector<8x128xf32>
    %113 = arith.mulf %111, %112 : vector<8x128xf32>
    %114 = arith.truncf %113 : vector<8x128xf32> to vector<8x128xbf16>
    %c4_69 = arith.constant 4 : index
    %c0_70 = arith.constant 0 : index
    %c0_71 = arith.constant 0 : index
    %115 = vector.load %arg2[%c4_69, %c0_70, %c0_71] : memref<16x8x128xf32, #tpu.memory_space<vmem>>, vector<1x8x128xf32>
    %116 = vector.shape_cast %115 : vector<1x8x128xf32> to vector<8x128xf32>
    %117 = arith.truncf %116 : vector<8x128xf32> to vector<8x128xbf16>
    %c4_72 = arith.constant 4 : index
    %c0_73 = arith.constant 0 : index
    %c0_74 = arith.constant 0 : index
    %118 = vector.load %arg3[%c4_72, %c0_73, %c0_74] : memref<16x8x128xf32, #tpu.memory_space<vmem>>, vector<1x8x128xf32>
    %119 = vector.shape_cast %118 : vector<1x8x128xf32> to vector<8x128xf32>
    %120 = arith.truncf %119 : vector<8x128xf32> to vector<8x128xbf16>
    %cst_75 = arith.constant dense<0.000000e+00> : vector<128x128xf32>
    %121 = tpu.matmul %114, %117, %cst_75 {dimension_numbers = #tpu.dot_dimension_numbers<[0], [0], [1], [1], [0, 1, 1, 1], [], []>} : vector<8x128xbf16>, vector<8x128xbf16>, vector<128x128xf32> -> vector<128x128xf32>
    %122 = arith.addf %121, %0 : vector<128x128xf32>
    %cst_76 = arith.constant dense<0xFF800000> : vector<128xf32>
    %123 = vector.multi_reduction <maximumf>, %122, %cst_76 [1] : vector<128x128xf32> to vector<128xf32>
    %124 = vector.shape_cast %123 : vector<128xf32> to vector<128x1xf32>
    %125 = vector.broadcast %124 : vector<128x1xf32> to vector<128x128xf32>
    %126 = arith.subf %122, %125 : vector<128x128xf32>
    %127 = math.exp %126 : vector<128x128xf32>
    %128 = arith.truncf %127 : vector<128x128xf32> to vector<128x128xbf16>
    %cst_77 = arith.constant dense<0.000000e+00> : vector<8x128xf32>
    %129 = tpu.matmul %120, %128, %cst_77 {dimension_numbers = #tpu.dot_dimension_numbers<[1], [1], [0], [0], [0, 0, 1, 0], [], []>} : vector<8x128xbf16>, vector<128x128xbf16>, vector<8x128xf32> -> vector<8x128xf32>
    %cst_78 = arith.constant dense<0.000000e+00> : vector<1x128xf32>
    %130 = tpu.matmul %1, %128, %cst_78 {dimension_numbers = #tpu.dot_dimension_numbers<[1], [1], [0], [0], [0, 0, 1, 0], [], []>} : vector<1x128xbf16>, vector<128x128xbf16>, vector<1x128xf32> -> vector<1x128xf32>
    %131 = tpu.reciprocal %130 {approx = true} : vector<1x128xf32> -> vector<1x128xf32>
    %132 = vector.broadcast %131 : vector<1x128xf32> to vector<8x128xf32>
    %133 = arith.mulf %129, %132 : vector<8x128xf32>
    %c4_79 = arith.constant 4 : index
    %c0_80 = arith.constant 0 : index
    %c0_81 = arith.constant 0 : index
    %134 = vector.load %arg5[%c4_79, %c0_80, %c0_81] : memref<16x8x128xf32, #tpu.memory_space<vmem>>, vector<1x8x128xf32>
    %135 = vector.shape_cast %134 : vector<1x8x128xf32> to vector<8x128xf32>
    %136 = vector.shape_cast %133 : vector<8x128xf32> to vector<1x8x128xf32>
    tpu.vector_store %arg5[%c4_79, %c0_80, %c0_81], %136 {strides = array<i32>} : memref<16x8x128xf32, #tpu.memory_space<vmem>>, vector<1x8x128xf32>,
    %c5 = arith.constant 5 : index
    %c0_82 = arith.constant 0 : index
    %c0_83 = arith.constant 0 : index
    %137 = vector.load %arg1[%c5, %c0_82, %c0_83] : memref<16x8x128xf32, #tpu.memory_space<vmem>>, vector<1x8x128xf32>
    %138 = vector.shape_cast %137 : vector<1x8x128xf32> to vector<8x128xf32>
    %cst_84 = arith.constant 0.353553385 : f32
    %139 = vector.broadcast %cst_84 : f32 to vector<8x128xf32>
    %140 = arith.mulf %138, %139 : vector<8x128xf32>
    %141 = arith.truncf %140 : vector<8x128xf32> to vector<8x128xbf16>
    %c5_85 = arith.constant 5 : index
    %c0_86 = arith.constant 0 : index
    %c0_87 = arith.constant 0 : index
    %142 = vector.load %arg2[%c5_85, %c0_86, %c0_87] : memref<16x8x128xf32, #tpu.memory_space<vmem>>, vector<1x8x128xf32>
    %143 = vector.shape_cast %142 : vector<1x8x128xf32> to vector<8x128xf32>
    %144 = arith.truncf %143 : vector<8x128xf32> to vector<8x128xbf16>
    %c5_88 = arith.constant 5 : index
    %c0_89 = arith.constant 0 : index
    %c0_90 = arith.constant 0 : index
    %145 = vector.load %arg3[%c5_88, %c0_89, %c0_90] : memref<16x8x128xf32, #tpu.memory_space<vmem>>, vector<1x8x128xf32>
    %146 = vector.shape_cast %145 : vector<1x8x128xf32> to vector<8x128xf32>
    %147 = arith.truncf %146 : vector<8x128xf32> to vector<8x128xbf16>
    %cst_91 = arith.constant dense<0.000000e+00> : vector<128x128xf32>
    %148 = tpu.matmul %141, %144, %cst_91 {dimension_numbers = #tpu.dot_dimension_numbers<[0], [0], [1], [1], [0, 1, 1, 1], [], []>} : vector<8x128xbf16>, vector<8x128xbf16>, vector<128x128xf32> -> vector<128x128xf32>
    %149 = arith.addf %148, %0 : vector<128x128xf32>
    %cst_92 = arith.constant dense<0xFF800000> : vector<128xf32>
    %150 = vector.multi_reduction <maximumf>, %149, %cst_92 [1] : vector<128x128xf32> to vector<128xf32>
    %151 = vector.shape_cast %150 : vector<128xf32> to vector<128x1xf32>
    %152 = vector.broadcast %151 : vector<128x1xf32> to vector<128x128xf32>
    %153 = arith.subf %149, %152 : vector<128x128xf32>
    %154 = math.exp %153 : vector<128x128xf32>
    %155 = arith.truncf %154 : vector<128x128xf32> to vector<128x128xbf16>
    %cst_93 = arith.constant dense<0.000000e+00> : vector<8x128xf32>
    %156 = tpu.matmul %147, %155, %cst_93 {dimension_numbers = #tpu.dot_dimension_numbers<[1], [1], [0], [0], [0, 0, 1, 0], [], []>} : vector<8x128xbf16>, vector<128x128xbf16>, vector<8x128xf32> -> vector<8x128xf32>
    %cst_94 = arith.constant dense<0.000000e+00> : vector<1x128xf32>
    %157 = tpu.matmul %1, %155, %cst_94 {dimension_numbers = #tpu.dot_dimension_numbers<[1], [1], [0], [0], [0, 0, 1, 0], [], []>} : vector<1x128xbf16>, vector<128x128xbf16>, vector<1x128xf32> -> vector<1x128xf32>
    %158 = tpu.reciprocal %157 {approx = true} : vector<1x128xf32> -> vector<1x128xf32>
    %159 = vector.broadcast %158 : vector<1x128xf32> to vector<8x128xf32>
    %160 = arith.mulf %156, %159 : vector<8x128xf32>
    %c5_95 = arith.constant 5 : index
    %c0_96 = arith.constant 0 : index
    %c0_97 = arith.constant 0 : index
    %161 = vector.load %arg5[%c5_95, %c0_96, %c0_97] : memref<16x8x128xf32, #tpu.memory_space<vmem>>, vector<1x8x128xf32>
    %162 = vector.shape_cast %161 : vector<1x8x128xf32> to vector<8x128xf32>
    %163 = vector.shape_cast %160 : vector<8x128xf32> to vector<1x8x128xf32>
    tpu.vector_store %arg5[%c5_95, %c0_96, %c0_97], %163 {strides = array<i32>} : memref<16x8x128xf32, #tpu.memory_space<vmem>>, vector<1x8x128xf32>,
    %c6 = arith.constant 6 : index
    %c0_98 = arith.constant 0 : index
    %c0_99 = arith.constant 0 : index
    %164 = vector.load %arg1[%c6, %c0_98, %c0_99] : memref<16x8x128xf32, #tpu.memory_space<vmem>>, vector<1x8x128xf32>
    %165 = vector.shape_cast %164 : vector<1x8x128xf32> to vector<8x128xf32>
    %cst_100 = arith.constant 0.353553385 : f32
    %166 = vector.broadcast %cst_100 : f32 to vector<8x128xf32>
    %167 = arith.mulf %165, %166 : vector<8x128xf32>
    %168 = arith.truncf %167 : vector<8x128xf32> to vector<8x128xbf16>
    %c6_101 = arith.constant 6 : index
    %c0_102 = arith.constant 0 : index
    %c0_103 = arith.constant 0 : index
    %169 = vector.load %arg2[%c6_101, %c0_102, %c0_103] : memref<16x8x128xf32, #tpu.memory_space<vmem>>, vector<1x8x128xf32>
    %170 = vector.shape_cast %169 : vector<1x8x128xf32> to vector<8x128xf32>
    %171 = arith.truncf %170 : vector<8x128xf32> to vector<8x128xbf16>
    %c6_104 = arith.constant 6 : index
    %c0_105 = arith.constant 0 : index
    %c0_106 = arith.constant 0 : index
    %172 = vector.load %arg3[%c6_104, %c0_105, %c0_106] : memref<16x8x128xf32, #tpu.memory_space<vmem>>, vector<1x8x128xf32>
    %173 = vector.shape_cast %172 : vector<1x8x128xf32> to vector<8x128xf32>
    %174 = arith.truncf %173 : vector<8x128xf32> to vector<8x128xbf16>
    %cst_107 = arith.constant dense<0.000000e+00> : vector<128x128xf32>
    %175 = tpu.matmul %168, %171, %cst_107 {dimension_numbers = #tpu.dot_dimension_numbers<[0], [0], [1], [1], [0, 1, 1, 1], [], []>} : vector<8x128xbf16>, vector<8x128xbf16>, vector<128x128xf32> -> vector<128x128xf32>
    %176 = arith.addf %175, %0 : vector<128x128xf32>
    %cst_108 = arith.constant dense<0xFF800000> : vector<128xf32>
    %177 = vector.multi_reduction <maximumf>, %176, %cst_108 [1] : vector<128x128xf32> to vector<128xf32>
    %178 = vector.shape_cast %177 : vector<128xf32> to vector<128x1xf32>
    %179 = vector.broadcast %178 : vector<128x1xf32> to vector<128x128xf32>
    %180 = arith.subf %176, %179 : vector<128x128xf32>
    %181 = math.exp %180 : vector<128x128xf32>
    %182 = arith.truncf %181 : vector<128x128xf32> to vector<128x128xbf16>
    %cst_109 = arith.constant dense<0.000000e+00> : vector<8x128xf32>
    %183 = tpu.matmul %174, %182, %cst_109 {dimension_numbers = #tpu.dot_dimension_numbers<[1], [1], [0], [0], [0, 0, 1, 0], [], []>} : vector<8x128xbf16>, vector<128x128xbf16>, vector<8x128xf32> -> vector<8x128xf32>
    %cst_110 = arith.constant dense<0.000000e+00> : vector<1x128xf32>
    %184 = tpu.matmul %1, %182, %cst_110 {dimension_numbers = #tpu.dot_dimension_numbers<[1], [1], [0], [0], [0, 0, 1, 0], [], []>} : vector<1x128xbf16>, vector<128x128xbf16>, vector<1x128xf32> -> vector<1x128xf32>
    %185 = tpu.reciprocal %184 {approx = true} : vector<1x128xf32> -> vector<1x128xf32>
    %186 = vector.broadcast %185 : vector<1x128xf32> to vector<8x128xf32>
    %187 = arith.mulf %183, %186 : vector<8x128xf32>
    %c6_111 = arith.constant 6 : index
    %c0_112 = arith.constant 0 : index
    %c0_113 = arith.constant 0 : index
    %188 = vector.load %arg5[%c6_111, %c0_112, %c0_113] : memref<16x8x128xf32, #tpu.memory_space<vmem>>, vector<1x8x128xf32>
    %189 = vector.shape_cast %188 : vector<1x8x128xf32> to vector<8x128xf32>
    %190 = vector.shape_cast %187 : vector<8x128xf32> to vector<1x8x128xf32>
    tpu.vector_store %arg5[%c6_111, %c0_112, %c0_113], %190 {strides = array<i32>} : memref<16x8x128xf32, #tpu.memory_space<vmem>>, vector<1x8x128xf32>,
    %c7 = arith.constant 7 : index
    %c0_114 = arith.constant 0 : index
    %c0_115 = arith.constant 0 : index
    %191 = vector.load %arg1[%c7, %c0_114, %c0_115] : memref<16x8x128xf32, #tpu.memory_space<vmem>>, vector<1x8x128xf32>
    %192 = vector.shape_cast %191 : vector<1x8x128xf32> to vector<8x128xf32>
    %cst_116 = arith.constant 0.353553385 : f32
    %193 = vector.broadcast %cst_116 : f32 to vector<8x128xf32>
    %194 = arith.mulf %192, %193 : vector<8x128xf32>
    %195 = arith.truncf %194 : vector<8x128xf32> to vector<8x128xbf16>
    %c7_117 = arith.constant 7 : index
    %c0_118 = arith.constant 0 : index
    %c0_119 = arith.constant 0 : index
    %196 = vector.load %arg2[%c7_117, %c0_118, %c0_119] : memref<16x8x128xf32, #tpu.memory_space<vmem>>, vector<1x8x128xf32>
    %197 = vector.shape_cast %196 : vector<1x8x128xf32> to vector<8x128xf32>
    %198 = arith.truncf %197 : vector<8x128xf32> to vector<8x128xbf16>
    %c7_120 = arith.constant 7 : index
    %c0_121 = arith.constant 0 : index
    %c0_122 = arith.constant 0 : index
    %199 = vector.load %arg3[%c7_120, %c0_121, %c0_122] : memref<16x8x128xf32, #tpu.memory_space<vmem>>, vector<1x8x128xf32>
    %200 = vector.shape_cast %199 : vector<1x8x128xf32> to vector<8x128xf32>
    %201 = arith.truncf %200 : vector<8x128xf32> to vector<8x128xbf16>
    %cst_123 = arith.constant dense<0.000000e+00> : vector<128x128xf32>
    %202 = tpu.matmul %195, %198, %cst_123 {dimension_numbers = #tpu.dot_dimension_numbers<[0], [0], [1], [1], [0, 1, 1, 1], [], []>} : vector<8x128xbf16>, vector<8x128xbf16>, vector<128x128xf32> -> vector<128x128xf32>
    %203 = arith.addf %202, %0 : vector<128x128xf32>
    %cst_124 = arith.constant dense<0xFF800000> : vector<128xf32>
    %204 = vector.multi_reduction <maximumf>, %203, %cst_124 [1] : vector<128x128xf32> to vector<128xf32>
    %205 = vector.shape_cast %204 : vector<128xf32> to vector<128x1xf32>
    %206 = vector.broadcast %205 : vector<128x1xf32> to vector<128x128xf32>
    %207 = arith.subf %203, %206 : vector<128x128xf32>
    %208 = math.exp %207 : vector<128x128xf32>
    %209 = arith.truncf %208 : vector<128x128xf32> to vector<128x128xbf16>
    %cst_125 = arith.constant dense<0.000000e+00> : vector<8x128xf32>
    %210 = tpu.matmul %201, %209, %cst_125 {dimension_numbers = #tpu.dot_dimension_numbers<[1], [1], [0], [0], [0, 0, 1, 0], [], []>} : vector<8x128xbf16>, vector<128x128xbf16>, vector<8x128xf32> -> vector<8x128xf32>
    %cst_126 = arith.constant dense<0.000000e+00> : vector<1x128xf32>
    %211 = tpu.matmul %1, %209, %cst_126 {dimension_numbers = #tpu.dot_dimension_numbers<[1], [1], [0], [0], [0, 0, 1, 0], [], []>} : vector<1x128xbf16>, vector<128x128xbf16>, vector<1x128xf32> -> vector<1x128xf32>
    %212 = tpu.reciprocal %211 {approx = true} : vector<1x128xf32> -> vector<1x128xf32>
    %213 = vector.broadcast %212 : vector<1x128xf32> to vector<8x128xf32>
    %214 = arith.mulf %210, %213 : vector<8x128xf32>
    %c7_127 = arith.constant 7 : index
    %c0_128 = arith.constant 0 : index
    %c0_129 = arith.constant 0 : index
    %215 = vector.load %arg5[%c7_127, %c0_128, %c0_129] : memref<16x8x128xf32, #tpu.memory_space<vmem>>, vector<1x8x128xf32>
    %216 = vector.shape_cast %215 : vector<1x8x128xf32> to vector<8x128xf32>
    %217 = vector.shape_cast %214 : vector<8x128xf32> to vector<1x8x128xf32>
    tpu.vector_store %arg5[%c7_127, %c0_128, %c0_129], %217 {strides = array<i32>} : memref<16x8x128xf32, #tpu.memory_space<vmem>>, vector<1x8x128xf32>,
    %c8 = arith.constant 8 : index
    %c0_130 = arith.constant 0 : index
    %c0_131 = arith.constant 0 : index
    %218 = vector.load %arg1[%c8, %c0_130, %c0_131] : memref<16x8x128xf32, #tpu.memory_space<vmem>>, vector<1x8x128xf32>
    %219 = vector.shape_cast %218 : vector<1x8x128xf32> to vector<8x128xf32>
    %cst_132 = arith.constant 0.353553385 : f32
    %220 = vector.broadcast %cst_132 : f32 to vector<8x128xf32>
    %221 = arith.mulf %219, %220 : vector<8x128xf32>
    %222 = arith.truncf %221 : vector<8x128xf32> to vector<8x128xbf16>
    %c8_133 = arith.constant 8 : index
    %c0_134 = arith.constant 0 : index
    %c0_135 = arith.constant 0 : index
    %223 = vector.load %arg2[%c8_133, %c0_134, %c0_135] : memref<16x8x128xf32, #tpu.memory_space<vmem>>, vector<1x8x128xf32>
    %224 = vector.shape_cast %223 : vector<1x8x128xf32> to vector<8x128xf32>
    %225 = arith.truncf %224 : vector<8x128xf32> to vector<8x128xbf16>
    %c8_136 = arith.constant 8 : index
    %c0_137 = arith.constant 0 : index
    %c0_138 = arith.constant 0 : index
    %226 = vector.load %arg3[%c8_136, %c0_137, %c0_138] : memref<16x8x128xf32, #tpu.memory_space<vmem>>, vector<1x8x128xf32>
    %227 = vector.shape_cast %226 : vector<1x8x128xf32> to vector<8x128xf32>
    %228 = arith.truncf %227 : vector<8x128xf32> to vector<8x128xbf16>
    %cst_139 = arith.constant dense<0.000000e+00> : vector<128x128xf32>
    %229 = tpu.matmul %222, %225, %cst_139 {dimension_numbers = #tpu.dot_dimension_numbers<[0], [0], [1], [1], [0, 1, 1, 1], [], []>} : vector<8x128xbf16>, vector<8x128xbf16>, vector<128x128xf32> -> vector<128x128xf32>
    %230 = arith.addf %229, %0 : vector<128x128xf32>
    %cst_140 = arith.constant dense<0xFF800000> : vector<128xf32>
    %231 = vector.multi_reduction <maximumf>, %230, %cst_140 [1] : vector<128x128xf32> to vector<128xf32>
    %232 = vector.shape_cast %231 : vector<128xf32> to vector<128x1xf32>
    %233 = vector.broadcast %232 : vector<128x1xf32> to vector<128x128xf32>
    %234 = arith.subf %230, %233 : vector<128x128xf32>
    %235 = math.exp %234 : vector<128x128xf32>
    %236 = arith.truncf %235 : vector<128x128xf32> to vector<128x128xbf16>
    %cst_141 = arith.constant dense<0.000000e+00> : vector<8x128xf32>
    %237 = tpu.matmul %228, %236, %cst_141 {dimension_numbers = #tpu.dot_dimension_numbers<[1], [1], [0], [0], [0, 0, 1, 0], [], []>} : vector<8x128xbf16>, vector<128x128xbf16>, vector<8x128xf32> -> vector<8x128xf32>
    %cst_142 = arith.constant dense<0.000000e+00> : vector<1x128xf32>
    %238 = tpu.matmul %1, %236, %cst_142 {dimension_numbers = #tpu.dot_dimension_numbers<[1], [1], [0], [0], [0, 0, 1, 0], [], []>} : vector<1x128xbf16>, vector<128x128xbf16>, vector<1x128xf32> -> vector<1x128xf32>
    %239 = tpu.reciprocal %238 {approx = true} : vector<1x128xf32> -> vector<1x128xf32>
    %240 = vector.broadcast %239 : vector<1x128xf32> to vector<8x128xf32>
    %241 = arith.mulf %237, %240 : vector<8x128xf32>
    %c8_143 = arith.constant 8 : index
    %c0_144 = arith.constant 0 : index
    %c0_145 = arith.constant 0 : index
    %242 = vector.load %arg5[%c8_143, %c0_144, %c0_145] : memref<16x8x128xf32, #tpu.memory_space<vmem>>, vector<1x8x128xf32>
    %243 = vector.shape_cast %242 : vector<1x8x128xf32> to vector<8x128xf32>
    %244 = vector.shape_cast %241 : vector<8x128xf32> to vector<1x8x128xf32>
    tpu.vector_store %arg5[%c8_143, %c0_144, %c0_145], %244 {strides = array<i32>} : memref<16x8x128xf32, #tpu.memory_space<vmem>>, vector<1x8x128xf32>,
    %c9 = arith.constant 9 : index
    %c0_146 = arith.constant 0 : index
    %c0_147 = arith.constant 0 : index
    %245 = vector.load %arg1[%c9, %c0_146, %c0_147] : memref<16x8x128xf32, #tpu.memory_space<vmem>>, vector<1x8x128xf32>
    %246 = vector.shape_cast %245 : vector<1x8x128xf32> to vector<8x128xf32>
    %cst_148 = arith.constant 0.353553385 : f32
    %247 = vector.broadcast %cst_148 : f32 to vector<8x128xf32>
    %248 = arith.mulf %246, %247 : vector<8x128xf32>
    %249 = arith.truncf %248 : vector<8x128xf32> to vector<8x128xbf16>
    %c9_149 = arith.constant 9 : index
    %c0_150 = arith.constant 0 : index
    %c0_151 = arith.constant 0 : index
    %250 = vector.load %arg2[%c9_149, %c0_150, %c0_151] : memref<16x8x128xf32, #tpu.memory_space<vmem>>, vector<1x8x128xf32>
    %251 = vector.shape_cast %250 : vector<1x8x128xf32> to vector<8x128xf32>
    %252 = arith.truncf %251 : vector<8x128xf32> to vector<8x128xbf16>
    %c9_152 = arith.constant 9 : index
    %c0_153 = arith.constant 0 : index
    %c0_154 = arith.constant 0 : index
    %253 = vector.load %arg3[%c9_152, %c0_153, %c0_154] : memref<16x8x128xf32, #tpu.memory_space<vmem>>, vector<1x8x128xf32>
    %254 = vector.shape_cast %253 : vector<1x8x128xf32> to vector<8x128xf32>
    %255 = arith.truncf %254 : vector<8x128xf32> to vector<8x128xbf16>
    %cst_155 = arith.constant dense<0.000000e+00> : vector<128x128xf32>
    %256 = tpu.matmul %249, %252, %cst_155 {dimension_numbers = #tpu.dot_dimension_numbers<[0], [0], [1], [1], [0, 1, 1, 1], [], []>} : vector<8x128xbf16>, vector<8x128xbf16>, vector<128x128xf32> -> vector<128x128xf32>
    %257 = arith.addf %256, %0 : vector<128x128xf32>
    %cst_156 = arith.constant dense<0xFF800000> : vector<128xf32>
    %258 = vector.multi_reduction <maximumf>, %257, %cst_156 [1] : vector<128x128xf32> to vector<128xf32>
    %259 = vector.shape_cast %258 : vector<128xf32> to vector<128x1xf32>
    %260 = vector.broadcast %259 : vector<128x1xf32> to vector<128x128xf32>
    %261 = arith.subf %257, %260 : vector<128x128xf32>
    %262 = math.exp %261 : vector<128x128xf32>
    %263 = arith.truncf %262 : vector<128x128xf32> to vector<128x128xbf16>
    %cst_157 = arith.constant dense<0.000000e+00> : vector<8x128xf32>
    %264 = tpu.matmul %255, %263, %cst_157 {dimension_numbers = #tpu.dot_dimension_numbers<[1], [1], [0], [0], [0, 0, 1, 0], [], []>} : vector<8x128xbf16>, vector<128x128xbf16>, vector<8x128xf32> -> vector<8x128xf32>
    %cst_158 = arith.constant dense<0.000000e+00> : vector<1x128xf32>
    %265 = tpu.matmul %1, %263, %cst_158 {dimension_numbers = #tpu.dot_dimension_numbers<[1], [1], [0], [0], [0, 0, 1, 0], [], []>} : vector<1x128xbf16>, vector<128x128xbf16>, vector<1x128xf32> -> vector<1x128xf32>
    %266 = tpu.reciprocal %265 {approx = true} : vector<1x128xf32> -> vector<1x128xf32>
    %267 = vector.broadcast %266 : vector<1x128xf32> to vector<8x128xf32>
    %268 = arith.mulf %264, %267 : vector<8x128xf32>
    %c9_159 = arith.constant 9 : index
    %c0_160 = arith.constant 0 : index
    %c0_161 = arith.constant 0 : index
    %269 = vector.load %arg5[%c9_159, %c0_160, %c0_161] : memref<16x8x128xf32, #tpu.memory_space<vmem>>, vector<1x8x128xf32>
    %270 = vector.shape_cast %269 : vector<1x8x128xf32> to vector<8x128xf32>
    %271 = vector.shape_cast %268 : vector<8x128xf32> to vector<1x8x128xf32>
    tpu.vector_store %arg5[%c9_159, %c0_160, %c0_161], %271 {strides = array<i32>} : memref<16x8x128xf32, #tpu.memory_space<vmem>>, vector<1x8x128xf32>,
    %c10 = arith.constant 10 : index
    %c0_162 = arith.constant 0 : index
    %c0_163 = arith.constant 0 : index
    %272 = vector.load %arg1[%c10, %c0_162, %c0_163] : memref<16x8x128xf32, #tpu.memory_space<vmem>>, vector<1x8x128xf32>
    %273 = vector.shape_cast %272 : vector<1x8x128xf32> to vector<8x128xf32>
    %cst_164 = arith.constant 0.353553385 : f32
    %274 = vector.broadcast %cst_164 : f32 to vector<8x128xf32>
    %275 = arith.mulf %273, %274 : vector<8x128xf32>
    %276 = arith.truncf %275 : vector<8x128xf32> to vector<8x128xbf16>
    %c10_165 = arith.constant 10 : index
    %c0_166 = arith.constant 0 : index
    %c0_167 = arith.constant 0 : index
    %277 = vector.load %arg2[%c10_165, %c0_166, %c0_167] : memref<16x8x128xf32, #tpu.memory_space<vmem>>, vector<1x8x128xf32>
    %278 = vector.shape_cast %277 : vector<1x8x128xf32> to vector<8x128xf32>
    %279 = arith.truncf %278 : vector<8x128xf32> to vector<8x128xbf16>
    %c10_168 = arith.constant 10 : index
    %c0_169 = arith.constant 0 : index
    %c0_170 = arith.constant 0 : index
    %280 = vector.load %arg3[%c10_168, %c0_169, %c0_170] : memref<16x8x128xf32, #tpu.memory_space<vmem>>, vector<1x8x128xf32>
    %281 = vector.shape_cast %280 : vector<1x8x128xf32> to vector<8x128xf32>
    %282 = arith.truncf %281 : vector<8x128xf32> to vector<8x128xbf16>
    %cst_171 = arith.constant dense<0.000000e+00> : vector<128x128xf32>
    %283 = tpu.matmul %276, %279, %cst_171 {dimension_numbers = #tpu.dot_dimension_numbers<[0], [0], [1], [1], [0, 1, 1, 1], [], []>} : vector<8x128xbf16>, vector<8x128xbf16>, vector<128x128xf32> -> vector<128x128xf32>
    %284 = arith.addf %283, %0 : vector<128x128xf32>
    %cst_172 = arith.constant dense<0xFF800000> : vector<128xf32>
    %285 = vector.multi_reduction <maximumf>, %284, %cst_172 [1] : vector<128x128xf32> to vector<128xf32>
    %286 = vector.shape_cast %285 : vector<128xf32> to vector<128x1xf32>
    %287 = vector.broadcast %286 : vector<128x1xf32> to vector<128x128xf32>
    %288 = arith.subf %284, %287 : vector<128x128xf32>
    %289 = math.exp %288 : vector<128x128xf32>
    %290 = arith.truncf %289 : vector<128x128xf32> to vector<128x128xbf16>
    %cst_173 = arith.constant dense<0.000000e+00> : vector<8x128xf32>
    %291 = tpu.matmul %282, %290, %cst_173 {dimension_numbers = #tpu.dot_dimension_numbers<[1], [1], [0], [0], [0, 0, 1, 0], [], []>} : vector<8x128xbf16>, vector<128x128xbf16>, vector<8x128xf32> -> vector<8x128xf32>
    %cst_174 = arith.constant dense<0.000000e+00> : vector<1x128xf32>
    %292 = tpu.matmul %1, %290, %cst_174 {dimension_numbers = #tpu.dot_dimension_numbers<[1], [1], [0], [0], [0, 0, 1, 0], [], []>} : vector<1x128xbf16>, vector<128x128xbf16>, vector<1x128xf32> -> vector<1x128xf32>
    %293 = tpu.reciprocal %292 {approx = true} : vector<1x128xf32> -> vector<1x128xf32>
    %294 = vector.broadcast %293 : vector<1x128xf32> to vector<8x128xf32>
    %295 = arith.mulf %291, %294 : vector<8x128xf32>
    %c10_175 = arith.constant 10 : index
    %c0_176 = arith.constant 0 : index
    %c0_177 = arith.constant 0 : index
    %296 = vector.load %arg5[%c10_175, %c0_176, %c0_177] : memref<16x8x128xf32, #tpu.memory_space<vmem>>, vector<1x8x128xf32>
    %297 = vector.shape_cast %296 : vector<1x8x128xf32> to vector<8x128xf32>
    %298 = vector.shape_cast %295 : vector<8x128xf32> to vector<1x8x128xf32>
    tpu.vector_store %arg5[%c10_175, %c0_176, %c0_177], %298 {strides = array<i32>} : memref<16x8x128xf32, #tpu.memory_space<vmem>>, vector<1x8x128xf32>,
    %c11 = arith.constant 11 : index
    %c0_178 = arith.constant 0 : index
    %c0_179 = arith.constant 0 : index
    %299 = vector.load %arg1[%c11, %c0_178, %c0_179] : memref<16x8x128xf32, #tpu.memory_space<vmem>>, vector<1x8x128xf32>
    %300 = vector.shape_cast %299 : vector<1x8x128xf32> to vector<8x128xf32>
    %cst_180 = arith.constant 0.353553385 : f32
    %301 = vector.broadcast %cst_180 : f32 to vector<8x128xf32>
    %302 = arith.mulf %300, %301 : vector<8x128xf32>
    %303 = arith.truncf %302 : vector<8x128xf32> to vector<8x128xbf16>
    %c11_181 = arith.constant 11 : index
    %c0_182 = arith.constant 0 : index
    %c0_183 = arith.constant 0 : index
    %304 = vector.load %arg2[%c11_181, %c0_182, %c0_183] : memref<16x8x128xf32, #tpu.memory_space<vmem>>, vector<1x8x128xf32>
    %305 = vector.shape_cast %304 : vector<1x8x128xf32> to vector<8x128xf32>
    %306 = arith.truncf %305 : vector<8x128xf32> to vector<8x128xbf16>
    %c11_184 = arith.constant 11 : index
    %c0_185 = arith.constant 0 : index
    %c0_186 = arith.constant 0 : index
    %307 = vector.load %arg3[%c11_184, %c0_185, %c0_186] : memref<16x8x128xf32, #tpu.memory_space<vmem>>, vector<1x8x128xf32>
    %308 = vector.shape_cast %307 : vector<1x8x128xf32> to vector<8x128xf32>
    %309 = arith.truncf %308 : vector<8x128xf32> to vector<8x128xbf16>
    %cst_187 = arith.constant dense<0.000000e+00> : vector<128x128xf32>
    %310 = tpu.matmul %303, %306, %cst_187 {dimension_numbers = #tpu.dot_dimension_numbers<[0], [0], [1], [1], [0, 1, 1, 1], [], []>} : vector<8x128xbf16>, vector<8x128xbf16>, vector<128x128xf32> -> vector<128x128xf32>
    %311 = arith.addf %310, %0 : vector<128x128xf32>
    %cst_188 = arith.constant dense<0xFF800000> : vector<128xf32>
    %312 = vector.multi_reduction <maximumf>, %311, %cst_188 [1] : vector<128x128xf32> to vector<128xf32>
    %313 = vector.shape_cast %312 : vector<128xf32> to vector<128x1xf32>
    %314 = vector.broadcast %313 : vector<128x1xf32> to vector<128x128xf32>
    %315 = arith.subf %311, %314 : vector<128x128xf32>
    %316 = math.exp %315 : vector<128x128xf32>
    %317 = arith.truncf %316 : vector<128x128xf32> to vector<128x128xbf16>
    %cst_189 = arith.constant dense<0.000000e+00> : vector<8x128xf32>
    %318 = tpu.matmul %309, %317, %cst_189 {dimension_numbers = #tpu.dot_dimension_numbers<[1], [1], [0], [0], [0, 0, 1, 0], [], []>} : vector<8x128xbf16>, vector<128x128xbf16>, vector<8x128xf32> -> vector<8x128xf32>
    %cst_190 = arith.constant dense<0.000000e+00> : vector<1x128xf32>
    %319 = tpu.matmul %1, %317, %cst_190 {dimension_numbers = #tpu.dot_dimension_numbers<[1], [1], [0], [0], [0, 0, 1, 0], [], []>} : vector<1x128xbf16>, vector<128x128xbf16>, vector<1x128xf32> -> vector<1x128xf32>
    %320 = tpu.reciprocal %319 {approx = true} : vector<1x128xf32> -> vector<1x128xf32>
    %321 = vector.broadcast %320 : vector<1x128xf32> to vector<8x128xf32>
    %322 = arith.mulf %318, %321 : vector<8x128xf32>
    %c11_191 = arith.constant 11 : index
    %c0_192 = arith.constant 0 : index
    %c0_193 = arith.constant 0 : index
    %323 = vector.load %arg5[%c11_191, %c0_192, %c0_193] : memref<16x8x128xf32, #tpu.memory_space<vmem>>, vector<1x8x128xf32>
    %324 = vector.shape_cast %323 : vector<1x8x128xf32> to vector<8x128xf32>
    %325 = vector.shape_cast %322 : vector<8x128xf32> to vector<1x8x128xf32>
    tpu.vector_store %arg5[%c11_191, %c0_192, %c0_193], %325 {strides = array<i32>} : memref<16x8x128xf32, #tpu.memory_space<vmem>>, vector<1x8x128xf32>,
    %c12 = arith.constant 12 : index
    %c0_194 = arith.constant 0 : index
    %c0_195 = arith.constant 0 : index
    %326 = vector.load %arg1[%c12, %c0_194, %c0_195] : memref<16x8x128xf32, #tpu.memory_space<vmem>>, vector<1x8x128xf32>
    %327 = vector.shape_cast %326 : vector<1x8x128xf32> to vector<8x128xf32>
    %cst_196 = arith.constant 0.353553385 : f32
    %328 = vector.broadcast %cst_196 : f32 to vector<8x128xf32>
    %329 = arith.mulf %327, %328 : vector<8x128xf32>
    %330 = arith.truncf %329 : vector<8x128xf32> to vector<8x128xbf16>
    %c12_197 = arith.constant 12 : index
    %c0_198 = arith.constant 0 : index
    %c0_199 = arith.constant 0 : index
    %331 = vector.load %arg2[%c12_197, %c0_198, %c0_199] : memref<16x8x128xf32, #tpu.memory_space<vmem>>, vector<1x8x128xf32>
    %332 = vector.shape_cast %331 : vector<1x8x128xf32> to vector<8x128xf32>
    %333 = arith.truncf %332 : vector<8x128xf32> to vector<8x128xbf16>
    %c12_200 = arith.constant 12 : index
    %c0_201 = arith.constant 0 : index
    %c0_202 = arith.constant 0 : index
    %334 = vector.load %arg3[%c12_200, %c0_201, %c0_202] : memref<16x8x128xf32, #tpu.memory_space<vmem>>, vector<1x8x128xf32>
    %335 = vector.shape_cast %334 : vector<1x8x128xf32> to vector<8x128xf32>
    %336 = arith.truncf %335 : vector<8x128xf32> to vector<8x128xbf16>
    %cst_203 = arith.constant dense<0.000000e+00> : vector<128x128xf32>
    %337 = tpu.matmul %330, %333, %cst_203 {dimension_numbers = #tpu.dot_dimension_numbers<[0], [0], [1], [1], [0, 1, 1, 1], [], []>} : vector<8x128xbf16>, vector<8x128xbf16>, vector<128x128xf32> -> vector<128x128xf32>
    %338 = arith.addf %337, %0 : vector<128x128xf32>
    %cst_204 = arith.constant dense<0xFF800000> : vector<128xf32>
    %339 = vector.multi_reduction <maximumf>, %338, %cst_204 [1] : vector<128x128xf32> to vector<128xf32>
    %340 = vector.shape_cast %339 : vector<128xf32> to vector<128x1xf32>
    %341 = vector.broadcast %340 : vector<128x1xf32> to vector<128x128xf32>
    %342 = arith.subf %338, %341 : vector<128x128xf32>
    %343 = math.exp %342 : vector<128x128xf32>
    %344 = arith.truncf %343 : vector<128x128xf32> to vector<128x128xbf16>
    %cst_205 = arith.constant dense<0.000000e+00> : vector<8x128xf32>
    %345 = tpu.matmul %336, %344, %cst_205 {dimension_numbers = #tpu.dot_dimension_numbers<[1], [1], [0], [0], [0, 0, 1, 0], [], []>} : vector<8x128xbf16>, vector<128x128xbf16>, vector<8x128xf32> -> vector<8x128xf32>
    %cst_206 = arith.constant dense<0.000000e+00> : vector<1x128xf32>
    %346 = tpu.matmul %1, %344, %cst_206 {dimension_numbers = #tpu.dot_dimension_numbers<[1], [1], [0], [0], [0, 0, 1, 0], [], []>} : vector<1x128xbf16>, vector<128x128xbf16>, vector<1x128xf32> -> vector<1x128xf32>
    %347 = tpu.reciprocal %346 {approx = true} : vector<1x128xf32> -> vector<1x128xf32>
    %348 = vector.broadcast %347 : vector<1x128xf32> to vector<8x128xf32>
    %349 = arith.mulf %345, %348 : vector<8x128xf32>
    %c12_207 = arith.constant 12 : index
    %c0_208 = arith.constant 0 : index
    %c0_209 = arith.constant 0 : index
    %350 = vector.load %arg5[%c12_207, %c0_208, %c0_209] : memref<16x8x128xf32, #tpu.memory_space<vmem>>, vector<1x8x128xf32>
    %351 = vector.shape_cast %350 : vector<1x8x128xf32> to vector<8x128xf32>
    %352 = vector.shape_cast %349 : vector<8x128xf32> to vector<1x8x128xf32>
    tpu.vector_store %arg5[%c12_207, %c0_208, %c0_209], %352 {strides = array<i32>} : memref<16x8x128xf32, #tpu.memory_space<vmem>>, vector<1x8x128xf32>,
    %c13 = arith.constant 13 : index
    %c0_210 = arith.constant 0 : index
    %c0_211 = arith.constant 0 : index
    %353 = vector.load %arg1[%c13, %c0_210, %c0_211] : memref<16x8x128xf32, #tpu.memory_space<vmem>>, vector<1x8x128xf32>
    %354 = vector.shape_cast %353 : vector<1x8x128xf32> to vector<8x128xf32>
    %cst_212 = arith.constant 0.353553385 : f32
    %355 = vector.broadcast %cst_212 : f32 to vector<8x128xf32>
    %356 = arith.mulf %354, %355 : vector<8x128xf32>
    %357 = arith.truncf %356 : vector<8x128xf32> to vector<8x128xbf16>
    %c13_213 = arith.constant 13 : index
    %c0_214 = arith.constant 0 : index
    %c0_215 = arith.constant 0 : index
    %358 = vector.load %arg2[%c13_213, %c0_214, %c0_215] : memref<16x8x128xf32, #tpu.memory_space<vmem>>, vector<1x8x128xf32>
    %359 = vector.shape_cast %358 : vector<1x8x128xf32> to vector<8x128xf32>
    %360 = arith.truncf %359 : vector<8x128xf32> to vector<8x128xbf16>
    %c13_216 = arith.constant 13 : index
    %c0_217 = arith.constant 0 : index
    %c0_218 = arith.constant 0 : index
    %361 = vector.load %arg3[%c13_216, %c0_217, %c0_218] : memref<16x8x128xf32, #tpu.memory_space<vmem>>, vector<1x8x128xf32>
    %362 = vector.shape_cast %361 : vector<1x8x128xf32> to vector<8x128xf32>
    %363 = arith.truncf %362 : vector<8x128xf32> to vector<8x128xbf16>
    %cst_219 = arith.constant dense<0.000000e+00> : vector<128x128xf32>
    %364 = tpu.matmul %357, %360, %cst_219 {dimension_numbers = #tpu.dot_dimension_numbers<[0], [0], [1], [1], [0, 1, 1, 1], [], []>} : vector<8x128xbf16>, vector<8x128xbf16>, vector<128x128xf32> -> vector<128x128xf32>
    %365 = arith.addf %364, %0 : vector<128x128xf32>
    %cst_220 = arith.constant dense<0xFF800000> : vector<128xf32>
    %366 = vector.multi_reduction <maximumf>, %365, %cst_220 [1] : vector<128x128xf32> to vector<128xf32>
    %367 = vector.shape_cast %366 : vector<128xf32> to vector<128x1xf32>
    %368 = vector.broadcast %367 : vector<128x1xf32> to vector<128x128xf32>
    %369 = arith.subf %365, %368 : vector<128x128xf32>
    %370 = math.exp %369 : vector<128x128xf32>
    %371 = arith.truncf %370 : vector<128x128xf32> to vector<128x128xbf16>
    %cst_221 = arith.constant dense<0.000000e+00> : vector<8x128xf32>
    %372 = tpu.matmul %363, %371, %cst_221 {dimension_numbers = #tpu.dot_dimension_numbers<[1], [1], [0], [0], [0, 0, 1, 0], [], []>} : vector<8x128xbf16>, vector<128x128xbf16>, vector<8x128xf32> -> vector<8x128xf32>
    %cst_222 = arith.constant dense<0.000000e+00> : vector<1x128xf32>
    %373 = tpu.matmul %1, %371, %cst_222 {dimension_numbers = #tpu.dot_dimension_numbers<[1], [1], [0], [0], [0, 0, 1, 0], [], []>} : vector<1x128xbf16>, vector<128x128xbf16>, vector<1x128xf32> -> vector<1x128xf32>
    %374 = tpu.reciprocal %373 {approx = true} : vector<1x128xf32> -> vector<1x128xf32>
    %375 = vector.broadcast %374 : vector<1x128xf32> to vector<8x128xf32>
    %376 = arith.mulf %372, %375 : vector<8x128xf32>
    %c13_223 = arith.constant 13 : index
    %c0_224 = arith.constant 0 : index
    %c0_225 = arith.constant 0 : index
    %377 = vector.load %arg5[%c13_223, %c0_224, %c0_225] : memref<16x8x128xf32, #tpu.memory_space<vmem>>, vector<1x8x128xf32>
    %378 = vector.shape_cast %377 : vector<1x8x128xf32> to vector<8x128xf32>
    %379 = vector.shape_cast %376 : vector<8x128xf32> to vector<1x8x128xf32>
    tpu.vector_store %arg5[%c13_223, %c0_224, %c0_225], %379 {strides = array<i32>} : memref<16x8x128xf32, #tpu.memory_space<vmem>>, vector<1x8x128xf32>,
    %c14 = arith.constant 14 : index
    %c0_226 = arith.constant 0 : index
    %c0_227 = arith.constant 0 : index
    %380 = vector.load %arg1[%c14, %c0_226, %c0_227] : memref<16x8x128xf32, #tpu.memory_space<vmem>>, vector<1x8x128xf32>
    %381 = vector.shape_cast %380 : vector<1x8x128xf32> to vector<8x128xf32>
    %cst_228 = arith.constant 0.353553385 : f32
    %382 = vector.broadcast %cst_228 : f32 to vector<8x128xf32>
    %383 = arith.mulf %381, %382 : vector<8x128xf32>
    %384 = arith.truncf %383 : vector<8x128xf32> to vector<8x128xbf16>
    %c14_229 = arith.constant 14 : index
    %c0_230 = arith.constant 0 : index
    %c0_231 = arith.constant 0 : index
    %385 = vector.load %arg2[%c14_229, %c0_230, %c0_231] : memref<16x8x128xf32, #tpu.memory_space<vmem>>, vector<1x8x128xf32>
    %386 = vector.shape_cast %385 : vector<1x8x128xf32> to vector<8x128xf32>
    %387 = arith.truncf %386 : vector<8x128xf32> to vector<8x128xbf16>
    %c14_232 = arith.constant 14 : index
    %c0_233 = arith.constant 0 : index
    %c0_234 = arith.constant 0 : index
    %388 = vector.load %arg3[%c14_232, %c0_233, %c0_234] : memref<16x8x128xf32, #tpu.memory_space<vmem>>, vector<1x8x128xf32>
    %389 = vector.shape_cast %388 : vector<1x8x128xf32> to vector<8x128xf32>
    %390 = arith.truncf %389 : vector<8x128xf32> to vector<8x128xbf16>
    %cst_235 = arith.constant dense<0.000000e+00> : vector<128x128xf32>
    %391 = tpu.matmul %384, %387, %cst_235 {dimension_numbers = #tpu.dot_dimension_numbers<[0], [0], [1], [1], [0, 1, 1, 1], [], []>} : vector<8x128xbf16>, vector<8x128xbf16>, vector<128x128xf32> -> vector<128x128xf32>
    %392 = arith.addf %391, %0 : vector<128x128xf32>
    %cst_236 = arith.constant dense<0xFF800000> : vector<128xf32>
    %393 = vector.multi_reduction <maximumf>, %392, %cst_236 [1] : vector<128x128xf32> to vector<128xf32>
    %394 = vector.shape_cast %393 : vector<128xf32> to vector<128x1xf32>
    %395 = vector.broadcast %394 : vector<128x1xf32> to vector<128x128xf32>
    %396 = arith.subf %392, %395 : vector<128x128xf32>
    %397 = math.exp %396 : vector<128x128xf32>
    %398 = arith.truncf %397 : vector<128x128xf32> to vector<128x128xbf16>
    %cst_237 = arith.constant dense<0.000000e+00> : vector<8x128xf32>
    %399 = tpu.matmul %390, %398, %cst_237 {dimension_numbers = #tpu.dot_dimension_numbers<[1], [1], [0], [0], [0, 0, 1, 0], [], []>} : vector<8x128xbf16>, vector<128x128xbf16>, vector<8x128xf32> -> vector<8x128xf32>
    %cst_238 = arith.constant dense<0.000000e+00> : vector<1x128xf32>
    %400 = tpu.matmul %1, %398, %cst_238 {dimension_numbers = #tpu.dot_dimension_numbers<[1], [1], [0], [0], [0, 0, 1, 0], [], []>} : vector<1x128xbf16>, vector<128x128xbf16>, vector<1x128xf32> -> vector<1x128xf32>
    %401 = tpu.reciprocal %400 {approx = true} : vector<1x128xf32> -> vector<1x128xf32>
    %402 = vector.broadcast %401 : vector<1x128xf32> to vector<8x128xf32>
    %403 = arith.mulf %399, %402 : vector<8x128xf32>
    %c14_239 = arith.constant 14 : index
    %c0_240 = arith.constant 0 : index
    %c0_241 = arith.constant 0 : index
    %404 = vector.load %arg5[%c14_239, %c0_240, %c0_241] : memref<16x8x128xf32, #tpu.memory_space<vmem>>, vector<1x8x128xf32>
    %405 = vector.shape_cast %404 : vector<1x8x128xf32> to vector<8x128xf32>
    %406 = vector.shape_cast %403 : vector<8x128xf32> to vector<1x8x128xf32>
    tpu.vector_store %arg5[%c14_239, %c0_240, %c0_241], %406 {strides = array<i32>} : memref<16x8x128xf32, #tpu.memory_space<vmem>>, vector<1x8x128xf32>,
    %c15 = arith.constant 15 : index
    %c0_242 = arith.constant 0 : index
    %c0_243 = arith.constant 0 : index
    %407 = vector.load %arg1[%c15, %c0_242, %c0_243] : memref<16x8x128xf32, #tpu.memory_space<vmem>>, vector<1x8x128xf32>
    %408 = vector.shape_cast %407 : vector<1x8x128xf32> to vector<8x128xf32>
    %cst_244 = arith.constant 0.353553385 : f32
    %409 = vector.broadcast %cst_244 : f32 to vector<8x128xf32>
    %410 = arith.mulf %408, %409 : vector<8x128xf32>
    %411 = arith.truncf %410 : vector<8x128xf32> to vector<8x128xbf16>
    %c15_245 = arith.constant 15 : index
    %c0_246 = arith.constant 0 : index
    %c0_247 = arith.constant 0 : index
    %412 = vector.load %arg2[%c15_245, %c0_246, %c0_247] : memref<16x8x128xf32, #tpu.memory_space<vmem>>, vector<1x8x128xf32>
    %413 = vector.shape_cast %412 : vector<1x8x128xf32> to vector<8x128xf32>
    %414 = arith.truncf %413 : vector<8x128xf32> to vector<8x128xbf16>
    %c15_248 = arith.constant 15 : index
    %c0_249 = arith.constant 0 : index
    %c0_250 = arith.constant 0 : index
    %415 = vector.load %arg3[%c15_248, %c0_249, %c0_250] : memref<16x8x128xf32, #tpu.memory_space<vmem>>, vector<1x8x128xf32>
    %416 = vector.shape_cast %415 : vector<1x8x128xf32> to vector<8x128xf32>
    %417 = arith.truncf %416 : vector<8x128xf32> to vector<8x128xbf16>
    %cst_251 = arith.constant dense<0.000000e+00> : vector<128x128xf32>
    %418 = tpu.matmul %411, %414, %cst_251 {dimension_numbers = #tpu.dot_dimension_numbers<[0], [0], [1], [1], [0, 1, 1, 1], [], []>} : vector<8x128xbf16>, vector<8x128xbf16>, vector<128x128xf32> -> vector<128x128xf32>
    %419 = arith.addf %418, %0 : vector<128x128xf32>
    %cst_252 = arith.constant dense<0xFF800000> : vector<128xf32>
    %420 = vector.multi_reduction <maximumf>, %419, %cst_252 [1] : vector<128x128xf32> to vector<128xf32>
    %421 = vector.shape_cast %420 : vector<128xf32> to vector<128x1xf32>
    %422 = vector.broadcast %421 : vector<128x1xf32> to vector<128x128xf32>
    %423 = arith.subf %419, %422 : vector<128x128xf32>
    %424 = math.exp %423 : vector<128x128xf32>
    %425 = arith.truncf %424 : vector<128x128xf32> to vector<128x128xbf16>
    %cst_253 = arith.constant dense<0.000000e+00> : vector<8x128xf32>
    %426 = tpu.matmul %417, %425, %cst_253 {dimension_numbers = #tpu.dot_dimension_numbers<[1], [1], [0], [0], [0, 0, 1, 0], [], []>} : vector<8x128xbf16>, vector<128x128xbf16>, vector<8x128xf32> -> vector<8x128xf32>
    %cst_254 = arith.constant dense<0.000000e+00> : vector<1x128xf32>
    %427 = tpu.matmul %1, %425, %cst_254 {dimension_numbers = #tpu.dot_dimension_numbers<[1], [1], [0], [0], [0, 0, 1, 0], [], []>} : vector<1x128xbf16>, vector<128x128xbf16>, vector<1x128xf32> -> vector<1x128xf32>
    %428 = tpu.reciprocal %427 {approx = true} : vector<1x128xf32> -> vector<1x128xf32>
    %429 = vector.broadcast %428 : vector<1x128xf32> to vector<8x128xf32>
    %430 = arith.mulf %426, %429 : vector<8x128xf32>
    %c15_255 = arith.constant 15 : index
    %c0_256 = arith.constant 0 : index
    %c0_257 = arith.constant 0 : index
    %431 = vector.load %arg5[%c15_255, %c0_256, %c0_257] : memref<16x8x128xf32, #tpu.memory_space<vmem>>, vector<1x8x128xf32>
    %432 = vector.shape_cast %431 : vector<1x8x128xf32> to vector<8x128xf32>
    %433 = vector.shape_cast %430 : vector<8x128xf32> to vector<1x8x128xf32>
    tpu.vector_store %arg5[%c15_255, %c0_256, %c0_257], %433 {strides = array<i32>} : memref<16x8x128xf32, #tpu.memory_space<vmem>>, vector<1x8x128xf32>,
    return
  }
  func.func @transform_0(%arg0: i32) -> (i32, i32, i32) {
    %c0_i32 = arith.constant 0 : i32
    %c0_i32_0 = arith.constant 0 : i32
    %c0_i32_1 = arith.constant 0 : i32
    return %arg0, %c0_i32, %c0_i32_0 : i32, i32, i32
  }
  func.func @transform_1(%arg0: i32) -> (i32, i32, i32) {
    %c0_i32 = arith.constant 0 : i32
    %c0_i32_0 = arith.constant 0 : i32
    %c0_i32_1 = arith.constant 0 : i32
    return %arg0, %c0_i32, %c0_i32_0 : i32, i32, i32
  }
  func.func @transform_2(%arg0: i32) -> (i32, i32, i32) {
    %c0_i32 = arith.constant 0 : i32
    %c0_i32_0 = arith.constant 0 : i32
    %c0_i32_1 = arith.constant 0 : i32
    return %arg0, %c0_i32, %c0_i32_0 : i32, i32, i32
  }
  func.func @transform_3(%arg0: i32) -> (i32, i32) {
    %c0_i32 = arith.constant 0 : i32
    %c0_i32_0 = arith.constant 0 : i32
    %c0_i32_1 = arith.constant 0 : i32
    return %c0_i32, %c0_i32_0 : i32, i32
  }
  func.func @transform_4(%arg0: i32) -> (i32, i32, i32) {
    %c0_i32 = arith.constant 0 : i32
    %c0_i32_0 = arith.constant 0 : i32
    %c0_i32_1 = arith.constant 0 : i32
    return %arg0, %c0_i32, %c0_i32_0 : i32, i32, i32
  }
}

</mosaic_0001>

<llo_original>
// kernel: tpu_custom_call.1
$region0: #{tpu_custom_call.1}
  #allocation0 [shape = 'u32[]', space=smem, size = 0x4, offset = 0x4, fixed_abs, tag = 'smem constant byte address 0x4 - core index']
  #allocation1 [shape = 'u32[144,128]{1,0:T(1,128)}', space=vmem, size = 0x12000, scoped, tag = 'internal scratch']
  %s0 = inlined_call_operand.hbm [shape: f32[32,8,128], index: 0, kind: input, shape index: {}]
  %s1 = inlined_call_operand.hbm [shape: f32[32,8,128], index: 1, kind: input, shape index: {}]
  %s2 = inlined_call_operand.hbm [shape: f32[32,8,128], index: 2, kind: input, shape index: {}]
  %s3 = inlined_call_operand.hbm [shape: f32[128,128], index: 3, kind: input, shape index: {}]
  %s4 = inlined_call_operand.hbm [shape: f32[32,8,128], index: 4, kind: output, shape index: {}]
  %s5 = sld [smem:[#allocation0]]
  $region65: #{tpu_custom_call.1} parent=0
    _
  %s7 = ssub.s32 1, %s5
  %s8 = scalar_select 0, %s7, %s5
  $region1: #{tpu_custom_call.1} parent=0
    #allocation2 [shape = 'u8[131072]{0}', space=vmem, size = 0x20000, scoped, tag = 'input window, operand 0']
    #allocation3 [shape = 's32[2]{0}', space=sflag, size = 0x8, scoped, tag = 'scoped memory for tpu_custom_call.1']
    #allocation4 [shape = 's32[2]{0}', space=sflag, size = 0x8, scoped, tag = 'scoped memory for tpu_custom_call.1']
    #allocation5 [shape = 'u8[131072]{0}', space=vmem, size = 0x20000, scoped, tag = 'input window, operand 1']
    #allocation6 [shape = 's32[2]{0}', space=sflag, size = 0x8, scoped, tag = 'scoped memory for tpu_custom_call.1']
    #allocation7 [shape = 'u8[131072]{0}', space=vmem, size = 0x20000, scoped, tag = 'input window, operand 2']
    #allocation8 [shape = 'u8[65536]{0}', space=vmem, size = 0x10000, scoped, tag = 'input window, operand 3, single buffered']
    #allocation9 [shape = 's32[1]{0}', space=sflag, size = 0x4, scoped, tag = 'scoped memory for tpu_custom_call.1']
    #allocation10 [shape = 'u8[131072]{0}', space=vmem, size = 0x20000, scoped, tag = 'output window, operand 0']
    %9 = vsyncpa [#allocation3], 0
    %s10 = scalar_lea.sflag [#allocation3], 1
    %11 = vsyncpa %s10, 0
    %12 = vsyncpa [#allocation6], 0
    %s13 = scalar_lea.sflag [#allocation6], 1
    %14 = vsyncpa %s13, 0
    %15 = vsyncpa [#allocation9], 0
    %16 = vsyncpa [#allocation4], 0
    %s17 = scalar_lea.sflag [#allocation4], 1
    %18 = vsyncpa %s17, 0
    loop: start=0, step=1, limit=4
    $region2: #{tpu_custom_call.1} parent=1 // loop_pre_header
      _
    $region3: #{tpu_custom_call.1} parent=1 // loop_header
      %s20 = sphi 0, %s24
      %p21 = scmp.ge.s32.totalorder %s20, 4
      %s30 = sphi 0, %s32
      %s33 = sphi 0, %s30
      %s34 = sphi 0, %s33
      %s50 = sphi 0, %s34
      %s56 = sphi 0, %s58
      %s59 = sphi 0, %s56
      %s60 = sphi 0, %s59
      %s76 = sphi 0, %s60
      %s82 = sphi 0, %s84
      %s85 = sphi 0, %s82
      %s86 = sphi 0, %s85
      %s102 = sphi 0, %s86
      %s106 = sphi 0, %s106
      %s108 = sphi 0, %s106
      %s109 = sphi 0, %s108
      %s123 = sphi 0, %s109
      %s129 = sphi 0, %s131
      %s132 = sphi 0, %s129
      %s133 = sphi 0, %s132
      %s149 = sphi 0, %s133
    $region4: #{tpu_custom_call.1} parent=1 // loop_header_branch
      %23 = sbr.rel (%p21) target = $region8
    $region5: #{tpu_custom_call.1} parent=1 // loop_body
      %s25 = ssub.s32 %s20, 1
      %s26 = ssub.s32 %s20, 2
      %s27 = sadd.s32 %s20, 1
      %s28 = ssub.s32 %s20, %s27
      %p29 = scmp.eq.s32.totalorder %s28, 0
      %s31 = sadd.s32 %s30, 1
      %s32 = scalar_select %p29, %s30, %s31
      %p35 = pneg %p29
      %p36 = scmp.eq.s32.totalorder %s20, 1
      %p37 = por %p35, %p36
      %p38 = scmp.ne.s32.totalorder %s30, %s33
      %p39 = scmp.eq.s32.totalorder %s20, 0
      %p40 = por %p38, %p39
      %p41 = scmp.ne.s32.totalorder %s30, %s33
      %p42 = scmp.eq.s32.totalorder %s25, 1
      %p43 = por %p41, %p42
      %p44 = scmp.ne.s32.totalorder %s33, %s34
      %p45 = scmp.eq.s32.totalorder %s25, 0
      %p46 = por %p44, %p45
      %p47 = scmp.ne.s32.totalorder %s33, %s34
      %p48 = scmp.eq.s32.totalorder %s26, 1
      %p49 = por %p47, %p48
      %p51 = scmp.ne.s32.totalorder %s34, %s50
      %p52 = scmp.eq.s32.totalorder %s26, 0
      %p53 = por %p51, %p52
      %s54 = ssub.s32 %s20, %s27
      %p55 = scmp.eq.s32.totalorder %s54, 0
      %s57 = sadd.s32 %s56, 1
      %s58 = scalar_select %p55, %s56, %s57
      %p61 = pneg %p55
      %p62 = scmp.eq.s32.totalorder %s20, 1
      %p63 = por %p61, %p62
      %p64 = scmp.ne.s32.totalorder %s56, %s59
      %p65 = scmp.eq.s32.totalorder %s20, 0
      %p66 = por %p64, %p65
      %p67 = scmp.ne.s32.totalorder %s56, %s59
      %p68 = scmp.eq.s32.totalorder %s25, 1
      %p69 = por %p67, %p68
      %p70 = scmp.ne.s32.totalorder %s59, %s60
      %p71 = scmp.eq.s32.totalorder %s25, 0
      %p72 = por %p70, %p71
      %p73 = scmp.ne.s32.totalorder %s59, %s60
      %p74 = scmp.eq.s32.totalorder %s26, 1
      %p75 = por %p73, %p74
      %p77 = scmp.ne.s32.totalorder %s60, %s76
      %p78 = scmp.eq.s32.totalorder %s26, 0
      %p79 = por %p77, %p78
      %s80 = ssub.s32 %s20, %s27
      %p81 = scmp.eq.s32.totalorder %s80, 0
      %s83 = sadd.s32 %s82, 1
      %s84 = scalar_select %p81, %s82, %s83
      %p87 = pneg %p81
      %p88 = scmp.eq.s32.totalorder %s20, 1
      %p89 = por %p87, %p88
      %p90 = scmp.ne.s32.totalorder %s82, %s85
      %p91 = scmp.eq.s32.totalorder %s20, 0
      %p92 = por %p90, %p91
      %p93 = scmp.ne.s32.totalorder %s82, %s85
      %p94 = scmp.eq.s32.totalorder %s25, 1
      %p95 = por %p93, %p94
      %p96 = scmp.ne.s32.totalorder %s85, %s86
      %p97 = scmp.eq.s32.totalorder %s25, 0
      %p98 = por %p96, %p97
      %p99 = scmp.ne.s32.totalorder %s85, %s86
      %p100 = scmp.eq.s32.totalorder %s26, 1
      %p101 = por %p99, %p100
      %p103 = scmp.ne.s32.totalorder %s86, %s102
      %p104 = scmp.eq.s32.totalorder %s26, 0
      %p105 = por %p103, %p104
      %s107 = sadd.s32 %s106, 1
      %p110 = scmp.eq.s32.totalorder %s20, 1
      %p111 = scmp.ne.s32.totalorder %s106, %s108
      %p112 = scmp.eq.s32.totalorder %s20, 0
      %p113 = por %p111, %p112
      %p114 = scmp.ne.s32.totalorder %s106, %s108
      %p115 = scmp.eq.s32.totalorder %s25, 1
      %p116 = por %p114, %p115
      %p117 = scmp.ne.s32.totalorder %s108, %s109
      %p118 = scmp.eq.s32.totalorder %s25, 0
      %p119 = por %p117, %p118
      %p120 = scmp.ne.s32.totalorder %s108, %s109
      %p121 = scmp.eq.s32.totalorder %s26, 1
      %p122 = por %p120, %p121
      %p124 = scmp.ne.s32.totalorder %s109, %s123
      %p125 = scmp.eq.s32.totalorder %s26, 0
      %p126 = por %p124, %p125
      %s127 = ssub.s32 %s20, %s27
      %p128 = scmp.eq.s32.totalorder %s127, 0
      %s130 = sadd.s32 %s129, 1
      %s131 = scalar_select %p128, %s129, %s130
      %p134 = pneg %p128
      %p135 = scmp.eq.s32.totalorder %s20, 1
      %p136 = por %p134, %p135
      %p137 = scmp.ne.s32.totalorder %s129, %s132
      %p138 = scmp.eq.s32.totalorder %s20, 0
      %p139 = por %p137, %p138
      %p140 = scmp.ne.s32.totalorder %s129, %s132
      %p141 = scmp.eq.s32.totalorder %s25, 1
      %p142 = por %p140, %p141
      %p143 = scmp.ne.s32.totalorder %s132, %s133
      %p144 = scmp.eq.s32.totalorder %s25, 0
      %p145 = por %p143, %p144
      %p146 = scmp.ne.s32.totalorder %s132, %s133
      %p147 = scmp.eq.s32.totalorder %s26, 1
      %p148 = por %p146, %p147
      %p150 = scmp.ne.s32.totalorder %s133, %s149
      %p151 = scmp.eq.s32.totalorder %s26, 0
      %p152 = por %p150, %p151
      %p153 = scmp.le.s32.totalorder 1, %s20
      %p154 = scmp.lt.s32.totalorder %s20, 3
      %p155 = pnand %p153, %p154
      %p156 = pneg %p155
      // Predicated region
      $region9: #{tpu_custom_call.1} parent=5 // pred_check
        _
      $region10: #{tpu_custom_call.1} parent=5 // pred_check_branch
        %158 = sbr.rel (%p155) target = $region12
      $region11: #{tpu_custom_call.1} parent=5 // pred_region
        %s159 = ssub.s32 %s20, 1
        // Predicated region
        $region13: #{tpu_custom_call.1} parent=11 // pred_check
          %p160 = pneg %p119
        $region14: #{tpu_custom_call.1} parent=11 // pred_check_branch
          %162 = sbr.rel (%p160) target = $region16
        $region15: #{tpu_custom_call.1} parent=11 // pred_region
          %s164 = ssub.s32 2048, 2048
          %165 = vsyncadd [#allocation9], %s164
          %s166 = sshll.u32 [#allocation8], 4
          %s167 = int_to_ptr.vmem [resolvable:$true] %s166
          %172 = dma.hbm_to_vmem [thread:$0]  %s3, 2048, %s167, [#allocation9], 128, 128, 8
        $region16: #{tpu_custom_call.1} parent=11 // pred_fallthru
          _
      $region12: #{tpu_custom_call.1} parent=5 // pred_fallthru
        _
      %p173 = scmp.lt.s32.totalorder %s20, 2
      // Predicated region
      $region17: #{tpu_custom_call.1} parent=5 // pred_check
        %p174 = pneg %p173
      $region18: #{tpu_custom_call.1} parent=5 // pred_check_branch
        %176 = sbr.rel (%p174) target = $region20
      $region19: #{tpu_custom_call.1} parent=5 // pred_region
        // Predicated region
        $region21: #{tpu_custom_call.1} parent=19 // pred_check
          %p177 = pneg %p40
        $region22: #{tpu_custom_call.1} parent=19 // pred_check_branch
          %179 = sbr.rel (%p177) target = $region24
        $region23: #{tpu_custom_call.1} parent=19 // pred_region
          %s180 = sand.u32 %s30, 1
          %s181 = scalar_lea.sflag [#allocation3], %s180
          %s182 = sand.u32 %s30, 1
          %s183 = smul.addr %s182, 128
          %s184 = scalar_lea.vmem [#allocation2], %s183
          %s185 = smul.u32 16, %s20
          %s187 = ssub.s32 2048, 2048
          %188 = vsyncadd %s181, %s187
          %s189 = smul.addr %s185, 128
          %s190 = scalar_lea.hbm %s0, %s189
          %s191 = sshll.u32 %s184, 4
          %s192 = int_to_ptr.vmem [resolvable:$true] %s191
          %197 = dma.hbm_to_vmem [thread:$0]  %s190, 2048, %s192, %s181, 128, 128, 8
        $region24: #{tpu_custom_call.1} parent=19 // pred_fallthru
          _
        // Predicated region
        $region25: #{tpu_custom_call.1} parent=19 // pred_check
          %p198 = pneg %p66
        $region26: #{tpu_custom_call.1} parent=19 // pred_check_branch
          %200 = sbr.rel (%p198) target = $region28
        $region27: #{tpu_custom_call.1} parent=19 // pred_region
          %s201 = sand.u32 %s20, 1
          %s202 = scalar_lea.sflag [#allocation6], %s201
          %s203 = sand.u32 %s56, 1
          %s204 = smul.addr %s203, 128
          %s205 = scalar_lea.vmem [#allocation5], %s204
          %s206 = smul.u32 16, %s20
          %s208 = ssub.s32 2048, 2048
          %209 = vsyncadd %s202, %s208
          %s210 = smul.addr %s206, 128
          %s211 = scalar_lea.hbm %s1, %s210
          %s212 = sshll.u32 %s205, 4
          %s213 = int_to_ptr.vmem [resolvable:$true] %s212
          %218 = dma.hbm_to_vmem [thread:$0]  %s211, 2048, %s213, %s202, 128, 128, 8
        $region28: #{tpu_custom_call.1} parent=19 // pred_fallthru
          _
        // Predicated region
        $region29: #{tpu_custom_call.1} parent=19 // pred_check
          %p219 = pneg %p92
        $region30: #{tpu_custom_call.1} parent=19 // pred_check_branch
          %221 = sbr.rel (%p219) target = $region32
        $region31: #{tpu_custom_call.1} parent=19 // pred_region
          %s222 = sand.u32 %s20, 1
          %s223 = scalar_lea.sflag [#allocation6], %s222
          %s224 = sand.u32 %s82, 1
          %s225 = smul.addr %s224, 128
          %s226 = scalar_lea.vmem [#allocation7], %s225
          %s227 = smul.u32 16, %s20
          %s229 = ssub.s32 2048, 2048
          %230 = vsyncadd %s223, %s229
          %s231 = smul.addr %s227, 128
          %s232 = scalar_lea.hbm %s2, %s231
          %s233 = sshll.u32 %s226, 4
          %s234 = int_to_ptr.vmem [resolvable:$true] %s233
          %239 = dma.hbm_to_vmem [thread:$0]  %s232, 2048, %s234, %s223, 128, 128, 8
        $region32: #{tpu_custom_call.1} parent=19 // pred_fallthru
          _
      $region20: #{tpu_custom_call.1} parent=5 // pred_fallthru
        _
      %p240 = scmp.le.s32.totalorder 1, %s20
      %p241 = scmp.lt.s32.totalorder %s20, 3
      %p242 = pnand %p240, %p241
      %p243 = pneg %p242
      // Predicated region
      $region33: #{tpu_custom_call.1} parent=5 // pred_check
        _
      $region34: #{tpu_custom_call.1} parent=5 // pred_check_branch
        %245 = sbr.rel (%p242) target = $region36
      $region35: #{tpu_custom_call.1} parent=5 // pred_region
        %s246 = ssub.s32 %s20, 1
        %s247 = sand.u32 %s33, 1
        %s248 = scalar_lea.sflag [#allocation3], %s247
        %s249 = sand.u32 %s33, 1
        %s250 = smul.addr %s249, 128
        %s251 = scalar_lea.vmem [#allocation2], %s250
        // Predicated region
        $region37: #{tpu_custom_call.1} parent=35 // pred_check
          %p252 = pneg %p46
        $region38: #{tpu_custom_call.1} parent=35 // pred_check_branch
          %254 = sbr.rel (%p252) target = $region40
        $region39: #{tpu_custom_call.1} parent=35 // pred_region
          %255 = dma.done %s248, 2048
        $region40: #{tpu_custom_call.1} parent=35 // pred_fallthru
          _
        %s256 = sand.u32 %s25, 1
        %s257 = scalar_lea.sflag [#allocation6], %s256
        %s258 = sand.u32 %s59, 1
        %s259 = smul.addr %s258, 128
        %s260 = scalar_lea.vmem [#allocation5], %s259
        // Predicated region
        $region41: #{tpu_custom_call.1} parent=35 // pred_check
          %p261 = pneg %p72
        $region42: #{tpu_custom_call.1} parent=35 // pred_check_branch
          %263 = sbr.rel (%p261) target = $region44
        $region43: #{tpu_custom_call.1} parent=35 // pred_region
          %264 = dma.done %s257, 2048
        $region44: #{tpu_custom_call.1} parent=35 // pred_fallthru
          _
        %s265 = sand.u32 %s25, 1
        %s266 = scalar_lea.sflag [#allocation6], %s265
        %s267 = sand.u32 %s85, 1
        %s268 = smul.addr %s267, 128
        %s269 = scalar_lea.vmem [#allocation7], %s268
        // Predicated region
        $region45: #{tpu_custom_call.1} parent=35 // pred_check
          %p270 = pneg %p98
        $region46: #{tpu_custom_call.1} parent=35 // pred_check_branch
          %272 = sbr.rel (%p270) target = $region48
        $region47: #{tpu_custom_call.1} parent=35 // pred_region
          %273 = dma.done %s266, 2048
        $region48: #{tpu_custom_call.1} parent=35 // pred_fallthru
          _
        // Predicated region
        $region49: #{tpu_custom_call.1} parent=35 // pred_check
          %p274 = pneg %p119
        $region50: #{tpu_custom_call.1} parent=35 // pred_check_branch
          %276 = sbr.rel (%p274) target = $region52
        $region51: #{tpu_custom_call.1} parent=35 // pred_region
          %277 = dma.done [#allocation9], 2048
        $region52: #{tpu_custom_call.1} parent=35 // pred_fallthru
          _
        %s278 = sand.u32 %s33, 1
        %s279 = scalar_lea.sflag [#allocation3], %s278
        %s280 = sand.u32 %s33, 1
        %s281 = smul.addr %s280, 128
        %s282 = scalar_lea.vmem [#allocation2], %s281
        %p283 = pneg %p46
        %p284 = pneg %p43
        %s285 = sand.u32 %s25, 1
        %s286 = scalar_lea.sflag [#allocation6], %s285
        %s287 = sand.u32 %s59, 1
        %s288 = smul.addr %s287, 128
        %s289 = scalar_lea.vmem [#allocation5], %s288
        %p290 = pneg %p72
        %p291 = pneg %p69
        %s292 = sand.u32 %s25, 1
        %s293 = scalar_lea.sflag [#allocation6], %s292
        %s294 = sand.u32 %s85, 1
        %s295 = smul.addr %s294, 128
        %s296 = scalar_lea.vmem [#allocation7], %s295
        %p297 = pneg %p98
        %p298 = pneg %p95
        %p299 = pneg %p119
        %p300 = pneg %p116
        %p301 = pneg %p145
        %p302 = pneg %p142
        %s303 = sand.u32 %s132, 1
        %s304 = scalar_lea.sflag [#allocation4], %s303
        %s305 = sand.u32 %s132, 1
        %s306 = smul.addr %s305, 128
        %s307 = scalar_lea.vmem [#allocation10], %s306
        %s308 = smul.u32 16, %s25
        %s309 = smul.u32 16, %s25
        %s310 = smul.u32 16, %s25
        %s311 = smul.u32 16, %s25
        %v314 = vld [vmem:[#allocation8] sm:$0xff]
        %v315 = vld [vmem:[#allocation8 + $0x8] sm:$0xff]
        %v316 = vld [vmem:[#allocation8 + $0x10] sm:$0xff]
        %v317 = vld [vmem:[#allocation8 + $0x18] sm:$0xff]
        %v318 = vld [vmem:[#allocation8 + $0x20] sm:$0xff]
        %v319 = vld [vmem:[#allocation8 + $0x28] sm:$0xff]
        %v320 = vld [vmem:[#allocation8 + $0x30] sm:$0xff]
        %v321 = vld [vmem:[#allocation8 + $0x38] sm:$0xff]
        %v322 = vld [vmem:[#allocation8 + $0x40] sm:$0xff]
        %v323 = vld [vmem:[#allocation8 + $0x48] sm:$0xff]
        %v324 = vld [vmem:[#allocation8 + $0x50] sm:$0xff]
        %v325 = vld [vmem:[#allocation8 + $0x58] sm:$0xff]
        %v326 = vld [vmem:[#allocation8 + $0x60] sm:$0xff]
        %v327 = vld [vmem:[#allocation8 + $0x68] sm:$0xff]
        %v328 = vld [vmem:[#allocation8 + $0x70] sm:$0xff]
        %v329 = vld [vmem:[#allocation8 + $0x78] sm:$0xff]
        %v330 = vld [vmem:[%s251] sm:$0xff]
        %v331 = vmul.f32 %v330, 0.35355338
        %v332 = vpack.c.bf16 %v331, %v331
        %v333 = vld [vmem:[%s260] sm:$0xff]
        %v334 = vpack.c.bf16 %v333, %v333
        %v335 = vld [vmem:[%s269] sm:$0xff]
        %v336 = vpack.c.bf16 %v335, %v335
        %337 = vxpose.xlu0.c.b16.start [1/8] %v332, 128
        %338 = vxpose.xlu0.c.b16.cont [2/8] 0, 128
        %339 = vxpose.xlu0.c.b16.cont [3/8] 0, 128
        %340 = vxpose.xlu0.c.b16.cont [4/8] 0, 128
        %341 = vxpose.xlu0.c.b16.cont [5/8] 0, 128
        %342 = vxpose.xlu0.c.b16.cont [6/8] 0, 128
        %343 = vxpose.xlu0.c.b16.cont [7/8] 0, 128
        %344 = vxpose.xlu0.c.b16.end [8/8] 0, 128
        %v345 = vpop.trf.xlu0
        %v346 = vpop.trf.xlu0
        %v347 = vpop.trf.xlu0
        %v348 = vpop.trf.xlu0
        %v349 = vpop.trf.xlu0
        %v350 = vpop.trf.xlu0
        %v351 = vpop.trf.xlu0
        %v352 = vpop.trf.xlu0
        %vm353 = vcmask 64512
        %v355 = vsel %vm353, %v345, 0
        %v358 = vsel %vm353, %v346, 0
        %v361 = vsel %vm353, %v347, 0
        %v364 = vsel %vm353, %v348, 0
        %v367 = vsel %vm353, %v349, 0
        %v370 = vsel %vm353, %v350, 0
        %v373 = vsel %vm353, %v351, 0
        %v376 = vsel %vm353, %v352, 0
        %vm378 = vcmask 1043456
        %v380 = vsel %vm378, %v334, 0
        %382 = vmatprep.subr.bf16.mxu0 0
        %383 = vmatpush1.bf16.msra.mxu0 %v380
        %384 = vmatprep.subr.bf16.mxu0 0
        %385 = vmatpush1.bf16.msra.mxu0 0
        %386 = vmatprep.subr.bf16.mxu0 0
        %387 = vmatpush1.bf16.msra.mxu0 0
        %388 = vmatprep.subr.bf16.mxu0 0
        %389 = vmatpush1.bf16.msra.mxu0 0
        %390 = vmatprep.subr.bf16.mxu0 0
        %391 = vmatpush1.bf16.msra.mxu0 0
        %392 = vmatprep.subr.bf16.mxu0 0
        %393 = vmatpush1.bf16.msra.mxu0 0
        %394 = vmatprep.subr.bf16.mxu0 0
        %395 = vmatpush1.bf16.msra.mxu0 0
        %396 = vmatprep.subr.bf16.mxu0 0
        %397 = vmatpush1.bf16.msra.mxu0 0
        %398 = vmatprep.subr.bf16.mxu0 0
        %399 = vmatpush1.bf16.msra.mxu0 0
        %400 = vmatprep.subr.bf16.mxu0 0
        %401 = vmatpush1.bf16.msra.mxu0 0
        %402 = vmatprep.subr.bf16.mxu0 0
        %403 = vmatpush1.bf16.msra.mxu0 0
        %404 = vmatprep.subr.bf16.mxu0 0
        %405 = vmatpush1.bf16.msra.mxu0 0
        %406 = vmatprep.subr.bf16.mxu0 0
        %407 = vmatpush1.bf16.msra.mxu0 0
        %408 = vmatprep.subr.bf16.mxu0 0
        %409 = vmatpush1.bf16.msra.mxu0 0
        %410 = vmatprep.subr.bf16.mxu0 0
        %411 = vmatpush1.bf16.msra.mxu0 0
        %412 = vmatprep.subr.bf16.mxu0 0
        %413 = vmatpush1.bf16.msra.mxu0 0
        %414 = vmatprep.mubr.bf16.mxu0 0
        %415 = vmatmul.mubr.bf16.gmra.mrb[0].mxu0 %v355
        %v416 = vpop.f32.mrb[0].mxu0
        %v417 = vadd.f32 %v314, %v416
        %v418 = vpop.f32.mrb[0].mxu0
        %v419 = vpop.f32.mrb[0].mxu0
        %v420 = vadd.f32 %v315, %v419
        %v421 = vpop.f32.mrb[0].mxu0
        %422 = vmatprep.mubr.bf16.mxu0 0
        %423 = vmatmul.mubr.bf16.gmra.mrb[0].mxu0 %v358
        %v424 = vpop.f32.mrb[0].mxu0
        %v425 = vadd.f32 %v316, %v424
        %v426 = vpop.f32.mrb[0].mxu0
        %v427 = vpop.f32.mrb[0].mxu0
        %v428 = vadd.f32 %v317, %v427
        %v429 = vpop.f32.mrb[0].mxu0
        %430 = vmatprep.mubr.bf16.mxu0 0
        %431 = vmatmul.mubr.bf16.gmra.mrb[0].mxu0 %v361
        %v432 = vpop.f32.mrb[0].mxu0
        %v433 = vadd.f32 %v318, %v432
        %v434 = vpop.f32.mrb[0].mxu0
        %v435 = vpop.f32.mrb[0].mxu0
        %v436 = vadd.f32 %v319, %v435
        %v437 = vpop.f32.mrb[0].mxu0
        %438 = vmatprep.mubr.bf16.mxu0 0
        %439 = vmatmul.mubr.bf16.gmra.mrb[0].mxu0 %v364
        %v440 = vpop.f32.mrb[0].mxu0
        %v441 = vadd.f32 %v320, %v440
        %v442 = vpop.f32.mrb[0].mxu0
        %v443 = vpop.f32.mrb[0].mxu0
        %v444 = vadd.f32 %v321, %v443
        %v445 = vpop.f32.mrb[0].mxu0
        %446 = vmatprep.mubr.bf16.mxu0 0
        %447 = vmatmul.mubr.bf16.gmra.mrb[0].mxu0 %v367
        %v448 = vpop.f32.mrb[0].mxu0
        %v449 = vadd.f32 %v322, %v448
        %v450 = vpop.f32.mrb[0].mxu0
        %v451 = vpop.f32.mrb[0].mxu0
        %v452 = vadd.f32 %v323, %v451
        %v453 = vpop.f32.mrb[0].mxu0
        %454 = vmatprep.mubr.bf16.mxu0 0
        %455 = vmatmul.mubr.bf16.gmra.mrb[0].mxu0 %v370
        %v456 = vpop.f32.mrb[0].mxu0
        %v457 = vadd.f32 %v324, %v456
        %v458 = vpop.f32.mrb[0].mxu0
        %v459 = vpop.f32.mrb[0].mxu0
        %v460 = vadd.f32 %v325, %v459
        %v461 = vpop.f32.mrb[0].mxu0
        %462 = vmatprep.mubr.bf16.mxu0 0
        %463 = vmatmul.mubr.bf16.gmra.mrb[0].mxu0 %v373
        %v464 = vpop.f32.mrb[0].mxu0
        %v465 = vadd.f32 %v326, %v464
        %v466 = vpop.f32.mrb[0].mxu0
        %v467 = vpop.f32.mrb[0].mxu0
        %v468 = vadd.f32 %v327, %v467
        %v469 = vpop.f32.mrb[0].mxu0
        %470 = vmatprep.mubr.bf16.mxu0 0
        %471 = vmatmul.mubr.bf16.gmra.mrb[0].mxu0 %v376
        %v472 = vpop.f32.mrb[0].mxu0
        %v473 = vadd.f32 %v328, %v472
        %v474 = vpop.f32.mrb[0].mxu0
        %v475 = vpop.f32.mrb[0].mxu0
        %v476 = vadd.f32 %v329, %v475
        %v477 = vpop.f32.mrb[0].mxu0
        %478 = vdwg.mxu0
        %479 = vmax.xlane.f32.xlu0 %v417
        %v480 = vpop.xlane.xlu0 %479
        %481 = vmax.xlane.f32.xlu0 %v420
        %v482 = vpop.xlane.xlu0 %481
        %483 = vmax.xlane.f32.xlu0 %v425
        %v484 = vpop.xlane.xlu0 %483
        %485 = vmax.xlane.f32.xlu0 %v428
        %v486 = vpop.xlane.xlu0 %485
        %487 = vmax.xlane.f32.xlu0 %v433
        %v488 = vpop.xlane.xlu0 %487
        %489 = vmax.xlane.f32.xlu0 %v436
        %v490 = vpop.xlane.xlu0 %489
        %491 = vmax.xlane.f32.xlu0 %v441
        %v492 = vpop.xlane.xlu0 %491
        %493 = vmax.xlane.f32.xlu0 %v444
        %v494 = vpop.xlane.xlu0 %493
        %495 = vmax.xlane.f32.xlu0 %v449
        %v496 = vpop.xlane.xlu0 %495
        %497 = vmax.xlane.f32.xlu0 %v452
        %v498 = vpop.xlane.xlu0 %497
        %499 = vmax.xlane.f32.xlu0 %v457
        %v500 = vpop.xlane.xlu0 %499
        %501 = vmax.xlane.f32.xlu0 %v460
        %v502 = vpop.xlane.xlu0 %501
        %503 = vmax.xlane.f32.xlu0 %v465
        %v504 = vpop.xlane.xlu0 %503
        %505 = vmax.xlane.f32.xlu0 %v468
        %v506 = vpop.xlane.xlu0 %505
        %507 = vmax.xlane.f32.xlu0 %v473
        %v508 = vpop.xlane.xlu0 %507
        %509 = vmax.xlane.f32.xlu0 %v476
        %v510 = vpop.xlane.xlu0 %509
        %v511 = vsub.f32 %v417, %v480
        %v512 = vsub.f32 %v420, %v482
        %v513 = vsub.f32 %v425, %v484
        %v514 = vsub.f32 %v428, %v486
        %v515 = vsub.f32 %v433, %v488
        %v516 = vsub.f32 %v436, %v490
        %v517 = vsub.f32 %v441, %v492
        %v518 = vsub.f32 %v444, %v494
        %v519 = vsub.f32 %v449, %v496
        %v520 = vsub.f32 %v452, %v498
        %v521 = vsub.f32 %v457, %v500
        %v522 = vsub.f32 %v460, %v502
        %v523 = vsub.f32 %v465, %v504
        %v524 = vsub.f32 %v468, %v506
        %v525 = vsub.f32 %v473, %v508
        %v526 = vsub.f32 %v476, %v510
        %v527 = vmul.f32 %v511, 1.442695
        %v528 = vpow.pop %v527
        %v529 = vmul.f32 %v512, 1.442695
        %v530 = vpow.pop %v529
        %v531 = vmul.f32 %v513, 1.442695
        %v532 = vpow.pop %v531
        %v533 = vmul.f32 %v514, 1.442695
        %v534 = vpow.pop %v533
        %v535 = vmul.f32 %v515, 1.442695
        %v536 = vpow.pop %v535
        %v537 = vmul.f32 %v516, 1.442695
        %v538 = vpow.pop %v537
        %v539 = vmul.f32 %v517, 1.442695
        %v540 = vpow.pop %v539
        %v541 = vmul.f32 %v518, 1.442695
        %v542 = vpow.pop %v541
        %v543 = vmul.f32 %v519, 1.442695
        %v544 = vpow.pop %v543
        %v545 = vmul.f32 %v520, 1.442695
        %v546 = vpow.pop %v545
        %v547 = vmul.f32 %v521, 1.442695
        %v548 = vpow.pop %v547
        %v549 = vmul.f32 %v522, 1.442695
        %v550 = vpow.pop %v549
        %v551 = vmul.f32 %v523, 1.442695
        %v552 = vpow.pop %v551
        %v553 = vmul.f32 %v524, 1.442695
        %v554 = vpow.pop %v553
        %v555 = vmul.f32 %v525, 1.442695
        %v556 = vpow.pop %v555
        %v557 = vmul.f32 %v526, 1.442695
        %v558 = vpow.pop %v557
        %v559 = vpack.c.bf16 %v530, %v528
        %v560 = vpack.c.bf16 %v534, %v532
        %v561 = vpack.c.bf16 %v538, %v536
        %v562 = vpack.c.bf16 %v542, %v540
        %v563 = vpack.c.bf16 %v546, %v544
        %v564 = vpack.c.bf16 %v550, %v548
        %v565 = vpack.c.bf16 %v554, %v552
        %v566 = vpack.c.bf16 %v558, %v556
        %567 = vmatprep.subr.bf16.mxu0 0
        %568 = vmatpush1.bf16.xpose.msra.mxu0 %v559
        %569 = vmatprep.subr.bf16.mxu0 0
        %570 = vmatpush1.bf16.xpose.msra.mxu0 %v560
        %571 = vmatprep.subr.bf16.mxu0 0
        %572 = vmatpush1.bf16.xpose.msra.mxu0 %v561
        %573 = vmatprep.subr.bf16.mxu0 0
        %574 = vmatpush1.bf16.xpose.msra.mxu0 %v562
        %575 = vmatprep.subr.bf16.mxu0 0
        %576 = vmatpush1.bf16.xpose.msra.mxu0 %v563
        %577 = vmatprep.subr.bf16.mxu0 0
        %578 = vmatpush1.bf16.xpose.msra.mxu0 %v564
        %579 = vmatprep.subr.bf16.mxu0 0
        %580 = vmatpush1.bf16.xpose.msra.mxu0 %v565
        %581 = vmatprep.subr.bf16.mxu0 0
        %582 = vmatpush1.bf16.xpose.msra.mxu0 %v566
        %583 = vmatprep.subr.bf16.mxu0 0
        %584 = vmatpush1.bf16.xpose.msra.mxu0 0
        %585 = vmatprep.subr.bf16.mxu0 0
        %586 = vmatpush1.bf16.xpose.msra.mxu0 0
        %587 = vmatprep.subr.bf16.mxu0 0
        %588 = vmatpush1.bf16.xpose.msra.mxu0 0
        %589 = vmatprep.subr.bf16.mxu0 0
        %590 = vmatpush1.bf16.xpose.msra.mxu0 0
        %591 = vmatprep.subr.bf16.mxu0 0
        %592 = vmatpush1.bf16.xpose.msra.mxu0 0
        %593 = vmatprep.subr.bf16.mxu0 0
        %594 = vmatpush1.bf16.xpose.msra.mxu0 0
        %595 = vmatprep.subr.bf16.mxu0 0
        %596 = vmatpush1.bf16.xpose.msra.mxu0 0
        %597 = vmatprep.subr.bf16.mxu0 0
        %598 = vmatpush1.bf16.xpose.msra.mxu0 0
        %599 = vmatprep.mubr.bf16.mxu0 0
        %600 = vmatmul.mubr.bf16.gmra.mrb[0].mxu0 %v336
        %v601 = vpop.f32.mrb[0].mxu0
        %v602 = vadd.f32 0.0, %v601
        %v603 = vpop.f32.mrb[0].mxu0
        %v604 = vpop.f32.mrb[0].mxu0
        %v605 = vpop.f32.mrb[0].mxu0
        %606 = vdwg.mxu0
        %607 = vmatprep.subr.bf16.mxu0 0
        %608 = vmatpush1.bf16.xpose.msra.mxu0 %v559
        %609 = vmatprep.subr.bf16.mxu0 0
        %610 = vmatpush1.bf16.xpose.msra.mxu0 %v560
        %611 = vmatprep.subr.bf16.mxu0 0
        %612 = vmatpush1.bf16.xpose.msra.mxu0 %v561
        %613 = vmatprep.subr.bf16.mxu0 0
        %614 = vmatpush1.bf16.xpose.msra.mxu0 %v562
        %615 = vmatprep.subr.bf16.mxu0 0
        %616 = vmatpush1.bf16.xpose.msra.mxu0 %v563
        %617 = vmatprep.subr.bf16.mxu0 0
        %618 = vmatpush1.bf16.xpose.msra.mxu0 %v564
        %619 = vmatprep.subr.bf16.mxu0 0
        %620 = vmatpush1.bf16.xpose.msra.mxu0 %v565
        %621 = vmatprep.subr.bf16.mxu0 0
        %622 = vmatpush1.bf16.xpose.msra.mxu0 %v566
        %623 = vmatprep.subr.bf16.mxu0 0
        %624 = vmatpush1.bf16.xpose.msra.mxu0 0
        %625 = vmatprep.subr.bf16.mxu0 0
        %626 = vmatpush1.bf16.xpose.msra.mxu0 0
        %627 = vmatprep.subr.bf16.mxu0 0
        %628 = vmatpush1.bf16.xpose.msra.mxu0 0
        %629 = vmatprep.subr.bf16.mxu0 0
        %630 = vmatpush1.bf16.xpose.msra.mxu0 0
        %631 = vmatprep.subr.bf16.mxu0 0
        %632 = vmatpush1.bf16.xpose.msra.mxu0 0
        %633 = vmatprep.subr.bf16.mxu0 0
        %634 = vmatpush1.bf16.xpose.msra.mxu0 0
        %635 = vmatprep.subr.bf16.mxu0 0
        %636 = vmatpush1.bf16.xpose.msra.mxu0 0
        %637 = vmatprep.subr.bf16.mxu0 0
        %638 = vmatpush1.bf16.xpose.msra.mxu0 0
        %639 = vmatprep.mubr.bf16.mxu0 0
        %640 = vmatmul.mubr.bf16.gmra.mrb[0].mxu0 1065369472
        %v641 = vpop.f32.mrb[0].mxu0
        %v642 = vadd.f32 0.0, %v641
        %v643 = vpop.f32.mrb[0].mxu0
        %v644 = vpop.f32.mrb[0].mxu0
        %v645 = vpop.f32.mrb[0].mxu0
        %646 = vdwg.mxu0
        %v647 = vrcp.pop %v642
        %v648 = vlaneseq
        %v649 = vshrl.u32 %v648, 7
        %v650 = vsub.s32 0, %v649
        %v651 = vrot.slane %v647, %v650
        %v652 = vmul.f32 %v602, %v651
        %653 = vst [vmem:[%s307] sm:$0xff] %v652
        %s654 = scalar_lea.vmem %s251, 8 [#allocation2]
        %v655 = vld [vmem:[%s654] sm:$0xff]
        %v656 = vmul.f32 %v655, 0.35355338
        %v657 = vpack.c.bf16 %v656, %v656
        %s658 = scalar_lea.vmem %s260, 8 [#allocation5]
        %v659 = vld [vmem:[%s658] sm:$0xff]
        %v660 = vpack.c.bf16 %v659, %v659
        %s661 = scalar_lea.vmem %s269, 8 [#allocation7]
        %v662 = vld [vmem:[%s661] sm:$0xff]
        %v663 = vpack.c.bf16 %v662, %v662
        %664 = vxpose.xlu0.c.b16.start [1/8] %v657, 128
        %665 = vxpose.xlu0.c.b16.cont [2/8] 0, 128
        %666 = vxpose.xlu0.c.b16.cont [3/8] 0, 128
        %667 = vxpose.xlu0.c.b16.cont [4/8] 0, 128
        %668 = vxpose.xlu0.c.b16.cont [5/8] 0, 128
        %669 = vxpose.xlu0.c.b16.cont [6/8] 0, 128
        %670 = vxpose.xlu0.c.b16.cont [7/8] 0, 128
        %671 = vxpose.xlu0.c.b16.end [8/8] 0, 128
        %v672 = vpop.trf.xlu0
        %v673 = vpop.trf.xlu0
        %v674 = vpop.trf.xlu0
        %v675 = vpop.trf.xlu0
        %v676 = vpop.trf.xlu0
        %v677 = vpop.trf.xlu0
        %v678 = vpop.trf.xlu0
        %v679 = vpop.trf.xlu0
        %v681 = vsel %vm353, %v672, 0
        %v684 = vsel %vm353, %v673, 0
        %v687 = vsel %vm353, %v674, 0
        %v690 = vsel %vm353, %v675, 0
        %v693 = vsel %vm353, %v676, 0
        %v696 = vsel %vm353, %v677, 0
        %v699 = vsel %vm353, %v678, 0
        %v702 = vsel %vm353, %v679, 0
        %v705 = vsel %vm378, %v660, 0
        %707 = vmatprep.subr.bf16.mxu0 0
        %708 = vmatpush1.bf16.msra.mxu0 %v705
        %709 = vmatprep.subr.bf16.mxu0 0
        %710 = vmatpush1.bf16.msra.mxu0 0
        %711 = vmatprep.subr.bf16.mxu0 0
        %712 = vmatpush1.bf16.msra.mxu0 0
        %713 = vmatprep.subr.bf16.mxu0 0
        %714 = vmatpush1.bf16.msra.mxu0 0
        %715 = vmatprep.subr.bf16.mxu0 0
        %716 = vmatpush1.bf16.msra.mxu0 0
        %717 = vmatprep.subr.bf16.mxu0 0
        %718 = vmatpush1.bf16.msra.mxu0 0
        %719 = vmatprep.subr.bf16.mxu0 0
        %720 = vmatpush1.bf16.msra.mxu0 0
        %721 = vmatprep.subr.bf16.mxu0 0
        %722 = vmatpush1.bf16.msra.mxu0 0
        %723 = vmatprep.subr.bf16.mxu0 0
        %724 = vmatpush1.bf16.msra.mxu0 0
        %725 = vmatprep.subr.bf16.mxu0 0
        %726 = vmatpush1.bf16.msra.mxu0 0
        %727 = vmatprep.subr.bf16.mxu0 0
        %728 = vmatpush1.bf16.msra.mxu0 0
        %729 = vmatprep.subr.bf16.mxu0 0
        %730 = vmatpush1.bf16.msra.mxu0 0
        %731 = vmatprep.subr.bf16.mxu0 0
        %732 = vmatpush1.bf16.msra.mxu0 0
        %733 = vmatprep.subr.bf16.mxu0 0
        %734 = vmatpush1.bf16.msra.mxu0 0
        %735 = vmatprep.subr.bf16.mxu0 0
        %736 = vmatpush1.bf16.msra.mxu0 0
        %737 = vmatprep.subr.bf16.mxu0 0
        %738 = vmatpush1.bf16.msra.mxu0 0
        %739 = vmatprep.mubr.bf16.mxu0 0
        %740 = vmatmul.mubr.bf16.gmra.mrb[0].mxu0 %v681
        %v741 = vpop.f32.mrb[0].mxu0
        %v742 = vadd.f32 %v314, %v741
        %v743 = vpop.f32.mrb[0].mxu0
        %v744 = vpop.f32.mrb[0].mxu0
        %v745 = vadd.f32 %v315, %v744
        %v746 = vpop.f32.mrb[0].mxu0
        %747 = vmatprep.mubr.bf16.mxu0 0
        %748 = vmatmul.mubr.bf16.gmra.mrb[0].mxu0 %v684
        %v749 = vpop.f32.mrb[0].mxu0
        %v750 = vadd.f32 %v316, %v749
        %v751 = vpop.f32.mrb[0].mxu0
        %v752 = vpop.f32.mrb[0].mxu0
        %v753 = vadd.f32 %v317, %v752
        %v754 = vpop.f32.mrb[0].mxu0
        %755 = vmatprep.mubr.bf16.mxu0 0
        %756 = vmatmul.mubr.bf16.gmra.mrb[0].mxu0 %v687
        %v757 = vpop.f32.mrb[0].mxu0
        %v758 = vadd.f32 %v318, %v757
        %v759 = vpop.f32.mrb[0].mxu0
        %v760 = vpop.f32.mrb[0].mxu0
        %v761 = vadd.f32 %v319, %v760
        %v762 = vpop.f32.mrb[0].mxu0
        %763 = vmatprep.mubr.bf16.mxu0 0
        %764 = vmatmul.mubr.bf16.gmra.mrb[0].mxu0 %v690
        %v765 = vpop.f32.mrb[0].mxu0
        %v766 = vadd.f32 %v320, %v765
        %v767 = vpop.f32.mrb[0].mxu0
        %v768 = vpop.f32.mrb[0].mxu0
        %v769 = vadd.f32 %v321, %v768
        %v770 = vpop.f32.mrb[0].mxu0
        %771 = vmatprep.mubr.bf16.mxu0 0
        %772 = vmatmul.mubr.bf16.gmra.mrb[0].mxu0 %v693
        %v773 = vpop.f32.mrb[0].mxu0
        %v774 = vadd.f32 %v322, %v773
        %v775 = vpop.f32.mrb[0].mxu0
        %v776 = vpop.f32.mrb[0].mxu0
        %v777 = vadd.f32 %v323, %v776
        %v778 = vpop.f32.mrb[0].mxu0
        %779 = vmatprep.mubr.bf16.mxu0 0
        %780 = vmatmul.mubr.bf16.gmra.mrb[0].mxu0 %v696
        %v781 = vpop.f32.mrb[0].mxu0
        %v782 = vadd.f32 %v324, %v781
        %v783 = vpop.f32.mrb[0].mxu0
        %v784 = vpop.f32.mrb[0].mxu0
        %v785 = vadd.f32 %v325, %v784
        %v786 = vpop.f32.mrb[0].mxu0
        %787 = vmatprep.mubr.bf16.mxu0 0
        %788 = vmatmul.mubr.bf16.gmra.mrb[0].mxu0 %v699
        %v789 = vpop.f32.mrb[0].mxu0
        %v790 = vadd.f32 %v326, %v789
        %v791 = vpop.f32.mrb[0].mxu0
        %v792 = vpop.f32.mrb[0].mxu0
        %v793 = vadd.f32 %v327, %v792
        %v794 = vpop.f32.mrb[0].mxu0
        %795 = vmatprep.mubr.bf16.mxu0 0
        %796 = vmatmul.mubr.bf16.gmra.mrb[0].mxu0 %v702
        %v797 = vpop.f32.mrb[0].mxu0
        %v798 = vadd.f32 %v328, %v797
        %v799 = vpop.f32.mrb[0].mxu0
        %v800 = vpop.f32.mrb[0].mxu0
        %v801 = vadd.f32 %v329, %v800
        %v802 = vpop.f32.mrb[0].mxu0
        %803 = vdwg.mxu0
        %804 = vmax.xlane.f32.xlu0 %v742
        %v805 = vpop.xlane.xlu0 %804
        %806 = vmax.xlane.f32.xlu0 %v745
        %v807 = vpop.xlane.xlu0 %806
        %808 = vmax.xlane.f32.xlu0 %v750
        %v809 = vpop.xlane.xlu0 %808
        %810 = vmax.xlane.f32.xlu0 %v753
        %v811 = vpop.xlane.xlu0 %810
        %812 = vmax.xlane.f32.xlu0 %v758
        %v813 = vpop.xlane.xlu0 %812
        %814 = vmax.xlane.f32.xlu0 %v761
        %v815 = vpop.xlane.xlu0 %814
        %816 = vmax.xlane.f32.xlu0 %v766
        %v817 = vpop.xlane.xlu0 %816
        %818 = vmax.xlane.f32.xlu0 %v769
        %v819 = vpop.xlane.xlu0 %818
        %820 = vmax.xlane.f32.xlu0 %v774
        %v821 = vpop.xlane.xlu0 %820
        %822 = vmax.xlane.f32.xlu0 %v777
        %v823 = vpop.xlane.xlu0 %822
        %824 = vmax.xlane.f32.xlu0 %v782
        %v825 = vpop.xlane.xlu0 %824
        %826 = vmax.xlane.f32.xlu0 %v785
        %v827 = vpop.xlane.xlu0 %826
        %828 = vmax.xlane.f32.xlu0 %v790
        %v829 = vpop.xlane.xlu0 %828
        %830 = vmax.xlane.f32.xlu0 %v793
        %v831 = vpop.xlane.xlu0 %830
        %832 = vmax.xlane.f32.xlu0 %v798
        %v833 = vpop.xlane.xlu0 %832
        %834 = vmax.xlane.f32.xlu0 %v801
        %v835 = vpop.xlane.xlu0 %834
        %v836 = vsub.f32 %v742, %v805
        %v837 = vsub.f32 %v745, %v807
        %v838 = vsub.f32 %v750, %v809
        %v839 = vsub.f32 %v753, %v811
        %v840 = vsub.f32 %v758, %v813
        %v841 = vsub.f32 %v761, %v815
        %v842 = vsub.f32 %v766, %v817
        %v843 = vsub.f32 %v769, %v819
        %v844 = vsub.f32 %v774, %v821
        %v845 = vsub.f32 %v777, %v823
        %v846 = vsub.f32 %v782, %v825
        %v847 = vsub.f32 %v785, %v827
        %v848 = vsub.f32 %v790, %v829
        %v849 = vsub.f32 %v793, %v831
        %v850 = vsub.f32 %v798, %v833
        %v851 = vsub.f32 %v801, %v835
        %v852 = vmul.f32 %v836, 1.442695
        %v853 = vpow.pop %v852
        %v854 = vmul.f32 %v837, 1.442695
        %v855 = vpow.pop %v854
        %v856 = vmul.f32 %v838, 1.442695
        %v857 = vpow.pop %v856
        %v858 = vmul.f32 %v839, 1.442695
        %v859 = vpow.pop %v858
        %v860 = vmul.f32 %v840, 1.442695
        %v861 = vpow.pop %v860
        %v862 = vmul.f32 %v841, 1.442695
        %v863 = vpow.pop %v862
        %v864 = vmul.f32 %v842, 1.442695
        %v865 = vpow.pop %v864
        %v866 = vmul.f32 %v843, 1.442695
        %v867 = vpow.pop %v866
        %v868 = vmul.f32 %v844, 1.442695
        %v869 = vpow.pop %v868
        %v870 = vmul.f32 %v845, 1.442695
        %v871 = vpow.pop %v870
        %v872 = vmul.f32 %v846, 1.442695
        %v873 = vpow.pop %v872
        %v874 = vmul.f32 %v847, 1.442695
        %v875 = vpow.pop %v874
        %v876 = vmul.f32 %v848, 1.442695
        %v877 = vpow.pop %v876
        %v878 = vmul.f32 %v849, 1.442695
        %v879 = vpow.pop %v878
        %v880 = vmul.f32 %v850, 1.442695
        %v881 = vpow.pop %v880
        %v882 = vmul.f32 %v851, 1.442695
        %v883 = vpow.pop %v882
        %v884 = vpack.c.bf16 %v855, %v853
        %v885 = vpack.c.bf16 %v859, %v857
        %v886 = vpack.c.bf16 %v863, %v861
        %v887 = vpack.c.bf16 %v867, %v865
        %v888 = vpack.c.bf16 %v871, %v869
        %v889 = vpack.c.bf16 %v875, %v873
        %v890 = vpack.c.bf16 %v879, %v877
        %v891 = vpack.c.bf16 %v883, %v881
        %892 = vmatprep.subr.bf16.mxu0 0
        %893 = vmatpush1.bf16.xpose.msra.mxu0 %v884
        %894 = vmatprep.subr.bf16.mxu0 0
        %895 = vmatpush1.bf16.xpose.msra.mxu0 %v885
        %896 = vmatprep.subr.bf16.mxu0 0
        %897 = vmatpush1.bf16.xpose.msra.mxu0 %v886
        %898 = vmatprep.subr.bf16.mxu0 0
        %899 = vmatpush1.bf16.xpose.msra.mxu0 %v887
        %900 = vmatprep.subr.bf16.mxu0 0
        %901 = vmatpush1.bf16.xpose.msra.mxu0 %v888
        %902 = vmatprep.subr.bf16.mxu0 0
        %903 = vmatpush1.bf16.xpose.msra.mxu0 %v889
        %904 = vmatprep.subr.bf16.mxu0 0
        %905 = vmatpush1.bf16.xpose.msra.mxu0 %v890
        %906 = vmatprep.subr.bf16.mxu0 0
        %907 = vmatpush1.bf16.xpose.msra.mxu0 %v891
        %908 = vmatprep.subr.bf16.mxu0 0
        %909 = vmatpush1.bf16.xpose.msra.mxu0 0
        %910 = vmatprep.subr.bf16.mxu0 0
        %911 = vmatpush1.bf16.xpose.msra.mxu0 0
        %912 = vmatprep.subr.bf16.mxu0 0
        %913 = vmatpush1.bf16.xpose.msra.mxu0 0
        %914 = vmatprep.subr.bf16.mxu0 0
        %915 = vmatpush1.bf16.xpose.msra.mxu0 0
        %916 = vmatprep.subr.bf16.mxu0 0
        %917 = vmatpush1.bf16.xpose.msra.mxu0 0
        %918 = vmatprep.subr.bf16.mxu0 0
        %919 = vmatpush1.bf16.xpose.msra.mxu0 0
        %920 = vmatprep.subr.bf16.mxu0 0
        %921 = vmatpush1.bf16.xpose.msra.mxu0 0
        %922 = vmatprep.subr.bf16.mxu0 0
        %923 = vmatpush1.bf16.xpose.msra.mxu0 0
        %924 = vmatprep.mubr.bf16.mxu0 0
        %925 = vmatmul.mubr.bf16.gmra.mrb[0].mxu0 %v663
        %v926 = vpop.f32.mrb[0].mxu0
        %v927 = vadd.f32 0.0, %v926
        %v928 = vpop.f32.mrb[0].mxu0
        %v929 = vpop.f32.mrb[0].mxu0
        %v930 = vpop.f32.mrb[0].mxu0
        %931 = vdwg.mxu0
        %932 = vmatprep.subr.bf16.mxu0 0
        %933 = vmatpush1.bf16.xpose.msra.mxu0 %v884
        %934 = vmatprep.subr.bf16.mxu0 0
        %935 = vmatpush1.bf16.xpose.msra.mxu0 %v885
        %936 = vmatprep.subr.bf16.mxu0 0
        %937 = vmatpush1.bf16.xpose.msra.mxu0 %v886
        %938 = vmatprep.subr.bf16.mxu0 0
        %939 = vmatpush1.bf16.xpose.msra.mxu0 %v887
        %940 = vmatprep.subr.bf16.mxu0 0
        %941 = vmatpush1.bf16.xpose.msra.mxu0 %v888
        %942 = vmatprep.subr.bf16.mxu0 0
        %943 = vmatpush1.bf16.xpose.msra.mxu0 %v889
        %944 = vmatprep.subr.bf16.mxu0 0
        %945 = vmatpush1.bf16.xpose.msra.mxu0 %v890
        %946 = vmatprep.subr.bf16.mxu0 0
        %947 = vmatpush1.bf16.xpose.msra.mxu0 %v891
        %948 = vmatprep.subr.bf16.mxu0 0
        %949 = vmatpush1.bf16.xpose.msra.mxu0 0
        %950 = vmatprep.subr.bf16.mxu0 0
        %951 = vmatpush1.bf16.xpose.msra.mxu0 0
        %952 = vmatprep.subr.bf16.mxu0 0
        %953 = vmatpush1.bf16.xpose.msra.mxu0 0
        %954 = vmatprep.subr.bf16.mxu0 0
        %955 = vmatpush1.bf16.xpose.msra.mxu0 0
        %956 = vmatprep.subr.bf16.mxu0 0
        %957 = vmatpush1.bf16.xpose.msra.mxu0 0
        %958 = vmatprep.subr.bf16.mxu0 0
        %959 = vmatpush1.bf16.xpose.msra.mxu0 0
        %960 = vmatprep.subr.bf16.mxu0 0
        %961 = vmatpush1.bf16.xpose.msra.mxu0 0
        %962 = vmatprep.subr.bf16.mxu0 0
        %963 = vmatpush1.bf16.xpose.msra.mxu0 0
        %964 = vmatprep.mubr.bf16.mxu0 0
        %965 = vmatmul.mubr.bf16.gmra.mrb[0].mxu0 1065369472
        %v966 = vpop.f32.mrb[0].mxu0
        %v967 = vadd.f32 0.0, %v966
        %v968 = vpop.f32.mrb[0].mxu0
        %v969 = vpop.f32.mrb[0].mxu0
        %v970 = vpop.f32.mrb[0].mxu0
        %971 = vdwg.mxu0
        %v972 = vrcp.pop %v967
        %v973 = vlaneseq
        %v974 = vshrl.u32 %v973, 7
        %v975 = vsub.s32 0, %v974
        %v976 = vrot.slane %v972, %v975
        %v977 = vmul.f32 %v927, %v976
        %s978 = scalar_lea.vmem %s307, 8 [#allocation10]
        %979 = vst [vmem:[%s978] sm:$0xff] %v977
        %s980 = scalar_lea.vmem %s251, 16 [#allocation2]
        %v981 = vld [vmem:[%s980] sm:$0xff]
        %v982 = vmul.f32 %v981, 0.35355338
        %v983 = vpack.c.bf16 %v982, %v982
        %s984 = scalar_lea.vmem %s260, 16 [#allocation5]
        %v985 = vld [vmem:[%s984] sm:$0xff]
        %v986 = vpack.c.bf16 %v985, %v985
        %s987 = scalar_lea.vmem %s269, 16 [#allocation7]
        %v988 = vld [vmem:[%s987] sm:$0xff]
        %v989 = vpack.c.bf16 %v988, %v988
        %990 = vxpose.xlu0.c.b16.start [1/8] %v983, 128
        %991 = vxpose.xlu0.c.b16.cont [2/8] 0, 128
        %992 = vxpose.xlu0.c.b16.cont [3/8] 0, 128
        %993 = vxpose.xlu0.c.b16.cont [4/8] 0, 128
        %994 = vxpose.xlu0.c.b16.cont [5/8] 0, 128
        %995 = vxpose.xlu0.c.b16.cont [6/8] 0, 128
        %996 = vxpose.xlu0.c.b16.cont [7/8] 0, 128
        %997 = vxpose.xlu0.c.b16.end [8/8] 0, 128
        %v998 = vpop.trf.xlu0
        %v999 = vpop.trf.xlu0
        %v1000 = vpop.trf.xlu0
        %v1001 = vpop.trf.xlu0
        %v1002 = vpop.trf.xlu0
        %v1003 = vpop.trf.xlu0
        %v1004 = vpop.trf.xlu0
        %v1005 = vpop.trf.xlu0
        %v1007 = vsel %vm353, %v998, 0
        %v1010 = vsel %vm353, %v999, 0
        %v1013 = vsel %vm353, %v1000, 0
        %v1016 = vsel %vm353, %v1001, 0
        %v1019 = vsel %vm353, %v1002, 0
        %v1022 = vsel %vm353, %v1003, 0
        %v1025 = vsel %vm353, %v1004, 0
        %v1028 = vsel %vm353, %v1005, 0
        %v1031 = vsel %vm378, %v986, 0
        %1033 = vmatprep.subr.bf16.mxu0 0
        %1034 = vmatpush1.bf16.msra.mxu0 %v1031
        %1035 = vmatprep.subr.bf16.mxu0 0
        %1036 = vmatpush1.bf16.msra.mxu0 0
        %1037 = vmatprep.subr.bf16.mxu0 0
        %1038 = vmatpush1.bf16.msra.mxu0 0
        %1039 = vmatprep.subr.bf16.mxu0 0
        %1040 = vmatpush1.bf16.msra.mxu0 0
        %1041 = vmatprep.subr.bf16.mxu0 0
        %1042 = vmatpush1.bf16.msra.mxu0 0
        %1043 = vmatprep.subr.bf16.mxu0 0
        %1044 = vmatpush1.bf16.msra.mxu0 0
        %1045 = vmatprep.subr.bf16.mxu0 0
        %1046 = vmatpush1.bf16.msra.mxu0 0
        %1047 = vmatprep.subr.bf16.mxu0 0
        %1048 = vmatpush1.bf16.msra.mxu0 0
        %1049 = vmatprep.subr.bf16.mxu0 0
        %1050 = vmatpush1.bf16.msra.mxu0 0
        %1051 = vmatprep.subr.bf16.mxu0 0
        %1052 = vmatpush1.bf16.msra.mxu0 0
        %1053 = vmatprep.subr.bf16.mxu0 0
        %1054 = vmatpush1.bf16.msra.mxu0 0
        %1055 = vmatprep.subr.bf16.mxu0 0
        %1056 = vmatpush1.bf16.msra.mxu0 0
        %1057 = vmatprep.subr.bf16.mxu0 0
        %1058 = vmatpush1.bf16.msra.mxu0 0
        %1059 = vmatprep.subr.bf16.mxu0 0
        %1060 = vmatpush1.bf16.msra.mxu0 0
        %1061 = vmatprep.subr.bf16.mxu0 0
        %1062 = vmatpush1.bf16.msra.mxu0 0
        %1063 = vmatprep.subr.bf16.mxu0 0
        %1064 = vmatpush1.bf16.msra.mxu0 0
        %1065 = vmatprep.mubr.bf16.mxu0 0
        %1066 = vmatmul.mubr.bf16.gmra.mrb[0].mxu0 %v1007
        %v1067 = vpop.f32.mrb[0].mxu0
        %v1068 = vadd.f32 %v314, %v1067
        %v1069 = vpop.f32.mrb[0].mxu0
        %v1070 = vpop.f32.mrb[0].mxu0
        %v1071 = vadd.f32 %v315, %v1070
        %v1072 = vpop.f32.mrb[0].mxu0
        %1073 = vmatprep.mubr.bf16.mxu0 0
        %1074 = vmatmul.mubr.bf16.gmra.mrb[0].mxu0 %v1010
        %v1075 = vpop.f32.mrb[0].mxu0
        %v1076 = vadd.f32 %v316, %v1075
        %v1077 = vpop.f32.mrb[0].mxu0
        %v1078 = vpop.f32.mrb[0].mxu0
        %v1079 = vadd.f32 %v317, %v1078
        %v1080 = vpop.f32.mrb[0].mxu0
        %1081 = vmatprep.mubr.bf16.mxu0 0
        %1082 = vmatmul.mubr.bf16.gmra.mrb[0].mxu0 %v1013
        %v1083 = vpop.f32.mrb[0].mxu0
        %v1084 = vadd.f32 %v318, %v1083
        %v1085 = vpop.f32.mrb[0].mxu0
        %v1086 = vpop.f32.mrb[0].mxu0
        %v1087 = vadd.f32 %v319, %v1086
        %v1088 = vpop.f32.mrb[0].mxu0
        %1089 = vmatprep.mubr.bf16.mxu0 0
        %1090 = vmatmul.mubr.bf16.gmra.mrb[0].mxu0 %v1016
        %v1091 = vpop.f32.mrb[0].mxu0
        %v1092 = vadd.f32 %v320, %v1091
        %v1093 = vpop.f32.mrb[0].mxu0
        %v1094 = vpop.f32.mrb[0].mxu0
        %v1095 = vadd.f32 %v321, %v1094
        %v1096 = vpop.f32.mrb[0].mxu0
        %1097 = vmatprep.mubr.bf16.mxu0 0
        %1098 = vmatmul.mubr.bf16.gmra.mrb[0].mxu0 %v1019
        %v1099 = vpop.f32.mrb[0].mxu0
        %v1100 = vadd.f32 %v322, %v1099
        %v1101 = vpop.f32.mrb[0].mxu0
        %v1102 = vpop.f32.mrb[0].mxu0
        %v1103 = vadd.f32 %v323, %v1102
        %v1104 = vpop.f32.mrb[0].mxu0
        %1105 = vmatprep.mubr.bf16.mxu0 0
        %1106 = vmatmul.mubr.bf16.gmra.mrb[0].mxu0 %v1022
        %v1107 = vpop.f32.mrb[0].mxu0
        %v1108 = vadd.f32 %v324, %v1107
        %v1109 = vpop.f32.mrb[0].mxu0
        %v1110 = vpop.f32.mrb[0].mxu0
        %v1111 = vadd.f32 %v325, %v1110
        %v1112 = vpop.f32.mrb[0].mxu0
        %1113 = vmatprep.mubr.bf16.mxu0 0
        %1114 = vmatmul.mubr.bf16.gmra.mrb[0].mxu0 %v1025
        %v1115 = vpop.f32.mrb[0].mxu0
        %v1116 = vadd.f32 %v326, %v1115
        %v1117 = vpop.f32.mrb[0].mxu0
        %v1118 = vpop.f32.mrb[0].mxu0
        %v1119 = vadd.f32 %v327, %v1118
        %v1120 = vpop.f32.mrb[0].mxu0
        %1121 = vmatprep.mubr.bf16.mxu0 0
        %1122 = vmatmul.mubr.bf16.gmra.mrb[0].mxu0 %v1028
        %v1123 = vpop.f32.mrb[0].mxu0
        %v1124 = vadd.f32 %v328, %v1123
        %v1125 = vpop.f32.mrb[0].mxu0
        %v1126 = vpop.f32.mrb[0].mxu0
        %v1127 = vadd.f32 %v329, %v1126
        %v1128 = vpop.f32.mrb[0].mxu0
        %1129 = vdwg.mxu0
        %1130 = vmax.xlane.f32.xlu0 %v1068
        %v1131 = vpop.xlane.xlu0 %1130
        %1132 = vmax.xlane.f32.xlu0 %v1071
        %v1133 = vpop.xlane.xlu0 %1132
        %1134 = vmax.xlane.f32.xlu0 %v1076
        %v1135 = vpop.xlane.xlu0 %1134
        %1136 = vmax.xlane.f32.xlu0 %v1079
        %v1137 = vpop.xlane.xlu0 %1136
        %1138 = vmax.xlane.f32.xlu0 %v1084
        %v1139 = vpop.xlane.xlu0 %1138
        %1140 = vmax.xlane.f32.xlu0 %v1087
        %v1141 = vpop.xlane.xlu0 %1140
        %1142 = vmax.xlane.f32.xlu0 %v1092
        %v1143 = vpop.xlane.xlu0 %1142
        %1144 = vmax.xlane.f32.xlu0 %v1095
        %v1145 = vpop.xlane.xlu0 %1144
        %1146 = vmax.xlane.f32.xlu0 %v1100
        %v1147 = vpop.xlane.xlu0 %1146
        %1148 = vmax.xlane.f32.xlu0 %v1103
        %v1149 = vpop.xlane.xlu0 %1148
        %1150 = vmax.xlane.f32.xlu0 %v1108
        %v1151 = vpop.xlane.xlu0 %1150
        %1152 = vmax.xlane.f32.xlu0 %v1111
        %v1153 = vpop.xlane.xlu0 %1152
        %1154 = vmax.xlane.f32.xlu0 %v1116
        %v1155 = vpop.xlane.xlu0 %1154
        %1156 = vmax.xlane.f32.xlu0 %v1119
        %v1157 = vpop.xlane.xlu0 %1156
        %1158 = vmax.xlane.f32.xlu0 %v1124
        %v1159 = vpop.xlane.xlu0 %1158
        %1160 = vmax.xlane.f32.xlu0 %v1127
        %v1161 = vpop.xlane.xlu0 %1160
        %v1162 = vsub.f32 %v1068, %v1131
        %v1163 = vsub.f32 %v1071, %v1133
        %v1164 = vsub.f32 %v1076, %v1135
        %v1165 = vsub.f32 %v1079, %v1137
        %v1166 = vsub.f32 %v1084, %v1139
        %v1167 = vsub.f32 %v1087, %v1141
        %v1168 = vsub.f32 %v1092, %v1143
        %v1169 = vsub.f32 %v1095, %v1145
        %v1170 = vsub.f32 %v1100, %v1147
        %v1171 = vsub.f32 %v1103, %v1149
        %v1172 = vsub.f32 %v1108, %v1151
        %v1173 = vsub.f32 %v1111, %v1153
        %v1174 = vsub.f32 %v1116, %v1155
        %v1175 = vsub.f32 %v1119, %v1157
        %v1176 = vsub.f32 %v1124, %v1159
        %v1177 = vsub.f32 %v1127, %v1161
        %v1178 = vmul.f32 %v1162, 1.442695
        %v1179 = vpow.pop %v1178
        %v1180 = vmul.f32 %v1163, 1.442695
        %v1181 = vpow.pop %v1180
        %v1182 = vmul.f32 %v1164, 1.442695
        %v1183 = vpow.pop %v1182
        %v1184 = vmul.f32 %v1165, 1.442695
        %v1185 = vpow.pop %v1184
        %v1186 = vmul.f32 %v1166, 1.442695
        %v1187 = vpow.pop %v1186
        %v1188 = vmul.f32 %v1167, 1.442695
        %v1189 = vpow.pop %v1188
        %v1190 = vmul.f32 %v1168, 1.442695
        %v1191 = vpow.pop %v1190
        %v1192 = vmul.f32 %v1169, 1.442695
        %v1193 = vpow.pop %v1192
        %v1194 = vmul.f32 %v1170, 1.442695
        %v1195 = vpow.pop %v1194
        %v1196 = vmul.f32 %v1171, 1.442695
        %v1197 = vpow.pop %v1196
        %v1198 = vmul.f32 %v1172, 1.442695
        %v1199 = vpow.pop %v1198
        %v1200 = vmul.f32 %v1173, 1.442695
        %v1201 = vpow.pop %v1200
        %v1202 = vmul.f32 %v1174, 1.442695
        %v1203 = vpow.pop %v1202
        %v1204 = vmul.f32 %v1175, 1.442695
        %v1205 = vpow.pop %v1204
        %v1206 = vmul.f32 %v1176, 1.442695
        %v1207 = vpow.pop %v1206
        %v1208 = vmul.f32 %v1177, 1.442695
        %v1209 = vpow.pop %v1208
        %v1210 = vpack.c.bf16 %v1181, %v1179
        %v1211 = vpack.c.bf16 %v1185, %v1183
        %v1212 = vpack.c.bf16 %v1189, %v1187
        %v1213 = vpack.c.bf16 %v1193, %v1191
        %v1214 = vpack.c.bf16 %v1197, %v1195
        %v1215 = vpack.c.bf16 %v1201, %v1199
        %v1216 = vpack.c.bf16 %v1205, %v1203
        %v1217 = vpack.c.bf16 %v1209, %v1207
        %1218 = vmatprep.subr.bf16.mxu0 0
        %1219 = vmatpush1.bf16.xpose.msra.mxu0 %v1210
        %1220 = vmatprep.subr.bf16.mxu0 0
        %1221 = vmatpush1.bf16.xpose.msra.mxu0 %v1211
        %1222 = vmatprep.subr.bf16.mxu0 0
        %1223 = vmatpush1.bf16.xpose.msra.mxu0 %v1212
        %1224 = vmatprep.subr.bf16.mxu0 0
        %1225 = vmatpush1.bf16.xpose.msra.mxu0 %v1213
        %1226 = vmatprep.subr.bf16.mxu0 0
        %1227 = vmatpush1.bf16.xpose.msra.mxu0 %v1214
        %1228 = vmatprep.subr.bf16.mxu0 0
        %1229 = vmatpush1.bf16.xpose.msra.mxu0 %v1215
        %1230 = vmatprep.subr.bf16.mxu0 0
        %1231 = vmatpush1.bf16.xpose.msra.mxu0 %v1216
        %1232 = vmatprep.subr.bf16.mxu0 0
        %1233 = vmatpush1.bf16.xpose.msra.mxu0 %v1217
        %1234 = vmatprep.subr.bf16.mxu0 0
        %1235 = vmatpush1.bf16.xpose.msra.mxu0 0
        %1236 = vmatprep.subr.bf16.mxu0 0
        %1237 = vmatpush1.bf16.xpose.msra.mxu0 0
        %1238 = vmatprep.subr.bf16.mxu0 0
        %1239 = vmatpush1.bf16.xpose.msra.mxu0 0
        %1240 = vmatprep.subr.bf16.mxu0 0
        %1241 = vmatpush1.bf16.xpose.msra.mxu0 0
        %1242 = vmatprep.subr.bf16.mxu0 0
        %1243 = vmatpush1.bf16.xpose.msra.mxu0 0
        %1244 = vmatprep.subr.bf16.mxu0 0
        %1245 = vmatpush1.bf16.xpose.msra.mxu0 0
        %1246 = vmatprep.subr.bf16.mxu0 0
        %1247 = vmatpush1.bf16.xpose.msra.mxu0 0
        %1248 = vmatprep.subr.bf16.mxu0 0
        %1249 = vmatpush1.bf16.xpose.msra.mxu0 0
        %1250 = vmatprep.mubr.bf16.mxu0 0
        %1251 = vmatmul.mubr.bf16.gmra.mrb[0].mxu0 %v989
        %v1252 = vpop.f32.mrb[0].mxu0
        %v1253 = vadd.f32 0.0, %v1252
        %v1254 = vpop.f32.mrb[0].mxu0
        %v1255 = vpop.f32.mrb[0].mxu0
        %v1256 = vpop.f32.mrb[0].mxu0
        %1257 = vdwg.mxu0
        %1258 = vmatprep.subr.bf16.mxu0 0
        %1259 = vmatpush1.bf16.xpose.msra.mxu0 %v1210
        %1260 = vmatprep.subr.bf16.mxu0 0
        %1261 = vmatpush1.bf16.xpose.msra.mxu0 %v1211
        %1262 = vmatprep.subr.bf16.mxu0 0
        %1263 = vmatpush1.bf16.xpose.msra.mxu0 %v1212
        %1264 = vmatprep.subr.bf16.mxu0 0
        %1265 = vmatpush1.bf16.xpose.msra.mxu0 %v1213
        %1266 = vmatprep.subr.bf16.mxu0 0
        %1267 = vmatpush1.bf16.xpose.msra.mxu0 %v1214
        %1268 = vmatprep.subr.bf16.mxu0 0
        %1269 = vmatpush1.bf16.xpose.msra.mxu0 %v1215
        %1270 = vmatprep.subr.bf16.mxu0 0
        %1271 = vmatpush1.bf16.xpose.msra.mxu0 %v1216
        %1272 = vmatprep.subr.bf16.mxu0 0
        %1273 = vmatpush1.bf16.xpose.msra.mxu0 %v1217
        %1274 = vmatprep.subr.bf16.mxu0 0
        %1275 = vmatpush1.bf16.xpose.msra.mxu0 0
        %1276 = vmatprep.subr.bf16.mxu0 0
        %1277 = vmatpush1.bf16.xpose.msra.mxu0 0
        %1278 = vmatprep.subr.bf16.mxu0 0
        %1279 = vmatpush1.bf16.xpose.msra.mxu0 0
        %1280 = vmatprep.subr.bf16.mxu0 0
        %1281 = vmatpush1.bf16.xpose.msra.mxu0 0
        %1282 = vmatprep.subr.bf16.mxu0 0
        %1283 = vmatpush1.bf16.xpose.msra.mxu0 0
        %1284 = vmatprep.subr.bf16.mxu0 0
        %1285 = vmatpush1.bf16.xpose.msra.mxu0 0
        %1286 = vmatprep.subr.bf16.mxu0 0
        %1287 = vmatpush1.bf16.xpose.msra.mxu0 0
        %1288 = vmatprep.subr.bf16.mxu0 0
        %1289 = vmatpush1.bf16.xpose.msra.mxu0 0
        %1290 = vmatprep.mubr.bf16.mxu0 0
        %1291 = vmatmul.mubr.bf16.gmra.mrb[0].mxu0 1065369472
        %v1292 = vpop.f32.mrb[0].mxu0
        %v1293 = vadd.f32 0.0, %v1292
        %v1294 = vpop.f32.mrb[0].mxu0
        %v1295 = vpop.f32.mrb[0].mxu0
        %v1296 = vpop.f32.mrb[0].mxu0
        %1297 = vdwg.mxu0
        %v1298 = vrcp.pop %v1293
        %v1299 = vlaneseq
        %v1300 = vshrl.u32 %v1299, 7
        %v1301 = vsub.s32 0, %v1300
        %v1302 = vrot.slane %v1298, %v1301
        %v1303 = vmul.f32 %v1253, %v1302
        %s1304 = scalar_lea.vmem %s307, 16 [#allocation10]
        %1305 = vst [vmem:[%s1304] sm:$0xff] %v1303
        %s1306 = scalar_lea.vmem %s251, 24 [#allocation2]
        %v1307 = vld [vmem:[%s1306] sm:$0xff]
        %v1308 = vmul.f32 %v1307, 0.35355338
        %v1309 = vpack.c.bf16 %v1308, %v1308
        %s1310 = scalar_lea.vmem %s260, 24 [#allocation5]
        %v1311 = vld [vmem:[%s1310] sm:$0xff]
        %v1312 = vpack.c.bf16 %v1311, %v1311
        %s1313 = scalar_lea.vmem %s269, 24 [#allocation7]
        %v1314 = vld [vmem:[%s1313] sm:$0xff]
        %v1315 = vpack.c.bf16 %v1314, %v1314
        %1316 = vxpose.xlu0.c.b16.start [1/8] %v1309, 128
        %1317 = vxpose.xlu0.c.b16.cont [2/8] 0, 128
        %1318 = vxpose.xlu0.c.b16.cont [3/8] 0, 128
        %1319 = vxpose.xlu0.c.b16.cont [4/8] 0, 128
        %1320 = vxpose.xlu0.c.b16.cont [5/8] 0, 128
        %1321 = vxpose.xlu0.c.b16.cont [6/8] 0, 128
        %1322 = vxpose.xlu0.c.b16.cont [7/8] 0, 128
        %1323 = vxpose.xlu0.c.b16.end [8/8] 0, 128
        %v1324 = vpop.trf.xlu0
        %v1325 = vpop.trf.xlu0
        %v1326 = vpop.trf.xlu0
        %v1327 = vpop.trf.xlu0
        %v1328 = vpop.trf.xlu0
        %v1329 = vpop.trf.xlu0
        %v1330 = vpop.trf.xlu0
        %v1331 = vpop.trf.xlu0
        %v1333 = vsel %vm353, %v1324, 0
        %v1336 = vsel %vm353, %v1325, 0
        %v1339 = vsel %vm353, %v1326, 0
        %v1342 = vsel %vm353, %v1327, 0
        %v1345 = vsel %vm353, %v1328, 0
        %v1348 = vsel %vm353, %v1329, 0
        %v1351 = vsel %vm353, %v1330, 0
        %v1354 = vsel %vm353, %v1331, 0
        %v1357 = vsel %vm378, %v1312, 0
        %1359 = vmatprep.subr.bf16.mxu0 0
        %1360 = vmatpush1.bf16.msra.mxu0 %v1357
        %1361 = vmatprep.subr.bf16.mxu0 0
        %1362 = vmatpush1.bf16.msra.mxu0 0
        %1363 = vmatprep.subr.bf16.mxu0 0
        %1364 = vmatpush1.bf16.msra.mxu0 0
        %1365 = vmatprep.subr.bf16.mxu0 0
        %1366 = vmatpush1.bf16.msra.mxu0 0
        %1367 = vmatprep.subr.bf16.mxu0 0
        %1368 = vmatpush1.bf16.msra.mxu0 0
        %1369 = vmatprep.subr.bf16.mxu0 0
        %1370 = vmatpush1.bf16.msra.mxu0 0
        %1371 = vmatprep.subr.bf16.mxu0 0
        %1372 = vmatpush1.bf16.msra.mxu0 0
        %1373 = vmatprep.subr.bf16.mxu0 0
        %1374 = vmatpush1.bf16.msra.mxu0 0
        %1375 = vmatprep.subr.bf16.mxu0 0
        %1376 = vmatpush1.bf16.msra.mxu0 0
        %1377 = vmatprep.subr.bf16.mxu0 0
        %1378 = vmatpush1.bf16.msra.mxu0 0
        %1379 = vmatprep.subr.bf16.mxu0 0
        %1380 = vmatpush1.bf16.msra.mxu0 0
        %1381 = vmatprep.subr.bf16.mxu0 0
        %1382 = vmatpush1.bf16.msra.mxu0 0
        %1383 = vmatprep.subr.bf16.mxu0 0
        %1384 = vmatpush1.bf16.msra.mxu0 0
        %1385 = vmatprep.subr.bf16.mxu0 0
        %1386 = vmatpush1.bf16.msra.mxu0 0
        %1387 = vmatprep.subr.bf16.mxu0 0
        %1388 = vmatpush1.bf16.msra.mxu0 0
        %1389 = vmatprep.subr.bf16.mxu0 0
        %1390 = vmatpush1.bf16.msra.mxu0 0
        %1391 = vmatprep.mubr.bf16.mxu0 0
        %1392 = vmatmul.mubr.bf16.gmra.mrb[0].mxu0 %v1333
        %v1393 = vpop.f32.mrb[0].mxu0
        %v1394 = vadd.f32 %v314, %v1393
        %v1395 = vpop.f32.mrb[0].mxu0
        %v1396 = vpop.f32.mrb[0].mxu0
        %v1397 = vadd.f32 %v315, %v1396
        %v1398 = vpop.f32.mrb[0].mxu0
        %1399 = vmatprep.mubr.bf16.mxu0 0
        %1400 = vmatmul.mubr.bf16.gmra.mrb[0].mxu0 %v1336
        %v1401 = vpop.f32.mrb[0].mxu0
        %v1402 = vadd.f32 %v316, %v1401
        %v1403 = vpop.f32.mrb[0].mxu0
        %v1404 = vpop.f32.mrb[0].mxu0
        %v1405 = vadd.f32 %v317, %v1404
        %v1406 = vpop.f32.mrb[0].mxu0
        %1407 = vmatprep.mubr.bf16.mxu0 0
        %1408 = vmatmul.mubr.bf16.gmra.mrb[0].mxu0 %v1339
        %v1409 = vpop.f32.mrb[0].mxu0
        %v1410 = vadd.f32 %v318, %v1409
        %v1411 = vpop.f32.mrb[0].mxu0
        %v1412 = vpop.f32.mrb[0].mxu0
        %v1413 = vadd.f32 %v319, %v1412
        %v1414 = vpop.f32.mrb[0].mxu0
        %1415 = vmatprep.mubr.bf16.mxu0 0
        %1416 = vmatmul.mubr.bf16.gmra.mrb[0].mxu0 %v1342
        %v1417 = vpop.f32.mrb[0].mxu0
        %v1418 = vadd.f32 %v320, %v1417
        %v1419 = vpop.f32.mrb[0].mxu0
        %v1420 = vpop.f32.mrb[0].mxu0
        %v1421 = vadd.f32 %v321, %v1420
        %v1422 = vpop.f32.mrb[0].mxu0
        %1423 = vmatprep.mubr.bf16.mxu0 0
        %1424 = vmatmul.mubr.bf16.gmra.mrb[0].mxu0 %v1345
        %v1425 = vpop.f32.mrb[0].mxu0
        %v1426 = vadd.f32 %v322, %v1425
        %v1427 = vpop.f32.mrb[0].mxu0
        %v1428 = vpop.f32.mrb[0].mxu0
        %v1429 = vadd.f32 %v323, %v1428
        %v1430 = vpop.f32.mrb[0].mxu0
        %1431 = vmatprep.mubr.bf16.mxu0 0
        %1432 = vmatmul.mubr.bf16.gmra.mrb[0].mxu0 %v1348
        %v1433 = vpop.f32.mrb[0].mxu0
        %v1434 = vadd.f32 %v324, %v1433
        %v1435 = vpop.f32.mrb[0].mxu0
        %v1436 = vpop.f32.mrb[0].mxu0
        %v1437 = vadd.f32 %v325, %v1436
        %v1438 = vpop.f32.mrb[0].mxu0
        %1439 = vmatprep.mubr.bf16.mxu0 0
        %1440 = vmatmul.mubr.bf16.gmra.mrb[0].mxu0 %v1351
        %v1441 = vpop.f32.mrb[0].mxu0
        %v1442 = vadd.f32 %v326, %v1441
        %v1443 = vpop.f32.mrb[0].mxu0
        %v1444 = vpop.f32.mrb[0].mxu0
        %v1445 = vadd.f32 %v327, %v1444
        %v1446 = vpop.f32.mrb[0].mxu0
        %1447 = vmatprep.mubr.bf16.mxu0 0
        %1448 = vmatmul.mubr.bf16.gmra.mrb[0].mxu0 %v1354
        %v1449 = vpop.f32.mrb[0].mxu0
        %v1450 = vadd.f32 %v328, %v1449
        %v1451 = vpop.f32.mrb[0].mxu0
        %v1452 = vpop.f32.mrb[0].mxu0
        %v1453 = vadd.f32 %v329, %v1452
        %v1454 = vpop.f32.mrb[0].mxu0
        %1455 = vdwg.mxu0
        %1456 = vmax.xlane.f32.xlu0 %v1394
        %v1457 = vpop.xlane.xlu0 %1456
        %1458 = vmax.xlane.f32.xlu0 %v1397
        %v1459 = vpop.xlane.xlu0 %1458
        %1460 = vmax.xlane.f32.xlu0 %v1402
        %v1461 = vpop.xlane.xlu0 %1460
        %1462 = vmax.xlane.f32.xlu0 %v1405
        %v1463 = vpop.xlane.xlu0 %1462
        %1464 = vmax.xlane.f32.xlu0 %v1410
        %v1465 = vpop.xlane.xlu0 %1464
        %1466 = vmax.xlane.f32.xlu0 %v1413
        %v1467 = vpop.xlane.xlu0 %1466
        %1468 = vmax.xlane.f32.xlu0 %v1418
        %v1469 = vpop.xlane.xlu0 %1468
        %1470 = vmax.xlane.f32.xlu0 %v1421
        %v1471 = vpop.xlane.xlu0 %1470
        %1472 = vmax.xlane.f32.xlu0 %v1426
        %v1473 = vpop.xlane.xlu0 %1472
        %1474 = vmax.xlane.f32.xlu0 %v1429
        %v1475 = vpop.xlane.xlu0 %1474
        %1476 = vmax.xlane.f32.xlu0 %v1434
        %v1477 = vpop.xlane.xlu0 %1476
        %1478 = vmax.xlane.f32.xlu0 %v1437
        %v1479 = vpop.xlane.xlu0 %1478
        %1480 = vmax.xlane.f32.xlu0 %v1442
        %v1481 = vpop.xlane.xlu0 %1480
        %1482 = vmax.xlane.f32.xlu0 %v1445
        %v1483 = vpop.xlane.xlu0 %1482
        %1484 = vmax.xlane.f32.xlu0 %v1450
        %v1485 = vpop.xlane.xlu0 %1484
        %1486 = vmax.xlane.f32.xlu0 %v1453
        %v1487 = vpop.xlane.xlu0 %1486
        %v1488 = vsub.f32 %v1394, %v1457
        %v1489 = vsub.f32 %v1397, %v1459
        %v1490 = vsub.f32 %v1402, %v1461
        %v1491 = vsub.f32 %v1405, %v1463
        %v1492 = vsub.f32 %v1410, %v1465
        %v1493 = vsub.f32 %v1413, %v1467
        %v1494 = vsub.f32 %v1418, %v1469
        %v1495 = vsub.f32 %v1421, %v1471
        %v1496 = vsub.f32 %v1426, %v1473
        %v1497 = vsub.f32 %v1429, %v1475
        %v1498 = vsub.f32 %v1434, %v1477
        %v1499 = vsub.f32 %v1437, %v1479
        %v1500 = vsub.f32 %v1442, %v1481
        %v1501 = vsub.f32 %v1445, %v1483
        %v1502 = vsub.f32 %v1450, %v1485
        %v1503 = vsub.f32 %v1453, %v1487
        %v1504 = vmul.f32 %v1488, 1.442695
        %v1505 = vpow.pop %v1504
        %v1506 = vmul.f32 %v1489, 1.442695
        %v1507 = vpow.pop %v1506
        %v1508 = vmul.f32 %v1490, 1.442695
        %v1509 = vpow.pop %v1508
        %v1510 = vmul.f32 %v1491, 1.442695
        %v1511 = vpow.pop %v1510
        %v1512 = vmul.f32 %v1492, 1.442695
        %v1513 = vpow.pop %v1512
        %v1514 = vmul.f32 %v1493, 1.442695
        %v1515 = vpow.pop %v1514
        %v1516 = vmul.f32 %v1494, 1.442695
        %v1517 = vpow.pop %v1516
        %v1518 = vmul.f32 %v1495, 1.442695
        %v1519 = vpow.pop %v1518
        %v1520 = vmul.f32 %v1496, 1.442695
        %v1521 = vpow.pop %v1520
        %v1522 = vmul.f32 %v1497, 1.442695
        %v1523 = vpow.pop %v1522
        %v1524 = vmul.f32 %v1498, 1.442695
        %v1525 = vpow.pop %v1524
        %v1526 = vmul.f32 %v1499, 1.442695
        %v1527 = vpow.pop %v1526
        %v1528 = vmul.f32 %v1500, 1.442695
        %v1529 = vpow.pop %v1528
        %v1530 = vmul.f32 %v1501, 1.442695
        %v1531 = vpow.pop %v1530
        %v1532 = vmul.f32 %v1502, 1.442695
        %v1533 = vpow.pop %v1532
        %v1534 = vmul.f32 %v1503, 1.442695
        %v1535 = vpow.pop %v1534
        %v1536 = vpack.c.bf16 %v1507, %v1505
        %v1537 = vpack.c.bf16 %v1511, %v1509
        %v1538 = vpack.c.bf16 %v1515, %v1513
        %v1539 = vpack.c.bf16 %v1519, %v1517
        %v1540 = vpack.c.bf16 %v1523, %v1521
        %v1541 = vpack.c.bf16 %v1527, %v1525
        %v1542 = vpack.c.bf16 %v1531, %v1529
        %v1543 = vpack.c.bf16 %v1535, %v1533
        %1544 = vmatprep.subr.bf16.mxu0 0
        %1545 = vmatpush1.bf16.xpose.msra.mxu0 %v1536
        %1546 = vmatprep.subr.bf16.mxu0 0
        %1547 = vmatpush1.bf16.xpose.msra.mxu0 %v1537
        %1548 = vmatprep.subr.bf16.mxu0 0
        %1549 = vmatpush1.bf16.xpose.msra.mxu0 %v1538
        %1550 = vmatprep.subr.bf16.mxu0 0
        %1551 = vmatpush1.bf16.xpose.msra.mxu0 %v1539
        %1552 = vmatprep.subr.bf16.mxu0 0
        %1553 = vmatpush1.bf16.xpose.msra.mxu0 %v1540
        %1554 = vmatprep.subr.bf16.mxu0 0
        %1555 = vmatpush1.bf16.xpose.msra.mxu0 %v1541
        %1556 = vmatprep.subr.bf16.mxu0 0
        %1557 = vmatpush1.bf16.xpose.msra.mxu0 %v1542
        %1558 = vmatprep.subr.bf16.mxu0 0
        %1559 = vmatpush1.bf16.xpose.msra.mxu0 %v1543
        %1560 = vmatprep.subr.bf16.mxu0 0
        %1561 = vmatpush1.bf16.xpose.msra.mxu0 0
        %1562 = vmatprep.subr.bf16.mxu0 0
        %1563 = vmatpush1.bf16.xpose.msra.mxu0 0
        %1564 = vmatprep.subr.bf16.mxu0 0
        %1565 = vmatpush1.bf16.xpose.msra.mxu0 0
        %1566 = vmatprep.subr.bf16.mxu0 0
        %1567 = vmatpush1.bf16.xpose.msra.mxu0 0
        %1568 = vmatprep.subr.bf16.mxu0 0
        %1569 = vmatpush1.bf16.xpose.msra.mxu0 0
        %1570 = vmatprep.subr.bf16.mxu0 0
        %1571 = vmatpush1.bf16.xpose.msra.mxu0 0
        %1572 = vmatprep.subr.bf16.mxu0 0
        %1573 = vmatpush1.bf16.xpose.msra.mxu0 0
        %1574 = vmatprep.subr.bf16.mxu0 0
        %1575 = vmatpush1.bf16.xpose.msra.mxu0 0
        %1576 = vmatprep.mubr.bf16.mxu0 0
        %1577 = vmatmul.mubr.bf16.gmra.mrb[0].mxu0 %v1315
        %v1578 = vpop.f32.mrb[0].mxu0
        %v1579 = vadd.f32 0.0, %v1578
        %v1580 = vpop.f32.mrb[0].mxu0
        %v1581 = vpop.f32.mrb[0].mxu0
        %v1582 = vpop.f32.mrb[0].mxu0
        %1583 = vdwg.mxu0
        %1584 = vmatprep.subr.bf16.mxu0 0
        %1585 = vmatpush1.bf16.xpose.msra.mxu0 %v1536
        %1586 = vmatprep.subr.bf16.mxu0 0
        %1587 = vmatpush1.bf16.xpose.msra.mxu0 %v1537
        %1588 = vmatprep.subr.bf16.mxu0 0
        %1589 = vmatpush1.bf16.xpose.msra.mxu0 %v1538
        %1590 = vmatprep.subr.bf16.mxu0 0
        %1591 = vmatpush1.bf16.xpose.msra.mxu0 %v1539
        %1592 = vmatprep.subr.bf16.mxu0 0
        %1593 = vmatpush1.bf16.xpose.msra.mxu0 %v1540
        %1594 = vmatprep.subr.bf16.mxu0 0
        %1595 = vmatpush1.bf16.xpose.msra.mxu0 %v1541
        %1596 = vmatprep.subr.bf16.mxu0 0
        %1597 = vmatpush1.bf16.xpose.msra.mxu0 %v1542
        %1598 = vmatprep.subr.bf16.mxu0 0
        %1599 = vmatpush1.bf16.xpose.msra.mxu0 %v1543
        %1600 = vmatprep.subr.bf16.mxu0 0
        %1601 = vmatpush1.bf16.xpose.msra.mxu0 0
        %1602 = vmatprep.subr.bf16.mxu0 0
        %1603 = vmatpush1.bf16.xpose.msra.mxu0 0
        %1604 = vmatprep.subr.bf16.mxu0 0
        %1605 = vmatpush1.bf16.xpose.msra.mxu0 0
        %1606 = vmatprep.subr.bf16.mxu0 0
        %1607 = vmatpush1.bf16.xpose.msra.mxu0 0
        %1608 = vmatprep.subr.bf16.mxu0 0
        %1609 = vmatpush1.bf16.xpose.msra.mxu0 0
        %1610 = vmatprep.subr.bf16.mxu0 0
        %1611 = vmatpush1.bf16.xpose.msra.mxu0 0
        %1612 = vmatprep.subr.bf16.mxu0 0
        %1613 = vmatpush1.bf16.xpose.msra.mxu0 0
        %1614 = vmatprep.subr.bf16.mxu0 0
        %1615 = vmatpush1.bf16.xpose.msra.mxu0 0
        %1616 = vmatprep.mubr.bf16.mxu0 0
        %1617 = vmatmul.mubr.bf16.gmra.mrb[0].mxu0 1065369472
        %v1618 = vpop.f32.mrb[0].mxu0
        %v1619 = vadd.f32 0.0, %v1618
        %v1620 = vpop.f32.mrb[0].mxu0
        %v1621 = vpop.f32.mrb[0].mxu0
        %v1622 = vpop.f32.mrb[0].mxu0
        %1623 = vdwg.mxu0
        %v1624 = vrcp.pop %v1619
        %v1625 = vlaneseq
        %v1626 = vshrl.u32 %v1625, 7
        %v1627 = vsub.s32 0, %v1626
        %v1628 = vrot.slane %v1624, %v1627
        %v1629 = vmul.f32 %v1579, %v1628
        %s1630 = scalar_lea.vmem %s307, 24 [#allocation10]
        %1631 = vst [vmem:[%s1630] sm:$0xff] %v1629
        %s1632 = scalar_lea.vmem %s251, 32 [#allocation2]
        %v1633 = vld [vmem:[%s1632] sm:$0xff]
        %v1634 = vmul.f32 %v1633, 0.35355338
        %v1635 = vpack.c.bf16 %v1634, %v1634
        %s1636 = scalar_lea.vmem %s260, 32 [#allocation5]
        %v1637 = vld [vmem:[%s1636] sm:$0xff]
        %v1638 = vpack.c.bf16 %v1637, %v1637
        %s1639 = scalar_lea.vmem %s269, 32 [#allocation7]
        %v1640 = vld [vmem:[%s1639] sm:$0xff]
        %v1641 = vpack.c.bf16 %v1640, %v1640
        %1642 = vxpose.xlu0.c.b16.start [1/8] %v1635, 128
        %1643 = vxpose.xlu0.c.b16.cont [2/8] 0, 128
        %1644 = vxpose.xlu0.c.b16.cont [3/8] 0, 128
        %1645 = vxpose.xlu0.c.b16.cont [4/8] 0, 128
        %1646 = vxpose.xlu0.c.b16.cont [5/8] 0, 128
        %1647 = vxpose.xlu0.c.b16.cont [6/8] 0, 128
        %1648 = vxpose.xlu0.c.b16.cont [7/8] 0, 128
        %1649 = vxpose.xlu0.c.b16.end [8/8] 0, 128
        %v1650 = vpop.trf.xlu0
        %v1651 = vpop.trf.xlu0
        %v1652 = vpop.trf.xlu0
        %v1653 = vpop.trf.xlu0
        %v1654 = vpop.trf.xlu0
        %v1655 = vpop.trf.xlu0
        %v1656 = vpop.trf.xlu0
        %v1657 = vpop.trf.xlu0
        %v1659 = vsel %vm353, %v1650, 0
        %v1662 = vsel %vm353, %v1651, 0
        %v1665 = vsel %vm353, %v1652, 0
        %v1668 = vsel %vm353, %v1653, 0
        %v1671 = vsel %vm353, %v1654, 0
        %v1674 = vsel %vm353, %v1655, 0
        %v1677 = vsel %vm353, %v1656, 0
        %v1680 = vsel %vm353, %v1657, 0
        %v1683 = vsel %vm378, %v1638, 0
        %1685 = vmatprep.subr.bf16.mxu0 0
        %1686 = vmatpush1.bf16.msra.mxu0 %v1683
        %1687 = vmatprep.subr.bf16.mxu0 0
        %1688 = vmatpush1.bf16.msra.mxu0 0
        %1689 = vmatprep.subr.bf16.mxu0 0
        %1690 = vmatpush1.bf16.msra.mxu0 0
        %1691 = vmatprep.subr.bf16.mxu0 0
        %1692 = vmatpush1.bf16.msra.mxu0 0
        %1693 = vmatprep.subr.bf16.mxu0 0
        %1694 = vmatpush1.bf16.msra.mxu0 0
        %1695 = vmatprep.subr.bf16.mxu0 0
        %1696 = vmatpush1.bf16.msra.mxu0 0
        %1697 = vmatprep.subr.bf16.mxu0 0
        %1698 = vmatpush1.bf16.msra.mxu0 0
        %1699 = vmatprep.subr.bf16.mxu0 0
        %1700 = vmatpush1.bf16.msra.mxu0 0
        %1701 = vmatprep.subr.bf16.mxu0 0
        %1702 = vmatpush1.bf16.msra.mxu0 0
        %1703 = vmatprep.subr.bf16.mxu0 0
        %1704 = vmatpush1.bf16.msra.mxu0 0
        %1705 = vmatprep.subr.bf16.mxu0 0
        %1706 = vmatpush1.bf16.msra.mxu0 0
        %1707 = vmatprep.subr.bf16.mxu0 0
        %1708 = vmatpush1.bf16.msra.mxu0 0
        %1709 = vmatprep.subr.bf16.mxu0 0
        %1710 = vmatpush1.bf16.msra.mxu0 0
        %1711 = vmatprep.subr.bf16.mxu0 0
        %1712 = vmatpush1.bf16.msra.mxu0 0
        %1713 = vmatprep.subr.bf16.mxu0 0
        %1714 = vmatpush1.bf16.msra.mxu0 0
        %1715 = vmatprep.subr.bf16.mxu0 0
        %1716 = vmatpush1.bf16.msra.mxu0 0
        %1717 = vmatprep.mubr.bf16.mxu0 0
        %1718 = vmatmul.mubr.bf16.gmra.mrb[0].mxu0 %v1659
        %v1719 = vpop.f32.mrb[0].mxu0
        %v1720 = vadd.f32 %v314, %v1719
        %v1721 = vpop.f32.mrb[0].mxu0
        %v1722 = vpop.f32.mrb[0].mxu0
        %v1723 = vadd.f32 %v315, %v1722
        %v1724 = vpop.f32.mrb[0].mxu0
        %1725 = vmatprep.mubr.bf16.mxu0 0
        %1726 = vmatmul.mubr.bf16.gmra.mrb[0].mxu0 %v1662
        %v1727 = vpop.f32.mrb[0].mxu0
        %v1728 = vadd.f32 %v316, %v1727
        %v1729 = vpop.f32.mrb[0].mxu0
        %v1730 = vpop.f32.mrb[0].mxu0
        %v1731 = vadd.f32 %v317, %v1730
        %v1732 = vpop.f32.mrb[0].mxu0
        %1733 = vmatprep.mubr.bf16.mxu0 0
        %1734 = vmatmul.mubr.bf16.gmra.mrb[0].mxu0 %v1665
        %v1735 = vpop.f32.mrb[0].mxu0
        %v1736 = vadd.f32 %v318, %v1735
        %v1737 = vpop.f32.mrb[0].mxu0
        %v1738 = vpop.f32.mrb[0].mxu0
        %v1739 = vadd.f32 %v319, %v1738
        %v1740 = vpop.f32.mrb[0].mxu0
        %1741 = vmatprep.mubr.bf16.mxu0 0
        %1742 = vmatmul.mubr.bf16.gmra.mrb[0].mxu0 %v1668
        %v1743 = vpop.f32.mrb[0].mxu0
        %v1744 = vadd.f32 %v320, %v1743
        %v1745 = vpop.f32.mrb[0].mxu0
        %v1746 = vpop.f32.mrb[0].mxu0
        %v1747 = vadd.f32 %v321, %v1746
        %v1748 = vpop.f32.mrb[0].mxu0
        %1749 = vmatprep.mubr.bf16.mxu0 0
        %1750 = vmatmul.mubr.bf16.gmra.mrb[0].mxu0 %v1671
        %v1751 = vpop.f32.mrb[0].mxu0
        %v1752 = vadd.f32 %v322, %v1751
        %v1753 = vpop.f32.mrb[0].mxu0
        %v1754 = vpop.f32.mrb[0].mxu0
        %v1755 = vadd.f32 %v323, %v1754
        %v1756 = vpop.f32.mrb[0].mxu0
        %1757 = vmatprep.mubr.bf16.mxu0 0
        %1758 = vmatmul.mubr.bf16.gmra.mrb[0].mxu0 %v1674
        %v1759 = vpop.f32.mrb[0].mxu0
        %v1760 = vadd.f32 %v324, %v1759
        %v1761 = vpop.f32.mrb[0].mxu0
        %v1762 = vpop.f32.mrb[0].mxu0
        %v1763 = vadd.f32 %v325, %v1762
        %v1764 = vpop.f32.mrb[0].mxu0
        %1765 = vmatprep.mubr.bf16.mxu0 0
        %1766 = vmatmul.mubr.bf16.gmra.mrb[0].mxu0 %v1677
        %v1767 = vpop.f32.mrb[0].mxu0
        %v1768 = vadd.f32 %v326, %v1767
        %v1769 = vpop.f32.mrb[0].mxu0
        %v1770 = vpop.f32.mrb[0].mxu0
        %v1771 = vadd.f32 %v327, %v1770
        %v1772 = vpop.f32.mrb[0].mxu0
        %1773 = vmatprep.mubr.bf16.mxu0 0
        %1774 = vmatmul.mubr.bf16.gmra.mrb[0].mxu0 %v1680
        %v1775 = vpop.f32.mrb[0].mxu0
        %v1776 = vadd.f32 %v328, %v1775
        %v1777 = vpop.f32.mrb[0].mxu0
        %v1778 = vpop.f32.mrb[0].mxu0
        %v1779 = vadd.f32 %v329, %v1778
        %v1780 = vpop.f32.mrb[0].mxu0
        %1781 = vdwg.mxu0
        %1782 = vmax.xlane.f32.xlu0 %v1720
        %v1783 = vpop.xlane.xlu0 %1782
        %1784 = vmax.xlane.f32.xlu0 %v1723
        %v1785 = vpop.xlane.xlu0 %1784
        %1786 = vmax.xlane.f32.xlu0 %v1728
        %v1787 = vpop.xlane.xlu0 %1786
        %1788 = vmax.xlane.f32.xlu0 %v1731
        %v1789 = vpop.xlane.xlu0 %1788
        %1790 = vmax.xlane.f32.xlu0 %v1736
        %v1791 = vpop.xlane.xlu0 %1790
        %1792 = vmax.xlane.f32.xlu0 %v1739
        %v1793 = vpop.xlane.xlu0 %1792
        %1794 = vmax.xlane.f32.xlu0 %v1744
        %v1795 = vpop.xlane.xlu0 %1794
        %1796 = vmax.xlane.f32.xlu0 %v1747
        %v1797 = vpop.xlane.xlu0 %1796
        %1798 = vmax.xlane.f32.xlu0 %v1752
        %v1799 = vpop.xlane.xlu0 %1798
        %1800 = vmax.xlane.f32.xlu0 %v1755
        %v1801 = vpop.xlane.xlu0 %1800
        %1802 = vmax.xlane.f32.xlu0 %v1760
        %v1803 = vpop.xlane.xlu0 %1802
        %1804 = vmax.xlane.f32.xlu0 %v1763
        %v1805 = vpop.xlane.xlu0 %1804
        %1806 = vmax.xlane.f32.xlu0 %v1768
        %v1807 = vpop.xlane.xlu0 %1806
        %1808 = vmax.xlane.f32.xlu0 %v1771
        %v1809 = vpop.xlane.xlu0 %1808
        %1810 = vmax.xlane.f32.xlu0 %v1776
        %v1811 = vpop.xlane.xlu0 %1810
        %1812 = vmax.xlane.f32.xlu0 %v1779
        %v1813 = vpop.xlane.xlu0 %1812
        %v1814 = vsub.f32 %v1720, %v1783
        %v1815 = vsub.f32 %v1723, %v1785
        %v1816 = vsub.f32 %v1728, %v1787
        %v1817 = vsub.f32 %v1731, %v1789
        %v1818 = vsub.f32 %v1736, %v1791
        %v1819 = vsub.f32 %v1739, %v1793
        %v1820 = vsub.f32 %v1744, %v1795
        %v1821 = vsub.f32 %v1747, %v1797
        %v1822 = vsub.f32 %v1752, %v1799
        %v1823 = vsub.f32 %v1755, %v1801
        %v1824 = vsub.f32 %v1760, %v1803
        %v1825 = vsub.f32 %v1763, %v1805
        %v1826 = vsub.f32 %v1768, %v1807
        %v1827 = vsub.f32 %v1771, %v1809
        %v1828 = vsub.f32 %v1776, %v1811
        %v1829 = vsub.f32 %v1779, %v1813
        %v1830 = vmul.f32 %v1814, 1.442695
        %v1831 = vpow.pop %v1830
        %v1832 = vmul.f32 %v1815, 1.442695
        %v1833 = vpow.pop %v1832
        %v1834 = vmul.f32 %v1816, 1.442695
        %v1835 = vpow.pop %v1834
        %v1836 = vmul.f32 %v1817, 1.442695
        %v1837 = vpow.pop %v1836
        %v1838 = vmul.f32 %v1818, 1.442695
        %v1839 = vpow.pop %v1838
        %v1840 = vmul.f32 %v1819, 1.442695
        %v1841 = vpow.pop %v1840
        %v1842 = vmul.f32 %v1820, 1.442695
        %v1843 = vpow.pop %v1842
        %v1844 = vmul.f32 %v1821, 1.442695
        %v1845 = vpow.pop %v1844
        %v1846 = vmul.f32 %v1822, 1.442695
        %v1847 = vpow.pop %v1846
        %v1848 = vmul.f32 %v1823, 1.442695
        %v1849 = vpow.pop %v1848
        %v1850 = vmul.f32 %v1824, 1.442695
        %v1851 = vpow.pop %v1850
        %v1852 = vmul.f32 %v1825, 1.442695
        %v1853 = vpow.pop %v1852
        %v1854 = vmul.f32 %v1826, 1.442695
        %v1855 = vpow.pop %v1854
        %v1856 = vmul.f32 %v1827, 1.442695
        %v1857 = vpow.pop %v1856
        %v1858 = vmul.f32 %v1828, 1.442695
        %v1859 = vpow.pop %v1858
        %v1860 = vmul.f32 %v1829, 1.442695
        %v1861 = vpow.pop %v1860
        %v1862 = vpack.c.bf16 %v1833, %v1831
        %v1863 = vpack.c.bf16 %v1837, %v1835
        %v1864 = vpack.c.bf16 %v1841, %v1839
        %v1865 = vpack.c.bf16 %v1845, %v1843
        %v1866 = vpack.c.bf16 %v1849, %v1847
        %v1867 = vpack.c.bf16 %v1853, %v1851
        %v1868 = vpack.c.bf16 %v1857, %v1855
        %v1869 = vpack.c.bf16 %v1861, %v1859
        %1870 = vmatprep.subr.bf16.mxu0 0
        %1871 = vmatpush1.bf16.xpose.msra.mxu0 %v1862
        %1872 = vmatprep.subr.bf16.mxu0 0
        %1873 = vmatpush1.bf16.xpose.msra.mxu0 %v1863
        %1874 = vmatprep.subr.bf16.mxu0 0
        %1875 = vmatpush1.bf16.xpose.msra.mxu0 %v1864
        %1876 = vmatprep.subr.bf16.mxu0 0
        %1877 = vmatpush1.bf16.xpose.msra.mxu0 %v1865
        %1878 = vmatprep.subr.bf16.mxu0 0
        %1879 = vmatpush1.bf16.xpose.msra.mxu0 %v1866
        %1880 = vmatprep.subr.bf16.mxu0 0
        %1881 = vmatpush1.bf16.xpose.msra.mxu0 %v1867
        %1882 = vmatprep.subr.bf16.mxu0 0
        %1883 = vmatpush1.bf16.xpose.msra.mxu0 %v1868
        %1884 = vmatprep.subr.bf16.mxu0 0
        %1885 = vmatpush1.bf16.xpose.msra.mxu0 %v1869
        %1886 = vmatprep.subr.bf16.mxu0 0
        %1887 = vmatpush1.bf16.xpose.msra.mxu0 0
        %1888 = vmatprep.subr.bf16.mxu0 0
        %1889 = vmatpush1.bf16.xpose.msra.mxu0 0
        %1890 = vmatprep.subr.bf16.mxu0 0
        %1891 = vmatpush1.bf16.xpose.msra.mxu0 0
        %1892 = vmatprep.subr.bf16.mxu0 0
        %1893 = vmatpush1.bf16.xpose.msra.mxu0 0
        %1894 = vmatprep.subr.bf16.mxu0 0
        %1895 = vmatpush1.bf16.xpose.msra.mxu0 0
        %1896 = vmatprep.subr.bf16.mxu0 0
        %1897 = vmatpush1.bf16.xpose.msra.mxu0 0
        %1898 = vmatprep.subr.bf16.mxu0 0
        %1899 = vmatpush1.bf16.xpose.msra.mxu0 0
        %1900 = vmatprep.subr.bf16.mxu0 0
        %1901 = vmatpush1.bf16.xpose.msra.mxu0 0
        %1902 = vmatprep.mubr.bf16.mxu0 0
        %1903 = vmatmul.mubr.bf16.gmra.mrb[0].mxu0 %v1641
        %v1904 = vpop.f32.mrb[0].mxu0
        %v1905 = vadd.f32 0.0, %v1904
        %v1906 = vpop.f32.mrb[0].mxu0
        %v1907 = vpop.f32.mrb[0].mxu0
        %v1908 = vpop.f32.mrb[0].mxu0
        %1909 = vdwg.mxu0
        %1910 = vmatprep.subr.bf16.mxu0 0
        %1911 = vmatpush1.bf16.xpose.msra.mxu0 %v1862
        %1912 = vmatprep.subr.bf16.mxu0 0
        %1913 = vmatpush1.bf16.xpose.msra.mxu0 %v1863
        %1914 = vmatprep.subr.bf16.mxu0 0
        %1915 = vmatpush1.bf16.xpose.msra.mxu0 %v1864
        %1916 = vmatprep.subr.bf16.mxu0 0
        %1917 = vmatpush1.bf16.xpose.msra.mxu0 %v1865
        %1918 = vmatprep.subr.bf16.mxu0 0
        %1919 = vmatpush1.bf16.xpose.msra.mxu0 %v1866
        %1920 = vmatprep.subr.bf16.mxu0 0
        %1921 = vmatpush1.bf16.xpose.msra.mxu0 %v1867
        %1922 = vmatprep.subr.bf16.mxu0 0
        %1923 = vmatpush1.bf16.xpose.msra.mxu0 %v1868
        %1924 = vmatprep.subr.bf16.mxu0 0
        %1925 = vmatpush1.bf16.xpose.msra.mxu0 %v1869
        %1926 = vmatprep.subr.bf16.mxu0 0
        %1927 = vmatpush1.bf16.xpose.msra.mxu0 0
        %1928 = vmatprep.subr.bf16.mxu0 0
        %1929 = vmatpush1.bf16.xpose.msra.mxu0 0
        %1930 = vmatprep.subr.bf16.mxu0 0
        %1931 = vmatpush1.bf16.xpose.msra.mxu0 0
        %1932 = vmatprep.subr.bf16.mxu0 0
        %1933 = vmatpush1.bf16.xpose.msra.mxu0 0
        %1934 = vmatprep.subr.bf16.mxu0 0
        %1935 = vmatpush1.bf16.xpose.msra.mxu0 0
        %1936 = vmatprep.subr.bf16.mxu0 0
        %1937 = vmatpush1.bf16.xpose.msra.mxu0 0
        %1938 = vmatprep.subr.bf16.mxu0 0
        %1939 = vmatpush1.bf16.xpose.msra.mxu0 0
        %1940 = vmatprep.subr.bf16.mxu0 0
        %1941 = vmatpush1.bf16.xpose.msra.mxu0 0
        %1942 = vmatprep.mubr.bf16.mxu0 0
        %1943 = vmatmul.mubr.bf16.gmra.mrb[0].mxu0 1065369472
        %v1944 = vpop.f32.mrb[0].mxu0
        %v1945 = vadd.f32 0.0, %v1944
        %v1946 = vpop.f32.mrb[0].mxu0
        %v1947 = vpop.f32.mrb[0].mxu0
        %v1948 = vpop.f32.mrb[0].mxu0
        %1949 = vdwg.mxu0
        %v1950 = vrcp.pop %v1945
        %v1951 = vlaneseq
        %v1952 = vshrl.u32 %v1951, 7
        %v1953 = vsub.s32 0, %v1952
        %v1954 = vrot.slane %v1950, %v1953
        %v1955 = vmul.f32 %v1905, %v1954
        %s1956 = scalar_lea.vmem %s307, 32 [#allocation10]
        %1957 = vst [vmem:[%s1956] sm:$0xff] %v1955
        %s1958 = scalar_lea.vmem %s251, 40 [#allocation2]
        %v1959 = vld [vmem:[%s1958] sm:$0xff]
        %v1960 = vmul.f32 %v1959, 0.35355338
        %v1961 = vpack.c.bf16 %v1960, %v1960
        %s1962 = scalar_lea.vmem %s260, 40 [#allocation5]
        %v1963 = vld [vmem:[%s1962] sm:$0xff]
        %v1964 = vpack.c.bf16 %v1963, %v1963
        %s1965 = scalar_lea.vmem %s269, 40 [#allocation7]
        %v1966 = vld [vmem:[%s1965] sm:$0xff]
        %v1967 = vpack.c.bf16 %v1966, %v1966
        %1968 = vxpose.xlu0.c.b16.start [1/8] %v1961, 128
        %1969 = vxpose.xlu0.c.b16.cont [2/8] 0, 128
        %1970 = vxpose.xlu0.c.b16.cont [3/8] 0, 128
        %1971 = vxpose.xlu0.c.b16.cont [4/8] 0, 128
        %1972 = vxpose.xlu0.c.b16.cont [5/8] 0, 128
        %1973 = vxpose.xlu0.c.b16.cont [6/8] 0, 128
        %1974 = vxpose.xlu0.c.b16.cont [7/8] 0, 128
        %1975 = vxpose.xlu0.c.b16.end [8/8] 0, 128
        %v1976 = vpop.trf.xlu0
        %v1977 = vpop.trf.xlu0
        %v1978 = vpop.trf.xlu0
        %v1979 = vpop.trf.xlu0
        %v1980 = vpop.trf.xlu0
        %v1981 = vpop.trf.xlu0
        %v1982 = vpop.trf.xlu0
        %v1983 = vpop.trf.xlu0
        %v1985 = vsel %vm353, %v1976, 0
        %v1988 = vsel %vm353, %v1977, 0
        %v1991 = vsel %vm353, %v1978, 0
        %v1994 = vsel %vm353, %v1979, 0
        %v1997 = vsel %vm353, %v1980, 0
        %v2000 = vsel %vm353, %v1981, 0
        %v2003 = vsel %vm353, %v1982, 0
        %v2006 = vsel %vm353, %v1983, 0
        %v2009 = vsel %vm378, %v1964, 0
        %2011 = vmatprep.subr.bf16.mxu0 0
        %2012 = vmatpush1.bf16.msra.mxu0 %v2009
        %2013 = vmatprep.subr.bf16.mxu0 0
        %2014 = vmatpush1.bf16.msra.mxu0 0
        %2015 = vmatprep.subr.bf16.mxu0 0
        %2016 = vmatpush1.bf16.msra.mxu0 0
        %2017 = vmatprep.subr.bf16.mxu0 0
        %2018 = vmatpush1.bf16.msra.mxu0 0
        %2019 = vmatprep.subr.bf16.mxu0 0
        %2020 = vmatpush1.bf16.msra.mxu0 0
        %2021 = vmatprep.subr.bf16.mxu0 0
        %2022 = vmatpush1.bf16.msra.mxu0 0
        %2023 = vmatprep.subr.bf16.mxu0 0
        %2024 = vmatpush1.bf16.msra.mxu0 0
        %2025 = vmatprep.subr.bf16.mxu0 0
        %2026 = vmatpush1.bf16.msra.mxu0 0
        %2027 = vmatprep.subr.bf16.mxu0 0
        %2028 = vmatpush1.bf16.msra.mxu0 0
        %2029 = vmatprep.subr.bf16.mxu0 0
        %2030 = vmatpush1.bf16.msra.mxu0 0
        %2031 = vmatprep.subr.bf16.mxu0 0
        %2032 = vmatpush1.bf16.msra.mxu0 0
        %2033 = vmatprep.subr.bf16.mxu0 0
        %2034 = vmatpush1.bf16.msra.mxu0 0
        %2035 = vmatprep.subr.bf16.mxu0 0
        %2036 = vmatpush1.bf16.msra.mxu0 0
        %2037 = vmatprep.subr.bf16.mxu0 0
        %2038 = vmatpush1.bf16.msra.mxu0 0
        %2039 = vmatprep.subr.bf16.mxu0 0
        %2040 = vmatpush1.bf16.msra.mxu0 0
        %2041 = vmatprep.subr.bf16.mxu0 0
        %2042 = vmatpush1.bf16.msra.mxu0 0
        %2043 = vmatprep.mubr.bf16.mxu0 0
        %2044 = vmatmul.mubr.bf16.gmra.mrb[0].mxu0 %v1985
        %v2045 = vpop.f32.mrb[0].mxu0
        %v2046 = vadd.f32 %v314, %v2045
        %v2047 = vpop.f32.mrb[0].mxu0
        %v2048 = vpop.f32.mrb[0].mxu0
        %v2049 = vadd.f32 %v315, %v2048
        %v2050 = vpop.f32.mrb[0].mxu0
        %2051 = vmatprep.mubr.bf16.mxu0 0
        %2052 = vmatmul.mubr.bf16.gmra.mrb[0].mxu0 %v1988
        %v2053 = vpop.f32.mrb[0].mxu0
        %v2054 = vadd.f32 %v316, %v2053
        %v2055 = vpop.f32.mrb[0].mxu0
        %v2056 = vpop.f32.mrb[0].mxu0
        %v2057 = vadd.f32 %v317, %v2056
        %v2058 = vpop.f32.mrb[0].mxu0
        %2059 = vmatprep.mubr.bf16.mxu0 0
        %2060 = vmatmul.mubr.bf16.gmra.mrb[0].mxu0 %v1991
        %v2061 = vpop.f32.mrb[0].mxu0
        %v2062 = vadd.f32 %v318, %v2061
        %v2063 = vpop.f32.mrb[0].mxu0
        %v2064 = vpop.f32.mrb[0].mxu0
        %v2065 = vadd.f32 %v319, %v2064
        %v2066 = vpop.f32.mrb[0].mxu0
        %2067 = vmatprep.mubr.bf16.mxu0 0
        %2068 = vmatmul.mubr.bf16.gmra.mrb[0].mxu0 %v1994
        %v2069 = vpop.f32.mrb[0].mxu0
        %v2070 = vadd.f32 %v320, %v2069
        %v2071 = vpop.f32.mrb[0].mxu0
        %v2072 = vpop.f32.mrb[0].mxu0
        %v2073 = vadd.f32 %v321, %v2072
        %v2074 = vpop.f32.mrb[0].mxu0
        %2075 = vmatprep.mubr.bf16.mxu0 0
        %2076 = vmatmul.mubr.bf16.gmra.mrb[0].mxu0 %v1997
        %v2077 = vpop.f32.mrb[0].mxu0
        %v2078 = vadd.f32 %v322, %v2077
        %v2079 = vpop.f32.mrb[0].mxu0
        %v2080 = vpop.f32.mrb[0].mxu0
        %v2081 = vadd.f32 %v323, %v2080
        %v2082 = vpop.f32.mrb[0].mxu0
        %2083 = vmatprep.mubr.bf16.mxu0 0
        %2084 = vmatmul.mubr.bf16.gmra.mrb[0].mxu0 %v2000
        %v2085 = vpop.f32.mrb[0].mxu0
        %v2086 = vadd.f32 %v324, %v2085
        %v2087 = vpop.f32.mrb[0].mxu0
        %v2088 = vpop.f32.mrb[0].mxu0
        %v2089 = vadd.f32 %v325, %v2088
        %v2090 = vpop.f32.mrb[0].mxu0
        %2091 = vmatprep.mubr.bf16.mxu0 0
        %2092 = vmatmul.mubr.bf16.gmra.mrb[0].mxu0 %v2003
        %v2093 = vpop.f32.mrb[0].mxu0
        %v2094 = vadd.f32 %v326, %v2093
        %v2095 = vpop.f32.mrb[0].mxu0
        %v2096 = vpop.f32.mrb[0].mxu0
        %v2097 = vadd.f32 %v327, %v2096
        %v2098 = vpop.f32.mrb[0].mxu0
        %2099 = vmatprep.mubr.bf16.mxu0 0
        %2100 = vmatmul.mubr.bf16.gmra.mrb[0].mxu0 %v2006
        %v2101 = vpop.f32.mrb[0].mxu0
        %v2102 = vadd.f32 %v328, %v2101
        %v2103 = vpop.f32.mrb[0].mxu0
        %v2104 = vpop.f32.mrb[0].mxu0
        %v2105 = vadd.f32 %v329, %v2104
        %v2106 = vpop.f32.mrb[0].mxu0
        %2107 = vdwg.mxu0
        %2108 = vmax.xlane.f32.xlu0 %v2046
        %v2109 = vpop.xlane.xlu0 %2108
        %2110 = vmax.xlane.f32.xlu0 %v2049
        %v2111 = vpop.xlane.xlu0 %2110
        %2112 = vmax.xlane.f32.xlu0 %v2054
        %v2113 = vpop.xlane.xlu0 %2112
        %2114 = vmax.xlane.f32.xlu0 %v2057
        %v2115 = vpop.xlane.xlu0 %2114
        %2116 = vmax.xlane.f32.xlu0 %v2062
        %v2117 = vpop.xlane.xlu0 %2116
        %2118 = vmax.xlane.f32.xlu0 %v2065
        %v2119 = vpop.xlane.xlu0 %2118
        %2120 = vmax.xlane.f32.xlu0 %v2070
        %v2121 = vpop.xlane.xlu0 %2120
        %2122 = vmax.xlane.f32.xlu0 %v2073
        %v2123 = vpop.xlane.xlu0 %2122
        %2124 = vmax.xlane.f32.xlu0 %v2078
        %v2125 = vpop.xlane.xlu0 %2124
        %2126 = vmax.xlane.f32.xlu0 %v2081
        %v2127 = vpop.xlane.xlu0 %2126
        %2128 = vmax.xlane.f32.xlu0 %v2086
        %v2129 = vpop.xlane.xlu0 %2128
        %2130 = vmax.xlane.f32.xlu0 %v2089
        %v2131 = vpop.xlane.xlu0 %2130
        %2132 = vmax.xlane.f32.xlu0 %v2094
        %v2133 = vpop.xlane.xlu0 %2132
        %2134 = vmax.xlane.f32.xlu0 %v2097
        %v2135 = vpop.xlane.xlu0 %2134
        %2136 = vmax.xlane.f32.xlu0 %v2102
        %v2137 = vpop.xlane.xlu0 %2136
        %2138 = vmax.xlane.f32.xlu0 %v2105
        %v2139 = vpop.xlane.xlu0 %2138
        %v2140 = vsub.f32 %v2046, %v2109
        %v2141 = vsub.f32 %v2049, %v2111
        %v2142 = vsub.f32 %v2054, %v2113
        %v2143 = vsub.f32 %v2057, %v2115
        %v2144 = vsub.f32 %v2062, %v2117
        %v2145 = vsub.f32 %v2065, %v2119
        %v2146 = vsub.f32 %v2070, %v2121
        %v2147 = vsub.f32 %v2073, %v2123
        %v2148 = vsub.f32 %v2078, %v2125
        %v2149 = vsub.f32 %v2081, %v2127
        %v2150 = vsub.f32 %v2086, %v2129
        %v2151 = vsub.f32 %v2089, %v2131
        %v2152 = vsub.f32 %v2094, %v2133
        %v2153 = vsub.f32 %v2097, %v2135
        %v2154 = vsub.f32 %v2102, %v2137
        %v2155 = vsub.f32 %v2105, %v2139
        %v2156 = vmul.f32 %v2140, 1.442695
        %v2157 = vpow.pop %v2156
        %v2158 = vmul.f32 %v2141, 1.442695
        %v2159 = vpow.pop %v2158
        %v2160 = vmul.f32 %v2142, 1.442695
        %v2161 = vpow.pop %v2160
        %v2162 = vmul.f32 %v2143, 1.442695
        %v2163 = vpow.pop %v2162
        %v2164 = vmul.f32 %v2144, 1.442695
        %v2165 = vpow.pop %v2164
        %v2166 = vmul.f32 %v2145, 1.442695
        %v2167 = vpow.pop %v2166
        %v2168 = vmul.f32 %v2146, 1.442695
        %v2169 = vpow.pop %v2168
        %v2170 = vmul.f32 %v2147, 1.442695
        %v2171 = vpow.pop %v2170
        %v2172 = vmul.f32 %v2148, 1.442695
        %v2173 = vpow.pop %v2172
        %v2174 = vmul.f32 %v2149, 1.442695
        %v2175 = vpow.pop %v2174
        %v2176 = vmul.f32 %v2150, 1.442695
        %v2177 = vpow.pop %v2176
        %v2178 = vmul.f32 %v2151, 1.442695
        %v2179 = vpow.pop %v2178
        %v2180 = vmul.f32 %v2152, 1.442695
        %v2181 = vpow.pop %v2180
        %v2182 = vmul.f32 %v2153, 1.442695
        %v2183 = vpow.pop %v2182
        %v2184 = vmul.f32 %v2154, 1.442695
        %v2185 = vpow.pop %v2184
        %v2186 = vmul.f32 %v2155, 1.442695
        %v2187 = vpow.pop %v2186
        %v2188 = vpack.c.bf16 %v2159, %v2157
        %v2189 = vpack.c.bf16 %v2163, %v2161
        %v2190 = vpack.c.bf16 %v2167, %v2165
        %v2191 = vpack.c.bf16 %v2171, %v2169
        %v2192 = vpack.c.bf16 %v2175, %v2173
        %v2193 = vpack.c.bf16 %v2179, %v2177
        %v2194 = vpack.c.bf16 %v2183, %v2181
        %v2195 = vpack.c.bf16 %v2187, %v2185
        %2196 = vmatprep.subr.bf16.mxu0 0
        %2197 = vmatpush1.bf16.xpose.msra.mxu0 %v2188
        %2198 = vmatprep.subr.bf16.mxu0 0
        %2199 = vmatpush1.bf16.xpose.msra.mxu0 %v2189
        %2200 = vmatprep.subr.bf16.mxu0 0
        %2201 = vmatpush1.bf16.xpose.msra.mxu0 %v2190
        %2202 = vmatprep.subr.bf16.mxu0 0
        %2203 = vmatpush1.bf16.xpose.msra.mxu0 %v2191
        %2204 = vmatprep.subr.bf16.mxu0 0
        %2205 = vmatpush1.bf16.xpose.msra.mxu0 %v2192
        %2206 = vmatprep.subr.bf16.mxu0 0
        %2207 = vmatpush1.bf16.xpose.msra.mxu0 %v2193
        %2208 = vmatprep.subr.bf16.mxu0 0
        %2209 = vmatpush1.bf16.xpose.msra.mxu0 %v2194
        %2210 = vmatprep.subr.bf16.mxu0 0
        %2211 = vmatpush1.bf16.xpose.msra.mxu0 %v2195
        %2212 = vmatprep.subr.bf16.mxu0 0
        %2213 = vmatpush1.bf16.xpose.msra.mxu0 0
        %2214 = vmatprep.subr.bf16.mxu0 0
        %2215 = vmatpush1.bf16.xpose.msra.mxu0 0
        %2216 = vmatprep.subr.bf16.mxu0 0
        %2217 = vmatpush1.bf16.xpose.msra.mxu0 0
        %2218 = vmatprep.subr.bf16.mxu0 0
        %2219 = vmatpush1.bf16.xpose.msra.mxu0 0
        %2220 = vmatprep.subr.bf16.mxu0 0
        %2221 = vmatpush1.bf16.xpose.msra.mxu0 0
        %2222 = vmatprep.subr.bf16.mxu0 0
        %2223 = vmatpush1.bf16.xpose.msra.mxu0 0
        %2224 = vmatprep.subr.bf16.mxu0 0
        %2225 = vmatpush1.bf16.xpose.msra.mxu0 0
        %2226 = vmatprep.subr.bf16.mxu0 0
        %2227 = vmatpush1.bf16.xpose.msra.mxu0 0
        %2228 = vmatprep.mubr.bf16.mxu0 0
        %2229 = vmatmul.mubr.bf16.gmra.mrb[0].mxu0 %v1967
        %v2230 = vpop.f32.mrb[0].mxu0
        %v2231 = vadd.f32 0.0, %v2230
        %v2232 = vpop.f32.mrb[0].mxu0
        %v2233 = vpop.f32.mrb[0].mxu0
        %v2234 = vpop.f32.mrb[0].mxu0
        %2235 = vdwg.mxu0
        %2236 = vmatprep.subr.bf16.mxu0 0
        %2237 = vmatpush1.bf16.xpose.msra.mxu0 %v2188
        %2238 = vmatprep.subr.bf16.mxu0 0
        %2239 = vmatpush1.bf16.xpose.msra.mxu0 %v2189
        %2240 = vmatprep.subr.bf16.mxu0 0
        %2241 = vmatpush1.bf16.xpose.msra.mxu0 %v2190
        %2242 = vmatprep.subr.bf16.mxu0 0
        %2243 = vmatpush1.bf16.xpose.msra.mxu0 %v2191
        %2244 = vmatprep.subr.bf16.mxu0 0
        %2245 = vmatpush1.bf16.xpose.msra.mxu0 %v2192
        %2246 = vmatprep.subr.bf16.mxu0 0
        %2247 = vmatpush1.bf16.xpose.msra.mxu0 %v2193
        %2248 = vmatprep.subr.bf16.mxu0 0
        %2249 = vmatpush1.bf16.xpose.msra.mxu0 %v2194
        %2250 = vmatprep.subr.bf16.mxu0 0
        %2251 = vmatpush1.bf16.xpose.msra.mxu0 %v2195
        %2252 = vmatprep.subr.bf16.mxu0 0
        %2253 = vmatpush1.bf16.xpose.msra.mxu0 0
        %2254 = vmatprep.subr.bf16.mxu0 0
        %2255 = vmatpush1.bf16.xpose.msra.mxu0 0
        %2256 = vmatprep.subr.bf16.mxu0 0
        %2257 = vmatpush1.bf16.xpose.msra.mxu0 0
        %2258 = vmatprep.subr.bf16.mxu0 0
        %2259 = vmatpush1.bf16.xpose.msra.mxu0 0
        %2260 = vmatprep.subr.bf16.mxu0 0
        %2261 = vmatpush1.bf16.xpose.msra.mxu0 0
        %2262 = vmatprep.subr.bf16.mxu0 0
        %2263 = vmatpush1.bf16.xpose.msra.mxu0 0
        %2264 = vmatprep.subr.bf16.mxu0 0
        %2265 = vmatpush1.bf16.xpose.msra.mxu0 0
        %2266 = vmatprep.subr.bf16.mxu0 0
        %2267 = vmatpush1.bf16.xpose.msra.mxu0 0
        %2268 = vmatprep.mubr.bf16.mxu0 0
        %2269 = vmatmul.mubr.bf16.gmra.mrb[0].mxu0 1065369472
        %v2270 = vpop.f32.mrb[0].mxu0
        %v2271 = vadd.f32 0.0, %v2270
        %v2272 = vpop.f32.mrb[0].mxu0
        %v2273 = vpop.f32.mrb[0].mxu0
        %v2274 = vpop.f32.mrb[0].mxu0
        %2275 = vdwg.mxu0
        %v2276 = vrcp.pop %v2271
        %v2277 = vlaneseq
        %v2278 = vshrl.u32 %v2277, 7
        %v2279 = vsub.s32 0, %v2278
        %v2280 = vrot.slane %v2276, %v2279
        %v2281 = vmul.f32 %v2231, %v2280
        %s2282 = scalar_lea.vmem %s307, 40 [#allocation10]
        %2283 = vst [vmem:[%s2282] sm:$0xff] %v2281
        %s2284 = scalar_lea.vmem %s251, 48 [#allocation2]
        %v2285 = vld [vmem:[%s2284] sm:$0xff]
        %v2286 = vmul.f32 %v2285, 0.35355338
        %v2287 = vpack.c.bf16 %v2286, %v2286
        %s2288 = scalar_lea.vmem %s260, 48 [#allocation5]
        %v2289 = vld [vmem:[%s2288] sm:$0xff]
        %v2290 = vpack.c.bf16 %v2289, %v2289
        %s2291 = scalar_lea.vmem %s269, 48 [#allocation7]
        %v2292 = vld [vmem:[%s2291] sm:$0xff]
        %v2293 = vpack.c.bf16 %v2292, %v2292
        %2294 = vxpose.xlu0.c.b16.start [1/8] %v2287, 128
        %2295 = vxpose.xlu0.c.b16.cont [2/8] 0, 128
        %2296 = vxpose.xlu0.c.b16.cont [3/8] 0, 128
        %2297 = vxpose.xlu0.c.b16.cont [4/8] 0, 128
        %2298 = vxpose.xlu0.c.b16.cont [5/8] 0, 128
        %2299 = vxpose.xlu0.c.b16.cont [6/8] 0, 128
        %2300 = vxpose.xlu0.c.b16.cont [7/8] 0, 128
        %2301 = vxpose.xlu0.c.b16.end [8/8] 0, 128
        %v2302 = vpop.trf.xlu0
        %v2303 = vpop.trf.xlu0
        %v2304 = vpop.trf.xlu0
        %v2305 = vpop.trf.xlu0
        %v2306 = vpop.trf.xlu0
        %v2307 = vpop.trf.xlu0
        %v2308 = vpop.trf.xlu0
        %v2309 = vpop.trf.xlu0
        %v2311 = vsel %vm353, %v2302, 0
        %v2314 = vsel %vm353, %v2303, 0
        %v2317 = vsel %vm353, %v2304, 0
        %v2320 = vsel %vm353, %v2305, 0
        %v2323 = vsel %vm353, %v2306, 0
        %v2326 = vsel %vm353, %v2307, 0
        %v2329 = vsel %vm353, %v2308, 0
        %v2332 = vsel %vm353, %v2309, 0
        %v2335 = vsel %vm378, %v2290, 0
        %2337 = vmatprep.subr.bf16.mxu0 0
        %2338 = vmatpush1.bf16.msra.mxu0 %v2335
        %2339 = vmatprep.subr.bf16.mxu0 0
        %2340 = vmatpush1.bf16.msra.mxu0 0
        %2341 = vmatprep.subr.bf16.mxu0 0
        %2342 = vmatpush1.bf16.msra.mxu0 0
        %2343 = vmatprep.subr.bf16.mxu0 0
        %2344 = vmatpush1.bf16.msra.mxu0 0
        %2345 = vmatprep.subr.bf16.mxu0 0
        %2346 = vmatpush1.bf16.msra.mxu0 0
        %2347 = vmatprep.subr.bf16.mxu0 0
        %2348 = vmatpush1.bf16.msra.mxu0 0
        %2349 = vmatprep.subr.bf16.mxu0 0
        %2350 = vmatpush1.bf16.msra.mxu0 0
        %2351 = vmatprep.subr.bf16.mxu0 0
        %2352 = vmatpush1.bf16.msra.mxu0 0
        %2353 = vmatprep.subr.bf16.mxu0 0
        %2354 = vmatpush1.bf16.msra.mxu0 0
        %2355 = vmatprep.subr.bf16.mxu0 0
        %2356 = vmatpush1.bf16.msra.mxu0 0
        %2357 = vmatprep.subr.bf16.mxu0 0
        %2358 = vmatpush1.bf16.msra.mxu0 0
        %2359 = vmatprep.subr.bf16.mxu0 0
        %2360 = vmatpush1.bf16.msra.mxu0 0
        %2361 = vmatprep.subr.bf16.mxu0 0
        %2362 = vmatpush1.bf16.msra.mxu0 0
        %2363 = vmatprep.subr.bf16.mxu0 0
        %2364 = vmatpush1.bf16.msra.mxu0 0
        %2365 = vmatprep.subr.bf16.mxu0 0
        %2366 = vmatpush1.bf16.msra.mxu0 0
        %2367 = vmatprep.subr.bf16.mxu0 0
        %2368 = vmatpush1.bf16.msra.mxu0 0
        %2369 = vmatprep.mubr.bf16.mxu0 0
        %2370 = vmatmul.mubr.bf16.gmra.mrb[0].mxu0 %v2311
        %v2371 = vpop.f32.mrb[0].mxu0
        %v2372 = vadd.f32 %v314, %v2371
        %v2373 = vpop.f32.mrb[0].mxu0
        %v2374 = vpop.f32.mrb[0].mxu0
        %v2375 = vadd.f32 %v315, %v2374
        %v2376 = vpop.f32.mrb[0].mxu0
        %2377 = vmatprep.mubr.bf16.mxu0 0
        %2378 = vmatmul.mubr.bf16.gmra.mrb[0].mxu0 %v2314
        %v2379 = vpop.f32.mrb[0].mxu0
        %v2380 = vadd.f32 %v316, %v2379
        %v2381 = vpop.f32.mrb[0].mxu0
        %v2382 = vpop.f32.mrb[0].mxu0
        %v2383 = vadd.f32 %v317, %v2382
        %v2384 = vpop.f32.mrb[0].mxu0
        %2385 = vmatprep.mubr.bf16.mxu0 0
        %2386 = vmatmul.mubr.bf16.gmra.mrb[0].mxu0 %v2317
        %v2387 = vpop.f32.mrb[0].mxu0
        %v2388 = vadd.f32 %v318, %v2387
        %v2389 = vpop.f32.mrb[0].mxu0
        %v2390 = vpop.f32.mrb[0].mxu0
        %v2391 = vadd.f32 %v319, %v2390
        %v2392 = vpop.f32.mrb[0].mxu0
        %2393 = vmatprep.mubr.bf16.mxu0 0
        %2394 = vmatmul.mubr.bf16.gmra.mrb[0].mxu0 %v2320
        %v2395 = vpop.f32.mrb[0].mxu0
        %v2396 = vadd.f32 %v320, %v2395
        %v2397 = vpop.f32.mrb[0].mxu0
        %v2398 = vpop.f32.mrb[0].mxu0
        %v2399 = vadd.f32 %v321, %v2398
        %v2400 = vpop.f32.mrb[0].mxu0
        %2401 = vmatprep.mubr.bf16.mxu0 0
        %2402 = vmatmul.mubr.bf16.gmra.mrb[0].mxu0 %v2323
        %v2403 = vpop.f32.mrb[0].mxu0
        %v2404 = vadd.f32 %v322, %v2403
        %v2405 = vpop.f32.mrb[0].mxu0
        %v2406 = vpop.f32.mrb[0].mxu0
        %v2407 = vadd.f32 %v323, %v2406
        %v2408 = vpop.f32.mrb[0].mxu0
        %2409 = vmatprep.mubr.bf16.mxu0 0
        %2410 = vmatmul.mubr.bf16.gmra.mrb[0].mxu0 %v2326
        %v2411 = vpop.f32.mrb[0].mxu0
        %v2412 = vadd.f32 %v324, %v2411
        %v2413 = vpop.f32.mrb[0].mxu0
        %v2414 = vpop.f32.mrb[0].mxu0
        %v2415 = vadd.f32 %v325, %v2414
        %v2416 = vpop.f32.mrb[0].mxu0
        %2417 = vmatprep.mubr.bf16.mxu0 0
        %2418 = vmatmul.mubr.bf16.gmra.mrb[0].mxu0 %v2329
        %v2419 = vpop.f32.mrb[0].mxu0
        %v2420 = vadd.f32 %v326, %v2419
        %v2421 = vpop.f32.mrb[0].mxu0
        %v2422 = vpop.f32.mrb[0].mxu0
        %v2423 = vadd.f32 %v327, %v2422
        %v2424 = vpop.f32.mrb[0].mxu0
        %2425 = vmatprep.mubr.bf16.mxu0 0
        %2426 = vmatmul.mubr.bf16.gmra.mrb[0].mxu0 %v2332
        %v2427 = vpop.f32.mrb[0].mxu0
        %v2428 = vadd.f32 %v328, %v2427
        %v2429 = vpop.f32.mrb[0].mxu0
        %v2430 = vpop.f32.mrb[0].mxu0
        %v2431 = vadd.f32 %v329, %v2430
        %v2432 = vpop.f32.mrb[0].mxu0
        %2433 = vdwg.mxu0
        %2434 = vmax.xlane.f32.xlu0 %v2372
        %v2435 = vpop.xlane.xlu0 %2434
        %2436 = vmax.xlane.f32.xlu0 %v2375
        %v2437 = vpop.xlane.xlu0 %2436
        %2438 = vmax.xlane.f32.xlu0 %v2380
        %v2439 = vpop.xlane.xlu0 %2438
        %2440 = vmax.xlane.f32.xlu0 %v2383
        %v2441 = vpop.xlane.xlu0 %2440
        %2442 = vmax.xlane.f32.xlu0 %v2388
        %v2443 = vpop.xlane.xlu0 %2442
        %2444 = vmax.xlane.f32.xlu0 %v2391
        %v2445 = vpop.xlane.xlu0 %2444
        %2446 = vmax.xlane.f32.xlu0 %v2396
        %v2447 = vpop.xlane.xlu0 %2446
        %2448 = vmax.xlane.f32.xlu0 %v2399
        %v2449 = vpop.xlane.xlu0 %2448
        %2450 = vmax.xlane.f32.xlu0 %v2404
        %v2451 = vpop.xlane.xlu0 %2450
        %2452 = vmax.xlane.f32.xlu0 %v2407
        %v2453 = vpop.xlane.xlu0 %2452
        %2454 = vmax.xlane.f32.xlu0 %v2412
        %v2455 = vpop.xlane.xlu0 %2454
        %2456 = vmax.xlane.f32.xlu0 %v2415
        %v2457 = vpop.xlane.xlu0 %2456
        %2458 = vmax.xlane.f32.xlu0 %v2420
        %v2459 = vpop.xlane.xlu0 %2458
        %2460 = vmax.xlane.f32.xlu0 %v2423
        %v2461 = vpop.xlane.xlu0 %2460
        %2462 = vmax.xlane.f32.xlu0 %v2428
        %v2463 = vpop.xlane.xlu0 %2462
        %2464 = vmax.xlane.f32.xlu0 %v2431
        %v2465 = vpop.xlane.xlu0 %2464
        %v2466 = vsub.f32 %v2372, %v2435
        %v2467 = vsub.f32 %v2375, %v2437
        %v2468 = vsub.f32 %v2380, %v2439
        %v2469 = vsub.f32 %v2383, %v2441
        %v2470 = vsub.f32 %v2388, %v2443
        %v2471 = vsub.f32 %v2391, %v2445
        %v2472 = vsub.f32 %v2396, %v2447
        %v2473 = vsub.f32 %v2399, %v2449
        %v2474 = vsub.f32 %v2404, %v2451
        %v2475 = vsub.f32 %v2407, %v2453
        %v2476 = vsub.f32 %v2412, %v2455
        %v2477 = vsub.f32 %v2415, %v2457
        %v2478 = vsub.f32 %v2420, %v2459
        %v2479 = vsub.f32 %v2423, %v2461
        %v2480 = vsub.f32 %v2428, %v2463
        %v2481 = vsub.f32 %v2431, %v2465
        %v2482 = vmul.f32 %v2466, 1.442695
        %v2483 = vpow.pop %v2482
        %v2484 = vmul.f32 %v2467, 1.442695
        %v2485 = vpow.pop %v2484
        %v2486 = vmul.f32 %v2468, 1.442695
        %v2487 = vpow.pop %v2486
        %v2488 = vmul.f32 %v2469, 1.442695
        %v2489 = vpow.pop %v2488
        %v2490 = vmul.f32 %v2470, 1.442695
        %v2491 = vpow.pop %v2490
        %v2492 = vmul.f32 %v2471, 1.442695
        %v2493 = vpow.pop %v2492
        %v2494 = vmul.f32 %v2472, 1.442695
        %v2495 = vpow.pop %v2494
        %v2496 = vmul.f32 %v2473, 1.442695
        %v2497 = vpow.pop %v2496
        %v2498 = vmul.f32 %v2474, 1.442695
        %v2499 = vpow.pop %v2498
        %v2500 = vmul.f32 %v2475, 1.442695
        %v2501 = vpow.pop %v2500
        %v2502 = vmul.f32 %v2476, 1.442695
        %v2503 = vpow.pop %v2502
        %v2504 = vmul.f32 %v2477, 1.442695
        %v2505 = vpow.pop %v2504
        %v2506 = vmul.f32 %v2478, 1.442695
        %v2507 = vpow.pop %v2506
        %v2508 = vmul.f32 %v2479, 1.442695
        %v2509 = vpow.pop %v2508
        %v2510 = vmul.f32 %v2480, 1.442695
        %v2511 = vpow.pop %v2510
        %v2512 = vmul.f32 %v2481, 1.442695
        %v2513 = vpow.pop %v2512
        %v2514 = vpack.c.bf16 %v2485, %v2483
        %v2515 = vpack.c.bf16 %v2489, %v2487
        %v2516 = vpack.c.bf16 %v2493, %v2491
        %v2517 = vpack.c.bf16 %v2497, %v2495
        %v2518 = vpack.c.bf16 %v2501, %v2499
        %v2519 = vpack.c.bf16 %v2505, %v2503
        %v2520 = vpack.c.bf16 %v2509, %v2507
        %v2521 = vpack.c.bf16 %v2513, %v2511
        %2522 = vmatprep.subr.bf16.mxu0 0
        %2523 = vmatpush1.bf16.xpose.msra.mxu0 %v2514
        %2524 = vmatprep.subr.bf16.mxu0 0
        %2525 = vmatpush1.bf16.xpose.msra.mxu0 %v2515
        %2526 = vmatprep.subr.bf16.mxu0 0
        %2527 = vmatpush1.bf16.xpose.msra.mxu0 %v2516
        %2528 = vmatprep.subr.bf16.mxu0 0
        %2529 = vmatpush1.bf16.xpose.msra.mxu0 %v2517
        %2530 = vmatprep.subr.bf16.mxu0 0
        %2531 = vmatpush1.bf16.xpose.msra.mxu0 %v2518
        %2532 = vmatprep.subr.bf16.mxu0 0
        %2533 = vmatpush1.bf16.xpose.msra.mxu0 %v2519
        %2534 = vmatprep.subr.bf16.mxu0 0
        %2535 = vmatpush1.bf16.xpose.msra.mxu0 %v2520
        %2536 = vmatprep.subr.bf16.mxu0 0
        %2537 = vmatpush1.bf16.xpose.msra.mxu0 %v2521
        %2538 = vmatprep.subr.bf16.mxu0 0
        %2539 = vmatpush1.bf16.xpose.msra.mxu0 0
        %2540 = vmatprep.subr.bf16.mxu0 0
        %2541 = vmatpush1.bf16.xpose.msra.mxu0 0
        %2542 = vmatprep.subr.bf16.mxu0 0
        %2543 = vmatpush1.bf16.xpose.msra.mxu0 0
        %2544 = vmatprep.subr.bf16.mxu0 0
        %2545 = vmatpush1.bf16.xpose.msra.mxu0 0
        %2546 = vmatprep.subr.bf16.mxu0 0
        %2547 = vmatpush1.bf16.xpose.msra.mxu0 0
        %2548 = vmatprep.subr.bf16.mxu0 0
        %2549 = vmatpush1.bf16.xpose.msra.mxu0 0
        %2550 = vmatprep.subr.bf16.mxu0 0
        %2551 = vmatpush1.bf16.xpose.msra.mxu0 0
        %2552 = vmatprep.subr.bf16.mxu0 0
        %2553 = vmatpush1.bf16.xpose.msra.mxu0 0
        %2554 = vmatprep.mubr.bf16.mxu0 0
        %2555 = vmatmul.mubr.bf16.gmra.mrb[0].mxu0 %v2293
        %v2556 = vpop.f32.mrb[0].mxu0
        %v2557 = vadd.f32 0.0, %v2556
        %v2558 = vpop.f32.mrb[0].mxu0
        %v2559 = vpop.f32.mrb[0].mxu0
        %v2560 = vpop.f32.mrb[0].mxu0
        %2561 = vdwg.mxu0
        %2562 = vmatprep.subr.bf16.mxu0 0
        %2563 = vmatpush1.bf16.xpose.msra.mxu0 %v2514
        %2564 = vmatprep.subr.bf16.mxu0 0
        %2565 = vmatpush1.bf16.xpose.msra.mxu0 %v2515
        %2566 = vmatprep.subr.bf16.mxu0 0
        %2567 = vmatpush1.bf16.xpose.msra.mxu0 %v2516
        %2568 = vmatprep.subr.bf16.mxu0 0
        %2569 = vmatpush1.bf16.xpose.msra.mxu0 %v2517
        %2570 = vmatprep.subr.bf16.mxu0 0
        %2571 = vmatpush1.bf16.xpose.msra.mxu0 %v2518
        %2572 = vmatprep.subr.bf16.mxu0 0
        %2573 = vmatpush1.bf16.xpose.msra.mxu0 %v2519
        %2574 = vmatprep.subr.bf16.mxu0 0
        %2575 = vmatpush1.bf16.xpose.msra.mxu0 %v2520
        %2576 = vmatprep.subr.bf16.mxu0 0
        %2577 = vmatpush1.bf16.xpose.msra.mxu0 %v2521
        %2578 = vmatprep.subr.bf16.mxu0 0
        %2579 = vmatpush1.bf16.xpose.msra.mxu0 0
        %2580 = vmatprep.subr.bf16.mxu0 0
        %2581 = vmatpush1.bf16.xpose.msra.mxu0 0
        %2582 = vmatprep.subr.bf16.mxu0 0
        %2583 = vmatpush1.bf16.xpose.msra.mxu0 0
        %2584 = vmatprep.subr.bf16.mxu0 0
        %2585 = vmatpush1.bf16.xpose.msra.mxu0 0
        %2586 = vmatprep.subr.bf16.mxu0 0
        %2587 = vmatpush1.bf16.xpose.msra.mxu0 0
        %2588 = vmatprep.subr.bf16.mxu0 0
        %2589 = vmatpush1.bf16.xpose.msra.mxu0 0
        %2590 = vmatprep.subr.bf16.mxu0 0
        %2591 = vmatpush1.bf16.xpose.msra.mxu0 0
        %2592 = vmatprep.subr.bf16.mxu0 0
        %2593 = vmatpush1.bf16.xpose.msra.mxu0 0
        %2594 = vmatprep.mubr.bf16.mxu0 0
        %2595 = vmatmul.mubr.bf16.gmra.mrb[0].mxu0 1065369472
        %v2596 = vpop.f32.mrb[0].mxu0
        %v2597 = vadd.f32 0.0, %v2596
        %v2598 = vpop.f32.mrb[0].mxu0
        %v2599 = vpop.f32.mrb[0].mxu0
        %v2600 = vpop.f32.mrb[0].mxu0
        %2601 = vdwg.mxu0
        %v2602 = vrcp.pop %v2597
        %v2603 = vlaneseq
        %v2604 = vshrl.u32 %v2603, 7
        %v2605 = vsub.s32 0, %v2604
        %v2606 = vrot.slane %v2602, %v2605
        %v2607 = vmul.f32 %v2557, %v2606
        %s2608 = scalar_lea.vmem %s307, 48 [#allocation10]
        %2609 = vst [vmem:[%s2608] sm:$0xff] %v2607
        %s2610 = scalar_lea.vmem %s251, 56 [#allocation2]
        %v2611 = vld [vmem:[%s2610] sm:$0xff]
        %v2612 = vmul.f32 %v2611, 0.35355338
        %v2613 = vpack.c.bf16 %v2612, %v2612
        %s2614 = scalar_lea.vmem %s260, 56 [#allocation5]
        %v2615 = vld [vmem:[%s2614] sm:$0xff]
        %v2616 = vpack.c.bf16 %v2615, %v2615
        %s2617 = scalar_lea.vmem %s269, 56 [#allocation7]
        %v2618 = vld [vmem:[%s2617] sm:$0xff]
        %v2619 = vpack.c.bf16 %v2618, %v2618
        %2620 = vxpose.xlu0.c.b16.start [1/8] %v2613, 128
        %2621 = vxpose.xlu0.c.b16.cont [2/8] 0, 128
        %2622 = vxpose.xlu0.c.b16.cont [3/8] 0, 128
        %2623 = vxpose.xlu0.c.b16.cont [4/8] 0, 128
        %2624 = vxpose.xlu0.c.b16.cont [5/8] 0, 128
        %2625 = vxpose.xlu0.c.b16.cont [6/8] 0, 128
        %2626 = vxpose.xlu0.c.b16.cont [7/8] 0, 128
        %2627 = vxpose.xlu0.c.b16.end [8/8] 0, 128
        %v2628 = vpop.trf.xlu0
        %v2629 = vpop.trf.xlu0
        %v2630 = vpop.trf.xlu0
        %v2631 = vpop.trf.xlu0
        %v2632 = vpop.trf.xlu0
        %v2633 = vpop.trf.xlu0
        %v2634 = vpop.trf.xlu0
        %v2635 = vpop.trf.xlu0
        %v2637 = vsel %vm353, %v2628, 0
        %v2640 = vsel %vm353, %v2629, 0
        %v2643 = vsel %vm353, %v2630, 0
        %v2646 = vsel %vm353, %v2631, 0
        %v2649 = vsel %vm353, %v2632, 0
        %v2652 = vsel %vm353, %v2633, 0
        %v2655 = vsel %vm353, %v2634, 0
        %v2658 = vsel %vm353, %v2635, 0
        %v2661 = vsel %vm378, %v2616, 0
        %2663 = vmatprep.subr.bf16.mxu0 0
        %2664 = vmatpush1.bf16.msra.mxu0 %v2661
        %2665 = vmatprep.subr.bf16.mxu0 0
        %2666 = vmatpush1.bf16.msra.mxu0 0
        %2667 = vmatprep.subr.bf16.mxu0 0
        %2668 = vmatpush1.bf16.msra.mxu0 0
        %2669 = vmatprep.subr.bf16.mxu0 0
        %2670 = vmatpush1.bf16.msra.mxu0 0
        %2671 = vmatprep.subr.bf16.mxu0 0
        %2672 = vmatpush1.bf16.msra.mxu0 0
        %2673 = vmatprep.subr.bf16.mxu0 0
        %2674 = vmatpush1.bf16.msra.mxu0 0
        %2675 = vmatprep.subr.bf16.mxu0 0
        %2676 = vmatpush1.bf16.msra.mxu0 0
        %2677 = vmatprep.subr.bf16.mxu0 0
        %2678 = vmatpush1.bf16.msra.mxu0 0
        %2679 = vmatprep.subr.bf16.mxu0 0
        %2680 = vmatpush1.bf16.msra.mxu0 0
        %2681 = vmatprep.subr.bf16.mxu0 0
        %2682 = vmatpush1.bf16.msra.mxu0 0
        %2683 = vmatprep.subr.bf16.mxu0 0
        %2684 = vmatpush1.bf16.msra.mxu0 0
        %2685 = vmatprep.subr.bf16.mxu0 0
        %2686 = vmatpush1.bf16.msra.mxu0 0
        %2687 = vmatprep.subr.bf16.mxu0 0
        %2688 = vmatpush1.bf16.msra.mxu0 0
        %2689 = vmatprep.subr.bf16.mxu0 0
        %2690 = vmatpush1.bf16.msra.mxu0 0
        %2691 = vmatprep.subr.bf16.mxu0 0
        %2692 = vmatpush1.bf16.msra.mxu0 0
        %2693 = vmatprep.subr.bf16.mxu0 0
        %2694 = vmatpush1.bf16.msra.mxu0 0
        %2695 = vmatprep.mubr.bf16.mxu0 0
        %2696 = vmatmul.mubr.bf16.gmra.mrb[0].mxu0 %v2637
        %v2697 = vpop.f32.mrb[0].mxu0
        %v2698 = vadd.f32 %v314, %v2697
        %v2699 = vpop.f32.mrb[0].mxu0
        %v2700 = vpop.f32.mrb[0].mxu0
        %v2701 = vadd.f32 %v315, %v2700
        %v2702 = vpop.f32.mrb[0].mxu0
        %2703 = vmatprep.mubr.bf16.mxu0 0
        %2704 = vmatmul.mubr.bf16.gmra.mrb[0].mxu0 %v2640
        %v2705 = vpop.f32.mrb[0].mxu0
        %v2706 = vadd.f32 %v316, %v2705
        %v2707 = vpop.f32.mrb[0].mxu0
        %v2708 = vpop.f32.mrb[0].mxu0
        %v2709 = vadd.f32 %v317, %v2708
        %v2710 = vpop.f32.mrb[0].mxu0
        %2711 = vmatprep.mubr.bf16.mxu0 0
        %2712 = vmatmul.mubr.bf16.gmra.mrb[0].mxu0 %v2643
        %v2713 = vpop.f32.mrb[0].mxu0
        %v2714 = vadd.f32 %v318, %v2713
        %v2715 = vpop.f32.mrb[0].mxu0
        %v2716 = vpop.f32.mrb[0].mxu0
        %v2717 = vadd.f32 %v319, %v2716
        %v2718 = vpop.f32.mrb[0].mxu0
        %2719 = vmatprep.mubr.bf16.mxu0 0
        %2720 = vmatmul.mubr.bf16.gmra.mrb[0].mxu0 %v2646
        %v2721 = vpop.f32.mrb[0].mxu0
        %v2722 = vadd.f32 %v320, %v2721
        %v2723 = vpop.f32.mrb[0].mxu0
        %v2724 = vpop.f32.mrb[0].mxu0
        %v2725 = vadd.f32 %v321, %v2724
        %v2726 = vpop.f32.mrb[0].mxu0
        %2727 = vmatprep.mubr.bf16.mxu0 0
        %2728 = vmatmul.mubr.bf16.gmra.mrb[0].mxu0 %v2649
        %v2729 = vpop.f32.mrb[0].mxu0
        %v2730 = vadd.f32 %v322, %v2729
        %v2731 = vpop.f32.mrb[0].mxu0
        %v2732 = vpop.f32.mrb[0].mxu0
        %v2733 = vadd.f32 %v323, %v2732
        %v2734 = vpop.f32.mrb[0].mxu0
        %2735 = vmatprep.mubr.bf16.mxu0 0
        %2736 = vmatmul.mubr.bf16.gmra.mrb[0].mxu0 %v2652
        %v2737 = vpop.f32.mrb[0].mxu0
        %v2738 = vadd.f32 %v324, %v2737
        %v2739 = vpop.f32.mrb[0].mxu0
        %v2740 = vpop.f32.mrb[0].mxu0
        %v2741 = vadd.f32 %v325, %v2740
        %v2742 = vpop.f32.mrb[0].mxu0
        %2743 = vmatprep.mubr.bf16.mxu0 0
        %2744 = vmatmul.mubr.bf16.gmra.mrb[0].mxu0 %v2655
        %v2745 = vpop.f32.mrb[0].mxu0
        %v2746 = vadd.f32 %v326, %v2745
        %v2747 = vpop.f32.mrb[0].mxu0
        %v2748 = vpop.f32.mrb[0].mxu0
        %v2749 = vadd.f32 %v327, %v2748
        %v2750 = vpop.f32.mrb[0].mxu0
        %2751 = vmatprep.mubr.bf16.mxu0 0
        %2752 = vmatmul.mubr.bf16.gmra.mrb[0].mxu0 %v2658
        %v2753 = vpop.f32.mrb[0].mxu0
        %v2754 = vadd.f32 %v328, %v2753
        %v2755 = vpop.f32.mrb[0].mxu0
        %v2756 = vpop.f32.mrb[0].mxu0
        %v2757 = vadd.f32 %v329, %v2756
        %v2758 = vpop.f32.mrb[0].mxu0
        %2759 = vdwg.mxu0
        %2760 = vmax.xlane.f32.xlu0 %v2698
        %v2761 = vpop.xlane.xlu0 %2760
        %2762 = vmax.xlane.f32.xlu0 %v2701
        %v2763 = vpop.xlane.xlu0 %2762
        %2764 = vmax.xlane.f32.xlu0 %v2706
        %v2765 = vpop.xlane.xlu0 %2764
        %2766 = vmax.xlane.f32.xlu0 %v2709
        %v2767 = vpop.xlane.xlu0 %2766
        %2768 = vmax.xlane.f32.xlu0 %v2714
        %v2769 = vpop.xlane.xlu0 %2768
        %2770 = vmax.xlane.f32.xlu0 %v2717
        %v2771 = vpop.xlane.xlu0 %2770
        %2772 = vmax.xlane.f32.xlu0 %v2722
        %v2773 = vpop.xlane.xlu0 %2772
        %2774 = vmax.xlane.f32.xlu0 %v2725
        %v2775 = vpop.xlane.xlu0 %2774
        %2776 = vmax.xlane.f32.xlu0 %v2730
        %v2777 = vpop.xlane.xlu0 %2776
        %2778 = vmax.xlane.f32.xlu0 %v2733
        %v2779 = vpop.xlane.xlu0 %2778
        %2780 = vmax.xlane.f32.xlu0 %v2738
        %v2781 = vpop.xlane.xlu0 %2780
        %2782 = vmax.xlane.f32.xlu0 %v2741
        %v2783 = vpop.xlane.xlu0 %2782
        %2784 = vmax.xlane.f32.xlu0 %v2746
        %v2785 = vpop.xlane.xlu0 %2784
        %2786 = vmax.xlane.f32.xlu0 %v2749
        %v2787 = vpop.xlane.xlu0 %2786
        %2788 = vmax.xlane.f32.xlu0 %v2754
        %v2789 = vpop.xlane.xlu0 %2788
        %2790 = vmax.xlane.f32.xlu0 %v2757
        %v2791 = vpop.xlane.xlu0 %2790
        %v2792 = vsub.f32 %v2698, %v2761
        %v2793 = vsub.f32 %v2701, %v2763
        %v2794 = vsub.f32 %v2706, %v2765
        %v2795 = vsub.f32 %v2709, %v2767
        %v2796 = vsub.f32 %v2714, %v2769
        %v2797 = vsub.f32 %v2717, %v2771
        %v2798 = vsub.f32 %v2722, %v2773
        %v2799 = vsub.f32 %v2725, %v2775
        %v2800 = vsub.f32 %v2730, %v2777
        %v2801 = vsub.f32 %v2733, %v2779
        %v2802 = vsub.f32 %v2738, %v2781
        %v2803 = vsub.f32 %v2741, %v2783
        %v2804 = vsub.f32 %v2746, %v2785
        %v2805 = vsub.f32 %v2749, %v2787
        %v2806 = vsub.f32 %v2754, %v2789
        %v2807 = vsub.f32 %v2757, %v2791
        %v2808 = vmul.f32 %v2792, 1.442695
        %v2809 = vpow.pop %v2808
        %v2810 = vmul.f32 %v2793, 1.442695
        %v2811 = vpow.pop %v2810
        %v2812 = vmul.f32 %v2794, 1.442695
        %v2813 = vpow.pop %v2812
        %v2814 = vmul.f32 %v2795, 1.442695
        %v2815 = vpow.pop %v2814
        %v2816 = vmul.f32 %v2796, 1.442695
        %v2817 = vpow.pop %v2816
        %v2818 = vmul.f32 %v2797, 1.442695
        %v2819 = vpow.pop %v2818
        %v2820 = vmul.f32 %v2798, 1.442695
        %v2821 = vpow.pop %v2820
        %v2822 = vmul.f32 %v2799, 1.442695
        %v2823 = vpow.pop %v2822
        %v2824 = vmul.f32 %v2800, 1.442695
        %v2825 = vpow.pop %v2824
        %v2826 = vmul.f32 %v2801, 1.442695
        %v2827 = vpow.pop %v2826
        %v2828 = vmul.f32 %v2802, 1.442695
        %v2829 = vpow.pop %v2828
        %v2830 = vmul.f32 %v2803, 1.442695
        %v2831 = vpow.pop %v2830
        %v2832 = vmul.f32 %v2804, 1.442695
        %v2833 = vpow.pop %v2832
        %v2834 = vmul.f32 %v2805, 1.442695
        %v2835 = vpow.pop %v2834
        %v2836 = vmul.f32 %v2806, 1.442695
        %v2837 = vpow.pop %v2836
        %v2838 = vmul.f32 %v2807, 1.442695
        %v2839 = vpow.pop %v2838
        %v2840 = vpack.c.bf16 %v2811, %v2809
        %v2841 = vpack.c.bf16 %v2815, %v2813
        %v2842 = vpack.c.bf16 %v2819, %v2817
        %v2843 = vpack.c.bf16 %v2823, %v2821
        %v2844 = vpack.c.bf16 %v2827, %v2825
        %v2845 = vpack.c.bf16 %v2831, %v2829
        %v2846 = vpack.c.bf16 %v2835, %v2833
        %v2847 = vpack.c.bf16 %v2839, %v2837
        %2848 = vmatprep.subr.bf16.mxu0 0
        %2849 = vmatpush1.bf16.xpose.msra.mxu0 %v2840
        %2850 = vmatprep.subr.bf16.mxu0 0
        %2851 = vmatpush1.bf16.xpose.msra.mxu0 %v2841
        %2852 = vmatprep.subr.bf16.mxu0 0
        %2853 = vmatpush1.bf16.xpose.msra.mxu0 %v2842
        %2854 = vmatprep.subr.bf16.mxu0 0
        %2855 = vmatpush1.bf16.xpose.msra.mxu0 %v2843
        %2856 = vmatprep.subr.bf16.mxu0 0
        %2857 = vmatpush1.bf16.xpose.msra.mxu0 %v2844
        %2858 = vmatprep.subr.bf16.mxu0 0
        %2859 = vmatpush1.bf16.xpose.msra.mxu0 %v2845
        %2860 = vmatprep.subr.bf16.mxu0 0
        %2861 = vmatpush1.bf16.xpose.msra.mxu0 %v2846
        %2862 = vmatprep.subr.bf16.mxu0 0
        %2863 = vmatpush1.bf16.xpose.msra.mxu0 %v2847
        %2864 = vmatprep.subr.bf16.mxu0 0
        %2865 = vmatpush1.bf16.xpose.msra.mxu0 0
        %2866 = vmatprep.subr.bf16.mxu0 0
        %2867 = vmatpush1.bf16.xpose.msra.mxu0 0
        %2868 = vmatprep.subr.bf16.mxu0 0
        %2869 = vmatpush1.bf16.xpose.msra.mxu0 0
        %2870 = vmatprep.subr.bf16.mxu0 0
        %2871 = vmatpush1.bf16.xpose.msra.mxu0 0
        %2872 = vmatprep.subr.bf16.mxu0 0
        %2873 = vmatpush1.bf16.xpose.msra.mxu0 0
        %2874 = vmatprep.subr.bf16.mxu0 0
        %2875 = vmatpush1.bf16.xpose.msra.mxu0 0
        %2876 = vmatprep.subr.bf16.mxu0 0
        %2877 = vmatpush1.bf16.xpose.msra.mxu0 0
        %2878 = vmatprep.subr.bf16.mxu0 0
        %2879 = vmatpush1.bf16.xpose.msra.mxu0 0
        %2880 = vmatprep.mubr.bf16.mxu0 0
        %2881 = vmatmul.mubr.bf16.gmra.mrb[0].mxu0 %v2619
        %v2882 = vpop.f32.mrb[0].mxu0
        %v2883 = vadd.f32 0.0, %v2882
        %v2884 = vpop.f32.mrb[0].mxu0
        %v2885 = vpop.f32.mrb[0].mxu0
        %v2886 = vpop.f32.mrb[0].mxu0
        %2887 = vdwg.mxu0
        %2888 = vmatprep.subr.bf16.mxu0 0
        %2889 = vmatpush1.bf16.xpose.msra.mxu0 %v2840
        %2890 = vmatprep.subr.bf16.mxu0 0
        %2891 = vmatpush1.bf16.xpose.msra.mxu0 %v2841
        %2892 = vmatprep.subr.bf16.mxu0 0
        %2893 = vmatpush1.bf16.xpose.msra.mxu0 %v2842
        %2894 = vmatprep.subr.bf16.mxu0 0
        %2895 = vmatpush1.bf16.xpose.msra.mxu0 %v2843
        %2896 = vmatprep.subr.bf16.mxu0 0
        %2897 = vmatpush1.bf16.xpose.msra.mxu0 %v2844
        %2898 = vmatprep.subr.bf16.mxu0 0
        %2899 = vmatpush1.bf16.xpose.msra.mxu0 %v2845
        %2900 = vmatprep.subr.bf16.mxu0 0
        %2901 = vmatpush1.bf16.xpose.msra.mxu0 %v2846
        %2902 = vmatprep.subr.bf16.mxu0 0
        %2903 = vmatpush1.bf16.xpose.msra.mxu0 %v2847
        %2904 = vmatprep.subr.bf16.mxu0 0
        %2905 = vmatpush1.bf16.xpose.msra.mxu0 0
        %2906 = vmatprep.subr.bf16.mxu0 0
        %2907 = vmatpush1.bf16.xpose.msra.mxu0 0
        %2908 = vmatprep.subr.bf16.mxu0 0
        %2909 = vmatpush1.bf16.xpose.msra.mxu0 0
        %2910 = vmatprep.subr.bf16.mxu0 0
        %2911 = vmatpush1.bf16.xpose.msra.mxu0 0
        %2912 = vmatprep.subr.bf16.mxu0 0
        %2913 = vmatpush1.bf16.xpose.msra.mxu0 0
        %2914 = vmatprep.subr.bf16.mxu0 0
        %2915 = vmatpush1.bf16.xpose.msra.mxu0 0
        %2916 = vmatprep.subr.bf16.mxu0 0
        %2917 = vmatpush1.bf16.xpose.msra.mxu0 0
        %2918 = vmatprep.subr.bf16.mxu0 0
        %2919 = vmatpush1.bf16.xpose.msra.mxu0 0
        %2920 = vmatprep.mubr.bf16.mxu0 0
        %2921 = vmatmul.mubr.bf16.gmra.mrb[0].mxu0 1065369472
        %v2922 = vpop.f32.mrb[0].mxu0
        %v2923 = vadd.f32 0.0, %v2922
        %v2924 = vpop.f32.mrb[0].mxu0
        %v2925 = vpop.f32.mrb[0].mxu0
        %v2926 = vpop.f32.mrb[0].mxu0
        %2927 = vdwg.mxu0
        %v2928 = vrcp.pop %v2923
        %v2929 = vlaneseq
        %v2930 = vshrl.u32 %v2929, 7
        %v2931 = vsub.s32 0, %v2930
        %v2932 = vrot.slane %v2928, %v2931
        %v2933 = vmul.f32 %v2883, %v2932
        %s2934 = scalar_lea.vmem %s307, 56 [#allocation10]
        %2935 = vst [vmem:[%s2934] sm:$0xff] %v2933
        %s2936 = scalar_lea.vmem %s251, 64 [#allocation2]
        %v2937 = vld [vmem:[%s2936] sm:$0xff]
        %v2938 = vmul.f32 %v2937, 0.35355338
        %v2939 = vpack.c.bf16 %v2938, %v2938
        %s2940 = scalar_lea.vmem %s260, 64 [#allocation5]
        %v2941 = vld [vmem:[%s2940] sm:$0xff]
        %v2942 = vpack.c.bf16 %v2941, %v2941
        %s2943 = scalar_lea.vmem %s269, 64 [#allocation7]
        %v2944 = vld [vmem:[%s2943] sm:$0xff]
        %v2945 = vpack.c.bf16 %v2944, %v2944
        %2946 = vxpose.xlu0.c.b16.start [1/8] %v2939, 128
        %2947 = vxpose.xlu0.c.b16.cont [2/8] 0, 128
        %2948 = vxpose.xlu0.c.b16.cont [3/8] 0, 128
        %2949 = vxpose.xlu0.c.b16.cont [4/8] 0, 128
        %2950 = vxpose.xlu0.c.b16.cont [5/8] 0, 128
        %2951 = vxpose.xlu0.c.b16.cont [6/8] 0, 128
        %2952 = vxpose.xlu0.c.b16.cont [7/8] 0, 128
        %2953 = vxpose.xlu0.c.b16.end [8/8] 0, 128
        %v2954 = vpop.trf.xlu0
        %v2955 = vpop.trf.xlu0
        %v2956 = vpop.trf.xlu0
        %v2957 = vpop.trf.xlu0
        %v2958 = vpop.trf.xlu0
        %v2959 = vpop.trf.xlu0
        %v2960 = vpop.trf.xlu0
        %v2961 = vpop.trf.xlu0
        %v2963 = vsel %vm353, %v2954, 0
        %v2966 = vsel %vm353, %v2955, 0
        %v2969 = vsel %vm353, %v2956, 0
        %v2972 = vsel %vm353, %v2957, 0
        %v2975 = vsel %vm353, %v2958, 0
        %v2978 = vsel %vm353, %v2959, 0
        %v2981 = vsel %vm353, %v2960, 0
        %v2984 = vsel %vm353, %v2961, 0
        %v2987 = vsel %vm378, %v2942, 0
        %2989 = vmatprep.subr.bf16.mxu0 0
        %2990 = vmatpush1.bf16.msra.mxu0 %v2987
        %2991 = vmatprep.subr.bf16.mxu0 0
        %2992 = vmatpush1.bf16.msra.mxu0 0
        %2993 = vmatprep.subr.bf16.mxu0 0
        %2994 = vmatpush1.bf16.msra.mxu0 0
        %2995 = vmatprep.subr.bf16.mxu0 0
        %2996 = vmatpush1.bf16.msra.mxu0 0
        %2997 = vmatprep.subr.bf16.mxu0 0
        %2998 = vmatpush1.bf16.msra.mxu0 0
        %2999 = vmatprep.subr.bf16.mxu0 0
        %3000 = vmatpush1.bf16.msra.mxu0 0
        %3001 = vmatprep.subr.bf16.mxu0 0
        %3002 = vmatpush1.bf16.msra.mxu0 0
        %3003 = vmatprep.subr.bf16.mxu0 0
        %3004 = vmatpush1.bf16.msra.mxu0 0
        %3005 = vmatprep.subr.bf16.mxu0 0
        %3006 = vmatpush1.bf16.msra.mxu0 0
        %3007 = vmatprep.subr.bf16.mxu0 0
        %3008 = vmatpush1.bf16.msra.mxu0 0
        %3009 = vmatprep.subr.bf16.mxu0 0
        %3010 = vmatpush1.bf16.msra.mxu0 0
        %3011 = vmatprep.subr.bf16.mxu0 0
        %3012 = vmatpush1.bf16.msra.mxu0 0
        %3013 = vmatprep.subr.bf16.mxu0 0
        %3014 = vmatpush1.bf16.msra.mxu0 0
        %3015 = vmatprep.subr.bf16.mxu0 0
        %3016 = vmatpush1.bf16.msra.mxu0 0
        %3017 = vmatprep.subr.bf16.mxu0 0
        %3018 = vmatpush1.bf16.msra.mxu0 0
        %3019 = vmatprep.subr.bf16.mxu0 0
        %3020 = vmatpush1.bf16.msra.mxu0 0
        %3021 = vmatprep.mubr.bf16.mxu0 0
        %3022 = vmatmul.mubr.bf16.gmra.mrb[0].mxu0 %v2963
        %v3023 = vpop.f32.mrb[0].mxu0
        %v3024 = vadd.f32 %v314, %v3023
        %v3025 = vpop.f32.mrb[0].mxu0
        %v3026 = vpop.f32.mrb[0].mxu0
        %v3027 = vadd.f32 %v315, %v3026
        %v3028 = vpop.f32.mrb[0].mxu0
        %3029 = vmatprep.mubr.bf16.mxu0 0
        %3030 = vmatmul.mubr.bf16.gmra.mrb[0].mxu0 %v2966
        %v3031 = vpop.f32.mrb[0].mxu0
        %v3032 = vadd.f32 %v316, %v3031
        %v3033 = vpop.f32.mrb[0].mxu0
        %v3034 = vpop.f32.mrb[0].mxu0
        %v3035 = vadd.f32 %v317, %v3034
        %v3036 = vpop.f32.mrb[0].mxu0
        %3037 = vmatprep.mubr.bf16.mxu0 0
        %3038 = vmatmul.mubr.bf16.gmra.mrb[0].mxu0 %v2969
        %v3039 = vpop.f32.mrb[0].mxu0
        %v3040 = vadd.f32 %v318, %v3039
        %v3041 = vpop.f32.mrb[0].mxu0
        %v3042 = vpop.f32.mrb[0].mxu0
        %v3043 = vadd.f32 %v319, %v3042
        %v3044 = vpop.f32.mrb[0].mxu0
        %3045 = vmatprep.mubr.bf16.mxu0 0
        %3046 = vmatmul.mubr.bf16.gmra.mrb[0].mxu0 %v2972
        %v3047 = vpop.f32.mrb[0].mxu0
        %v3048 = vadd.f32 %v320, %v3047
        %v3049 = vpop.f32.mrb[0].mxu0
        %v3050 = vpop.f32.mrb[0].mxu0
        %v3051 = vadd.f32 %v321, %v3050
        %v3052 = vpop.f32.mrb[0].mxu0
        %3053 = vmatprep.mubr.bf16.mxu0 0
        %3054 = vmatmul.mubr.bf16.gmra.mrb[0].mxu0 %v2975
        %v3055 = vpop.f32.mrb[0].mxu0
        %v3056 = vadd.f32 %v322, %v3055
        %v3057 = vpop.f32.mrb[0].mxu0
        %v3058 = vpop.f32.mrb[0].mxu0
        %v3059 = vadd.f32 %v323, %v3058
        %v3060 = vpop.f32.mrb[0].mxu0
        %3061 = vmatprep.mubr.bf16.mxu0 0
        %3062 = vmatmul.mubr.bf16.gmra.mrb[0].mxu0 %v2978
        %v3063 = vpop.f32.mrb[0].mxu0
        %v3064 = vadd.f32 %v324, %v3063
        %v3065 = vpop.f32.mrb[0].mxu0
        %v3066 = vpop.f32.mrb[0].mxu0
        %v3067 = vadd.f32 %v325, %v3066
        %v3068 = vpop.f32.mrb[0].mxu0
        %3069 = vmatprep.mubr.bf16.mxu0 0
        %3070 = vmatmul.mubr.bf16.gmra.mrb[0].mxu0 %v2981
        %v3071 = vpop.f32.mrb[0].mxu0
        %v3072 = vadd.f32 %v326, %v3071
        %v3073 = vpop.f32.mrb[0].mxu0
        %v3074 = vpop.f32.mrb[0].mxu0
        %v3075 = vadd.f32 %v327, %v3074
        %v3076 = vpop.f32.mrb[0].mxu0
        %3077 = vmatprep.mubr.bf16.mxu0 0
        %3078 = vmatmul.mubr.bf16.gmra.mrb[0].mxu0 %v2984
        %v3079 = vpop.f32.mrb[0].mxu0
        %v3080 = vadd.f32 %v328, %v3079
        %v3081 = vpop.f32.mrb[0].mxu0
        %v3082 = vpop.f32.mrb[0].mxu0
        %v3083 = vadd.f32 %v329, %v3082
        %v3084 = vpop.f32.mrb[0].mxu0
        %3085 = vdwg.mxu0
        %3086 = vmax.xlane.f32.xlu0 %v3024
        %v3087 = vpop.xlane.xlu0 %3086
        %3088 = vmax.xlane.f32.xlu0 %v3027
        %v3089 = vpop.xlane.xlu0 %3088
        %3090 = vmax.xlane.f32.xlu0 %v3032
        %v3091 = vpop.xlane.xlu0 %3090
        %3092 = vmax.xlane.f32.xlu0 %v3035
        %v3093 = vpop.xlane.xlu0 %3092
        %3094 = vmax.xlane.f32.xlu0 %v3040
        %v3095 = vpop.xlane.xlu0 %3094
        %3096 = vmax.xlane.f32.xlu0 %v3043
        %v3097 = vpop.xlane.xlu0 %3096
        %3098 = vmax.xlane.f32.xlu0 %v3048
        %v3099 = vpop.xlane.xlu0 %3098
        %3100 = vmax.xlane.f32.xlu0 %v3051
        %v3101 = vpop.xlane.xlu0 %3100
        %3102 = vmax.xlane.f32.xlu0 %v3056
        %v3103 = vpop.xlane.xlu0 %3102
        %3104 = vmax.xlane.f32.xlu0 %v3059
        %v3105 = vpop.xlane.xlu0 %3104
        %3106 = vmax.xlane.f32.xlu0 %v3064
        %v3107 = vpop.xlane.xlu0 %3106
        %3108 = vmax.xlane.f32.xlu0 %v3067
        %v3109 = vpop.xlane.xlu0 %3108
        %3110 = vmax.xlane.f32.xlu0 %v3072
        %v3111 = vpop.xlane.xlu0 %3110
        %3112 = vmax.xlane.f32.xlu0 %v3075
        %v3113 = vpop.xlane.xlu0 %3112
        %3114 = vmax.xlane.f32.xlu0 %v3080
        %v3115 = vpop.xlane.xlu0 %3114
        %3116 = vmax.xlane.f32.xlu0 %v3083
        %v3117 = vpop.xlane.xlu0 %3116
        %v3118 = vsub.f32 %v3024, %v3087
        %v3119 = vsub.f32 %v3027, %v3089
        %v3120 = vsub.f32 %v3032, %v3091
        %v3121 = vsub.f32 %v3035, %v3093
        %v3122 = vsub.f32 %v3040, %v3095
        %v3123 = vsub.f32 %v3043, %v3097
        %v3124 = vsub.f32 %v3048, %v3099
        %v3125 = vsub.f32 %v3051, %v3101
        %v3126 = vsub.f32 %v3056, %v3103
        %v3127 = vsub.f32 %v3059, %v3105
        %v3128 = vsub.f32 %v3064, %v3107
        %v3129 = vsub.f32 %v3067, %v3109
        %v3130 = vsub.f32 %v3072, %v3111
        %v3131 = vsub.f32 %v3075, %v3113
        %v3132 = vsub.f32 %v3080, %v3115
        %v3133 = vsub.f32 %v3083, %v3117
        %v3134 = vmul.f32 %v3118, 1.442695
        %v3135 = vpow.pop %v3134
        %v3136 = vmul.f32 %v3119, 1.442695
        %v3137 = vpow.pop %v3136
        %v3138 = vmul.f32 %v3120, 1.442695
        %v3139 = vpow.pop %v3138
        %v3140 = vmul.f32 %v3121, 1.442695
        %v3141 = vpow.pop %v3140
        %v3142 = vmul.f32 %v3122, 1.442695
        %v3143 = vpow.pop %v3142
        %v3144 = vmul.f32 %v3123, 1.442695
        %v3145 = vpow.pop %v3144
        %v3146 = vmul.f32 %v3124, 1.442695
        %v3147 = vpow.pop %v3146
        %v3148 = vmul.f32 %v3125, 1.442695
        %v3149 = vpow.pop %v3148
        %v3150 = vmul.f32 %v3126, 1.442695
        %v3151 = vpow.pop %v3150
        %v3152 = vmul.f32 %v3127, 1.442695
        %v3153 = vpow.pop %v3152
        %v3154 = vmul.f32 %v3128, 1.442695
        %v3155 = vpow.pop %v3154
        %v3156 = vmul.f32 %v3129, 1.442695
        %v3157 = vpow.pop %v3156
        %v3158 = vmul.f32 %v3130, 1.442695
        %v3159 = vpow.pop %v3158
        %v3160 = vmul.f32 %v3131, 1.442695
        %v3161 = vpow.pop %v3160
        %v3162 = vmul.f32 %v3132, 1.442695
        %v3163 = vpow.pop %v3162
        %v3164 = vmul.f32 %v3133, 1.442695
        %v3165 = vpow.pop %v3164
        %v3166 = vpack.c.bf16 %v3137, %v3135
        %v3167 = vpack.c.bf16 %v3141, %v3139
        %v3168 = vpack.c.bf16 %v3145, %v3143
        %v3169 = vpack.c.bf16 %v3149, %v3147
        %v3170 = vpack.c.bf16 %v3153, %v3151
        %v3171 = vpack.c.bf16 %v3157, %v3155
        %v3172 = vpack.c.bf16 %v3161, %v3159
        %v3173 = vpack.c.bf16 %v3165, %v3163
        %3174 = vmatprep.subr.bf16.mxu0 0
        %3175 = vmatpush1.bf16.xpose.msra.mxu0 %v3166
        %3176 = vmatprep.subr.bf16.mxu0 0
        %3177 = vmatpush1.bf16.xpose.msra.mxu0 %v3167
        %3178 = vmatprep.subr.bf16.mxu0 0
        %3179 = vmatpush1.bf16.xpose.msra.mxu0 %v3168
        %3180 = vmatprep.subr.bf16.mxu0 0
        %3181 = vmatpush1.bf16.xpose.msra.mxu0 %v3169
        %3182 = vmatprep.subr.bf16.mxu0 0
        %3183 = vmatpush1.bf16.xpose.msra.mxu0 %v3170
        %3184 = vmatprep.subr.bf16.mxu0 0
        %3185 = vmatpush1.bf16.xpose.msra.mxu0 %v3171
        %3186 = vmatprep.subr.bf16.mxu0 0
        %3187 = vmatpush1.bf16.xpose.msra.mxu0 %v3172
        %3188 = vmatprep.subr.bf16.mxu0 0
        %3189 = vmatpush1.bf16.xpose.msra.mxu0 %v3173
        %3190 = vmatprep.subr.bf16.mxu0 0
        %3191 = vmatpush1.bf16.xpose.msra.mxu0 0
        %3192 = vmatprep.subr.bf16.mxu0 0
        %3193 = vmatpush1.bf16.xpose.msra.mxu0 0
        %3194 = vmatprep.subr.bf16.mxu0 0
        %3195 = vmatpush1.bf16.xpose.msra.mxu0 0
        %3196 = vmatprep.subr.bf16.mxu0 0
        %3197 = vmatpush1.bf16.xpose.msra.mxu0 0
        %3198 = vmatprep.subr.bf16.mxu0 0
        %3199 = vmatpush1.bf16.xpose.msra.mxu0 0
        %3200 = vmatprep.subr.bf16.mxu0 0
        %3201 = vmatpush1.bf16.xpose.msra.mxu0 0
        %3202 = vmatprep.subr.bf16.mxu0 0
        %3203 = vmatpush1.bf16.xpose.msra.mxu0 0
        %3204 = vmatprep.subr.bf16.mxu0 0
        %3205 = vmatpush1.bf16.xpose.msra.mxu0 0
        %3206 = vmatprep.mubr.bf16.mxu0 0
        %3207 = vmatmul.mubr.bf16.gmra.mrb[0].mxu0 %v2945
        %v3208 = vpop.f32.mrb[0].mxu0
        %v3209 = vadd.f32 0.0, %v3208
        %v3210 = vpop.f32.mrb[0].mxu0
        %v3211 = vpop.f32.mrb[0].mxu0
        %v3212 = vpop.f32.mrb[0].mxu0
        %3213 = vdwg.mxu0
        %3214 = vmatprep.subr.bf16.mxu0 0
        %3215 = vmatpush1.bf16.xpose.msra.mxu0 %v3166
        %3216 = vmatprep.subr.bf16.mxu0 0
        %3217 = vmatpush1.bf16.xpose.msra.mxu0 %v3167
        %3218 = vmatprep.subr.bf16.mxu0 0
        %3219 = vmatpush1.bf16.xpose.msra.mxu0 %v3168
        %3220 = vmatprep.subr.bf16.mxu0 0
        %3221 = vmatpush1.bf16.xpose.msra.mxu0 %v3169
        %3222 = vmatprep.subr.bf16.mxu0 0
        %3223 = vmatpush1.bf16.xpose.msra.mxu0 %v3170
        %3224 = vmatprep.subr.bf16.mxu0 0
        %3225 = vmatpush1.bf16.xpose.msra.mxu0 %v3171
        %3226 = vmatprep.subr.bf16.mxu0 0
        %3227 = vmatpush1.bf16.xpose.msra.mxu0 %v3172
        %3228 = vmatprep.subr.bf16.mxu0 0
        %3229 = vmatpush1.bf16.xpose.msra.mxu0 %v3173
        %3230 = vmatprep.subr.bf16.mxu0 0
        %3231 = vmatpush1.bf16.xpose.msra.mxu0 0
        %3232 = vmatprep.subr.bf16.mxu0 0
        %3233 = vmatpush1.bf16.xpose.msra.mxu0 0
        %3234 = vmatprep.subr.bf16.mxu0 0
        %3235 = vmatpush1.bf16.xpose.msra.mxu0 0
        %3236 = vmatprep.subr.bf16.mxu0 0
        %3237 = vmatpush1.bf16.xpose.msra.mxu0 0
        %3238 = vmatprep.subr.bf16.mxu0 0
        %3239 = vmatpush1.bf16.xpose.msra.mxu0 0
        %3240 = vmatprep.subr.bf16.mxu0 0
        %3241 = vmatpush1.bf16.xpose.msra.mxu0 0
        %3242 = vmatprep.subr.bf16.mxu0 0
        %3243 = vmatpush1.bf16.xpose.msra.mxu0 0
        %3244 = vmatprep.subr.bf16.mxu0 0
        %3245 = vmatpush1.bf16.xpose.msra.mxu0 0
        %3246 = vmatprep.mubr.bf16.mxu0 0
        %3247 = vmatmul.mubr.bf16.gmra.mrb[0].mxu0 1065369472
        %v3248 = vpop.f32.mrb[0].mxu0
        %v3249 = vadd.f32 0.0, %v3248
        %v3250 = vpop.f32.mrb[0].mxu0
        %v3251 = vpop.f32.mrb[0].mxu0
        %v3252 = vpop.f32.mrb[0].mxu0
        %3253 = vdwg.mxu0
        %v3254 = vrcp.pop %v3249
        %v3255 = vlaneseq
        %v3256 = vshrl.u32 %v3255, 7
        %v3257 = vsub.s32 0, %v3256
        %v3258 = vrot.slane %v3254, %v3257
        %v3259 = vmul.f32 %v3209, %v3258
        %s3260 = scalar_lea.vmem %s307, 64 [#allocation10]
        %3261 = vst [vmem:[%s3260] sm:$0xff] %v3259
        %s3262 = scalar_lea.vmem %s251, 72 [#allocation2]
        %v3263 = vld [vmem:[%s3262] sm:$0xff]
        %v3264 = vmul.f32 %v3263, 0.35355338
        %v3265 = vpack.c.bf16 %v3264, %v3264
        %s3266 = scalar_lea.vmem %s260, 72 [#allocation5]
        %v3267 = vld [vmem:[%s3266] sm:$0xff]
        %v3268 = vpack.c.bf16 %v3267, %v3267
        %s3269 = scalar_lea.vmem %s269, 72 [#allocation7]
        %v3270 = vld [vmem:[%s3269] sm:$0xff]
        %v3271 = vpack.c.bf16 %v3270, %v3270
        %3272 = vxpose.xlu0.c.b16.start [1/8] %v3265, 128
        %3273 = vxpose.xlu0.c.b16.cont [2/8] 0, 128
        %3274 = vxpose.xlu0.c.b16.cont [3/8] 0, 128
        %3275 = vxpose.xlu0.c.b16.cont [4/8] 0, 128
        %3276 = vxpose.xlu0.c.b16.cont [5/8] 0, 128
        %3277 = vxpose.xlu0.c.b16.cont [6/8] 0, 128
        %3278 = vxpose.xlu0.c.b16.cont [7/8] 0, 128
        %3279 = vxpose.xlu0.c.b16.end [8/8] 0, 128
        %v3280 = vpop.trf.xlu0
        %v3281 = vpop.trf.xlu0
        %v3282 = vpop.trf.xlu0
        %v3283 = vpop.trf.xlu0
        %v3284 = vpop.trf.xlu0
        %v3285 = vpop.trf.xlu0
        %v3286 = vpop.trf.xlu0
        %v3287 = vpop.trf.xlu0
        %v3289 = vsel %vm353, %v3280, 0
        %v3292 = vsel %vm353, %v3281, 0
        %v3295 = vsel %vm353, %v3282, 0
        %v3298 = vsel %vm353, %v3283, 0
        %v3301 = vsel %vm353, %v3284, 0
        %v3304 = vsel %vm353, %v3285, 0
        %v3307 = vsel %vm353, %v3286, 0
        %v3310 = vsel %vm353, %v3287, 0
        %v3313 = vsel %vm378, %v3268, 0
        %3315 = vmatprep.subr.bf16.mxu0 0
        %3316 = vmatpush1.bf16.msra.mxu0 %v3313
        %3317 = vmatprep.subr.bf16.mxu0 0
        %3318 = vmatpush1.bf16.msra.mxu0 0
        %3319 = vmatprep.subr.bf16.mxu0 0
        %3320 = vmatpush1.bf16.msra.mxu0 0
        %3321 = vmatprep.subr.bf16.mxu0 0
        %3322 = vmatpush1.bf16.msra.mxu0 0
        %3323 = vmatprep.subr.bf16.mxu0 0
        %3324 = vmatpush1.bf16.msra.mxu0 0
        %3325 = vmatprep.subr.bf16.mxu0 0
        %3326 = vmatpush1.bf16.msra.mxu0 0
        %3327 = vmatprep.subr.bf16.mxu0 0
        %3328 = vmatpush1.bf16.msra.mxu0 0
        %3329 = vmatprep.subr.bf16.mxu0 0
        %3330 = vmatpush1.bf16.msra.mxu0 0
        %3331 = vmatprep.subr.bf16.mxu0 0
        %3332 = vmatpush1.bf16.msra.mxu0 0
        %3333 = vmatprep.subr.bf16.mxu0 0
        %3334 = vmatpush1.bf16.msra.mxu0 0
        %3335 = vmatprep.subr.bf16.mxu0 0
        %3336 = vmatpush1.bf16.msra.mxu0 0
        %3337 = vmatprep.subr.bf16.mxu0 0
        %3338 = vmatpush1.bf16.msra.mxu0 0
        %3339 = vmatprep.subr.bf16.mxu0 0
        %3340 = vmatpush1.bf16.msra.mxu0 0
        %3341 = vmatprep.subr.bf16.mxu0 0
        %3342 = vmatpush1.bf16.msra.mxu0 0
        %3343 = vmatprep.subr.bf16.mxu0 0
        %3344 = vmatpush1.bf16.msra.mxu0 0
        %3345 = vmatprep.subr.bf16.mxu0 0
        %3346 = vmatpush1.bf16.msra.mxu0 0
        %3347 = vmatprep.mubr.bf16.mxu0 0
        %3348 = vmatmul.mubr.bf16.gmra.mrb[0].mxu0 %v3289
        %v3349 = vpop.f32.mrb[0].mxu0
        %v3350 = vadd.f32 %v314, %v3349
        %v3351 = vpop.f32.mrb[0].mxu0
        %v3352 = vpop.f32.mrb[0].mxu0
        %v3353 = vadd.f32 %v315, %v3352
        %v3354 = vpop.f32.mrb[0].mxu0
        %3355 = vmatprep.mubr.bf16.mxu0 0
        %3356 = vmatmul.mubr.bf16.gmra.mrb[0].mxu0 %v3292
        %v3357 = vpop.f32.mrb[0].mxu0
        %v3358 = vadd.f32 %v316, %v3357
        %v3359 = vpop.f32.mrb[0].mxu0
        %v3360 = vpop.f32.mrb[0].mxu0
        %v3361 = vadd.f32 %v317, %v3360
        %v3362 = vpop.f32.mrb[0].mxu0
        %3363 = vmatprep.mubr.bf16.mxu0 0
        %3364 = vmatmul.mubr.bf16.gmra.mrb[0].mxu0 %v3295
        %v3365 = vpop.f32.mrb[0].mxu0
        %v3366 = vadd.f32 %v318, %v3365
        %v3367 = vpop.f32.mrb[0].mxu0
        %v3368 = vpop.f32.mrb[0].mxu0
        %v3369 = vadd.f32 %v319, %v3368
        %v3370 = vpop.f32.mrb[0].mxu0
        %3371 = vmatprep.mubr.bf16.mxu0 0
        %3372 = vmatmul.mubr.bf16.gmra.mrb[0].mxu0 %v3298
        %v3373 = vpop.f32.mrb[0].mxu0
        %v3374 = vadd.f32 %v320, %v3373
        %v3375 = vpop.f32.mrb[0].mxu0
        %v3376 = vpop.f32.mrb[0].mxu0
        %v3377 = vadd.f32 %v321, %v3376
        %v3378 = vpop.f32.mrb[0].mxu0
        %3379 = vmatprep.mubr.bf16.mxu0 0
        %3380 = vmatmul.mubr.bf16.gmra.mrb[0].mxu0 %v3301
        %v3381 = vpop.f32.mrb[0].mxu0
        %v3382 = vadd.f32 %v322, %v3381
        %v3383 = vpop.f32.mrb[0].mxu0
        %v3384 = vpop.f32.mrb[0].mxu0
        %v3385 = vadd.f32 %v323, %v3384
        %v3386 = vpop.f32.mrb[0].mxu0
        %3387 = vmatprep.mubr.bf16.mxu0 0
        %3388 = vmatmul.mubr.bf16.gmra.mrb[0].mxu0 %v3304
        %v3389 = vpop.f32.mrb[0].mxu0
        %v3390 = vadd.f32 %v324, %v3389
        %v3391 = vpop.f32.mrb[0].mxu0
        %v3392 = vpop.f32.mrb[0].mxu0
        %v3393 = vadd.f32 %v325, %v3392
        %v3394 = vpop.f32.mrb[0].mxu0
        %3395 = vmatprep.mubr.bf16.mxu0 0
        %3396 = vmatmul.mubr.bf16.gmra.mrb[0].mxu0 %v3307
        %v3397 = vpop.f32.mrb[0].mxu0
        %v3398 = vadd.f32 %v326, %v3397
        %v3399 = vpop.f32.mrb[0].mxu0
        %v3400 = vpop.f32.mrb[0].mxu0
        %v3401 = vadd.f32 %v327, %v3400
        %v3402 = vpop.f32.mrb[0].mxu0
        %3403 = vmatprep.mubr.bf16.mxu0 0
        %3404 = vmatmul.mubr.bf16.gmra.mrb[0].mxu0 %v3310
        %v3405 = vpop.f32.mrb[0].mxu0
        %v3406 = vadd.f32 %v328, %v3405
        %v3407 = vpop.f32.mrb[0].mxu0
        %v3408 = vpop.f32.mrb[0].mxu0
        %v3409 = vadd.f32 %v329, %v3408
        %v3410 = vpop.f32.mrb[0].mxu0
        %3411 = vdwg.mxu0
        %3412 = vmax.xlane.f32.xlu0 %v3350
        %v3413 = vpop.xlane.xlu0 %3412
        %3414 = vmax.xlane.f32.xlu0 %v3353
        %v3415 = vpop.xlane.xlu0 %3414
        %3416 = vmax.xlane.f32.xlu0 %v3358
        %v3417 = vpop.xlane.xlu0 %3416
        %3418 = vmax.xlane.f32.xlu0 %v3361
        %v3419 = vpop.xlane.xlu0 %3418
        %3420 = vmax.xlane.f32.xlu0 %v3366
        %v3421 = vpop.xlane.xlu0 %3420
        %3422 = vmax.xlane.f32.xlu0 %v3369
        %v3423 = vpop.xlane.xlu0 %3422
        %3424 = vmax.xlane.f32.xlu0 %v3374
        %v3425 = vpop.xlane.xlu0 %3424
        %3426 = vmax.xlane.f32.xlu0 %v3377
        %v3427 = vpop.xlane.xlu0 %3426
        %3428 = vmax.xlane.f32.xlu0 %v3382
        %v3429 = vpop.xlane.xlu0 %3428
        %3430 = vmax.xlane.f32.xlu0 %v3385
        %v3431 = vpop.xlane.xlu0 %3430
        %3432 = vmax.xlane.f32.xlu0 %v3390
        %v3433 = vpop.xlane.xlu0 %3432
        %3434 = vmax.xlane.f32.xlu0 %v3393
        %v3435 = vpop.xlane.xlu0 %3434
        %3436 = vmax.xlane.f32.xlu0 %v3398
        %v3437 = vpop.xlane.xlu0 %3436
        %3438 = vmax.xlane.f32.xlu0 %v3401
        %v3439 = vpop.xlane.xlu0 %3438
        %3440 = vmax.xlane.f32.xlu0 %v3406
        %v3441 = vpop.xlane.xlu0 %3440
        %3442 = vmax.xlane.f32.xlu0 %v3409
        %v3443 = vpop.xlane.xlu0 %3442
        %v3444 = vsub.f32 %v3350, %v3413
        %v3445 = vsub.f32 %v3353, %v3415
        %v3446 = vsub.f32 %v3358, %v3417
        %v3447 = vsub.f32 %v3361, %v3419
        %v3448 = vsub.f32 %v3366, %v3421
        %v3449 = vsub.f32 %v3369, %v3423
        %v3450 = vsub.f32 %v3374, %v3425
        %v3451 = vsub.f32 %v3377, %v3427
        %v3452 = vsub.f32 %v3382, %v3429
        %v3453 = vsub.f32 %v3385, %v3431
        %v3454 = vsub.f32 %v3390, %v3433
        %v3455 = vsub.f32 %v3393, %v3435
        %v3456 = vsub.f32 %v3398, %v3437
        %v3457 = vsub.f32 %v3401, %v3439
        %v3458 = vsub.f32 %v3406, %v3441
        %v3459 = vsub.f32 %v3409, %v3443
        %v3460 = vmul.f32 %v3444, 1.442695
        %v3461 = vpow.pop %v3460
        %v3462 = vmul.f32 %v3445, 1.442695
        %v3463 = vpow.pop %v3462
        %v3464 = vmul.f32 %v3446, 1.442695
        %v3465 = vpow.pop %v3464
        %v3466 = vmul.f32 %v3447, 1.442695
        %v3467 = vpow.pop %v3466
        %v3468 = vmul.f32 %v3448, 1.442695
        %v3469 = vpow.pop %v3468
        %v3470 = vmul.f32 %v3449, 1.442695
        %v3471 = vpow.pop %v3470
        %v3472 = vmul.f32 %v3450, 1.442695
        %v3473 = vpow.pop %v3472
        %v3474 = vmul.f32 %v3451, 1.442695
        %v3475 = vpow.pop %v3474
        %v3476 = vmul.f32 %v3452, 1.442695
        %v3477 = vpow.pop %v3476
        %v3478 = vmul.f32 %v3453, 1.442695
        %v3479 = vpow.pop %v3478
        %v3480 = vmul.f32 %v3454, 1.442695
        %v3481 = vpow.pop %v3480
        %v3482 = vmul.f32 %v3455, 1.442695
        %v3483 = vpow.pop %v3482
        %v3484 = vmul.f32 %v3456, 1.442695
        %v3485 = vpow.pop %v3484
        %v3486 = vmul.f32 %v3457, 1.442695
        %v3487 = vpow.pop %v3486
        %v3488 = vmul.f32 %v3458, 1.442695
        %v3489 = vpow.pop %v3488
        %v3490 = vmul.f32 %v3459, 1.442695
        %v3491 = vpow.pop %v3490
        %v3492 = vpack.c.bf16 %v3463, %v3461
        %v3493 = vpack.c.bf16 %v3467, %v3465
        %v3494 = vpack.c.bf16 %v3471, %v3469
        %v3495 = vpack.c.bf16 %v3475, %v3473
        %v3496 = vpack.c.bf16 %v3479, %v3477
        %v3497 = vpack.c.bf16 %v3483, %v3481
        %v3498 = vpack.c.bf16 %v3487, %v3485
        %v3499 = vpack.c.bf16 %v3491, %v3489
        %3500 = vmatprep.subr.bf16.mxu0 0
        %3501 = vmatpush1.bf16.xpose.msra.mxu0 %v3492
        %3502 = vmatprep.subr.bf16.mxu0 0
        %3503 = vmatpush1.bf16.xpose.msra.mxu0 %v3493
        %3504 = vmatprep.subr.bf16.mxu0 0
        %3505 = vmatpush1.bf16.xpose.msra.mxu0 %v3494
        %3506 = vmatprep.subr.bf16.mxu0 0
        %3507 = vmatpush1.bf16.xpose.msra.mxu0 %v3495
        %3508 = vmatprep.subr.bf16.mxu0 0
        %3509 = vmatpush1.bf16.xpose.msra.mxu0 %v3496
        %3510 = vmatprep.subr.bf16.mxu0 0
        %3511 = vmatpush1.bf16.xpose.msra.mxu0 %v3497
        %3512 = vmatprep.subr.bf16.mxu0 0
        %3513 = vmatpush1.bf16.xpose.msra.mxu0 %v3498
        %3514 = vmatprep.subr.bf16.mxu0 0
        %3515 = vmatpush1.bf16.xpose.msra.mxu0 %v3499
        %3516 = vmatprep.subr.bf16.mxu0 0
        %3517 = vmatpush1.bf16.xpose.msra.mxu0 0
        %3518 = vmatprep.subr.bf16.mxu0 0
        %3519 = vmatpush1.bf16.xpose.msra.mxu0 0
        %3520 = vmatprep.subr.bf16.mxu0 0
        %3521 = vmatpush1.bf16.xpose.msra.mxu0 0
        %3522 = vmatprep.subr.bf16.mxu0 0
        %3523 = vmatpush1.bf16.xpose.msra.mxu0 0
        %3524 = vmatprep.subr.bf16.mxu0 0
        %3525 = vmatpush1.bf16.xpose.msra.mxu0 0
        %3526 = vmatprep.subr.bf16.mxu0 0
        %3527 = vmatpush1.bf16.xpose.msra.mxu0 0
        %3528 = vmatprep.subr.bf16.mxu0 0
        %3529 = vmatpush1.bf16.xpose.msra.mxu0 0
        %3530 = vmatprep.subr.bf16.mxu0 0
        %3531 = vmatpush1.bf16.xpose.msra.mxu0 0
        %3532 = vmatprep.mubr.bf16.mxu0 0
        %3533 = vmatmul.mubr.bf16.gmra.mrb[0].mxu0 %v3271
        %v3534 = vpop.f32.mrb[0].mxu0
        %v3535 = vadd.f32 0.0, %v3534
        %v3536 = vpop.f32.mrb[0].mxu0
        %v3537 = vpop.f32.mrb[0].mxu0
        %v3538 = vpop.f32.mrb[0].mxu0
        %3539 = vdwg.mxu0
        %3540 = vmatprep.subr.bf16.mxu0 0
        %3541 = vmatpush1.bf16.xpose.msra.mxu0 %v3492
        %3542 = vmatprep.subr.bf16.mxu0 0
        %3543 = vmatpush1.bf16.xpose.msra.mxu0 %v3493
        %3544 = vmatprep.subr.bf16.mxu0 0
        %3545 = vmatpush1.bf16.xpose.msra.mxu0 %v3494
        %3546 = vmatprep.subr.bf16.mxu0 0
        %3547 = vmatpush1.bf16.xpose.msra.mxu0 %v3495
        %3548 = vmatprep.subr.bf16.mxu0 0
        %3549 = vmatpush1.bf16.xpose.msra.mxu0 %v3496
        %3550 = vmatprep.subr.bf16.mxu0 0
        %3551 = vmatpush1.bf16.xpose.msra.mxu0 %v3497
        %3552 = vmatprep.subr.bf16.mxu0 0
        %3553 = vmatpush1.bf16.xpose.msra.mxu0 %v3498
        %3554 = vmatprep.subr.bf16.mxu0 0
        %3555 = vmatpush1.bf16.xpose.msra.mxu0 %v3499
        %3556 = vmatprep.subr.bf16.mxu0 0
        %3557 = vmatpush1.bf16.xpose.msra.mxu0 0
        %3558 = vmatprep.subr.bf16.mxu0 0
        %3559 = vmatpush1.bf16.xpose.msra.mxu0 0
        %3560 = vmatprep.subr.bf16.mxu0 0
        %3561 = vmatpush1.bf16.xpose.msra.mxu0 0
        %3562 = vmatprep.subr.bf16.mxu0 0
        %3563 = vmatpush1.bf16.xpose.msra.mxu0 0
        %3564 = vmatprep.subr.bf16.mxu0 0
        %3565 = vmatpush1.bf16.xpose.msra.mxu0 0
        %3566 = vmatprep.subr.bf16.mxu0 0
        %3567 = vmatpush1.bf16.xpose.msra.mxu0 0
        %3568 = vmatprep.subr.bf16.mxu0 0
        %3569 = vmatpush1.bf16.xpose.msra.mxu0 0
        %3570 = vmatprep.subr.bf16.mxu0 0
        %3571 = vmatpush1.bf16.xpose.msra.mxu0 0
        %3572 = vmatprep.mubr.bf16.mxu0 0
        %3573 = vmatmul.mubr.bf16.gmra.mrb[0].mxu0 1065369472
        %v3574 = vpop.f32.mrb[0].mxu0
        %v3575 = vadd.f32 0.0, %v3574
        %v3576 = vpop.f32.mrb[0].mxu0
        %v3577 = vpop.f32.mrb[0].mxu0
        %v3578 = vpop.f32.mrb[0].mxu0
        %3579 = vdwg.mxu0
        %v3580 = vrcp.pop %v3575
        %v3581 = vlaneseq
        %v3582 = vshrl.u32 %v3581, 7
        %v3583 = vsub.s32 0, %v3582
        %v3584 = vrot.slane %v3580, %v3583
        %v3585 = vmul.f32 %v3535, %v3584
        %s3586 = scalar_lea.vmem %s307, 72 [#allocation10]
        %3587 = vst [vmem:[%s3586] sm:$0xff] %v3585
        %s3588 = scalar_lea.vmem %s251, 80 [#allocation2]
        %v3589 = vld [vmem:[%s3588] sm:$0xff]
        %v3590 = vmul.f32 %v3589, 0.35355338
        %v3591 = vpack.c.bf16 %v3590, %v3590
        %s3592 = scalar_lea.vmem %s260, 80 [#allocation5]
        %v3593 = vld [vmem:[%s3592] sm:$0xff]
        %v3594 = vpack.c.bf16 %v3593, %v3593
        %s3595 = scalar_lea.vmem %s269, 80 [#allocation7]
        %v3596 = vld [vmem:[%s3595] sm:$0xff]
        %v3597 = vpack.c.bf16 %v3596, %v3596
        %3598 = vxpose.xlu0.c.b16.start [1/8] %v3591, 128
        %3599 = vxpose.xlu0.c.b16.cont [2/8] 0, 128
        %3600 = vxpose.xlu0.c.b16.cont [3/8] 0, 128
        %3601 = vxpose.xlu0.c.b16.cont [4/8] 0, 128
        %3602 = vxpose.xlu0.c.b16.cont [5/8] 0, 128
        %3603 = vxpose.xlu0.c.b16.cont [6/8] 0, 128
        %3604 = vxpose.xlu0.c.b16.cont [7/8] 0, 128
        %3605 = vxpose.xlu0.c.b16.end [8/8] 0, 128
        %v3606 = vpop.trf.xlu0
        %v3607 = vpop.trf.xlu0
        %v3608 = vpop.trf.xlu0
        %v3609 = vpop.trf.xlu0
        %v3610 = vpop.trf.xlu0
        %v3611 = vpop.trf.xlu0
        %v3612 = vpop.trf.xlu0
        %v3613 = vpop.trf.xlu0
        %v3615 = vsel %vm353, %v3606, 0
        %v3618 = vsel %vm353, %v3607, 0
        %v3621 = vsel %vm353, %v3608, 0
        %v3624 = vsel %vm353, %v3609, 0
        %v3627 = vsel %vm353, %v3610, 0
        %v3630 = vsel %vm353, %v3611, 0
        %v3633 = vsel %vm353, %v3612, 0
        %v3636 = vsel %vm353, %v3613, 0
        %v3639 = vsel %vm378, %v3594, 0
        %3641 = vmatprep.subr.bf16.mxu0 0
        %3642 = vmatpush1.bf16.msra.mxu0 %v3639
        %3643 = vmatprep.subr.bf16.mxu0 0
        %3644 = vmatpush1.bf16.msra.mxu0 0
        %3645 = vmatprep.subr.bf16.mxu0 0
        %3646 = vmatpush1.bf16.msra.mxu0 0
        %3647 = vmatprep.subr.bf16.mxu0 0
        %3648 = vmatpush1.bf16.msra.mxu0 0
        %3649 = vmatprep.subr.bf16.mxu0 0
        %3650 = vmatpush1.bf16.msra.mxu0 0
        %3651 = vmatprep.subr.bf16.mxu0 0
        %3652 = vmatpush1.bf16.msra.mxu0 0
        %3653 = vmatprep.subr.bf16.mxu0 0
        %3654 = vmatpush1.bf16.msra.mxu0 0
        %3655 = vmatprep.subr.bf16.mxu0 0
        %3656 = vmatpush1.bf16.msra.mxu0 0
        %3657 = vmatprep.subr.bf16.mxu0 0
        %3658 = vmatpush1.bf16.msra.mxu0 0
        %3659 = vmatprep.subr.bf16.mxu0 0
        %3660 = vmatpush1.bf16.msra.mxu0 0
        %3661 = vmatprep.subr.bf16.mxu0 0
        %3662 = vmatpush1.bf16.msra.mxu0 0
        %3663 = vmatprep.subr.bf16.mxu0 0
        %3664 = vmatpush1.bf16.msra.mxu0 0
        %3665 = vmatprep.subr.bf16.mxu0 0
        %3666 = vmatpush1.bf16.msra.mxu0 0
        %3667 = vmatprep.subr.bf16.mxu0 0
        %3668 = vmatpush1.bf16.msra.mxu0 0
        %3669 = vmatprep.subr.bf16.mxu0 0
        %3670 = vmatpush1.bf16.msra.mxu0 0
        %3671 = vmatprep.subr.bf16.mxu0 0
        %3672 = vmatpush1.bf16.msra.mxu0 0
        %3673 = vmatprep.mubr.bf16.mxu0 0
        %3674 = vmatmul.mubr.bf16.gmra.mrb[0].mxu0 %v3615
        %v3675 = vpop.f32.mrb[0].mxu0
        %v3676 = vadd.f32 %v314, %v3675
        %v3677 = vpop.f32.mrb[0].mxu0
        %v3678 = vpop.f32.mrb[0].mxu0
        %v3679 = vadd.f32 %v315, %v3678
        %v3680 = vpop.f32.mrb[0].mxu0
        %3681 = vmatprep.mubr.bf16.mxu0 0
        %3682 = vmatmul.mubr.bf16.gmra.mrb[0].mxu0 %v3618
        %v3683 = vpop.f32.mrb[0].mxu0
        %v3684 = vadd.f32 %v316, %v3683
        %v3685 = vpop.f32.mrb[0].mxu0
        %v3686 = vpop.f32.mrb[0].mxu0
        %v3687 = vadd.f32 %v317, %v3686
        %v3688 = vpop.f32.mrb[0].mxu0
        %3689 = vmatprep.mubr.bf16.mxu0 0
        %3690 = vmatmul.mubr.bf16.gmra.mrb[0].mxu0 %v3621
        %v3691 = vpop.f32.mrb[0].mxu0
        %v3692 = vadd.f32 %v318, %v3691
        %v3693 = vpop.f32.mrb[0].mxu0
        %v3694 = vpop.f32.mrb[0].mxu0
        %v3695 = vadd.f32 %v319, %v3694
        %v3696 = vpop.f32.mrb[0].mxu0
        %3697 = vmatprep.mubr.bf16.mxu0 0
        %3698 = vmatmul.mubr.bf16.gmra.mrb[0].mxu0 %v3624
        %v3699 = vpop.f32.mrb[0].mxu0
        %v3700 = vadd.f32 %v320, %v3699
        %v3701 = vpop.f32.mrb[0].mxu0
        %v3702 = vpop.f32.mrb[0].mxu0
        %v3703 = vadd.f32 %v321, %v3702
        %v3704 = vpop.f32.mrb[0].mxu0
        %3705 = vmatprep.mubr.bf16.mxu0 0
        %3706 = vmatmul.mubr.bf16.gmra.mrb[0].mxu0 %v3627
        %v3707 = vpop.f32.mrb[0].mxu0
        %v3708 = vadd.f32 %v322, %v3707
        %v3709 = vpop.f32.mrb[0].mxu0
        %v3710 = vpop.f32.mrb[0].mxu0
        %v3711 = vadd.f32 %v323, %v3710
        %v3712 = vpop.f32.mrb[0].mxu0
        %3713 = vmatprep.mubr.bf16.mxu0 0
        %3714 = vmatmul.mubr.bf16.gmra.mrb[0].mxu0 %v3630
        %v3715 = vpop.f32.mrb[0].mxu0
        %v3716 = vadd.f32 %v324, %v3715
        %v3717 = vpop.f32.mrb[0].mxu0
        %v3718 = vpop.f32.mrb[0].mxu0
        %v3719 = vadd.f32 %v325, %v3718
        %v3720 = vpop.f32.mrb[0].mxu0
        %3721 = vmatprep.mubr.bf16.mxu0 0
        %3722 = vmatmul.mubr.bf16.gmra.mrb[0].mxu0 %v3633
        %v3723 = vpop.f32.mrb[0].mxu0
        %v3724 = vadd.f32 %v326, %v3723
        %v3725 = vpop.f32.mrb[0].mxu0
        %v3726 = vpop.f32.mrb[0].mxu0
        %v3727 = vadd.f32 %v327, %v3726
        %v3728 = vpop.f32.mrb[0].mxu0
        %3729 = vmatprep.mubr.bf16.mxu0 0
        %3730 = vmatmul.mubr.bf16.gmra.mrb[0].mxu0 %v3636
        %v3731 = vpop.f32.mrb[0].mxu0
        %v3732 = vadd.f32 %v328, %v3731
        %v3733 = vpop.f32.mrb[0].mxu0
        %v3734 = vpop.f32.mrb[0].mxu0
        %v3735 = vadd.f32 %v329, %v3734
        %v3736 = vpop.f32.mrb[0].mxu0
        %3737 = vdwg.mxu0
        %3738 = vmax.xlane.f32.xlu0 %v3676
        %v3739 = vpop.xlane.xlu0 %3738
        %3740 = vmax.xlane.f32.xlu0 %v3679
        %v3741 = vpop.xlane.xlu0 %3740
        %3742 = vmax.xlane.f32.xlu0 %v3684
        %v3743 = vpop.xlane.xlu0 %3742
        %3744 = vmax.xlane.f32.xlu0 %v3687
        %v3745 = vpop.xlane.xlu0 %3744
        %3746 = vmax.xlane.f32.xlu0 %v3692
        %v3747 = vpop.xlane.xlu0 %3746
        %3748 = vmax.xlane.f32.xlu0 %v3695
        %v3749 = vpop.xlane.xlu0 %3748
        %3750 = vmax.xlane.f32.xlu0 %v3700
        %v3751 = vpop.xlane.xlu0 %3750
        %3752 = vmax.xlane.f32.xlu0 %v3703
        %v3753 = vpop.xlane.xlu0 %3752
        %3754 = vmax.xlane.f32.xlu0 %v3708
        %v3755 = vpop.xlane.xlu0 %3754
        %3756 = vmax.xlane.f32.xlu0 %v3711
        %v3757 = vpop.xlane.xlu0 %3756
        %3758 = vmax.xlane.f32.xlu0 %v3716
        %v3759 = vpop.xlane.xlu0 %3758
        %3760 = vmax.xlane.f32.xlu0 %v3719
        %v3761 = vpop.xlane.xlu0 %3760
        %3762 = vmax.xlane.f32.xlu0 %v3724
        %v3763 = vpop.xlane.xlu0 %3762
        %3764 = vmax.xlane.f32.xlu0 %v3727
        %v3765 = vpop.xlane.xlu0 %3764
        %3766 = vmax.xlane.f32.xlu0 %v3732
        %v3767 = vpop.xlane.xlu0 %3766
        %3768 = vmax.xlane.f32.xlu0 %v3735
        %v3769 = vpop.xlane.xlu0 %3768
        %v3770 = vsub.f32 %v3676, %v3739
        %v3771 = vsub.f32 %v3679, %v3741
        %v3772 = vsub.f32 %v3684, %v3743
        %v3773 = vsub.f32 %v3687, %v3745
        %v3774 = vsub.f32 %v3692, %v3747
        %v3775 = vsub.f32 %v3695, %v3749
        %v3776 = vsub.f32 %v3700, %v3751
        %v3777 = vsub.f32 %v3703, %v3753
        %v3778 = vsub.f32 %v3708, %v3755
        %v3779 = vsub.f32 %v3711, %v3757
        %v3780 = vsub.f32 %v3716, %v3759
        %v3781 = vsub.f32 %v3719, %v3761
        %v3782 = vsub.f32 %v3724, %v3763
        %v3783 = vsub.f32 %v3727, %v3765
        %v3784 = vsub.f32 %v3732, %v3767
        %v3785 = vsub.f32 %v3735, %v3769
        %v3786 = vmul.f32 %v3770, 1.442695
        %v3787 = vpow.pop %v3786
        %v3788 = vmul.f32 %v3771, 1.442695
        %v3789 = vpow.pop %v3788
        %v3790 = vmul.f32 %v3772, 1.442695
        %v3791 = vpow.pop %v3790
        %v3792 = vmul.f32 %v3773, 1.442695
        %v3793 = vpow.pop %v3792
        %v3794 = vmul.f32 %v3774, 1.442695
        %v3795 = vpow.pop %v3794
        %v3796 = vmul.f32 %v3775, 1.442695
        %v3797 = vpow.pop %v3796
        %v3798 = vmul.f32 %v3776, 1.442695
        %v3799 = vpow.pop %v3798
        %v3800 = vmul.f32 %v3777, 1.442695
        %v3801 = vpow.pop %v3800
        %v3802 = vmul.f32 %v3778, 1.442695
        %v3803 = vpow.pop %v3802
        %v3804 = vmul.f32 %v3779, 1.442695
        %v3805 = vpow.pop %v3804
        %v3806 = vmul.f32 %v3780, 1.442695
        %v3807 = vpow.pop %v3806
        %v3808 = vmul.f32 %v3781, 1.442695
        %v3809 = vpow.pop %v3808
        %v3810 = vmul.f32 %v3782, 1.442695
        %v3811 = vpow.pop %v3810
        %v3812 = vmul.f32 %v3783, 1.442695
        %v3813 = vpow.pop %v3812
        %v3814 = vmul.f32 %v3784, 1.442695
        %v3815 = vpow.pop %v3814
        %v3816 = vmul.f32 %v3785, 1.442695
        %v3817 = vpow.pop %v3816
        %v3818 = vpack.c.bf16 %v3789, %v3787
        %v3819 = vpack.c.bf16 %v3793, %v3791
        %v3820 = vpack.c.bf16 %v3797, %v3795
        %v3821 = vpack.c.bf16 %v3801, %v3799
        %v3822 = vpack.c.bf16 %v3805, %v3803
        %v3823 = vpack.c.bf16 %v3809, %v3807
        %v3824 = vpack.c.bf16 %v3813, %v3811
        %v3825 = vpack.c.bf16 %v3817, %v3815
        %3826 = vmatprep.subr.bf16.mxu0 0
        %3827 = vmatpush1.bf16.xpose.msra.mxu0 %v3818
        %3828 = vmatprep.subr.bf16.mxu0 0
        %3829 = vmatpush1.bf16.xpose.msra.mxu0 %v3819
        %3830 = vmatprep.subr.bf16.mxu0 0
        %3831 = vmatpush1.bf16.xpose.msra.mxu0 %v3820
        %3832 = vmatprep.subr.bf16.mxu0 0
        %3833 = vmatpush1.bf16.xpose.msra.mxu0 %v3821
        %3834 = vmatprep.subr.bf16.mxu0 0
        %3835 = vmatpush1.bf16.xpose.msra.mxu0 %v3822
        %3836 = vmatprep.subr.bf16.mxu0 0
        %3837 = vmatpush1.bf16.xpose.msra.mxu0 %v3823
        %3838 = vmatprep.subr.bf16.mxu0 0
        %3839 = vmatpush1.bf16.xpose.msra.mxu0 %v3824
        %3840 = vmatprep.subr.bf16.mxu0 0
        %3841 = vmatpush1.bf16.xpose.msra.mxu0 %v3825
        %3842 = vmatprep.subr.bf16.mxu0 0
        %3843 = vmatpush1.bf16.xpose.msra.mxu0 0
        %3844 = vmatprep.subr.bf16.mxu0 0
        %3845 = vmatpush1.bf16.xpose.msra.mxu0 0
        %3846 = vmatprep.subr.bf16.mxu0 0
        %3847 = vmatpush1.bf16.xpose.msra.mxu0 0
        %3848 = vmatprep.subr.bf16.mxu0 0
        %3849 = vmatpush1.bf16.xpose.msra.mxu0 0
        %3850 = vmatprep.subr.bf16.mxu0 0
        %3851 = vmatpush1.bf16.xpose.msra.mxu0 0
        %3852 = vmatprep.subr.bf16.mxu0 0
        %3853 = vmatpush1.bf16.xpose.msra.mxu0 0
        %3854 = vmatprep.subr.bf16.mxu0 0
        %3855 = vmatpush1.bf16.xpose.msra.mxu0 0
        %3856 = vmatprep.subr.bf16.mxu0 0
        %3857 = vmatpush1.bf16.xpose.msra.mxu0 0
        %3858 = vmatprep.mubr.bf16.mxu0 0
        %3859 = vmatmul.mubr.bf16.gmra.mrb[0].mxu0 %v3597
        %v3860 = vpop.f32.mrb[0].mxu0
        %v3861 = vadd.f32 0.0, %v3860
        %v3862 = vpop.f32.mrb[0].mxu0
        %v3863 = vpop.f32.mrb[0].mxu0
        %v3864 = vpop.f32.mrb[0].mxu0
        %3865 = vdwg.mxu0
        %3866 = vmatprep.subr.bf16.mxu0 0
        %3867 = vmatpush1.bf16.xpose.msra.mxu0 %v3818
        %3868 = vmatprep.subr.bf16.mxu0 0
        %3869 = vmatpush1.bf16.xpose.msra.mxu0 %v3819
        %3870 = vmatprep.subr.bf16.mxu0 0
        %3871 = vmatpush1.bf16.xpose.msra.mxu0 %v3820
        %3872 = vmatprep.subr.bf16.mxu0 0
        %3873 = vmatpush1.bf16.xpose.msra.mxu0 %v3821
        %3874 = vmatprep.subr.bf16.mxu0 0
        %3875 = vmatpush1.bf16.xpose.msra.mxu0 %v3822
        %3876 = vmatprep.subr.bf16.mxu0 0
        %3877 = vmatpush1.bf16.xpose.msra.mxu0 %v3823
        %3878 = vmatprep.subr.bf16.mxu0 0
        %3879 = vmatpush1.bf16.xpose.msra.mxu0 %v3824
        %3880 = vmatprep.subr.bf16.mxu0 0
        %3881 = vmatpush1.bf16.xpose.msra.mxu0 %v3825
        %3882 = vmatprep.subr.bf16.mxu0 0
        %3883 = vmatpush1.bf16.xpose.msra.mxu0 0
        %3884 = vmatprep.subr.bf16.mxu0 0
        %3885 = vmatpush1.bf16.xpose.msra.mxu0 0
        %3886 = vmatprep.subr.bf16.mxu0 0
        %3887 = vmatpush1.bf16.xpose.msra.mxu0 0
        %3888 = vmatprep.subr.bf16.mxu0 0
        %3889 = vmatpush1.bf16.xpose.msra.mxu0 0
        %3890 = vmatprep.subr.bf16.mxu0 0
        %3891 = vmatpush1.bf16.xpose.msra.mxu0 0
        %3892 = vmatprep.subr.bf16.mxu0 0
        %3893 = vmatpush1.bf16.xpose.msra.mxu0 0
        %3894 = vmatprep.subr.bf16.mxu0 0
        %3895 = vmatpush1.bf16.xpose.msra.mxu0 0
        %3896 = vmatprep.subr.bf16.mxu0 0
        %3897 = vmatpush1.bf16.xpose.msra.mxu0 0
        %3898 = vmatprep.mubr.bf16.mxu0 0
        %3899 = vmatmul.mubr.bf16.gmra.mrb[0].mxu0 1065369472
        %v3900 = vpop.f32.mrb[0].mxu0
        %v3901 = vadd.f32 0.0, %v3900
        %v3902 = vpop.f32.mrb[0].mxu0
        %v3903 = vpop.f32.mrb[0].mxu0
        %v3904 = vpop.f32.mrb[0].mxu0
        %3905 = vdwg.mxu0
        %v3906 = vrcp.pop %v3901
        %v3907 = vlaneseq
        %v3908 = vshrl.u32 %v3907, 7
        %v3909 = vsub.s32 0, %v3908
        %v3910 = vrot.slane %v3906, %v3909
        %v3911 = vmul.f32 %v3861, %v3910
        %s3912 = scalar_lea.vmem %s307, 80 [#allocation10]
        %3913 = vst [vmem:[%s3912] sm:$0xff] %v3911
        %s3914 = scalar_lea.vmem %s251, 88 [#allocation2]
        %v3915 = vld [vmem:[%s3914] sm:$0xff]
        %v3916 = vmul.f32 %v3915, 0.35355338
        %v3917 = vpack.c.bf16 %v3916, %v3916
        %s3918 = scalar_lea.vmem %s260, 88 [#allocation5]
        %v3919 = vld [vmem:[%s3918] sm:$0xff]
        %v3920 = vpack.c.bf16 %v3919, %v3919
        %s3921 = scalar_lea.vmem %s269, 88 [#allocation7]
        %v3922 = vld [vmem:[%s3921] sm:$0xff]
        %v3923 = vpack.c.bf16 %v3922, %v3922
        %3924 = vxpose.xlu0.c.b16.start [1/8] %v3917, 128
        %3925 = vxpose.xlu0.c.b16.cont [2/8] 0, 128
        %3926 = vxpose.xlu0.c.b16.cont [3/8] 0, 128
        %3927 = vxpose.xlu0.c.b16.cont [4/8] 0, 128
        %3928 = vxpose.xlu0.c.b16.cont [5/8] 0, 128
        %3929 = vxpose.xlu0.c.b16.cont [6/8] 0, 128
        %3930 = vxpose.xlu0.c.b16.cont [7/8] 0, 128
        %3931 = vxpose.xlu0.c.b16.end [8/8] 0, 128
        %v3932 = vpop.trf.xlu0
        %v3933 = vpop.trf.xlu0
        %v3934 = vpop.trf.xlu0
        %v3935 = vpop.trf.xlu0
        %v3936 = vpop.trf.xlu0
        %v3937 = vpop.trf.xlu0
        %v3938 = vpop.trf.xlu0
        %v3939 = vpop.trf.xlu0
        %v3941 = vsel %vm353, %v3932, 0
        %v3944 = vsel %vm353, %v3933, 0
        %v3947 = vsel %vm353, %v3934, 0
        %v3950 = vsel %vm353, %v3935, 0
        %v3953 = vsel %vm353, %v3936, 0
        %v3956 = vsel %vm353, %v3937, 0
        %v3959 = vsel %vm353, %v3938, 0
        %v3962 = vsel %vm353, %v3939, 0
        %v3965 = vsel %vm378, %v3920, 0
        %3967 = vmatprep.subr.bf16.mxu0 0
        %3968 = vmatpush1.bf16.msra.mxu0 %v3965
        %3969 = vmatprep.subr.bf16.mxu0 0
        %3970 = vmatpush1.bf16.msra.mxu0 0
        %3971 = vmatprep.subr.bf16.mxu0 0
        %3972 = vmatpush1.bf16.msra.mxu0 0
        %3973 = vmatprep.subr.bf16.mxu0 0
        %3974 = vmatpush1.bf16.msra.mxu0 0
        %3975 = vmatprep.subr.bf16.mxu0 0
        %3976 = vmatpush1.bf16.msra.mxu0 0
        %3977 = vmatprep.subr.bf16.mxu0 0
        %3978 = vmatpush1.bf16.msra.mxu0 0
        %3979 = vmatprep.subr.bf16.mxu0 0
        %3980 = vmatpush1.bf16.msra.mxu0 0
        %3981 = vmatprep.subr.bf16.mxu0 0
        %3982 = vmatpush1.bf16.msra.mxu0 0
        %3983 = vmatprep.subr.bf16.mxu0 0
        %3984 = vmatpush1.bf16.msra.mxu0 0
        %3985 = vmatprep.subr.bf16.mxu0 0
        %3986 = vmatpush1.bf16.msra.mxu0 0
        %3987 = vmatprep.subr.bf16.mxu0 0
        %3988 = vmatpush1.bf16.msra.mxu0 0
        %3989 = vmatprep.subr.bf16.mxu0 0
        %3990 = vmatpush1.bf16.msra.mxu0 0
        %3991 = vmatprep.subr.bf16.mxu0 0
        %3992 = vmatpush1.bf16.msra.mxu0 0
        %3993 = vmatprep.subr.bf16.mxu0 0
        %3994 = vmatpush1.bf16.msra.mxu0 0
        %3995 = vmatprep.subr.bf16.mxu0 0
        %3996 = vmatpush1.bf16.msra.mxu0 0
        %3997 = vmatprep.subr.bf16.mxu0 0
        %3998 = vmatpush1.bf16.msra.mxu0 0
        %3999 = vmatprep.mubr.bf16.mxu0 0
        %4000 = vmatmul.mubr.bf16.gmra.mrb[0].mxu0 %v3941
        %v4001 = vpop.f32.mrb[0].mxu0
        %v4002 = vadd.f32 %v314, %v4001
        %v4003 = vpop.f32.mrb[0].mxu0
        %v4004 = vpop.f32.mrb[0].mxu0
        %v4005 = vadd.f32 %v315, %v4004
        %v4006 = vpop.f32.mrb[0].mxu0
        %4007 = vmatprep.mubr.bf16.mxu0 0
        %4008 = vmatmul.mubr.bf16.gmra.mrb[0].mxu0 %v3944
        %v4009 = vpop.f32.mrb[0].mxu0
        %v4010 = vadd.f32 %v316, %v4009
        %v4011 = vpop.f32.mrb[0].mxu0
        %v4012 = vpop.f32.mrb[0].mxu0
        %v4013 = vadd.f32 %v317, %v4012
        %v4014 = vpop.f32.mrb[0].mxu0
        %4015 = vmatprep.mubr.bf16.mxu0 0
        %4016 = vmatmul.mubr.bf16.gmra.mrb[0].mxu0 %v3947
        %v4017 = vpop.f32.mrb[0].mxu0
        %v4018 = vadd.f32 %v318, %v4017
        %v4019 = vpop.f32.mrb[0].mxu0
        %v4020 = vpop.f32.mrb[0].mxu0
        %v4021 = vadd.f32 %v319, %v4020
        %v4022 = vpop.f32.mrb[0].mxu0
        %4023 = vmatprep.mubr.bf16.mxu0 0
        %4024 = vmatmul.mubr.bf16.gmra.mrb[0].mxu0 %v3950
        %v4025 = vpop.f32.mrb[0].mxu0
        %v4026 = vadd.f32 %v320, %v4025
        %v4027 = vpop.f32.mrb[0].mxu0
        %v4028 = vpop.f32.mrb[0].mxu0
        %v4029 = vadd.f32 %v321, %v4028
        %v4030 = vpop.f32.mrb[0].mxu0
        %4031 = vmatprep.mubr.bf16.mxu0 0
        %4032 = vmatmul.mubr.bf16.gmra.mrb[0].mxu0 %v3953
        %v4033 = vpop.f32.mrb[0].mxu0
        %v4034 = vadd.f32 %v322, %v4033
        %v4035 = vpop.f32.mrb[0].mxu0
        %v4036 = vpop.f32.mrb[0].mxu0
        %v4037 = vadd.f32 %v323, %v4036
        %v4038 = vpop.f32.mrb[0].mxu0
        %4039 = vmatprep.mubr.bf16.mxu0 0
        %4040 = vmatmul.mubr.bf16.gmra.mrb[0].mxu0 %v3956
        %v4041 = vpop.f32.mrb[0].mxu0
        %v4042 = vadd.f32 %v324, %v4041
        %v4043 = vpop.f32.mrb[0].mxu0
        %v4044 = vpop.f32.mrb[0].mxu0
        %v4045 = vadd.f32 %v325, %v4044
        %v4046 = vpop.f32.mrb[0].mxu0
        %4047 = vmatprep.mubr.bf16.mxu0 0
        %4048 = vmatmul.mubr.bf16.gmra.mrb[0].mxu0 %v3959
        %v4049 = vpop.f32.mrb[0].mxu0
        %v4050 = vadd.f32 %v326, %v4049
        %v4051 = vpop.f32.mrb[0].mxu0
        %v4052 = vpop.f32.mrb[0].mxu0
        %v4053 = vadd.f32 %v327, %v4052
        %v4054 = vpop.f32.mrb[0].mxu0
        %4055 = vmatprep.mubr.bf16.mxu0 0
        %4056 = vmatmul.mubr.bf16.gmra.mrb[0].mxu0 %v3962
        %v4057 = vpop.f32.mrb[0].mxu0
        %v4058 = vadd.f32 %v328, %v4057
        %v4059 = vpop.f32.mrb[0].mxu0
        %v4060 = vpop.f32.mrb[0].mxu0
        %v4061 = vadd.f32 %v329, %v4060
        %v4062 = vpop.f32.mrb[0].mxu0
        %4063 = vdwg.mxu0
        %4064 = vmax.xlane.f32.xlu0 %v4002
        %v4065 = vpop.xlane.xlu0 %4064
        %4066 = vmax.xlane.f32.xlu0 %v4005
        %v4067 = vpop.xlane.xlu0 %4066
        %4068 = vmax.xlane.f32.xlu0 %v4010
        %v4069 = vpop.xlane.xlu0 %4068
        %4070 = vmax.xlane.f32.xlu0 %v4013
        %v4071 = vpop.xlane.xlu0 %4070
        %4072 = vmax.xlane.f32.xlu0 %v4018
        %v4073 = vpop.xlane.xlu0 %4072
        %4074 = vmax.xlane.f32.xlu0 %v4021
        %v4075 = vpop.xlane.xlu0 %4074
        %4076 = vmax.xlane.f32.xlu0 %v4026
        %v4077 = vpop.xlane.xlu0 %4076
        %4078 = vmax.xlane.f32.xlu0 %v4029
        %v4079 = vpop.xlane.xlu0 %4078
        %4080 = vmax.xlane.f32.xlu0 %v4034
        %v4081 = vpop.xlane.xlu0 %4080
        %4082 = vmax.xlane.f32.xlu0 %v4037
        %v4083 = vpop.xlane.xlu0 %4082
        %4084 = vmax.xlane.f32.xlu0 %v4042
        %v4085 = vpop.xlane.xlu0 %4084
        %4086 = vmax.xlane.f32.xlu0 %v4045
        %v4087 = vpop.xlane.xlu0 %4086
        %4088 = vmax.xlane.f32.xlu0 %v4050
        %v4089 = vpop.xlane.xlu0 %4088
        %4090 = vmax.xlane.f32.xlu0 %v4053
        %v4091 = vpop.xlane.xlu0 %4090
        %4092 = vmax.xlane.f32.xlu0 %v4058
        %v4093 = vpop.xlane.xlu0 %4092
        %4094 = vmax.xlane.f32.xlu0 %v4061
        %v4095 = vpop.xlane.xlu0 %4094
        %v4096 = vsub.f32 %v4002, %v4065
        %v4097 = vsub.f32 %v4005, %v4067
        %v4098 = vsub.f32 %v4010, %v4069
        %v4099 = vsub.f32 %v4013, %v4071
        %v4100 = vsub.f32 %v4018, %v4073
        %v4101 = vsub.f32 %v4021, %v4075
        %v4102 = vsub.f32 %v4026, %v4077
        %v4103 = vsub.f32 %v4029, %v4079
        %v4104 = vsub.f32 %v4034, %v4081
        %v4105 = vsub.f32 %v4037, %v4083
        %v4106 = vsub.f32 %v4042, %v4085
        %v4107 = vsub.f32 %v4045, %v4087
        %v4108 = vsub.f32 %v4050, %v4089
        %v4109 = vsub.f32 %v4053, %v4091
        %v4110 = vsub.f32 %v4058, %v4093
        %v4111 = vsub.f32 %v4061, %v4095
        %v4112 = vmul.f32 %v4096, 1.442695
        %v4113 = vpow.pop %v4112
        %v4114 = vmul.f32 %v4097, 1.442695
        %v4115 = vpow.pop %v4114
        %v4116 = vmul.f32 %v4098, 1.442695
        %v4117 = vpow.pop %v4116
        %v4118 = vmul.f32 %v4099, 1.442695
        %v4119 = vpow.pop %v4118
        %v4120 = vmul.f32 %v4100, 1.442695
        %v4121 = vpow.pop %v4120
        %v4122 = vmul.f32 %v4101, 1.442695
        %v4123 = vpow.pop %v4122
        %v4124 = vmul.f32 %v4102, 1.442695
        %v4125 = vpow.pop %v4124
        %v4126 = vmul.f32 %v4103, 1.442695
        %v4127 = vpow.pop %v4126
        %v4128 = vmul.f32 %v4104, 1.442695
        %v4129 = vpow.pop %v4128
        %v4130 = vmul.f32 %v4105, 1.442695
        %v4131 = vpow.pop %v4130
        %v4132 = vmul.f32 %v4106, 1.442695
        %v4133 = vpow.pop %v4132
        %v4134 = vmul.f32 %v4107, 1.442695
        %v4135 = vpow.pop %v4134
        %v4136 = vmul.f32 %v4108, 1.442695
        %v4137 = vpow.pop %v4136
        %v4138 = vmul.f32 %v4109, 1.442695
        %v4139 = vpow.pop %v4138
        %v4140 = vmul.f32 %v4110, 1.442695
        %v4141 = vpow.pop %v4140
        %v4142 = vmul.f32 %v4111, 1.442695
        %v4143 = vpow.pop %v4142
        %v4144 = vpack.c.bf16 %v4115, %v4113
        %v4145 = vpack.c.bf16 %v4119, %v4117
        %v4146 = vpack.c.bf16 %v4123, %v4121
        %v4147 = vpack.c.bf16 %v4127, %v4125
        %v4148 = vpack.c.bf16 %v4131, %v4129
        %v4149 = vpack.c.bf16 %v4135, %v4133
        %v4150 = vpack.c.bf16 %v4139, %v4137
        %v4151 = vpack.c.bf16 %v4143, %v4141
        %4152 = vmatprep.subr.bf16.mxu0 0
        %4153 = vmatpush1.bf16.xpose.msra.mxu0 %v4144
        %4154 = vmatprep.subr.bf16.mxu0 0
        %4155 = vmatpush1.bf16.xpose.msra.mxu0 %v4145
        %4156 = vmatprep.subr.bf16.mxu0 0
        %4157 = vmatpush1.bf16.xpose.msra.mxu0 %v4146
        %4158 = vmatprep.subr.bf16.mxu0 0
        %4159 = vmatpush1.bf16.xpose.msra.mxu0 %v4147
        %4160 = vmatprep.subr.bf16.mxu0 0
        %4161 = vmatpush1.bf16.xpose.msra.mxu0 %v4148
        %4162 = vmatprep.subr.bf16.mxu0 0
        %4163 = vmatpush1.bf16.xpose.msra.mxu0 %v4149
        %4164 = vmatprep.subr.bf16.mxu0 0
        %4165 = vmatpush1.bf16.xpose.msra.mxu0 %v4150
        %4166 = vmatprep.subr.bf16.mxu0 0
        %4167 = vmatpush1.bf16.xpose.msra.mxu0 %v4151
        %4168 = vmatprep.subr.bf16.mxu0 0
        %4169 = vmatpush1.bf16.xpose.msra.mxu0 0
        %4170 = vmatprep.subr.bf16.mxu0 0
        %4171 = vmatpush1.bf16.xpose.msra.mxu0 0
        %4172 = vmatprep.subr.bf16.mxu0 0
        %4173 = vmatpush1.bf16.xpose.msra.mxu0 0
        %4174 = vmatprep.subr.bf16.mxu0 0
        %4175 = vmatpush1.bf16.xpose.msra.mxu0 0
        %4176 = vmatprep.subr.bf16.mxu0 0
        %4177 = vmatpush1.bf16.xpose.msra.mxu0 0
        %4178 = vmatprep.subr.bf16.mxu0 0
        %4179 = vmatpush1.bf16.xpose.msra.mxu0 0
        %4180 = vmatprep.subr.bf16.mxu0 0
        %4181 = vmatpush1.bf16.xpose.msra.mxu0 0
        %4182 = vmatprep.subr.bf16.mxu0 0
        %4183 = vmatpush1.bf16.xpose.msra.mxu0 0
        %4184 = vmatprep.mubr.bf16.mxu0 0
        %4185 = vmatmul.mubr.bf16.gmra.mrb[0].mxu0 %v3923
        %v4186 = vpop.f32.mrb[0].mxu0
        %v4187 = vadd.f32 0.0, %v4186
        %v4188 = vpop.f32.mrb[0].mxu0
        %v4189 = vpop.f32.mrb[0].mxu0
        %v4190 = vpop.f32.mrb[0].mxu0
        %4191 = vdwg.mxu0
        %4192 = vmatprep.subr.bf16.mxu0 0
        %4193 = vmatpush1.bf16.xpose.msra.mxu0 %v4144
        %4194 = vmatprep.subr.bf16.mxu0 0
        %4195 = vmatpush1.bf16.xpose.msra.mxu0 %v4145
        %4196 = vmatprep.subr.bf16.mxu0 0
        %4197 = vmatpush1.bf16.xpose.msra.mxu0 %v4146
        %4198 = vmatprep.subr.bf16.mxu0 0
        %4199 = vmatpush1.bf16.xpose.msra.mxu0 %v4147
        %4200 = vmatprep.subr.bf16.mxu0 0
        %4201 = vmatpush1.bf16.xpose.msra.mxu0 %v4148
        %4202 = vmatprep.subr.bf16.mxu0 0
        %4203 = vmatpush1.bf16.xpose.msra.mxu0 %v4149
        %4204 = vmatprep.subr.bf16.mxu0 0
        %4205 = vmatpush1.bf16.xpose.msra.mxu0 %v4150
        %4206 = vmatprep.subr.bf16.mxu0 0
        %4207 = vmatpush1.bf16.xpose.msra.mxu0 %v4151
        %4208 = vmatprep.subr.bf16.mxu0 0
        %4209 = vmatpush1.bf16.xpose.msra.mxu0 0
        %4210 = vmatprep.subr.bf16.mxu0 0
        %4211 = vmatpush1.bf16.xpose.msra.mxu0 0
        %4212 = vmatprep.subr.bf16.mxu0 0
        %4213 = vmatpush1.bf16.xpose.msra.mxu0 0
        %4214 = vmatprep.subr.bf16.mxu0 0
        %4215 = vmatpush1.bf16.xpose.msra.mxu0 0
        %4216 = vmatprep.subr.bf16.mxu0 0
        %4217 = vmatpush1.bf16.xpose.msra.mxu0 0
        %4218 = vmatprep.subr.bf16.mxu0 0
        %4219 = vmatpush1.bf16.xpose.msra.mxu0 0
        %4220 = vmatprep.subr.bf16.mxu0 0
        %4221 = vmatpush1.bf16.xpose.msra.mxu0 0
        %4222 = vmatprep.subr.bf16.mxu0 0
        %4223 = vmatpush1.bf16.xpose.msra.mxu0 0
        %4224 = vmatprep.mubr.bf16.mxu0 0
        %4225 = vmatmul.mubr.bf16.gmra.mrb[0].mxu0 1065369472
        %v4226 = vpop.f32.mrb[0].mxu0
        %v4227 = vadd.f32 0.0, %v4226
        %v4228 = vpop.f32.mrb[0].mxu0
        %v4229 = vpop.f32.mrb[0].mxu0
        %v4230 = vpop.f32.mrb[0].mxu0
        %4231 = vdwg.mxu0
        %v4232 = vrcp.pop %v4227
        %v4233 = vlaneseq
        %v4234 = vshrl.u32 %v4233, 7
        %v4235 = vsub.s32 0, %v4234
        %v4236 = vrot.slane %v4232, %v4235
        %v4237 = vmul.f32 %v4187, %v4236
        %s4238 = scalar_lea.vmem %s307, 88 [#allocation10]
        %4239 = vst [vmem:[%s4238] sm:$0xff] %v4237
        %s4240 = scalar_lea.vmem %s251, 96 [#allocation2]
        %v4241 = vld [vmem:[%s4240] sm:$0xff]
        %v4242 = vmul.f32 %v4241, 0.35355338
        %v4243 = vpack.c.bf16 %v4242, %v4242
        %s4244 = scalar_lea.vmem %s260, 96 [#allocation5]
        %v4245 = vld [vmem:[%s4244] sm:$0xff]
        %v4246 = vpack.c.bf16 %v4245, %v4245
        %s4247 = scalar_lea.vmem %s269, 96 [#allocation7]
        %v4248 = vld [vmem:[%s4247] sm:$0xff]
        %v4249 = vpack.c.bf16 %v4248, %v4248
        %4250 = vxpose.xlu0.c.b16.start [1/8] %v4243, 128
        %4251 = vxpose.xlu0.c.b16.cont [2/8] 0, 128
        %4252 = vxpose.xlu0.c.b16.cont [3/8] 0, 128
        %4253 = vxpose.xlu0.c.b16.cont [4/8] 0, 128
        %4254 = vxpose.xlu0.c.b16.cont [5/8] 0, 128
        %4255 = vxpose.xlu0.c.b16.cont [6/8] 0, 128
        %4256 = vxpose.xlu0.c.b16.cont [7/8] 0, 128
        %4257 = vxpose.xlu0.c.b16.end [8/8] 0, 128
        %v4258 = vpop.trf.xlu0
        %v4259 = vpop.trf.xlu0
        %v4260 = vpop.trf.xlu0
        %v4261 = vpop.trf.xlu0
        %v4262 = vpop.trf.xlu0
        %v4263 = vpop.trf.xlu0
        %v4264 = vpop.trf.xlu0
        %v4265 = vpop.trf.xlu0
        %v4267 = vsel %vm353, %v4258, 0
        %v4270 = vsel %vm353, %v4259, 0
        %v4273 = vsel %vm353, %v4260, 0
        %v4276 = vsel %vm353, %v4261, 0
        %v4279 = vsel %vm353, %v4262, 0
        %v4282 = vsel %vm353, %v4263, 0
        %v4285 = vsel %vm353, %v4264, 0
        %v4288 = vsel %vm353, %v4265, 0
        %v4291 = vsel %vm378, %v4246, 0
        %4293 = vmatprep.subr.bf16.mxu0 0
        %4294 = vmatpush1.bf16.msra.mxu0 %v4291
        %4295 = vmatprep.subr.bf16.mxu0 0
        %4296 = vmatpush1.bf16.msra.mxu0 0
        %4297 = vmatprep.subr.bf16.mxu0 0
        %4298 = vmatpush1.bf16.msra.mxu0 0
        %4299 = vmatprep.subr.bf16.mxu0 0
        %4300 = vmatpush1.bf16.msra.mxu0 0
        %4301 = vmatprep.subr.bf16.mxu0 0
        %4302 = vmatpush1.bf16.msra.mxu0 0
        %4303 = vmatprep.subr.bf16.mxu0 0
        %4304 = vmatpush1.bf16.msra.mxu0 0
        %4305 = vmatprep.subr.bf16.mxu0 0
        %4306 = vmatpush1.bf16.msra.mxu0 0
        %4307 = vmatprep.subr.bf16.mxu0 0
        %4308 = vmatpush1.bf16.msra.mxu0 0
        %4309 = vmatprep.subr.bf16.mxu0 0
        %4310 = vmatpush1.bf16.msra.mxu0 0
        %4311 = vmatprep.subr.bf16.mxu0 0
        %4312 = vmatpush1.bf16.msra.mxu0 0
        %4313 = vmatprep.subr.bf16.mxu0 0
        %4314 = vmatpush1.bf16.msra.mxu0 0
        %4315 = vmatprep.subr.bf16.mxu0 0
        %4316 = vmatpush1.bf16.msra.mxu0 0
        %4317 = vmatprep.subr.bf16.mxu0 0
        %4318 = vmatpush1.bf16.msra.mxu0 0
        %4319 = vmatprep.subr.bf16.mxu0 0
        %4320 = vmatpush1.bf16.msra.mxu0 0
        %4321 = vmatprep.subr.bf16.mxu0 0
        %4322 = vmatpush1.bf16.msra.mxu0 0
        %4323 = vmatprep.subr.bf16.mxu0 0
        %4324 = vmatpush1.bf16.msra.mxu0 0
        %4325 = vmatprep.mubr.bf16.mxu0 0
        %4326 = vmatmul.mubr.bf16.gmra.mrb[0].mxu0 %v4267
        %v4327 = vpop.f32.mrb[0].mxu0
        %v4328 = vadd.f32 %v314, %v4327
        %v4329 = vpop.f32.mrb[0].mxu0
        %v4330 = vpop.f32.mrb[0].mxu0
        %v4331 = vadd.f32 %v315, %v4330
        %v4332 = vpop.f32.mrb[0].mxu0
        %4333 = vmatprep.mubr.bf16.mxu0 0
        %4334 = vmatmul.mubr.bf16.gmra.mrb[0].mxu0 %v4270
        %v4335 = vpop.f32.mrb[0].mxu0
        %v4336 = vadd.f32 %v316, %v4335
        %v4337 = vpop.f32.mrb[0].mxu0
        %v4338 = vpop.f32.mrb[0].mxu0
        %v4339 = vadd.f32 %v317, %v4338
        %v4340 = vpop.f32.mrb[0].mxu0
        %4341 = vmatprep.mubr.bf16.mxu0 0
        %4342 = vmatmul.mubr.bf16.gmra.mrb[0].mxu0 %v4273
        %v4343 = vpop.f32.mrb[0].mxu0
        %v4344 = vadd.f32 %v318, %v4343
        %v4345 = vpop.f32.mrb[0].mxu0
        %v4346 = vpop.f32.mrb[0].mxu0
        %v4347 = vadd.f32 %v319, %v4346
        %v4348 = vpop.f32.mrb[0].mxu0
        %4349 = vmatprep.mubr.bf16.mxu0 0
        %4350 = vmatmul.mubr.bf16.gmra.mrb[0].mxu0 %v4276
        %v4351 = vpop.f32.mrb[0].mxu0
        %v4352 = vadd.f32 %v320, %v4351
        %v4353 = vpop.f32.mrb[0].mxu0
        %v4354 = vpop.f32.mrb[0].mxu0
        %v4355 = vadd.f32 %v321, %v4354
        %v4356 = vpop.f32.mrb[0].mxu0
        %4357 = vmatprep.mubr.bf16.mxu0 0
        %4358 = vmatmul.mubr.bf16.gmra.mrb[0].mxu0 %v4279
        %v4359 = vpop.f32.mrb[0].mxu0
        %v4360 = vadd.f32 %v322, %v4359
        %v4361 = vpop.f32.mrb[0].mxu0
        %v4362 = vpop.f32.mrb[0].mxu0
        %v4363 = vadd.f32 %v323, %v4362
        %v4364 = vpop.f32.mrb[0].mxu0
        %4365 = vmatprep.mubr.bf16.mxu0 0
        %4366 = vmatmul.mubr.bf16.gmra.mrb[0].mxu0 %v4282
        %v4367 = vpop.f32.mrb[0].mxu0
        %v4368 = vadd.f32 %v324, %v4367
        %v4369 = vpop.f32.mrb[0].mxu0
        %v4370 = vpop.f32.mrb[0].mxu0
        %v4371 = vadd.f32 %v325, %v4370
        %v4372 = vpop.f32.mrb[0].mxu0
        %4373 = vmatprep.mubr.bf16.mxu0 0
        %4374 = vmatmul.mubr.bf16.gmra.mrb[0].mxu0 %v4285
        %v4375 = vpop.f32.mrb[0].mxu0
        %v4376 = vadd.f32 %v326, %v4375
        %v4377 = vpop.f32.mrb[0].mxu0
        %v4378 = vpop.f32.mrb[0].mxu0
        %v4379 = vadd.f32 %v327, %v4378
        %v4380 = vpop.f32.mrb[0].mxu0
        %4381 = vmatprep.mubr.bf16.mxu0 0
        %4382 = vmatmul.mubr.bf16.gmra.mrb[0].mxu0 %v4288
        %v4383 = vpop.f32.mrb[0].mxu0
        %v4384 = vadd.f32 %v328, %v4383
        %v4385 = vpop.f32.mrb[0].mxu0
        %v4386 = vpop.f32.mrb[0].mxu0
        %v4387 = vadd.f32 %v329, %v4386
        %v4388 = vpop.f32.mrb[0].mxu0
        %4389 = vdwg.mxu0
        %4390 = vmax.xlane.f32.xlu0 %v4328
        %v4391 = vpop.xlane.xlu0 %4390
        %4392 = vmax.xlane.f32.xlu0 %v4331
        %v4393 = vpop.xlane.xlu0 %4392
        %4394 = vmax.xlane.f32.xlu0 %v4336
        %v4395 = vpop.xlane.xlu0 %4394
        %4396 = vmax.xlane.f32.xlu0 %v4339
        %v4397 = vpop.xlane.xlu0 %4396
        %4398 = vmax.xlane.f32.xlu0 %v4344
        %v4399 = vpop.xlane.xlu0 %4398
        %4400 = vmax.xlane.f32.xlu0 %v4347
        %v4401 = vpop.xlane.xlu0 %4400
        %4402 = vmax.xlane.f32.xlu0 %v4352
        %v4403 = vpop.xlane.xlu0 %4402
        %4404 = vmax.xlane.f32.xlu0 %v4355
        %v4405 = vpop.xlane.xlu0 %4404
        %4406 = vmax.xlane.f32.xlu0 %v4360
        %v4407 = vpop.xlane.xlu0 %4406
        %4408 = vmax.xlane.f32.xlu0 %v4363
        %v4409 = vpop.xlane.xlu0 %4408
        %4410 = vmax.xlane.f32.xlu0 %v4368
        %v4411 = vpop.xlane.xlu0 %4410
        %4412 = vmax.xlane.f32.xlu0 %v4371
        %v4413 = vpop.xlane.xlu0 %4412
        %4414 = vmax.xlane.f32.xlu0 %v4376
        %v4415 = vpop.xlane.xlu0 %4414
        %4416 = vmax.xlane.f32.xlu0 %v4379
        %v4417 = vpop.xlane.xlu0 %4416
        %4418 = vmax.xlane.f32.xlu0 %v4384
        %v4419 = vpop.xlane.xlu0 %4418
        %4420 = vmax.xlane.f32.xlu0 %v4387
        %v4421 = vpop.xlane.xlu0 %4420
        %v4422 = vsub.f32 %v4328, %v4391
        %v4423 = vsub.f32 %v4331, %v4393
        %v4424 = vsub.f32 %v4336, %v4395
        %v4425 = vsub.f32 %v4339, %v4397
        %v4426 = vsub.f32 %v4344, %v4399
        %v4427 = vsub.f32 %v4347, %v4401
        %v4428 = vsub.f32 %v4352, %v4403
        %v4429 = vsub.f32 %v4355, %v4405
        %v4430 = vsub.f32 %v4360, %v4407
        %v4431 = vsub.f32 %v4363, %v4409
        %v4432 = vsub.f32 %v4368, %v4411
        %v4433 = vsub.f32 %v4371, %v4413
        %v4434 = vsub.f32 %v4376, %v4415
        %v4435 = vsub.f32 %v4379, %v4417
        %v4436 = vsub.f32 %v4384, %v4419
        %v4437 = vsub.f32 %v4387, %v4421
        %v4438 = vmul.f32 %v4422, 1.442695
        %v4439 = vpow.pop %v4438
        %v4440 = vmul.f32 %v4423, 1.442695
        %v4441 = vpow.pop %v4440
        %v4442 = vmul.f32 %v4424, 1.442695
        %v4443 = vpow.pop %v4442
        %v4444 = vmul.f32 %v4425, 1.442695
        %v4445 = vpow.pop %v4444
        %v4446 = vmul.f32 %v4426, 1.442695
        %v4447 = vpow.pop %v4446
        %v4448 = vmul.f32 %v4427, 1.442695
        %v4449 = vpow.pop %v4448
        %v4450 = vmul.f32 %v4428, 1.442695
        %v4451 = vpow.pop %v4450
        %v4452 = vmul.f32 %v4429, 1.442695
        %v4453 = vpow.pop %v4452
        %v4454 = vmul.f32 %v4430, 1.442695
        %v4455 = vpow.pop %v4454
        %v4456 = vmul.f32 %v4431, 1.442695
        %v4457 = vpow.pop %v4456
        %v4458 = vmul.f32 %v4432, 1.442695
        %v4459 = vpow.pop %v4458
        %v4460 = vmul.f32 %v4433, 1.442695
        %v4461 = vpow.pop %v4460
        %v4462 = vmul.f32 %v4434, 1.442695
        %v4463 = vpow.pop %v4462
        %v4464 = vmul.f32 %v4435, 1.442695
        %v4465 = vpow.pop %v4464
        %v4466 = vmul.f32 %v4436, 1.442695
        %v4467 = vpow.pop %v4466
        %v4468 = vmul.f32 %v4437, 1.442695
        %v4469 = vpow.pop %v4468
        %v4470 = vpack.c.bf16 %v4441, %v4439
        %v4471 = vpack.c.bf16 %v4445, %v4443
        %v4472 = vpack.c.bf16 %v4449, %v4447
        %v4473 = vpack.c.bf16 %v4453, %v4451
        %v4474 = vpack.c.bf16 %v4457, %v4455
        %v4475 = vpack.c.bf16 %v4461, %v4459
        %v4476 = vpack.c.bf16 %v4465, %v4463
        %v4477 = vpack.c.bf16 %v4469, %v4467
        %4478 = vmatprep.subr.bf16.mxu0 0
        %4479 = vmatpush1.bf16.xpose.msra.mxu0 %v4470
        %4480 = vmatprep.subr.bf16.mxu0 0
        %4481 = vmatpush1.bf16.xpose.msra.mxu0 %v4471
        %4482 = vmatprep.subr.bf16.mxu0 0
        %4483 = vmatpush1.bf16.xpose.msra.mxu0 %v4472
        %4484 = vmatprep.subr.bf16.mxu0 0
        %4485 = vmatpush1.bf16.xpose.msra.mxu0 %v4473
        %4486 = vmatprep.subr.bf16.mxu0 0
        %4487 = vmatpush1.bf16.xpose.msra.mxu0 %v4474
        %4488 = vmatprep.subr.bf16.mxu0 0
        %4489 = vmatpush1.bf16.xpose.msra.mxu0 %v4475
        %4490 = vmatprep.subr.bf16.mxu0 0
        %4491 = vmatpush1.bf16.xpose.msra.mxu0 %v4476
        %4492 = vmatprep.subr.bf16.mxu0 0
        %4493 = vmatpush1.bf16.xpose.msra.mxu0 %v4477
        %4494 = vmatprep.subr.bf16.mxu0 0
        %4495 = vmatpush1.bf16.xpose.msra.mxu0 0
        %4496 = vmatprep.subr.bf16.mxu0 0
        %4497 = vmatpush1.bf16.xpose.msra.mxu0 0
        %4498 = vmatprep.subr.bf16.mxu0 0
        %4499 = vmatpush1.bf16.xpose.msra.mxu0 0
        %4500 = vmatprep.subr.bf16.mxu0 0
        %4501 = vmatpush1.bf16.xpose.msra.mxu0 0
        %4502 = vmatprep.subr.bf16.mxu0 0
        %4503 = vmatpush1.bf16.xpose.msra.mxu0 0
        %4504 = vmatprep.subr.bf16.mxu0 0
        %4505 = vmatpush1.bf16.xpose.msra.mxu0 0
        %4506 = vmatprep.subr.bf16.mxu0 0
        %4507 = vmatpush1.bf16.xpose.msra.mxu0 0
        %4508 = vmatprep.subr.bf16.mxu0 0
        %4509 = vmatpush1.bf16.xpose.msra.mxu0 0
        %4510 = vmatprep.mubr.bf16.mxu0 0
        %4511 = vmatmul.mubr.bf16.gmra.mrb[0].mxu0 %v4249
        %v4512 = vpop.f32.mrb[0].mxu0
        %v4513 = vadd.f32 0.0, %v4512
        %v4514 = vpop.f32.mrb[0].mxu0
        %v4515 = vpop.f32.mrb[0].mxu0
        %v4516 = vpop.f32.mrb[0].mxu0
        %4517 = vdwg.mxu0
        %4518 = vmatprep.subr.bf16.mxu0 0
        %4519 = vmatpush1.bf16.xpose.msra.mxu0 %v4470
        %4520 = vmatprep.subr.bf16.mxu0 0
        %4521 = vmatpush1.bf16.xpose.msra.mxu0 %v4471
        %4522 = vmatprep.subr.bf16.mxu0 0
        %4523 = vmatpush1.bf16.xpose.msra.mxu0 %v4472
        %4524 = vmatprep.subr.bf16.mxu0 0
        %4525 = vmatpush1.bf16.xpose.msra.mxu0 %v4473
        %4526 = vmatprep.subr.bf16.mxu0 0
        %4527 = vmatpush1.bf16.xpose.msra.mxu0 %v4474
        %4528 = vmatprep.subr.bf16.mxu0 0
        %4529 = vmatpush1.bf16.xpose.msra.mxu0 %v4475
        %4530 = vmatprep.subr.bf16.mxu0 0
        %4531 = vmatpush1.bf16.xpose.msra.mxu0 %v4476
        %4532 = vmatprep.subr.bf16.mxu0 0
        %4533 = vmatpush1.bf16.xpose.msra.mxu0 %v4477
        %4534 = vmatprep.subr.bf16.mxu0 0
        %4535 = vmatpush1.bf16.xpose.msra.mxu0 0
        %4536 = vmatprep.subr.bf16.mxu0 0
        %4537 = vmatpush1.bf16.xpose.msra.mxu0 0
        %4538 = vmatprep.subr.bf16.mxu0 0
        %4539 = vmatpush1.bf16.xpose.msra.mxu0 0
        %4540 = vmatprep.subr.bf16.mxu0 0
        %4541 = vmatpush1.bf16.xpose.msra.mxu0 0
        %4542 = vmatprep.subr.bf16.mxu0 0
        %4543 = vmatpush1.bf16.xpose.msra.mxu0 0
        %4544 = vmatprep.subr.bf16.mxu0 0
        %4545 = vmatpush1.bf16.xpose.msra.mxu0 0
        %4546 = vmatprep.subr.bf16.mxu0 0
        %4547 = vmatpush1.bf16.xpose.msra.mxu0 0
        %4548 = vmatprep.subr.bf16.mxu0 0
        %4549 = vmatpush1.bf16.xpose.msra.mxu0 0
        %4550 = vmatprep.mubr.bf16.mxu0 0
        %4551 = vmatmul.mubr.bf16.gmra.mrb[0].mxu0 1065369472
        %v4552 = vpop.f32.mrb[0].mxu0
        %v4553 = vadd.f32 0.0, %v4552
        %v4554 = vpop.f32.mrb[0].mxu0
        %v4555 = vpop.f32.mrb[0].mxu0
        %v4556 = vpop.f32.mrb[0].mxu0
        %4557 = vdwg.mxu0
        %v4558 = vrcp.pop %v4553
        %v4559 = vlaneseq
        %v4560 = vshrl.u32 %v4559, 7
        %v4561 = vsub.s32 0, %v4560
        %v4562 = vrot.slane %v4558, %v4561
        %v4563 = vmul.f32 %v4513, %v4562
        %s4564 = scalar_lea.vmem %s307, 96 [#allocation10]
        %4565 = vst [vmem:[%s4564] sm:$0xff] %v4563
        %s4566 = scalar_lea.vmem %s251, 104 [#allocation2]
        %v4567 = vld [vmem:[%s4566] sm:$0xff]
        %v4568 = vmul.f32 %v4567, 0.35355338
        %v4569 = vpack.c.bf16 %v4568, %v4568
        %s4570 = scalar_lea.vmem %s260, 104 [#allocation5]
        %v4571 = vld [vmem:[%s4570] sm:$0xff]
        %v4572 = vpack.c.bf16 %v4571, %v4571
        %s4573 = scalar_lea.vmem %s269, 104 [#allocation7]
        %v4574 = vld [vmem:[%s4573] sm:$0xff]
        %v4575 = vpack.c.bf16 %v4574, %v4574
        %4576 = vxpose.xlu0.c.b16.start [1/8] %v4569, 128
        %4577 = vxpose.xlu0.c.b16.cont [2/8] 0, 128
        %4578 = vxpose.xlu0.c.b16.cont [3/8] 0, 128
        %4579 = vxpose.xlu0.c.b16.cont [4/8] 0, 128
        %4580 = vxpose.xlu0.c.b16.cont [5/8] 0, 128
        %4581 = vxpose.xlu0.c.b16.cont [6/8] 0, 128
        %4582 = vxpose.xlu0.c.b16.cont [7/8] 0, 128
        %4583 = vxpose.xlu0.c.b16.end [8/8] 0, 128
        %v4584 = vpop.trf.xlu0
        %v4585 = vpop.trf.xlu0
        %v4586 = vpop.trf.xlu0
        %v4587 = vpop.trf.xlu0
        %v4588 = vpop.trf.xlu0
        %v4589 = vpop.trf.xlu0
        %v4590 = vpop.trf.xlu0
        %v4591 = vpop.trf.xlu0
        %v4593 = vsel %vm353, %v4584, 0
        %v4596 = vsel %vm353, %v4585, 0
        %v4599 = vsel %vm353, %v4586, 0
        %v4602 = vsel %vm353, %v4587, 0
        %v4605 = vsel %vm353, %v4588, 0
        %v4608 = vsel %vm353, %v4589, 0
        %v4611 = vsel %vm353, %v4590, 0
        %v4614 = vsel %vm353, %v4591, 0
        %v4617 = vsel %vm378, %v4572, 0
        %4619 = vmatprep.subr.bf16.mxu0 0
        %4620 = vmatpush1.bf16.msra.mxu0 %v4617
        %4621 = vmatprep.subr.bf16.mxu0 0
        %4622 = vmatpush1.bf16.msra.mxu0 0
        %4623 = vmatprep.subr.bf16.mxu0 0
        %4624 = vmatpush1.bf16.msra.mxu0 0
        %4625 = vmatprep.subr.bf16.mxu0 0
        %4626 = vmatpush1.bf16.msra.mxu0 0
        %4627 = vmatprep.subr.bf16.mxu0 0
        %4628 = vmatpush1.bf16.msra.mxu0 0
        %4629 = vmatprep.subr.bf16.mxu0 0
        %4630 = vmatpush1.bf16.msra.mxu0 0
        %4631 = vmatprep.subr.bf16.mxu0 0
        %4632 = vmatpush1.bf16.msra.mxu0 0
        %4633 = vmatprep.subr.bf16.mxu0 0
        %4634 = vmatpush1.bf16.msra.mxu0 0
        %4635 = vmatprep.subr.bf16.mxu0 0
        %4636 = vmatpush1.bf16.msra.mxu0 0
        %4637 = vmatprep.subr.bf16.mxu0 0
        %4638 = vmatpush1.bf16.msra.mxu0 0
        %4639 = vmatprep.subr.bf16.mxu0 0
        %4640 = vmatpush1.bf16.msra.mxu0 0
        %4641 = vmatprep.subr.bf16.mxu0 0
        %4642 = vmatpush1.bf16.msra.mxu0 0
        %4643 = vmatprep.subr.bf16.mxu0 0
        %4644 = vmatpush1.bf16.msra.mxu0 0
        %4645 = vmatprep.subr.bf16.mxu0 0
        %4646 = vmatpush1.bf16.msra.mxu0 0
        %4647 = vmatprep.subr.bf16.mxu0 0
        %4648 = vmatpush1.bf16.msra.mxu0 0
        %4649 = vmatprep.subr.bf16.mxu0 0
        %4650 = vmatpush1.bf16.msra.mxu0 0
        %4651 = vmatprep.mubr.bf16.mxu0 0
        %4652 = vmatmul.mubr.bf16.gmra.mrb[0].mxu0 %v4593
        %v4653 = vpop.f32.mrb[0].mxu0
        %v4654 = vadd.f32 %v314, %v4653
        %v4655 = vpop.f32.mrb[0].mxu0
        %v4656 = vpop.f32.mrb[0].mxu0
        %v4657 = vadd.f32 %v315, %v4656
        %v4658 = vpop.f32.mrb[0].mxu0
        %4659 = vmatprep.mubr.bf16.mxu0 0
        %4660 = vmatmul.mubr.bf16.gmra.mrb[0].mxu0 %v4596
        %v4661 = vpop.f32.mrb[0].mxu0
        %v4662 = vadd.f32 %v316, %v4661
        %v4663 = vpop.f32.mrb[0].mxu0
        %v4664 = vpop.f32.mrb[0].mxu0
        %v4665 = vadd.f32 %v317, %v4664
        %v4666 = vpop.f32.mrb[0].mxu0
        %4667 = vmatprep.mubr.bf16.mxu0 0
        %4668 = vmatmul.mubr.bf16.gmra.mrb[0].mxu0 %v4599
        %v4669 = vpop.f32.mrb[0].mxu0
        %v4670 = vadd.f32 %v318, %v4669
        %v4671 = vpop.f32.mrb[0].mxu0
        %v4672 = vpop.f32.mrb[0].mxu0
        %v4673 = vadd.f32 %v319, %v4672
        %v4674 = vpop.f32.mrb[0].mxu0
        %4675 = vmatprep.mubr.bf16.mxu0 0
        %4676 = vmatmul.mubr.bf16.gmra.mrb[0].mxu0 %v4602
        %v4677 = vpop.f32.mrb[0].mxu0
        %v4678 = vadd.f32 %v320, %v4677
        %v4679 = vpop.f32.mrb[0].mxu0
        %v4680 = vpop.f32.mrb[0].mxu0
        %v4681 = vadd.f32 %v321, %v4680
        %v4682 = vpop.f32.mrb[0].mxu0
        %4683 = vmatprep.mubr.bf16.mxu0 0
        %4684 = vmatmul.mubr.bf16.gmra.mrb[0].mxu0 %v4605
        %v4685 = vpop.f32.mrb[0].mxu0
        %v4686 = vadd.f32 %v322, %v4685
        %v4687 = vpop.f32.mrb[0].mxu0
        %v4688 = vpop.f32.mrb[0].mxu0
        %v4689 = vadd.f32 %v323, %v4688
        %v4690 = vpop.f32.mrb[0].mxu0
        %4691 = vmatprep.mubr.bf16.mxu0 0
        %4692 = vmatmul.mubr.bf16.gmra.mrb[0].mxu0 %v4608
        %v4693 = vpop.f32.mrb[0].mxu0
        %v4694 = vadd.f32 %v324, %v4693
        %v4695 = vpop.f32.mrb[0].mxu0
        %v4696 = vpop.f32.mrb[0].mxu0
        %v4697 = vadd.f32 %v325, %v4696
        %v4698 = vpop.f32.mrb[0].mxu0
        %4699 = vmatprep.mubr.bf16.mxu0 0
        %4700 = vmatmul.mubr.bf16.gmra.mrb[0].mxu0 %v4611
        %v4701 = vpop.f32.mrb[0].mxu0
        %v4702 = vadd.f32 %v326, %v4701
        %v4703 = vpop.f32.mrb[0].mxu0
        %v4704 = vpop.f32.mrb[0].mxu0
        %v4705 = vadd.f32 %v327, %v4704
        %v4706 = vpop.f32.mrb[0].mxu0
        %4707 = vmatprep.mubr.bf16.mxu0 0
        %4708 = vmatmul.mubr.bf16.gmra.mrb[0].mxu0 %v4614
        %v4709 = vpop.f32.mrb[0].mxu0
        %v4710 = vadd.f32 %v328, %v4709
        %v4711 = vpop.f32.mrb[0].mxu0
        %v4712 = vpop.f32.mrb[0].mxu0
        %v4713 = vadd.f32 %v329, %v4712
        %v4714 = vpop.f32.mrb[0].mxu0
        %4715 = vdwg.mxu0
        %4716 = vmax.xlane.f32.xlu0 %v4654
        %v4717 = vpop.xlane.xlu0 %4716
        %4718 = vmax.xlane.f32.xlu0 %v4657
        %v4719 = vpop.xlane.xlu0 %4718
        %4720 = vmax.xlane.f32.xlu0 %v4662
        %v4721 = vpop.xlane.xlu0 %4720
        %4722 = vmax.xlane.f32.xlu0 %v4665
        %v4723 = vpop.xlane.xlu0 %4722
        %4724 = vmax.xlane.f32.xlu0 %v4670
        %v4725 = vpop.xlane.xlu0 %4724
        %4726 = vmax.xlane.f32.xlu0 %v4673
        %v4727 = vpop.xlane.xlu0 %4726
        %4728 = vmax.xlane.f32.xlu0 %v4678
        %v4729 = vpop.xlane.xlu0 %4728
        %4730 = vmax.xlane.f32.xlu0 %v4681
        %v4731 = vpop.xlane.xlu0 %4730
        %4732 = vmax.xlane.f32.xlu0 %v4686
        %v4733 = vpop.xlane.xlu0 %4732
        %4734 = vmax.xlane.f32.xlu0 %v4689
        %v4735 = vpop.xlane.xlu0 %4734
        %4736 = vmax.xlane.f32.xlu0 %v4694
        %v4737 = vpop.xlane.xlu0 %4736
        %4738 = vmax.xlane.f32.xlu0 %v4697
        %v4739 = vpop.xlane.xlu0 %4738
        %4740 = vmax.xlane.f32.xlu0 %v4702
        %v4741 = vpop.xlane.xlu0 %4740
        %4742 = vmax.xlane.f32.xlu0 %v4705
        %v4743 = vpop.xlane.xlu0 %4742
        %4744 = vmax.xlane.f32.xlu0 %v4710
        %v4745 = vpop.xlane.xlu0 %4744
        %4746 = vmax.xlane.f32.xlu0 %v4713
        %v4747 = vpop.xlane.xlu0 %4746
        %v4748 = vsub.f32 %v4654, %v4717
        %v4749 = vsub.f32 %v4657, %v4719
        %v4750 = vsub.f32 %v4662, %v4721
        %v4751 = vsub.f32 %v4665, %v4723
        %v4752 = vsub.f32 %v4670, %v4725
        %v4753 = vsub.f32 %v4673, %v4727
        %v4754 = vsub.f32 %v4678, %v4729
        %v4755 = vsub.f32 %v4681, %v4731
        %v4756 = vsub.f32 %v4686, %v4733
        %v4757 = vsub.f32 %v4689, %v4735
        %v4758 = vsub.f32 %v4694, %v4737
        %v4759 = vsub.f32 %v4697, %v4739
        %v4760 = vsub.f32 %v4702, %v4741
        %v4761 = vsub.f32 %v4705, %v4743
        %v4762 = vsub.f32 %v4710, %v4745
        %v4763 = vsub.f32 %v4713, %v4747
        %v4764 = vmul.f32 %v4748, 1.442695
        %v4765 = vpow.pop %v4764
        %v4766 = vmul.f32 %v4749, 1.442695
        %v4767 = vpow.pop %v4766
        %v4768 = vmul.f32 %v4750, 1.442695
        %v4769 = vpow.pop %v4768
        %v4770 = vmul.f32 %v4751, 1.442695
        %v4771 = vpow.pop %v4770
        %v4772 = vmul.f32 %v4752, 1.442695
        %v4773 = vpow.pop %v4772
        %v4774 = vmul.f32 %v4753, 1.442695
        %v4775 = vpow.pop %v4774
        %v4776 = vmul.f32 %v4754, 1.442695
        %v4777 = vpow.pop %v4776
        %v4778 = vmul.f32 %v4755, 1.442695
        %v4779 = vpow.pop %v4778
        %v4780 = vmul.f32 %v4756, 1.442695
        %v4781 = vpow.pop %v4780
        %v4782 = vmul.f32 %v4757, 1.442695
        %v4783 = vpow.pop %v4782
        %v4784 = vmul.f32 %v4758, 1.442695
        %v4785 = vpow.pop %v4784
        %v4786 = vmul.f32 %v4759, 1.442695
        %v4787 = vpow.pop %v4786
        %v4788 = vmul.f32 %v4760, 1.442695
        %v4789 = vpow.pop %v4788
        %v4790 = vmul.f32 %v4761, 1.442695
        %v4791 = vpow.pop %v4790
        %v4792 = vmul.f32 %v4762, 1.442695
        %v4793 = vpow.pop %v4792
        %v4794 = vmul.f32 %v4763, 1.442695
        %v4795 = vpow.pop %v4794
        %v4796 = vpack.c.bf16 %v4767, %v4765
        %v4797 = vpack.c.bf16 %v4771, %v4769
        %v4798 = vpack.c.bf16 %v4775, %v4773
        %v4799 = vpack.c.bf16 %v4779, %v4777
        %v4800 = vpack.c.bf16 %v4783, %v4781
        %v4801 = vpack.c.bf16 %v4787, %v4785
        %v4802 = vpack.c.bf16 %v4791, %v4789
        %v4803 = vpack.c.bf16 %v4795, %v4793
        %4804 = vmatprep.subr.bf16.mxu0 0
        %4805 = vmatpush1.bf16.xpose.msra.mxu0 %v4796
        %4806 = vmatprep.subr.bf16.mxu0 0
        %4807 = vmatpush1.bf16.xpose.msra.mxu0 %v4797
        %4808 = vmatprep.subr.bf16.mxu0 0
        %4809 = vmatpush1.bf16.xpose.msra.mxu0 %v4798
        %4810 = vmatprep.subr.bf16.mxu0 0
        %4811 = vmatpush1.bf16.xpose.msra.mxu0 %v4799
        %4812 = vmatprep.subr.bf16.mxu0 0
        %4813 = vmatpush1.bf16.xpose.msra.mxu0 %v4800
        %4814 = vmatprep.subr.bf16.mxu0 0
        %4815 = vmatpush1.bf16.xpose.msra.mxu0 %v4801
        %4816 = vmatprep.subr.bf16.mxu0 0
        %4817 = vmatpush1.bf16.xpose.msra.mxu0 %v4802
        %4818 = vmatprep.subr.bf16.mxu0 0
        %4819 = vmatpush1.bf16.xpose.msra.mxu0 %v4803
        %4820 = vmatprep.subr.bf16.mxu0 0
        %4821 = vmatpush1.bf16.xpose.msra.mxu0 0
        %4822 = vmatprep.subr.bf16.mxu0 0
        %4823 = vmatpush1.bf16.xpose.msra.mxu0 0
        %4824 = vmatprep.subr.bf16.mxu0 0
        %4825 = vmatpush1.bf16.xpose.msra.mxu0 0
        %4826 = vmatprep.subr.bf16.mxu0 0
        %4827 = vmatpush1.bf16.xpose.msra.mxu0 0
        %4828 = vmatprep.subr.bf16.mxu0 0
        %4829 = vmatpush1.bf16.xpose.msra.mxu0 0
        %4830 = vmatprep.subr.bf16.mxu0 0
        %4831 = vmatpush1.bf16.xpose.msra.mxu0 0
        %4832 = vmatprep.subr.bf16.mxu0 0
        %4833 = vmatpush1.bf16.xpose.msra.mxu0 0
        %4834 = vmatprep.subr.bf16.mxu0 0
        %4835 = vmatpush1.bf16.xpose.msra.mxu0 0
        %4836 = vmatprep.mubr.bf16.mxu0 0
        %4837 = vmatmul.mubr.bf16.gmra.mrb[0].mxu0 %v4575
        %v4838 = vpop.f32.mrb[0].mxu0
        %v4839 = vadd.f32 0.0, %v4838
        %v4840 = vpop.f32.mrb[0].mxu0
        %v4841 = vpop.f32.mrb[0].mxu0
        %v4842 = vpop.f32.mrb[0].mxu0
        %4843 = vdwg.mxu0
        %4844 = vmatprep.subr.bf16.mxu0 0
        %4845 = vmatpush1.bf16.xpose.msra.mxu0 %v4796
        %4846 = vmatprep.subr.bf16.mxu0 0
        %4847 = vmatpush1.bf16.xpose.msra.mxu0 %v4797
        %4848 = vmatprep.subr.bf16.mxu0 0
        %4849 = vmatpush1.bf16.xpose.msra.mxu0 %v4798
        %4850 = vmatprep.subr.bf16.mxu0 0
        %4851 = vmatpush1.bf16.xpose.msra.mxu0 %v4799
        %4852 = vmatprep.subr.bf16.mxu0 0
        %4853 = vmatpush1.bf16.xpose.msra.mxu0 %v4800
        %4854 = vmatprep.subr.bf16.mxu0 0
        %4855 = vmatpush1.bf16.xpose.msra.mxu0 %v4801
        %4856 = vmatprep.subr.bf16.mxu0 0
        %4857 = vmatpush1.bf16.xpose.msra.mxu0 %v4802
        %4858 = vmatprep.subr.bf16.mxu0 0
        %4859 = vmatpush1.bf16.xpose.msra.mxu0 %v4803
        %4860 = vmatprep.subr.bf16.mxu0 0
        %4861 = vmatpush1.bf16.xpose.msra.mxu0 0
        %4862 = vmatprep.subr.bf16.mxu0 0
        %4863 = vmatpush1.bf16.xpose.msra.mxu0 0
        %4864 = vmatprep.subr.bf16.mxu0 0
        %4865 = vmatpush1.bf16.xpose.msra.mxu0 0
        %4866 = vmatprep.subr.bf16.mxu0 0
        %4867 = vmatpush1.bf16.xpose.msra.mxu0 0
        %4868 = vmatprep.subr.bf16.mxu0 0
        %4869 = vmatpush1.bf16.xpose.msra.mxu0 0
        %4870 = vmatprep.subr.bf16.mxu0 0
        %4871 = vmatpush1.bf16.xpose.msra.mxu0 0
        %4872 = vmatprep.subr.bf16.mxu0 0
        %4873 = vmatpush1.bf16.xpose.msra.mxu0 0
        %4874 = vmatprep.subr.bf16.mxu0 0
        %4875 = vmatpush1.bf16.xpose.msra.mxu0 0
        %4876 = vmatprep.mubr.bf16.mxu0 0
        %4877 = vmatmul.mubr.bf16.gmra.mrb[0].mxu0 1065369472
        %v4878 = vpop.f32.mrb[0].mxu0
        %v4879 = vadd.f32 0.0, %v4878
        %v4880 = vpop.f32.mrb[0].mxu0
        %v4881 = vpop.f32.mrb[0].mxu0
        %v4882 = vpop.f32.mrb[0].mxu0
        %4883 = vdwg.mxu0
        %v4884 = vrcp.pop %v4879
        %v4885 = vlaneseq
        %v4886 = vshrl.u32 %v4885, 7
        %v4887 = vsub.s32 0, %v4886
        %v4888 = vrot.slane %v4884, %v4887
        %v4889 = vmul.f32 %v4839, %v4888
        %s4890 = scalar_lea.vmem %s307, 104 [#allocation10]
        %4891 = vst [vmem:[%s4890] sm:$0xff] %v4889
        %s4892 = scalar_lea.vmem %s251, 112 [#allocation2]
        %v4893 = vld [vmem:[%s4892] sm:$0xff]
        %v4894 = vmul.f32 %v4893, 0.35355338
        %v4895 = vpack.c.bf16 %v4894, %v4894
        %s4896 = scalar_lea.vmem %s260, 112 [#allocation5]
        %v4897 = vld [vmem:[%s4896] sm:$0xff]
        %v4898 = vpack.c.bf16 %v4897, %v4897
        %s4899 = scalar_lea.vmem %s269, 112 [#allocation7]
        %v4900 = vld [vmem:[%s4899] sm:$0xff]
        %v4901 = vpack.c.bf16 %v4900, %v4900
        %4902 = vxpose.xlu0.c.b16.start [1/8] %v4895, 128
        %4903 = vxpose.xlu0.c.b16.cont [2/8] 0, 128
        %4904 = vxpose.xlu0.c.b16.cont [3/8] 0, 128
        %4905 = vxpose.xlu0.c.b16.cont [4/8] 0, 128
        %4906 = vxpose.xlu0.c.b16.cont [5/8] 0, 128
        %4907 = vxpose.xlu0.c.b16.cont [6/8] 0, 128
        %4908 = vxpose.xlu0.c.b16.cont [7/8] 0, 128
        %4909 = vxpose.xlu0.c.b16.end [8/8] 0, 128
        %v4910 = vpop.trf.xlu0
        %v4911 = vpop.trf.xlu0
        %v4912 = vpop.trf.xlu0
        %v4913 = vpop.trf.xlu0
        %v4914 = vpop.trf.xlu0
        %v4915 = vpop.trf.xlu0
        %v4916 = vpop.trf.xlu0
        %v4917 = vpop.trf.xlu0
        %v4919 = vsel %vm353, %v4910, 0
        %v4922 = vsel %vm353, %v4911, 0
        %v4925 = vsel %vm353, %v4912, 0
        %v4928 = vsel %vm353, %v4913, 0
        %v4931 = vsel %vm353, %v4914, 0
        %v4934 = vsel %vm353, %v4915, 0
        %v4937 = vsel %vm353, %v4916, 0
        %v4940 = vsel %vm353, %v4917, 0
        %v4943 = vsel %vm378, %v4898, 0
        %4945 = vmatprep.subr.bf16.mxu0 0
        %4946 = vmatpush1.bf16.msra.mxu0 %v4943
        %4947 = vmatprep.subr.bf16.mxu0 0
        %4948 = vmatpush1.bf16.msra.mxu0 0
        %4949 = vmatprep.subr.bf16.mxu0 0
        %4950 = vmatpush1.bf16.msra.mxu0 0
        %4951 = vmatprep.subr.bf16.mxu0 0
        %4952 = vmatpush1.bf16.msra.mxu0 0
        %4953 = vmatprep.subr.bf16.mxu0 0
        %4954 = vmatpush1.bf16.msra.mxu0 0
        %4955 = vmatprep.subr.bf16.mxu0 0
        %4956 = vmatpush1.bf16.msra.mxu0 0
        %4957 = vmatprep.subr.bf16.mxu0 0
        %4958 = vmatpush1.bf16.msra.mxu0 0
        %4959 = vmatprep.subr.bf16.mxu0 0
        %4960 = vmatpush1.bf16.msra.mxu0 0
        %4961 = vmatprep.subr.bf16.mxu0 0
        %4962 = vmatpush1.bf16.msra.mxu0 0
        %4963 = vmatprep.subr.bf16.mxu0 0
        %4964 = vmatpush1.bf16.msra.mxu0 0
        %4965 = vmatprep.subr.bf16.mxu0 0
        %4966 = vmatpush1.bf16.msra.mxu0 0
        %4967 = vmatprep.subr.bf16.mxu0 0
        %4968 = vmatpush1.bf16.msra.mxu0 0
        %4969 = vmatprep.subr.bf16.mxu0 0
        %4970 = vmatpush1.bf16.msra.mxu0 0
        %4971 = vmatprep.subr.bf16.mxu0 0
        %4972 = vmatpush1.bf16.msra.mxu0 0
        %4973 = vmatprep.subr.bf16.mxu0 0
        %4974 = vmatpush1.bf16.msra.mxu0 0
        %4975 = vmatprep.subr.bf16.mxu0 0
        %4976 = vmatpush1.bf16.msra.mxu0 0
        %4977 = vmatprep.mubr.bf16.mxu0 0
        %4978 = vmatmul.mubr.bf16.gmra.mrb[0].mxu0 %v4919
        %v4979 = vpop.f32.mrb[0].mxu0
        %v4980 = vadd.f32 %v314, %v4979
        %v4981 = vpop.f32.mrb[0].mxu0
        %v4982 = vpop.f32.mrb[0].mxu0
        %v4983 = vadd.f32 %v315, %v4982
        %v4984 = vpop.f32.mrb[0].mxu0
        %4985 = vmatprep.mubr.bf16.mxu0 0
        %4986 = vmatmul.mubr.bf16.gmra.mrb[0].mxu0 %v4922
        %v4987 = vpop.f32.mrb[0].mxu0
        %v4988 = vadd.f32 %v316, %v4987
        %v4989 = vpop.f32.mrb[0].mxu0
        %v4990 = vpop.f32.mrb[0].mxu0
        %v4991 = vadd.f32 %v317, %v4990
        %v4992 = vpop.f32.mrb[0].mxu0
        %4993 = vmatprep.mubr.bf16.mxu0 0
        %4994 = vmatmul.mubr.bf16.gmra.mrb[0].mxu0 %v4925
        %v4995 = vpop.f32.mrb[0].mxu0
        %v4996 = vadd.f32 %v318, %v4995
        %v4997 = vpop.f32.mrb[0].mxu0
        %v4998 = vpop.f32.mrb[0].mxu0
        %v4999 = vadd.f32 %v319, %v4998
        %v5000 = vpop.f32.mrb[0].mxu0
        %5001 = vmatprep.mubr.bf16.mxu0 0
        %5002 = vmatmul.mubr.bf16.gmra.mrb[0].mxu0 %v4928
        %v5003 = vpop.f32.mrb[0].mxu0
        %v5004 = vadd.f32 %v320, %v5003
        %v5005 = vpop.f32.mrb[0].mxu0
        %v5006 = vpop.f32.mrb[0].mxu0
        %v5007 = vadd.f32 %v321, %v5006
        %v5008 = vpop.f32.mrb[0].mxu0
        %5009 = vmatprep.mubr.bf16.mxu0 0
        %5010 = vmatmul.mubr.bf16.gmra.mrb[0].mxu0 %v4931
        %v5011 = vpop.f32.mrb[0].mxu0
        %v5012 = vadd.f32 %v322, %v5011
        %v5013 = vpop.f32.mrb[0].mxu0
        %v5014 = vpop.f32.mrb[0].mxu0
        %v5015 = vadd.f32 %v323, %v5014
        %v5016 = vpop.f32.mrb[0].mxu0
        %5017 = vmatprep.mubr.bf16.mxu0 0
        %5018 = vmatmul.mubr.bf16.gmra.mrb[0].mxu0 %v4934
        %v5019 = vpop.f32.mrb[0].mxu0
        %v5020 = vadd.f32 %v324, %v5019
        %v5021 = vpop.f32.mrb[0].mxu0
        %v5022 = vpop.f32.mrb[0].mxu0
        %v5023 = vadd.f32 %v325, %v5022
        %v5024 = vpop.f32.mrb[0].mxu0
        %5025 = vmatprep.mubr.bf16.mxu0 0
        %5026 = vmatmul.mubr.bf16.gmra.mrb[0].mxu0 %v4937
        %v5027 = vpop.f32.mrb[0].mxu0
        %v5028 = vadd.f32 %v326, %v5027
        %v5029 = vpop.f32.mrb[0].mxu0
        %v5030 = vpop.f32.mrb[0].mxu0
        %v5031 = vadd.f32 %v327, %v5030
        %v5032 = vpop.f32.mrb[0].mxu0
        %5033 = vmatprep.mubr.bf16.mxu0 0
        %5034 = vmatmul.mubr.bf16.gmra.mrb[0].mxu0 %v4940
        %v5035 = vpop.f32.mrb[0].mxu0
        %v5036 = vadd.f32 %v328, %v5035
        %v5037 = vpop.f32.mrb[0].mxu0
        %v5038 = vpop.f32.mrb[0].mxu0
        %v5039 = vadd.f32 %v329, %v5038
        %v5040 = vpop.f32.mrb[0].mxu0
        %5041 = vdwg.mxu0
        %5042 = vmax.xlane.f32.xlu0 %v4980
        %v5043 = vpop.xlane.xlu0 %5042
        %5044 = vmax.xlane.f32.xlu0 %v4983
        %v5045 = vpop.xlane.xlu0 %5044
        %5046 = vmax.xlane.f32.xlu0 %v4988
        %v5047 = vpop.xlane.xlu0 %5046
        %5048 = vmax.xlane.f32.xlu0 %v4991
        %v5049 = vpop.xlane.xlu0 %5048
        %5050 = vmax.xlane.f32.xlu0 %v4996
        %v5051 = vpop.xlane.xlu0 %5050
        %5052 = vmax.xlane.f32.xlu0 %v4999
        %v5053 = vpop.xlane.xlu0 %5052
        %5054 = vmax.xlane.f32.xlu0 %v5004
        %v5055 = vpop.xlane.xlu0 %5054
        %5056 = vmax.xlane.f32.xlu0 %v5007
        %v5057 = vpop.xlane.xlu0 %5056
        %5058 = vmax.xlane.f32.xlu0 %v5012
        %v5059 = vpop.xlane.xlu0 %5058
        %5060 = vmax.xlane.f32.xlu0 %v5015
        %v5061 = vpop.xlane.xlu0 %5060
        %5062 = vmax.xlane.f32.xlu0 %v5020
        %v5063 = vpop.xlane.xlu0 %5062
        %5064 = vmax.xlane.f32.xlu0 %v5023
        %v5065 = vpop.xlane.xlu0 %5064
        %5066 = vmax.xlane.f32.xlu0 %v5028
        %v5067 = vpop.xlane.xlu0 %5066
        %5068 = vmax.xlane.f32.xlu0 %v5031
        %v5069 = vpop.xlane.xlu0 %5068
        %5070 = vmax.xlane.f32.xlu0 %v5036
        %v5071 = vpop.xlane.xlu0 %5070
        %5072 = vmax.xlane.f32.xlu0 %v5039
        %v5073 = vpop.xlane.xlu0 %5072
        %v5074 = vsub.f32 %v4980, %v5043
        %v5075 = vsub.f32 %v4983, %v5045
        %v5076 = vsub.f32 %v4988, %v5047
        %v5077 = vsub.f32 %v4991, %v5049
        %v5078 = vsub.f32 %v4996, %v5051
        %v5079 = vsub.f32 %v4999, %v5053
        %v5080 = vsub.f32 %v5004, %v5055
        %v5081 = vsub.f32 %v5007, %v5057
        %v5082 = vsub.f32 %v5012, %v5059
        %v5083 = vsub.f32 %v5015, %v5061
        %v5084 = vsub.f32 %v5020, %v5063
        %v5085 = vsub.f32 %v5023, %v5065
        %v5086 = vsub.f32 %v5028, %v5067
        %v5087 = vsub.f32 %v5031, %v5069
        %v5088 = vsub.f32 %v5036, %v5071
        %v5089 = vsub.f32 %v5039, %v5073
        %v5090 = vmul.f32 %v5074, 1.442695
        %v5091 = vpow.pop %v5090
        %v5092 = vmul.f32 %v5075, 1.442695
        %v5093 = vpow.pop %v5092
        %v5094 = vmul.f32 %v5076, 1.442695
        %v5095 = vpow.pop %v5094
        %v5096 = vmul.f32 %v5077, 1.442695
        %v5097 = vpow.pop %v5096
        %v5098 = vmul.f32 %v5078, 1.442695
        %v5099 = vpow.pop %v5098
        %v5100 = vmul.f32 %v5079, 1.442695
        %v5101 = vpow.pop %v5100
        %v5102 = vmul.f32 %v5080, 1.442695
        %v5103 = vpow.pop %v5102
        %v5104 = vmul.f32 %v5081, 1.442695
        %v5105 = vpow.pop %v5104
        %v5106 = vmul.f32 %v5082, 1.442695
        %v5107 = vpow.pop %v5106
        %v5108 = vmul.f32 %v5083, 1.442695
        %v5109 = vpow.pop %v5108
        %v5110 = vmul.f32 %v5084, 1.442695
        %v5111 = vpow.pop %v5110
        %v5112 = vmul.f32 %v5085, 1.442695
        %v5113 = vpow.pop %v5112
        %v5114 = vmul.f32 %v5086, 1.442695
        %v5115 = vpow.pop %v5114
        %v5116 = vmul.f32 %v5087, 1.442695
        %v5117 = vpow.pop %v5116
        %v5118 = vmul.f32 %v5088, 1.442695
        %v5119 = vpow.pop %v5118
        %v5120 = vmul.f32 %v5089, 1.442695
        %v5121 = vpow.pop %v5120
        %v5122 = vpack.c.bf16 %v5093, %v5091
        %v5123 = vpack.c.bf16 %v5097, %v5095
        %v5124 = vpack.c.bf16 %v5101, %v5099
        %v5125 = vpack.c.bf16 %v5105, %v5103
        %v5126 = vpack.c.bf16 %v5109, %v5107
        %v5127 = vpack.c.bf16 %v5113, %v5111
        %v5128 = vpack.c.bf16 %v5117, %v5115
        %v5129 = vpack.c.bf16 %v5121, %v5119
        %5130 = vmatprep.subr.bf16.mxu0 0
        %5131 = vmatpush1.bf16.xpose.msra.mxu0 %v5122
        %5132 = vmatprep.subr.bf16.mxu0 0
        %5133 = vmatpush1.bf16.xpose.msra.mxu0 %v5123
        %5134 = vmatprep.subr.bf16.mxu0 0
        %5135 = vmatpush1.bf16.xpose.msra.mxu0 %v5124
        %5136 = vmatprep.subr.bf16.mxu0 0
        %5137 = vmatpush1.bf16.xpose.msra.mxu0 %v5125
        %5138 = vmatprep.subr.bf16.mxu0 0
        %5139 = vmatpush1.bf16.xpose.msra.mxu0 %v5126
        %5140 = vmatprep.subr.bf16.mxu0 0
        %5141 = vmatpush1.bf16.xpose.msra.mxu0 %v5127
        %5142 = vmatprep.subr.bf16.mxu0 0
        %5143 = vmatpush1.bf16.xpose.msra.mxu0 %v5128
        %5144 = vmatprep.subr.bf16.mxu0 0
        %5145 = vmatpush1.bf16.xpose.msra.mxu0 %v5129
        %5146 = vmatprep.subr.bf16.mxu0 0
        %5147 = vmatpush1.bf16.xpose.msra.mxu0 0
        %5148 = vmatprep.subr.bf16.mxu0 0
        %5149 = vmatpush1.bf16.xpose.msra.mxu0 0
        %5150 = vmatprep.subr.bf16.mxu0 0
        %5151 = vmatpush1.bf16.xpose.msra.mxu0 0
        %5152 = vmatprep.subr.bf16.mxu0 0
        %5153 = vmatpush1.bf16.xpose.msra.mxu0 0
        %5154 = vmatprep.subr.bf16.mxu0 0
        %5155 = vmatpush1.bf16.xpose.msra.mxu0 0
        %5156 = vmatprep.subr.bf16.mxu0 0
        %5157 = vmatpush1.bf16.xpose.msra.mxu0 0
        %5158 = vmatprep.subr.bf16.mxu0 0
        %5159 = vmatpush1.bf16.xpose.msra.mxu0 0
        %5160 = vmatprep.subr.bf16.mxu0 0
        %5161 = vmatpush1.bf16.xpose.msra.mxu0 0
        %5162 = vmatprep.mubr.bf16.mxu0 0
        %5163 = vmatmul.mubr.bf16.gmra.mrb[0].mxu0 %v4901
        %v5164 = vpop.f32.mrb[0].mxu0
        %v5165 = vadd.f32 0.0, %v5164
        %v5166 = vpop.f32.mrb[0].mxu0
        %v5167 = vpop.f32.mrb[0].mxu0
        %v5168 = vpop.f32.mrb[0].mxu0
        %5169 = vdwg.mxu0
        %5170 = vmatprep.subr.bf16.mxu0 0
        %5171 = vmatpush1.bf16.xpose.msra.mxu0 %v5122
        %5172 = vmatprep.subr.bf16.mxu0 0
        %5173 = vmatpush1.bf16.xpose.msra.mxu0 %v5123
        %5174 = vmatprep.subr.bf16.mxu0 0
        %5175 = vmatpush1.bf16.xpose.msra.mxu0 %v5124
        %5176 = vmatprep.subr.bf16.mxu0 0
        %5177 = vmatpush1.bf16.xpose.msra.mxu0 %v5125
        %5178 = vmatprep.subr.bf16.mxu0 0
        %5179 = vmatpush1.bf16.xpose.msra.mxu0 %v5126
        %5180 = vmatprep.subr.bf16.mxu0 0
        %5181 = vmatpush1.bf16.xpose.msra.mxu0 %v5127
        %5182 = vmatprep.subr.bf16.mxu0 0
        %5183 = vmatpush1.bf16.xpose.msra.mxu0 %v5128
        %5184 = vmatprep.subr.bf16.mxu0 0
        %5185 = vmatpush1.bf16.xpose.msra.mxu0 %v5129
        %5186 = vmatprep.subr.bf16.mxu0 0
        %5187 = vmatpush1.bf16.xpose.msra.mxu0 0
        %5188 = vmatprep.subr.bf16.mxu0 0
        %5189 = vmatpush1.bf16.xpose.msra.mxu0 0
        %5190 = vmatprep.subr.bf16.mxu0 0
        %5191 = vmatpush1.bf16.xpose.msra.mxu0 0
        %5192 = vmatprep.subr.bf16.mxu0 0
        %5193 = vmatpush1.bf16.xpose.msra.mxu0 0
        %5194 = vmatprep.subr.bf16.mxu0 0
        %5195 = vmatpush1.bf16.xpose.msra.mxu0 0
        %5196 = vmatprep.subr.bf16.mxu0 0
        %5197 = vmatpush1.bf16.xpose.msra.mxu0 0
        %5198 = vmatprep.subr.bf16.mxu0 0
        %5199 = vmatpush1.bf16.xpose.msra.mxu0 0
        %5200 = vmatprep.subr.bf16.mxu0 0
        %5201 = vmatpush1.bf16.xpose.msra.mxu0 0
        %5202 = vmatprep.mubr.bf16.mxu0 0
        %5203 = vmatmul.mubr.bf16.gmra.mrb[0].mxu0 1065369472
        %v5204 = vpop.f32.mrb[0].mxu0
        %v5205 = vadd.f32 0.0, %v5204
        %v5206 = vpop.f32.mrb[0].mxu0
        %v5207 = vpop.f32.mrb[0].mxu0
        %v5208 = vpop.f32.mrb[0].mxu0
        %5209 = vdwg.mxu0
        %v5210 = vrcp.pop %v5205
        %v5211 = vlaneseq
        %v5212 = vshrl.u32 %v5211, 7
        %v5213 = vsub.s32 0, %v5212
        %v5214 = vrot.slane %v5210, %v5213
        %v5215 = vmul.f32 %v5165, %v5214
        %s5216 = scalar_lea.vmem %s307, 112 [#allocation10]
        %5217 = vst [vmem:[%s5216] sm:$0xff] %v5215
        %s5218 = scalar_lea.vmem %s251, 120 [#allocation2]
        %v5219 = vld [vmem:[%s5218] sm:$0xff]
        %v5220 = vmul.f32 %v5219, 0.35355338
        %v5221 = vpack.c.bf16 %v5220, %v5220
        %s5222 = scalar_lea.vmem %s260, 120 [#allocation5]
        %v5223 = vld [vmem:[%s5222] sm:$0xff]
        %v5224 = vpack.c.bf16 %v5223, %v5223
        %s5225 = scalar_lea.vmem %s269, 120 [#allocation7]
        %v5226 = vld [vmem:[%s5225] sm:$0xff]
        %v5227 = vpack.c.bf16 %v5226, %v5226
        %5228 = vxpose.xlu0.c.b16.start [1/8] %v5221, 128
        %5229 = vxpose.xlu0.c.b16.cont [2/8] 0, 128
        %5230 = vxpose.xlu0.c.b16.cont [3/8] 0, 128
        %5231 = vxpose.xlu0.c.b16.cont [4/8] 0, 128
        %5232 = vxpose.xlu0.c.b16.cont [5/8] 0, 128
        %5233 = vxpose.xlu0.c.b16.cont [6/8] 0, 128
        %5234 = vxpose.xlu0.c.b16.cont [7/8] 0, 128
        %5235 = vxpose.xlu0.c.b16.end [8/8] 0, 128
        %v5236 = vpop.trf.xlu0
        %v5237 = vpop.trf.xlu0
        %v5238 = vpop.trf.xlu0
        %v5239 = vpop.trf.xlu0
        %v5240 = vpop.trf.xlu0
        %v5241 = vpop.trf.xlu0
        %v5242 = vpop.trf.xlu0
        %v5243 = vpop.trf.xlu0
        %v5245 = vsel %vm353, %v5236, 0
        %v5248 = vsel %vm353, %v5237, 0
        %v5251 = vsel %vm353, %v5238, 0
        %v5254 = vsel %vm353, %v5239, 0
        %v5257 = vsel %vm353, %v5240, 0
        %v5260 = vsel %vm353, %v5241, 0
        %v5263 = vsel %vm353, %v5242, 0
        %v5266 = vsel %vm353, %v5243, 0
        %v5269 = vsel %vm378, %v5224, 0
        %5271 = vmatprep.subr.bf16.mxu0 0
        %5272 = vmatpush1.bf16.msra.mxu0 %v5269
        %5273 = vmatprep.subr.bf16.mxu0 0
        %5274 = vmatpush1.bf16.msra.mxu0 0
        %5275 = vmatprep.subr.bf16.mxu0 0
        %5276 = vmatpush1.bf16.msra.mxu0 0
        %5277 = vmatprep.subr.bf16.mxu0 0
        %5278 = vmatpush1.bf16.msra.mxu0 0
        %5279 = vmatprep.subr.bf16.mxu0 0
        %5280 = vmatpush1.bf16.msra.mxu0 0
        %5281 = vmatprep.subr.bf16.mxu0 0
        %5282 = vmatpush1.bf16.msra.mxu0 0
        %5283 = vmatprep.subr.bf16.mxu0 0
        %5284 = vmatpush1.bf16.msra.mxu0 0
        %5285 = vmatprep.subr.bf16.mxu0 0
        %5286 = vmatpush1.bf16.msra.mxu0 0
        %5287 = vmatprep.subr.bf16.mxu0 0
        %5288 = vmatpush1.bf16.msra.mxu0 0
        %5289 = vmatprep.subr.bf16.mxu0 0
        %5290 = vmatpush1.bf16.msra.mxu0 0
        %5291 = vmatprep.subr.bf16.mxu0 0
        %5292 = vmatpush1.bf16.msra.mxu0 0
        %5293 = vmatprep.subr.bf16.mxu0 0
        %5294 = vmatpush1.bf16.msra.mxu0 0
        %5295 = vmatprep.subr.bf16.mxu0 0
        %5296 = vmatpush1.bf16.msra.mxu0 0
        %5297 = vmatprep.subr.bf16.mxu0 0
        %5298 = vmatpush1.bf16.msra.mxu0 0
        %5299 = vmatprep.subr.bf16.mxu0 0
        %5300 = vmatpush1.bf16.msra.mxu0 0
        %5301 = vmatprep.subr.bf16.mxu0 0
        %5302 = vmatpush1.bf16.msra.mxu0 0
        %5303 = vmatprep.mubr.bf16.mxu0 0
        %5304 = vmatmul.mubr.bf16.gmra.mrb[0].mxu0 %v5245
        %v5305 = vpop.f32.mrb[0].mxu0
        %v5306 = vadd.f32 %v314, %v5305
        %v5307 = vpop.f32.mrb[0].mxu0
        %v5308 = vpop.f32.mrb[0].mxu0
        %v5309 = vadd.f32 %v315, %v5308
        %v5310 = vpop.f32.mrb[0].mxu0
        %5311 = vmatprep.mubr.bf16.mxu0 0
        %5312 = vmatmul.mubr.bf16.gmra.mrb[0].mxu0 %v5248
        %v5313 = vpop.f32.mrb[0].mxu0
        %v5314 = vadd.f32 %v316, %v5313
        %v5315 = vpop.f32.mrb[0].mxu0
        %v5316 = vpop.f32.mrb[0].mxu0
        %v5317 = vadd.f32 %v317, %v5316
        %v5318 = vpop.f32.mrb[0].mxu0
        %5319 = vmatprep.mubr.bf16.mxu0 0
        %5320 = vmatmul.mubr.bf16.gmra.mrb[0].mxu0 %v5251
        %v5321 = vpop.f32.mrb[0].mxu0
        %v5322 = vadd.f32 %v318, %v5321
        %v5323 = vpop.f32.mrb[0].mxu0
        %v5324 = vpop.f32.mrb[0].mxu0
        %v5325 = vadd.f32 %v319, %v5324
        %v5326 = vpop.f32.mrb[0].mxu0
        %5327 = vmatprep.mubr.bf16.mxu0 0
        %5328 = vmatmul.mubr.bf16.gmra.mrb[0].mxu0 %v5254
        %v5329 = vpop.f32.mrb[0].mxu0
        %v5330 = vadd.f32 %v320, %v5329
        %v5331 = vpop.f32.mrb[0].mxu0
        %v5332 = vpop.f32.mrb[0].mxu0
        %v5333 = vadd.f32 %v321, %v5332
        %v5334 = vpop.f32.mrb[0].mxu0
        %5335 = vmatprep.mubr.bf16.mxu0 0
        %5336 = vmatmul.mubr.bf16.gmra.mrb[0].mxu0 %v5257
        %v5337 = vpop.f32.mrb[0].mxu0
        %v5338 = vadd.f32 %v322, %v5337
        %v5339 = vpop.f32.mrb[0].mxu0
        %v5340 = vpop.f32.mrb[0].mxu0
        %v5341 = vadd.f32 %v323, %v5340
        %v5342 = vpop.f32.mrb[0].mxu0
        %5343 = vmatprep.mubr.bf16.mxu0 0
        %5344 = vmatmul.mubr.bf16.gmra.mrb[0].mxu0 %v5260
        %v5345 = vpop.f32.mrb[0].mxu0
        %v5346 = vadd.f32 %v324, %v5345
        %v5347 = vpop.f32.mrb[0].mxu0
        %v5348 = vpop.f32.mrb[0].mxu0
        %v5349 = vadd.f32 %v325, %v5348
        %v5350 = vpop.f32.mrb[0].mxu0
        %5351 = vmatprep.mubr.bf16.mxu0 0
        %5352 = vmatmul.mubr.bf16.gmra.mrb[0].mxu0 %v5263
        %v5353 = vpop.f32.mrb[0].mxu0
        %v5354 = vadd.f32 %v326, %v5353
        %v5355 = vpop.f32.mrb[0].mxu0
        %v5356 = vpop.f32.mrb[0].mxu0
        %v5357 = vadd.f32 %v327, %v5356
        %v5358 = vpop.f32.mrb[0].mxu0
        %5359 = vmatprep.mubr.bf16.mxu0 0
        %5360 = vmatmul.mubr.bf16.gmra.mrb[0].mxu0 %v5266
        %v5361 = vpop.f32.mrb[0].mxu0
        %v5362 = vadd.f32 %v328, %v5361
        %v5363 = vpop.f32.mrb[0].mxu0
        %v5364 = vpop.f32.mrb[0].mxu0
        %v5365 = vadd.f32 %v329, %v5364
        %v5366 = vpop.f32.mrb[0].mxu0
        %5367 = vdwg.mxu0
        %5368 = vmax.xlane.f32.xlu0 %v5306
        %v5369 = vpop.xlane.xlu0 %5368
        %5370 = vmax.xlane.f32.xlu0 %v5309
        %v5371 = vpop.xlane.xlu0 %5370
        %5372 = vmax.xlane.f32.xlu0 %v5314
        %v5373 = vpop.xlane.xlu0 %5372
        %5374 = vmax.xlane.f32.xlu0 %v5317
        %v5375 = vpop.xlane.xlu0 %5374
        %5376 = vmax.xlane.f32.xlu0 %v5322
        %v5377 = vpop.xlane.xlu0 %5376
        %5378 = vmax.xlane.f32.xlu0 %v5325
        %v5379 = vpop.xlane.xlu0 %5378
        %5380 = vmax.xlane.f32.xlu0 %v5330
        %v5381 = vpop.xlane.xlu0 %5380
        %5382 = vmax.xlane.f32.xlu0 %v5333
        %v5383 = vpop.xlane.xlu0 %5382
        %5384 = vmax.xlane.f32.xlu0 %v5338
        %v5385 = vpop.xlane.xlu0 %5384
        %5386 = vmax.xlane.f32.xlu0 %v5341
        %v5387 = vpop.xlane.xlu0 %5386
        %5388 = vmax.xlane.f32.xlu0 %v5346
        %v5389 = vpop.xlane.xlu0 %5388
        %5390 = vmax.xlane.f32.xlu0 %v5349
        %v5391 = vpop.xlane.xlu0 %5390
        %5392 = vmax.xlane.f32.xlu0 %v5354
        %v5393 = vpop.xlane.xlu0 %5392
        %5394 = vmax.xlane.f32.xlu0 %v5357
        %v5395 = vpop.xlane.xlu0 %5394
        %5396 = vmax.xlane.f32.xlu0 %v5362
        %v5397 = vpop.xlane.xlu0 %5396
        %5398 = vmax.xlane.f32.xlu0 %v5365
        %v5399 = vpop.xlane.xlu0 %5398
        %v5400 = vsub.f32 %v5306, %v5369
        %v5401 = vsub.f32 %v5309, %v5371
        %v5402 = vsub.f32 %v5314, %v5373
        %v5403 = vsub.f32 %v5317, %v5375
        %v5404 = vsub.f32 %v5322, %v5377
        %v5405 = vsub.f32 %v5325, %v5379
        %v5406 = vsub.f32 %v5330, %v5381
        %v5407 = vsub.f32 %v5333, %v5383
        %v5408 = vsub.f32 %v5338, %v5385
        %v5409 = vsub.f32 %v5341, %v5387
        %v5410 = vsub.f32 %v5346, %v5389
        %v5411 = vsub.f32 %v5349, %v5391
        %v5412 = vsub.f32 %v5354, %v5393
        %v5413 = vsub.f32 %v5357, %v5395
        %v5414 = vsub.f32 %v5362, %v5397
        %v5415 = vsub.f32 %v5365, %v5399
        %v5416 = vmul.f32 %v5400, 1.442695
        %v5417 = vpow.pop %v5416
        %v5418 = vmul.f32 %v5401, 1.442695
        %v5419 = vpow.pop %v5418
        %v5420 = vmul.f32 %v5402, 1.442695
        %v5421 = vpow.pop %v5420
        %v5422 = vmul.f32 %v5403, 1.442695
        %v5423 = vpow.pop %v5422
        %v5424 = vmul.f32 %v5404, 1.442695
        %v5425 = vpow.pop %v5424
        %v5426 = vmul.f32 %v5405, 1.442695
        %v5427 = vpow.pop %v5426
        %v5428 = vmul.f32 %v5406, 1.442695
        %v5429 = vpow.pop %v5428
        %v5430 = vmul.f32 %v5407, 1.442695
        %v5431 = vpow.pop %v5430
        %v5432 = vmul.f32 %v5408, 1.442695
        %v5433 = vpow.pop %v5432
        %v5434 = vmul.f32 %v5409, 1.442695
        %v5435 = vpow.pop %v5434
        %v5436 = vmul.f32 %v5410, 1.442695
        %v5437 = vpow.pop %v5436
        %v5438 = vmul.f32 %v5411, 1.442695
        %v5439 = vpow.pop %v5438
        %v5440 = vmul.f32 %v5412, 1.442695
        %v5441 = vpow.pop %v5440
        %v5442 = vmul.f32 %v5413, 1.442695
        %v5443 = vpow.pop %v5442
        %v5444 = vmul.f32 %v5414, 1.442695
        %v5445 = vpow.pop %v5444
        %v5446 = vmul.f32 %v5415, 1.442695
        %v5447 = vpow.pop %v5446
        %v5448 = vpack.c.bf16 %v5419, %v5417
        %v5449 = vpack.c.bf16 %v5423, %v5421
        %v5450 = vpack.c.bf16 %v5427, %v5425
        %v5451 = vpack.c.bf16 %v5431, %v5429
        %v5452 = vpack.c.bf16 %v5435, %v5433
        %v5453 = vpack.c.bf16 %v5439, %v5437
        %v5454 = vpack.c.bf16 %v5443, %v5441
        %v5455 = vpack.c.bf16 %v5447, %v5445
        %5456 = vmatprep.subr.bf16.mxu0 0
        %5457 = vmatpush1.bf16.xpose.msra.mxu0 %v5448
        %5458 = vmatprep.subr.bf16.mxu0 0
        %5459 = vmatpush1.bf16.xpose.msra.mxu0 %v5449
        %5460 = vmatprep.subr.bf16.mxu0 0
        %5461 = vmatpush1.bf16.xpose.msra.mxu0 %v5450
        %5462 = vmatprep.subr.bf16.mxu0 0
        %5463 = vmatpush1.bf16.xpose.msra.mxu0 %v5451
        %5464 = vmatprep.subr.bf16.mxu0 0
        %5465 = vmatpush1.bf16.xpose.msra.mxu0 %v5452
        %5466 = vmatprep.subr.bf16.mxu0 0
        %5467 = vmatpush1.bf16.xpose.msra.mxu0 %v5453
        %5468 = vmatprep.subr.bf16.mxu0 0
        %5469 = vmatpush1.bf16.xpose.msra.mxu0 %v5454
        %5470 = vmatprep.subr.bf16.mxu0 0
        %5471 = vmatpush1.bf16.xpose.msra.mxu0 %v5455
        %5472 = vmatprep.subr.bf16.mxu0 0
        %5473 = vmatpush1.bf16.xpose.msra.mxu0 0
        %5474 = vmatprep.subr.bf16.mxu0 0
        %5475 = vmatpush1.bf16.xpose.msra.mxu0 0
        %5476 = vmatprep.subr.bf16.mxu0 0
        %5477 = vmatpush1.bf16.xpose.msra.mxu0 0
        %5478 = vmatprep.subr.bf16.mxu0 0
        %5479 = vmatpush1.bf16.xpose.msra.mxu0 0
        %5480 = vmatprep.subr.bf16.mxu0 0
        %5481 = vmatpush1.bf16.xpose.msra.mxu0 0
        %5482 = vmatprep.subr.bf16.mxu0 0
        %5483 = vmatpush1.bf16.xpose.msra.mxu0 0
        %5484 = vmatprep.subr.bf16.mxu0 0
        %5485 = vmatpush1.bf16.xpose.msra.mxu0 0
        %5486 = vmatprep.subr.bf16.mxu0 0
        %5487 = vmatpush1.bf16.xpose.msra.mxu0 0
        %5488 = vmatprep.mubr.bf16.mxu0 0
        %5489 = vmatmul.mubr.bf16.gmra.mrb[0].mxu0 %v5227
        %v5490 = vpop.f32.mrb[0].mxu0
        %v5491 = vadd.f32 0.0, %v5490
        %v5492 = vpop.f32.mrb[0].mxu0
        %v5493 = vpop.f32.mrb[0].mxu0
        %v5494 = vpop.f32.mrb[0].mxu0
        %5495 = vdwg.mxu0
        %5496 = vmatprep.subr.bf16.mxu0 0
        %5497 = vmatpush1.bf16.xpose.msra.mxu0 %v5448
        %5498 = vmatprep.subr.bf16.mxu0 0
        %5499 = vmatpush1.bf16.xpose.msra.mxu0 %v5449
        %5500 = vmatprep.subr.bf16.mxu0 0
        %5501 = vmatpush1.bf16.xpose.msra.mxu0 %v5450
        %5502 = vmatprep.subr.bf16.mxu0 0
        %5503 = vmatpush1.bf16.xpose.msra.mxu0 %v5451
        %5504 = vmatprep.subr.bf16.mxu0 0
        %5505 = vmatpush1.bf16.xpose.msra.mxu0 %v5452
        %5506 = vmatprep.subr.bf16.mxu0 0
        %5507 = vmatpush1.bf16.xpose.msra.mxu0 %v5453
        %5508 = vmatprep.subr.bf16.mxu0 0
        %5509 = vmatpush1.bf16.xpose.msra.mxu0 %v5454
        %5510 = vmatprep.subr.bf16.mxu0 0
        %5511 = vmatpush1.bf16.xpose.msra.mxu0 %v5455
        %5512 = vmatprep.subr.bf16.mxu0 0
        %5513 = vmatpush1.bf16.xpose.msra.mxu0 0
        %5514 = vmatprep.subr.bf16.mxu0 0
        %5515 = vmatpush1.bf16.xpose.msra.mxu0 0
        %5516 = vmatprep.subr.bf16.mxu0 0
        %5517 = vmatpush1.bf16.xpose.msra.mxu0 0
        %5518 = vmatprep.subr.bf16.mxu0 0
        %5519 = vmatpush1.bf16.xpose.msra.mxu0 0
        %5520 = vmatprep.subr.bf16.mxu0 0
        %5521 = vmatpush1.bf16.xpose.msra.mxu0 0
        %5522 = vmatprep.subr.bf16.mxu0 0
        %5523 = vmatpush1.bf16.xpose.msra.mxu0 0
        %5524 = vmatprep.subr.bf16.mxu0 0
        %5525 = vmatpush1.bf16.xpose.msra.mxu0 0
        %5526 = vmatprep.subr.bf16.mxu0 0
        %5527 = vmatpush1.bf16.xpose.msra.mxu0 0
        %5528 = vmatprep.mubr.bf16.mxu0 0
        %5529 = vmatmul.mubr.bf16.gmra.mrb[0].mxu0 1065369472
        %v5530 = vpop.f32.mrb[0].mxu0
        %v5531 = vadd.f32 0.0, %v5530
        %v5532 = vpop.f32.mrb[0].mxu0
        %v5533 = vpop.f32.mrb[0].mxu0
        %v5534 = vpop.f32.mrb[0].mxu0
        %5535 = vdwg.mxu0
        %v5536 = vrcp.pop %v5531
        %v5537 = vlaneseq
        %v5538 = vshrl.u32 %v5537, 7
        %v5539 = vsub.s32 0, %v5538
        %v5540 = vrot.slane %v5536, %v5539
        %v5541 = vmul.f32 %v5491, %v5540
        %s5542 = scalar_lea.vmem %s307, 120 [#allocation10]
        %5543 = vst [vmem:[%s5542] sm:$0xff] %v5541
        %s5544 = sand.u32 %s132, 1
        %s5545 = scalar_lea.sflag [#allocation4], %s5544
        %s5546 = sand.u32 %s132, 1
        %s5547 = smul.addr %s5546, 128
        %s5548 = scalar_lea.vmem [#allocation10], %s5547
        // Predicated region
        $region53: #{tpu_custom_call.1} parent=35 // pred_check
          %p5549 = pneg %p142
        $region54: #{tpu_custom_call.1} parent=35 // pred_check_branch
          %5551 = sbr.rel (%p5549) target = $region56
        $region55: #{tpu_custom_call.1} parent=35 // pred_region
          %s5552 = smul.u32 16, %s25
          %s5554 = ssub.s32 2048, 2048
          %5555 = vsyncadd %s5545, %s5554
          %s5556 = smul.addr %s5552, 128
          %s5557 = scalar_lea.hbm %s4, %s5556
          %s5558 = sshll.u32 %s5548, 4
          %s5559 = int_to_ptr.vmem [resolvable:$true] %s5558
          %5564 = dma.vmem_to_hbm [thread:$0]  %s5559, 2048, %s5557, %s5545, 128, 128, 8
        $region56: #{tpu_custom_call.1} parent=35 // pred_fallthru
          _
      $region36: #{tpu_custom_call.1} parent=5 // pred_fallthru
        _
      %p5565 = scmp.le.s32.totalorder 2, %s20
      // Predicated region
      $region57: #{tpu_custom_call.1} parent=5 // pred_check
        %p5566 = pneg %p5565
      $region58: #{tpu_custom_call.1} parent=5 // pred_check_branch
        %5568 = sbr.rel (%p5566) target = $region60
      $region59: #{tpu_custom_call.1} parent=5 // pred_region
        %s5569 = ssub.s32 %s20, 2
        // Predicated region
        $region61: #{tpu_custom_call.1} parent=59 // pred_check
          %p5570 = pneg %p148
        $region62: #{tpu_custom_call.1} parent=59 // pred_check_branch
          %5572 = sbr.rel (%p5570) target = $region64
        $region63: #{tpu_custom_call.1} parent=59 // pred_region
          %s5573 = sand.u32 %s133, 1
          %s5574 = scalar_lea.sflag [#allocation4], %s5573
          %s5575 = sand.u32 %s133, 1
          %s5576 = smul.addr %s5575, 128
          %s5577 = scalar_lea.vmem [#allocation10], %s5576
          %5578 = dma.done %s5574, 2048
        $region64: #{tpu_custom_call.1} parent=59 // pred_fallthru
          _
      $region60: #{tpu_custom_call.1} parent=5 // pred_fallthru
        _
    $region6: #{tpu_custom_call.1} parent=1 // loop_footer
      %s24 = sadd.s32 1, %s20
    $region7: #{tpu_custom_call.1} parent=1 // loop_footer_branch
      %19 = sbr.rel target = $region3
    $region8: #{tpu_custom_call.1} parent=1 // loop_exit
      _
    %5579 = vsyncpa [#allocation3], 1
    %s5580 = scalar_lea.sflag [#allocation3], 1
    %5581 = vsyncpa %s5580, 1
    %5582 = vsyncpa [#allocation6], 1
    %s5583 = scalar_lea.sflag [#allocation6], 1
    %5584 = vsyncpa %s5583, 1
    %5585 = vsyncpa [#allocation9], 1
    %5586 = vsyncpa [#allocation4], 1
    %s5587 = scalar_lea.sflag [#allocation4], 1
    %5588 = vsyncpa %s5587, 1

</llo_original>
